<compile_context>
chip_gen: v7x
topology: tpu7x:2x2x1
jax: 0.10.0
libtpu: 0.0.40
codegen_flags: <defaults>
</compile_context>

<pallas_src>
import jax
import jax.numpy as jnp
from jax.experimental import pallas as pl
from jax.experimental.pallas import tpu as pltpu


# ----------------------------- in-kernel helpers ----------------------------

def _flatten_hw(p):
    """(H, W, C) -> (H*W, C), channel (lane) dim untouched."""
    H, W, C = p.shape
    if W % 8 == 0:
        return p.reshape(H * W, C)
    # Tiny spatial dims (W < 8): merge rows via leading-dim slices + concat.
    return jnp.concatenate([p[i] for i in range(H)], axis=0)


def _pad_hw1(h):
    """Zero-pad the two spatial dims of an (H, W, C) value by 1 on each side."""
    H, W, C = h.shape
    zr = jnp.zeros((1, W, C), h.dtype)
    h = jnp.concatenate([zr, h, zr], axis=0)
    zc = jnp.zeros((H + 2, 1, C), h.dtype)
    return jnp.concatenate([zc, h, zc], axis=1)


def _patches_nhwc(h):
    """In-kernel im2col for a 3x3/pad-1 conv: (H, W, C) -> (H*W, 9*C)."""
    H, W, C = h.shape
    hp = _pad_hw1(h)
    taps = [hp[kh:kh + H, kw:kw + W, :] for kh in range(3) for kw in range(3)]
    return _flatten_hw(jnp.concatenate(taps, axis=-1))


def _patches_chan1(xp, H, W):
    """im2col for the first conv (Cin=1) from the pre-padded (H+2, W+2) image."""
    taps = [xp[kh:kh + H, kw:kw + W] for kh in range(3) for kw in range(3)]
    return _flatten_hw(jnp.stack(taps, axis=-1))          # (H*W, 9)


def _maxpool2x2(y_ref, H, W):
    """MaxPool2d(2, 2) of the conv output staged in VMEM scratch.

    y_ref holds (H*W, C) rows in (h, w) order; returns (H//2, W//2, C).
    """
    Ho, Wo = H // 2, W // 2
    even_w = y_ref[pl.ds(0, H * Wo, stride=2), :]          # columns 0,2,4,...
    odd_w = y_ref[pl.ds(1, H * Wo, stride=2), :]           # columns 1,3,5,...
    m = jnp.maximum(even_w, odd_w)                         # (H*Wo, C), rows (h, wo)
    rows = []
    for k in range(Ho):
        top = m[(2 * k) * Wo:(2 * k + 1) * Wo]
        bot = m[(2 * k + 1) * Wo:(2 * k + 2) * Wo]
        rows.append(jnp.maximum(top, bot))
    return jnp.stack(rows, axis=0)                         # (Ho, Wo, C)


def _conv_block(p, w_ref, shift_ref, y_ref, H, W):
    """Conv3x3(pad=1) + folded-BN + ReLU + MaxPool2x2 for one sample."""
    y = jnp.dot(p.astype(w_ref.dtype), w_ref[...],         # bf16 MXU, f32 acc
                preferred_element_type=jnp.float32)
    y = jnp.maximum(y + shift_ref[...], 0.0)               # BN shift + ReLU (f32)
    y_ref[...] = y
    return _maxpool2x2(y_ref, H, W)


# --------------------------------- kernel -----------------------------------

def _stoi_kernel(x_ref,
                 cw1, cs1, cw2, cs2, cw3, cs3, cw4, cs4,
                 fw1, fb1, fw2, fb2, fw3, fb3,
                 o_ref,
                 y1, y2, y3, y4):
    Hp, Wp = x_ref.shape[1], x_ref.shape[2]
    H, W = Hp - 2, Wp - 2

    # ---- conv stack: everything stays on-chip between layers ----
    xp = x_ref[0]                                          # (H+2, W+2) padded image
    h = _conv_block(_patches_chan1(xp, H, W), cw1, cs1, y1, H, W)
    h = _conv_block(_patches_nhwc(h), cw2, cs2, y2, H // 2, W // 2)
    h = _conv_block(_patches_nhwc(h), cw3, cs3, y3, H // 4, W // 4)
    h = _conv_block(_patches_nhwc(h), cw4, cs4, y4, H // 8, W // 8)

    # ---- flatten (NHWC order; fc1 rows were permuted from NCHW at init) ----
    Hf, Wf, C = h.shape
    pieces = [h[i, j:j + 1, :] for i in range(Hf) for j in range(Wf)]
    flat = jnp.concatenate(pieces, axis=-1)                # (1, Hf*Wf*C)

    # ---- fused MLP: Linear->ReLU->(Dropout=id)->Linear->ReLU->(Dropout=id)->Linear
    z = jnp.dot(flat.astype(fw1.dtype), fw1[...],
                preferred_element_type=jnp.float32)
    z = jnp.maximum(z + fb1[...], 0.0)
    z = jnp.dot(z.astype(fw2.dtype), fw2[...],
                preferred_element_type=jnp.float32)
    z = jnp.maximum(z + fb2[...], 0.0)
    out = jnp.sum(z * fw3[...], axis=-1, keepdims=True) + fb3[...]
    o_ref[...] = out.reshape(1, 1, 1)


# ------------------------------ JAX wrapper ----------------------------------

def stoi_predictor_forward(x, conv_params, fc_params):
    """x: (B, H, W) float32 -> (B, 1) float32 (PyTorch forward does unsqueeze(1))."""
    B, H, W = x.shape
    assert H % 16 == 0 and W % 16 == 0, "H and W must be divisible by 16"
    (cw1, cs1), (cw2, cs2), (cw3, cs3), (cw4, cs4) = conv_params
    (fw1, fb1), (fw2, fb2), (fw3, fb3) = fc_params

    xp = jnp.pad(x, ((0, 0), (1, 1), (1, 1)))              # pad=1 for the first conv

    weights = (cw1, cs1, cw2, cs2, cw3, cs3, cw4, cs4,
               fw1, fb1, fw2, fb2, fw3, fb3)
    in_specs = [pl.BlockSpec((1, H + 2, W + 2), lambda b: (b, 0, 0))]
    in_specs += [pl.BlockSpec(a.shape, lambda b: (0, 0)) for a in weights]

    scratch = [
        pltpu.VMEM((H * W, 16), jnp.float32),
        pltpu.VMEM((H * W // 4, 32), jnp.float32),
        pltpu.VMEM((H * W // 16, 64), jnp.float32),
        pltpu.VMEM((H * W // 64, 128), jnp.float32),
    ]

    out = pl.pallas_call(
        _stoi_kernel,
        out_shape=jax.ShapeDtypeStruct((B, 1, 1), jnp.float32),
        grid_spec=pltpu.PrefetchScalarGridSpec(
            num_scalar_prefetch=0,
            grid=(B,),
            in_specs=in_specs,
            out_specs=pl.BlockSpec((1, 1, 1), lambda b: (b, 0, 0)),
            scratch_shapes=scratch,
        ),
        compiler_params=pltpu.CompilerParams(
            dimension_semantics=("parallel",)),            # batch over both v7x TCs
    )(xp, *weights)
    return out.reshape(B, 1)


# ------------------------------ parameters -----------------------------------

def init_params(key, input_shape):
    """Synthetic parameters matching the PyTorch module shapes, pre-folded."""
    H, W = input_shape
    chans = [1, 16, 32, 64, 128]
    eps = 1e-5
    conv_params = []
    for li in range(4):
        cin, cout = chans[li], chans[li + 1]
        key, k_w, k_b = jax.random.split(key, 3)
        w = jax.random.normal(k_w, (cout, cin, 3, 3), jnp.float32) * 0.05
        b = jax.random.normal(k_b, (cout,), jnp.float32) * 0.05
        # BatchNorm2d eval stats: gamma=1, beta=0, running_mean=0, running_var=1
        gamma = jnp.ones((cout,), jnp.float32)
        beta = jnp.zeros((cout,), jnp.float32)
        mean = jnp.zeros((cout,), jnp.float32)
        var = jnp.ones((cout,), jnp.float32)
        scale = gamma / jnp.sqrt(var + eps)
        shift = beta + (b - mean) * scale
        # (Cout, Cin, 3, 3) -> (9*Cin, Cout), rows ordered (kh, kw, cin);
        # fold the BN scale into the weights so the kernel only adds `shift`.
        w2d = jnp.transpose(w, (2, 3, 1, 0)).reshape(9 * cin, cout) * scale[None, :]
        conv_params.append((w2d.astype(jnp.bfloat16), shift.reshape(1, cout)))

    Hf, Wf, C = H // 16, W // 16, 128
    flatten_size = Hf * Wf * C
    dims = [flatten_size, 256, 64, 1]
    ws, bs = [], []
    for li in range(3):
        key, k_w, k_b = jax.random.split(key, 3)
        ws.append(jax.random.normal(k_w, (dims[li], dims[li + 1]), jnp.float32) * 0.05)
        bs.append(jax.random.normal(k_b, (1, dims[li + 1]), jnp.float32) * 0.05)

    # Fold PyTorch's NCHW flatten order into fc1's rows (kernel flattens NHWC).
    hh, ww, cc = jnp.meshgrid(jnp.arange(Hf), jnp.arange(Wf), jnp.arange(C),
                              indexing="ij")
    perm = (cc * (Hf * Wf) + hh * Wf + ww).reshape(-1)
    fw1 = ws[0][perm, :].astype(jnp.bfloat16)
    fw2 = ws[1].astype(jnp.bfloat16)
    fw3 = ws[2].reshape(1, dims[2])                        # (64, 1) -> (1, 64) row
    fc_params = ((fw1, bs[0]), (fw2, bs[1]), (fw3, bs[2]))
    return conv_params, fc_params


if __name__ == "__main__":
    input_shape = (32, 32)          # spectrogram patch (H, W); 4 maxpools -> 2x2
    batch = 2

    key = jax.random.PRNGKey(0)
    key, kx = jax.random.split(key)
    x = jax.random.normal(kx, (batch, *input_shape), jnp.float32)

    conv_params, fc_params = init_params(key, input_shape)

    fwd = jax.jit(lambda xx: stoi_predictor_forward(xx, conv_params, fc_params))
    out = fwd(x)
    jax.block_until_ready(out)
    assert out.shape == (batch, 1), out.shape
    print("KERNEL_OK")
</pallas_src>

<mosaic_0001>
module attributes {stable_mosaic.version = 11 : i64} {
  func.func @_stoi_kernel(%arg0: i32, %arg1: memref<1x34x34xf32, #tpu.memory_space<vmem>>, %arg2: memref<9x16xbf16, #tpu.memory_space<vmem>>, %arg3: memref<1x16xf32, #tpu.memory_space<vmem>>, %arg4: memref<144x32xbf16, #tpu.memory_space<vmem>>, %arg5: memref<1x32xf32, #tpu.memory_space<vmem>>, %arg6: memref<288x64xbf16, #tpu.memory_space<vmem>>, %arg7: memref<1x64xf32, #tpu.memory_space<vmem>>, %arg8: memref<576x128xbf16, #tpu.memory_space<vmem>>, %arg9: memref<1x128xf32, #tpu.memory_space<vmem>>, %arg10: memref<512x256xbf16, #tpu.memory_space<vmem>>, %arg11: memref<1x256xf32, #tpu.memory_space<vmem>>, %arg12: memref<256x64xbf16, #tpu.memory_space<vmem>>, %arg13: memref<1x64xf32, #tpu.memory_space<vmem>>, %arg14: memref<1x64xf32, #tpu.memory_space<vmem>>, %arg15: memref<1x1xf32, #tpu.memory_space<vmem>>, %arg16: memref<1x1x1xf32, #tpu.memory_space<vmem>>, %arg17: memref<1024x16xf32, #tpu.memory_space<vmem>>, %arg18: memref<256x32xf32, #tpu.memory_space<vmem>>, %arg19: memref<64x64xf32, #tpu.memory_space<vmem>>, %arg20: memref<16x128xf32, #tpu.memory_space<vmem>>) attributes {dimension_semantics = [#tpu.dimension_semantics<parallel>], iteration_bounds = array<i64: 2>, scalar_prefetch = 0 : i64, scratch_operands = 4 : i64, tpu.core_type = #tpu.core_type<tc>, window_params = [{transform_indices = @transform_0, window_bounds = array<i64: 1, 34, 34>}, {pipeline_mode = #tpu.pipeline_mode<synchronous>, transform_indices = @transform_1, window_bounds = array<i64: 9, 16>}, {pipeline_mode = #tpu.pipeline_mode<synchronous>, transform_indices = @transform_2, window_bounds = array<i64: 1, 16>}, {pipeline_mode = #tpu.pipeline_mode<synchronous>, transform_indices = @transform_3, window_bounds = array<i64: 144, 32>}, {pipeline_mode = #tpu.pipeline_mode<synchronous>, transform_indices = @transform_4, window_bounds = array<i64: 1, 32>}, {pipeline_mode = #tpu.pipeline_mode<synchronous>, transform_indices = @transform_5, window_bounds = array<i64: 288, 64>}, {pipeline_mode = #tpu.pipeline_mode<synchronous>, transform_indices = @transform_6, window_bounds = array<i64: 1, 64>}, {pipeline_mode = #tpu.pipeline_mode<synchronous>, transform_indices = @transform_7, window_bounds = array<i64: 576, 128>}, {pipeline_mode = #tpu.pipeline_mode<synchronous>, transform_indices = @transform_8, window_bounds = array<i64: 1, 128>}, {pipeline_mode = #tpu.pipeline_mode<synchronous>, transform_indices = @transform_9, window_bounds = array<i64: 512, 256>}, {pipeline_mode = #tpu.pipeline_mode<synchronous>, transform_indices = @transform_10, window_bounds = array<i64: 1, 256>}, {pipeline_mode = #tpu.pipeline_mode<synchronous>, transform_indices = @transform_11, window_bounds = array<i64: 256, 64>}, {pipeline_mode = #tpu.pipeline_mode<synchronous>, transform_indices = @transform_12, window_bounds = array<i64: 1, 64>}, {pipeline_mode = #tpu.pipeline_mode<synchronous>, transform_indices = @transform_13, window_bounds = array<i64: 1, 64>}, {pipeline_mode = #tpu.pipeline_mode<synchronous>, transform_indices = @transform_14, window_bounds = array<i64: 1, 1>}, {transform_indices = @transform_15, window_bounds = array<i64: 1, 1, 1>}]} {
    %c0 = arith.constant 0 : index
    %c0_0 = arith.constant 0 : index
    %c0_1 = arith.constant 0 : index
    %0 = vector.load %arg1[%c0, %c0_0, %c0_1] : memref<1x34x34xf32, #tpu.memory_space<vmem>>, vector<1x34x34xf32>
    %1 = vector.shape_cast %0 : vector<1x34x34xf32> to vector<34x34xf32>
    %2 = vector.extract_strided_slice %1 {offsets = [0, 0], sizes = [32, 32], strides = [1, 1]} : vector<34x34xf32> to vector<32x32xf32>
    %3 = vector.extract_strided_slice %1 {offsets = [0, 1], sizes = [32, 32], strides = [1, 1]} : vector<34x34xf32> to vector<32x32xf32>
    %4 = vector.extract_strided_slice %1 {offsets = [0, 2], sizes = [32, 32], strides = [1, 1]} : vector<34x34xf32> to vector<32x32xf32>
    %5 = vector.extract_strided_slice %1 {offsets = [1, 0], sizes = [32, 32], strides = [1, 1]} : vector<34x34xf32> to vector<32x32xf32>
    %6 = vector.extract_strided_slice %1 {offsets = [1, 1], sizes = [32, 32], strides = [1, 1]} : vector<34x34xf32> to vector<32x32xf32>
    %7 = vector.extract_strided_slice %1 {offsets = [1, 2], sizes = [32, 32], strides = [1, 1]} : vector<34x34xf32> to vector<32x32xf32>
    %8 = vector.extract_strided_slice %1 {offsets = [2, 0], sizes = [32, 32], strides = [1, 1]} : vector<34x34xf32> to vector<32x32xf32>
    %9 = vector.extract_strided_slice %1 {offsets = [2, 1], sizes = [32, 32], strides = [1, 1]} : vector<34x34xf32> to vector<32x32xf32>
    %10 = vector.extract_strided_slice %1 {offsets = [2, 2], sizes = [32, 32], strides = [1, 1]} : vector<34x34xf32> to vector<32x32xf32>
    %11 = vector.shape_cast %2 : vector<32x32xf32> to vector<32x32x1xf32>
    %12 = vector.shape_cast %3 : vector<32x32xf32> to vector<32x32x1xf32>
    %13 = vector.shape_cast %4 : vector<32x32xf32> to vector<32x32x1xf32>
    %14 = vector.shape_cast %5 : vector<32x32xf32> to vector<32x32x1xf32>
    %15 = vector.shape_cast %6 : vector<32x32xf32> to vector<32x32x1xf32>
    %16 = vector.shape_cast %7 : vector<32x32xf32> to vector<32x32x1xf32>
    %17 = vector.shape_cast %8 : vector<32x32xf32> to vector<32x32x1xf32>
    %18 = vector.shape_cast %9 : vector<32x32xf32> to vector<32x32x1xf32>
    %19 = vector.shape_cast %10 : vector<32x32xf32> to vector<32x32x1xf32>
    %20 = tpu.concatenate %11, %12, %13, %14, %15, %16, %17, %18, %19 in 2 : vector<32x32x1xf32>, vector<32x32x1xf32>, vector<32x32x1xf32>, vector<32x32x1xf32>, vector<32x32x1xf32>, vector<32x32x1xf32>, vector<32x32x1xf32>, vector<32x32x1xf32>, vector<32x32x1xf32> -> vector<32x32x9xf32>
    %21 = vector.shape_cast %20 : vector<32x32x9xf32> to vector<1024x9xf32>
    %22 = arith.truncf %21 : vector<1024x9xf32> to vector<1024x9xbf16>
    %c0_2 = arith.constant 0 : index
    %c0_3 = arith.constant 0 : index
    %23 = vector.load %arg2[%c0_2, %c0_3] : memref<9x16xbf16, #tpu.memory_space<vmem>>, vector<9x16xbf16>
    %cst = arith.constant dense<0.000000e+00> : vector<1024x16xf32>
    %24 = tpu.matmul %22, %23, %cst {dimension_numbers = #tpu.dot_dimension_numbers<[1], [0], [0], [1], [0, 0, 1, 1], [], []>} : vector<1024x9xbf16>, vector<9x16xbf16>, vector<1024x16xf32> -> vector<1024x16xf32>
    %c0_4 = arith.constant 0 : index
    %c0_5 = arith.constant 0 : index
    %25 = vector.load %arg3[%c0_4, %c0_5] : memref<1x16xf32, #tpu.memory_space<vmem>>, vector<1x16xf32>
    %26 = vector.broadcast %25 : vector<1x16xf32> to vector<1024x16xf32>
    %27 = arith.addf %24, %26 : vector<1024x16xf32>
    %cst_6 = arith.constant 0.000000e+00 : f32
    %28 = vector.broadcast %cst_6 : f32 to vector<1024x16xf32>
    %29 = arith.maximumf %27, %28 : vector<1024x16xf32>
    %c0_7 = arith.constant 0 : index
    %c0_8 = arith.constant 0 : index
    %30 = vector.load %arg17[%c0_7, %c0_8] : memref<1024x16xf32, #tpu.memory_space<vmem>>, vector<1024x16xf32>
    tpu.vector_store %arg17[%c0_7, %c0_8], %29 {strides = array<i32>} : memref<1024x16xf32, #tpu.memory_space<vmem>>, vector<1024x16xf32>,
    %c0_9 = arith.constant 0 : index
    %c0_10 = arith.constant 0 : index
    %31 = tpu.strided_load %arg17[%c0_9, %c0_10] {strides = array<i32: 2, 1>} : memref<1024x16xf32, #tpu.memory_space<vmem>>, vector<512x16xf32>
    %c1 = arith.constant 1 : index
    %c0_11 = arith.constant 0 : index
    %32 = tpu.strided_load %arg17[%c1, %c0_11] {strides = array<i32: 2, 1>} : memref<1024x16xf32, #tpu.memory_space<vmem>>, vector<512x16xf32>
    %33 = arith.maximumf %31, %32 : vector<512x16xf32>
    %34 = vector.extract_strided_slice %33 {offsets = [0, 0], sizes = [16, 16], strides = [1, 1]} : vector<512x16xf32> to vector<16x16xf32>
    %35 = vector.extract_strided_slice %33 {offsets = [16, 0], sizes = [16, 16], strides = [1, 1]} : vector<512x16xf32> to vector<16x16xf32>
    %36 = arith.maximumf %34, %35 : vector<16x16xf32>
    %37 = vector.extract_strided_slice %33 {offsets = [32, 0], sizes = [16, 16], strides = [1, 1]} : vector<512x16xf32> to vector<16x16xf32>
    %38 = vector.extract_strided_slice %33 {offsets = [48, 0], sizes = [16, 16], strides = [1, 1]} : vector<512x16xf32> to vector<16x16xf32>
    %39 = arith.maximumf %37, %38 : vector<16x16xf32>
    %40 = vector.extract_strided_slice %33 {offsets = [64, 0], sizes = [16, 16], strides = [1, 1]} : vector<512x16xf32> to vector<16x16xf32>
    %41 = vector.extract_strided_slice %33 {offsets = [80, 0], sizes = [16, 16], strides = [1, 1]} : vector<512x16xf32> to vector<16x16xf32>
    %42 = arith.maximumf %40, %41 : vector<16x16xf32>
    %43 = vector.extract_strided_slice %33 {offsets = [96, 0], sizes = [16, 16], strides = [1, 1]} : vector<512x16xf32> to vector<16x16xf32>
    %44 = vector.extract_strided_slice %33 {offsets = [112, 0], sizes = [16, 16], strides = [1, 1]} : vector<512x16xf32> to vector<16x16xf32>
    %45 = arith.maximumf %43, %44 : vector<16x16xf32>
    %46 = vector.extract_strided_slice %33 {offsets = [128, 0], sizes = [16, 16], strides = [1, 1]} : vector<512x16xf32> to vector<16x16xf32>
    %47 = vector.extract_strided_slice %33 {offsets = [144, 0], sizes = [16, 16], strides = [1, 1]} : vector<512x16xf32> to vector<16x16xf32>
    %48 = arith.maximumf %46, %47 : vector<16x16xf32>
    %49 = vector.extract_strided_slice %33 {offsets = [160, 0], sizes = [16, 16], strides = [1, 1]} : vector<512x16xf32> to vector<16x16xf32>
    %50 = vector.extract_strided_slice %33 {offsets = [176, 0], sizes = [16, 16], strides = [1, 1]} : vector<512x16xf32> to vector<16x16xf32>
    %51 = arith.maximumf %49, %50 : vector<16x16xf32>
    %52 = vector.extract_strided_slice %33 {offsets = [192, 0], sizes = [16, 16], strides = [1, 1]} : vector<512x16xf32> to vector<16x16xf32>
    %53 = vector.extract_strided_slice %33 {offsets = [208, 0], sizes = [16, 16], strides = [1, 1]} : vector<512x16xf32> to vector<16x16xf32>
    %54 = arith.maximumf %52, %53 : vector<16x16xf32>
    %55 = vector.extract_strided_slice %33 {offsets = [224, 0], sizes = [16, 16], strides = [1, 1]} : vector<512x16xf32> to vector<16x16xf32>
    %56 = vector.extract_strided_slice %33 {offsets = [240, 0], sizes = [16, 16], strides = [1, 1]} : vector<512x16xf32> to vector<16x16xf32>
    %57 = arith.maximumf %55, %56 : vector<16x16xf32>
    %58 = vector.extract_strided_slice %33 {offsets = [256, 0], sizes = [16, 16], strides = [1, 1]} : vector<512x16xf32> to vector<16x16xf32>
    %59 = vector.extract_strided_slice %33 {offsets = [272, 0], sizes = [16, 16], strides = [1, 1]} : vector<512x16xf32> to vector<16x16xf32>
    %60 = arith.maximumf %58, %59 : vector<16x16xf32>
    %61 = vector.extract_strided_slice %33 {offsets = [288, 0], sizes = [16, 16], strides = [1, 1]} : vector<512x16xf32> to vector<16x16xf32>
    %62 = vector.extract_strided_slice %33 {offsets = [304, 0], sizes = [16, 16], strides = [1, 1]} : vector<512x16xf32> to vector<16x16xf32>
    %63 = arith.maximumf %61, %62 : vector<16x16xf32>
    %64 = vector.extract_strided_slice %33 {offsets = [320, 0], sizes = [16, 16], strides = [1, 1]} : vector<512x16xf32> to vector<16x16xf32>
    %65 = vector.extract_strided_slice %33 {offsets = [336, 0], sizes = [16, 16], strides = [1, 1]} : vector<512x16xf32> to vector<16x16xf32>
    %66 = arith.maximumf %64, %65 : vector<16x16xf32>
    %67 = vector.extract_strided_slice %33 {offsets = [352, 0], sizes = [16, 16], strides = [1, 1]} : vector<512x16xf32> to vector<16x16xf32>
    %68 = vector.extract_strided_slice %33 {offsets = [368, 0], sizes = [16, 16], strides = [1, 1]} : vector<512x16xf32> to vector<16x16xf32>
    %69 = arith.maximumf %67, %68 : vector<16x16xf32>
    %70 = vector.extract_strided_slice %33 {offsets = [384, 0], sizes = [16, 16], strides = [1, 1]} : vector<512x16xf32> to vector<16x16xf32>
    %71 = vector.extract_strided_slice %33 {offsets = [400, 0], sizes = [16, 16], strides = [1, 1]} : vector<512x16xf32> to vector<16x16xf32>
    %72 = arith.maximumf %70, %71 : vector<16x16xf32>
    %73 = vector.extract_strided_slice %33 {offsets = [416, 0], sizes = [16, 16], strides = [1, 1]} : vector<512x16xf32> to vector<16x16xf32>
    %74 = vector.extract_strided_slice %33 {offsets = [432, 0], sizes = [16, 16], strides = [1, 1]} : vector<512x16xf32> to vector<16x16xf32>
    %75 = arith.maximumf %73, %74 : vector<16x16xf32>
    %76 = vector.extract_strided_slice %33 {offsets = [448, 0], sizes = [16, 16], strides = [1, 1]} : vector<512x16xf32> to vector<16x16xf32>
    %77 = vector.extract_strided_slice %33 {offsets = [464, 0], sizes = [16, 16], strides = [1, 1]} : vector<512x16xf32> to vector<16x16xf32>
    %78 = arith.maximumf %76, %77 : vector<16x16xf32>
    %79 = vector.extract_strided_slice %33 {offsets = [480, 0], sizes = [16, 16], strides = [1, 1]} : vector<512x16xf32> to vector<16x16xf32>
    %80 = vector.extract_strided_slice %33 {offsets = [496, 0], sizes = [16, 16], strides = [1, 1]} : vector<512x16xf32> to vector<16x16xf32>
    %81 = arith.maximumf %79, %80 : vector<16x16xf32>
    %82 = vector.shape_cast %36 : vector<16x16xf32> to vector<1x16x16xf32>
    %83 = vector.shape_cast %39 : vector<16x16xf32> to vector<1x16x16xf32>
    %84 = vector.shape_cast %42 : vector<16x16xf32> to vector<1x16x16xf32>
    %85 = vector.shape_cast %45 : vector<16x16xf32> to vector<1x16x16xf32>
    %86 = vector.shape_cast %48 : vector<16x16xf32> to vector<1x16x16xf32>
    %87 = vector.shape_cast %51 : vector<16x16xf32> to vector<1x16x16xf32>
    %88 = vector.shape_cast %54 : vector<16x16xf32> to vector<1x16x16xf32>
    %89 = vector.shape_cast %57 : vector<16x16xf32> to vector<1x16x16xf32>
    %90 = vector.shape_cast %60 : vector<16x16xf32> to vector<1x16x16xf32>
    %91 = vector.shape_cast %63 : vector<16x16xf32> to vector<1x16x16xf32>
    %92 = vector.shape_cast %66 : vector<16x16xf32> to vector<1x16x16xf32>
    %93 = vector.shape_cast %69 : vector<16x16xf32> to vector<1x16x16xf32>
    %94 = vector.shape_cast %72 : vector<16x16xf32> to vector<1x16x16xf32>
    %95 = vector.shape_cast %75 : vector<16x16xf32> to vector<1x16x16xf32>
    %96 = vector.shape_cast %78 : vector<16x16xf32> to vector<1x16x16xf32>
    %97 = vector.shape_cast %81 : vector<16x16xf32> to vector<1x16x16xf32>
    %98 = tpu.concatenate %82, %83, %84, %85, %86, %87, %88, %89, %90, %91, %92, %93, %94, %95, %96, %97 in 0 : vector<1x16x16xf32>, vector<1x16x16xf32>, vector<1x16x16xf32>, vector<1x16x16xf32>, vector<1x16x16xf32>, vector<1x16x16xf32>, vector<1x16x16xf32>, vector<1x16x16xf32>, vector<1x16x16xf32>, vector<1x16x16xf32>, vector<1x16x16xf32>, vector<1x16x16xf32>, vector<1x16x16xf32>, vector<1x16x16xf32>, vector<1x16x16xf32>, vector<1x16x16xf32> -> vector<16x16x16xf32>
    %cst_12 = arith.constant 0.000000e+00 : f32
    %99 = vector.broadcast %cst_12 : f32 to vector<1x16x16xf32>
    %100 = tpu.concatenate %99, %98, %99 in 0 : vector<1x16x16xf32>, vector<16x16x16xf32>, vector<1x16x16xf32> -> vector<18x16x16xf32>
    %cst_13 = arith.constant 0.000000e+00 : f32
    %101 = vector.broadcast %cst_13 : f32 to vector<18x1x16xf32>
    %102 = tpu.concatenate %101, %100, %101 in 1 : vector<18x1x16xf32>, vector<18x16x16xf32>, vector<18x1x16xf32> -> vector<18x18x16xf32>
    %103 = vector.extract_strided_slice %102 {offsets = [0, 0, 0], sizes = [16, 16, 16], strides = [1, 1, 1]} : vector<18x18x16xf32> to vector<16x16x16xf32>
    %104 = vector.extract_strided_slice %102 {offsets = [0, 1, 0], sizes = [16, 16, 16], strides = [1, 1, 1]} : vector<18x18x16xf32> to vector<16x16x16xf32>
    %105 = vector.extract_strided_slice %102 {offsets = [0, 2, 0], sizes = [16, 16, 16], strides = [1, 1, 1]} : vector<18x18x16xf32> to vector<16x16x16xf32>
    %106 = vector.extract_strided_slice %102 {offsets = [1, 0, 0], sizes = [16, 16, 16], strides = [1, 1, 1]} : vector<18x18x16xf32> to vector<16x16x16xf32>
    %107 = vector.extract_strided_slice %102 {offsets = [1, 1, 0], sizes = [16, 16, 16], strides = [1, 1, 1]} : vector<18x18x16xf32> to vector<16x16x16xf32>
    %108 = vector.extract_strided_slice %102 {offsets = [1, 2, 0], sizes = [16, 16, 16], strides = [1, 1, 1]} : vector<18x18x16xf32> to vector<16x16x16xf32>
    %109 = vector.extract_strided_slice %102 {offsets = [2, 0, 0], sizes = [16, 16, 16], strides = [1, 1, 1]} : vector<18x18x16xf32> to vector<16x16x16xf32>
    %110 = vector.extract_strided_slice %102 {offsets = [2, 1, 0], sizes = [16, 16, 16], strides = [1, 1, 1]} : vector<18x18x16xf32> to vector<16x16x16xf32>
    %111 = vector.extract_strided_slice %102 {offsets = [2, 2, 0], sizes = [16, 16, 16], strides = [1, 1, 1]} : vector<18x18x16xf32> to vector<16x16x16xf32>
    %112 = tpu.concatenate %103, %104, %105, %106, %107, %108, %109, %110, %111 in 2 : vector<16x16x16xf32>, vector<16x16x16xf32>, vector<16x16x16xf32>, vector<16x16x16xf32>, vector<16x16x16xf32>, vector<16x16x16xf32>, vector<16x16x16xf32>, vector<16x16x16xf32>, vector<16x16x16xf32> -> vector<16x16x144xf32>
    %113 = vector.shape_cast %112 : vector<16x16x144xf32> to vector<256x144xf32>
    %114 = arith.truncf %113 : vector<256x144xf32> to vector<256x144xbf16>
    %c0_14 = arith.constant 0 : index
    %c0_15 = arith.constant 0 : index
    %115 = vector.load %arg4[%c0_14, %c0_15] : memref<144x32xbf16, #tpu.memory_space<vmem>>, vector<144x32xbf16>
    %cst_16 = arith.constant dense<0.000000e+00> : vector<256x32xf32>
    %116 = tpu.matmul %114, %115, %cst_16 {dimension_numbers = #tpu.dot_dimension_numbers<[1], [0], [0], [1], [0, 0, 1, 1], [], []>} : vector<256x144xbf16>, vector<144x32xbf16>, vector<256x32xf32> -> vector<256x32xf32>
    %c0_17 = arith.constant 0 : index
    %c0_18 = arith.constant 0 : index
    %117 = vector.load %arg5[%c0_17, %c0_18] : memref<1x32xf32, #tpu.memory_space<vmem>>, vector<1x32xf32>
    %118 = vector.broadcast %117 : vector<1x32xf32> to vector<256x32xf32>
    %119 = arith.addf %116, %118 : vector<256x32xf32>
    %cst_19 = arith.constant 0.000000e+00 : f32
    %120 = vector.broadcast %cst_19 : f32 to vector<256x32xf32>
    %121 = arith.maximumf %119, %120 : vector<256x32xf32>
    %c0_20 = arith.constant 0 : index
    %c0_21 = arith.constant 0 : index
    %122 = vector.load %arg18[%c0_20, %c0_21] : memref<256x32xf32, #tpu.memory_space<vmem>>, vector<256x32xf32>
    tpu.vector_store %arg18[%c0_20, %c0_21], %121 {strides = array<i32>} : memref<256x32xf32, #tpu.memory_space<vmem>>, vector<256x32xf32>,
    %c0_22 = arith.constant 0 : index
    %c0_23 = arith.constant 0 : index
    %123 = tpu.strided_load %arg18[%c0_22, %c0_23] {strides = array<i32: 2, 1>} : memref<256x32xf32, #tpu.memory_space<vmem>>, vector<128x32xf32>
    %c1_24 = arith.constant 1 : index
    %c0_25 = arith.constant 0 : index
    %124 = tpu.strided_load %arg18[%c1_24, %c0_25] {strides = array<i32: 2, 1>} : memref<256x32xf32, #tpu.memory_space<vmem>>, vector<128x32xf32>
    %125 = arith.maximumf %123, %124 : vector<128x32xf32>
    %126 = vector.extract_strided_slice %125 {offsets = [0, 0], sizes = [8, 32], strides = [1, 1]} : vector<128x32xf32> to vector<8x32xf32>
    %127 = vector.extract_strided_slice %125 {offsets = [8, 0], sizes = [8, 32], strides = [1, 1]} : vector<128x32xf32> to vector<8x32xf32>
    %128 = arith.maximumf %126, %127 : vector<8x32xf32>
    %129 = vector.extract_strided_slice %125 {offsets = [16, 0], sizes = [8, 32], strides = [1, 1]} : vector<128x32xf32> to vector<8x32xf32>
    %130 = vector.extract_strided_slice %125 {offsets = [24, 0], sizes = [8, 32], strides = [1, 1]} : vector<128x32xf32> to vector<8x32xf32>
    %131 = arith.maximumf %129, %130 : vector<8x32xf32>
    %132 = vector.extract_strided_slice %125 {offsets = [32, 0], sizes = [8, 32], strides = [1, 1]} : vector<128x32xf32> to vector<8x32xf32>
    %133 = vector.extract_strided_slice %125 {offsets = [40, 0], sizes = [8, 32], strides = [1, 1]} : vector<128x32xf32> to vector<8x32xf32>
    %134 = arith.maximumf %132, %133 : vector<8x32xf32>
    %135 = vector.extract_strided_slice %125 {offsets = [48, 0], sizes = [8, 32], strides = [1, 1]} : vector<128x32xf32> to vector<8x32xf32>
    %136 = vector.extract_strided_slice %125 {offsets = [56, 0], sizes = [8, 32], strides = [1, 1]} : vector<128x32xf32> to vector<8x32xf32>
    %137 = arith.maximumf %135, %136 : vector<8x32xf32>
    %138 = vector.extract_strided_slice %125 {offsets = [64, 0], sizes = [8, 32], strides = [1, 1]} : vector<128x32xf32> to vector<8x32xf32>
    %139 = vector.extract_strided_slice %125 {offsets = [72, 0], sizes = [8, 32], strides = [1, 1]} : vector<128x32xf32> to vector<8x32xf32>
    %140 = arith.maximumf %138, %139 : vector<8x32xf32>
    %141 = vector.extract_strided_slice %125 {offsets = [80, 0], sizes = [8, 32], strides = [1, 1]} : vector<128x32xf32> to vector<8x32xf32>
    %142 = vector.extract_strided_slice %125 {offsets = [88, 0], sizes = [8, 32], strides = [1, 1]} : vector<128x32xf32> to vector<8x32xf32>
    %143 = arith.maximumf %141, %142 : vector<8x32xf32>
    %144 = vector.extract_strided_slice %125 {offsets = [96, 0], sizes = [8, 32], strides = [1, 1]} : vector<128x32xf32> to vector<8x32xf32>
    %145 = vector.extract_strided_slice %125 {offsets = [104, 0], sizes = [8, 32], strides = [1, 1]} : vector<128x32xf32> to vector<8x32xf32>
    %146 = arith.maximumf %144, %145 : vector<8x32xf32>
    %147 = vector.extract_strided_slice %125 {offsets = [112, 0], sizes = [8, 32], strides = [1, 1]} : vector<128x32xf32> to vector<8x32xf32>
    %148 = vector.extract_strided_slice %125 {offsets = [120, 0], sizes = [8, 32], strides = [1, 1]} : vector<128x32xf32> to vector<8x32xf32>
    %149 = arith.maximumf %147, %148 : vector<8x32xf32>
    %150 = vector.shape_cast %128 : vector<8x32xf32> to vector<1x8x32xf32>
    %151 = vector.shape_cast %131 : vector<8x32xf32> to vector<1x8x32xf32>
    %152 = vector.shape_cast %134 : vector<8x32xf32> to vector<1x8x32xf32>
    %153 = vector.shape_cast %137 : vector<8x32xf32> to vector<1x8x32xf32>
    %154 = vector.shape_cast %140 : vector<8x32xf32> to vector<1x8x32xf32>
    %155 = vector.shape_cast %143 : vector<8x32xf32> to vector<1x8x32xf32>
    %156 = vector.shape_cast %146 : vector<8x32xf32> to vector<1x8x32xf32>
    %157 = vector.shape_cast %149 : vector<8x32xf32> to vector<1x8x32xf32>
    %158 = tpu.concatenate %150, %151, %152, %153, %154, %155, %156, %157 in 0 : vector<1x8x32xf32>, vector<1x8x32xf32>, vector<1x8x32xf32>, vector<1x8x32xf32>, vector<1x8x32xf32>, vector<1x8x32xf32>, vector<1x8x32xf32>, vector<1x8x32xf32> -> vector<8x8x32xf32>
    %cst_26 = arith.constant 0.000000e+00 : f32
    %159 = vector.broadcast %cst_26 : f32 to vector<1x8x32xf32>
    %160 = tpu.concatenate %159, %158, %159 in 0 : vector<1x8x32xf32>, vector<8x8x32xf32>, vector<1x8x32xf32> -> vector<10x8x32xf32>
    %cst_27 = arith.constant 0.000000e+00 : f32
    %161 = vector.broadcast %cst_27 : f32 to vector<10x1x32xf32>
    %162 = tpu.concatenate %161, %160, %161 in 1 : vector<10x1x32xf32>, vector<10x8x32xf32>, vector<10x1x32xf32> -> vector<10x10x32xf32>
    %163 = vector.extract_strided_slice %162 {offsets = [0, 0, 0], sizes = [8, 8, 32], strides = [1, 1, 1]} : vector<10x10x32xf32> to vector<8x8x32xf32>
    %164 = vector.extract_strided_slice %162 {offsets = [0, 1, 0], sizes = [8, 8, 32], strides = [1, 1, 1]} : vector<10x10x32xf32> to vector<8x8x32xf32>
    %165 = vector.extract_strided_slice %162 {offsets = [0, 2, 0], sizes = [8, 8, 32], strides = [1, 1, 1]} : vector<10x10x32xf32> to vector<8x8x32xf32>
    %166 = vector.extract_strided_slice %162 {offsets = [1, 0, 0], sizes = [8, 8, 32], strides = [1, 1, 1]} : vector<10x10x32xf32> to vector<8x8x32xf32>
    %167 = vector.extract_strided_slice %162 {offsets = [1, 1, 0], sizes = [8, 8, 32], strides = [1, 1, 1]} : vector<10x10x32xf32> to vector<8x8x32xf32>
    %168 = vector.extract_strided_slice %162 {offsets = [1, 2, 0], sizes = [8, 8, 32], strides = [1, 1, 1]} : vector<10x10x32xf32> to vector<8x8x32xf32>
    %169 = vector.extract_strided_slice %162 {offsets = [2, 0, 0], sizes = [8, 8, 32], strides = [1, 1, 1]} : vector<10x10x32xf32> to vector<8x8x32xf32>
    %170 = vector.extract_strided_slice %162 {offsets = [2, 1, 0], sizes = [8, 8, 32], strides = [1, 1, 1]} : vector<10x10x32xf32> to vector<8x8x32xf32>
    %171 = vector.extract_strided_slice %162 {offsets = [2, 2, 0], sizes = [8, 8, 32], strides = [1, 1, 1]} : vector<10x10x32xf32> to vector<8x8x32xf32>
    %172 = tpu.concatenate %163, %164, %165, %166, %167, %168, %169, %170, %171 in 2 : vector<8x8x32xf32>, vector<8x8x32xf32>, vector<8x8x32xf32>, vector<8x8x32xf32>, vector<8x8x32xf32>, vector<8x8x32xf32>, vector<8x8x32xf32>, vector<8x8x32xf32>, vector<8x8x32xf32> -> vector<8x8x288xf32>
    %173 = vector.shape_cast %172 : vector<8x8x288xf32> to vector<64x288xf32>
    %174 = arith.truncf %173 : vector<64x288xf32> to vector<64x288xbf16>
    %c0_28 = arith.constant 0 : index
    %c0_29 = arith.constant 0 : index
    %175 = vector.load %arg6[%c0_28, %c0_29] : memref<288x64xbf16, #tpu.memory_space<vmem>>, vector<288x64xbf16>
    %cst_30 = arith.constant dense<0.000000e+00> : vector<64x64xf32>
    %176 = tpu.matmul %174, %175, %cst_30 {dimension_numbers = #tpu.dot_dimension_numbers<[1], [0], [0], [1], [0, 0, 1, 1], [], []>} : vector<64x288xbf16>, vector<288x64xbf16>, vector<64x64xf32> -> vector<64x64xf32>
    %c0_31 = arith.constant 0 : index
    %c0_32 = arith.constant 0 : index
    %177 = vector.load %arg7[%c0_31, %c0_32] : memref<1x64xf32, #tpu.memory_space<vmem>>, vector<1x64xf32>
    %178 = vector.broadcast %177 : vector<1x64xf32> to vector<64x64xf32>
    %179 = arith.addf %176, %178 : vector<64x64xf32>
    %cst_33 = arith.constant 0.000000e+00 : f32
    %180 = vector.broadcast %cst_33 : f32 to vector<64x64xf32>
    %181 = arith.maximumf %179, %180 : vector<64x64xf32>
    %c0_34 = arith.constant 0 : index
    %c0_35 = arith.constant 0 : index
    %182 = vector.load %arg19[%c0_34, %c0_35] : memref<64x64xf32, #tpu.memory_space<vmem>>, vector<64x64xf32>
    tpu.vector_store %arg19[%c0_34, %c0_35], %181 {strides = array<i32>} : memref<64x64xf32, #tpu.memory_space<vmem>>, vector<64x64xf32>,
    %c0_36 = arith.constant 0 : index
    %c0_37 = arith.constant 0 : index
    %183 = tpu.strided_load %arg19[%c0_36, %c0_37] {strides = array<i32: 2, 1>} : memref<64x64xf32, #tpu.memory_space<vmem>>, vector<32x64xf32>
    %c1_38 = arith.constant 1 : index
    %c0_39 = arith.constant 0 : index
    %184 = tpu.strided_load %arg19[%c1_38, %c0_39] {strides = array<i32: 2, 1>} : memref<64x64xf32, #tpu.memory_space<vmem>>, vector<32x64xf32>
    %185 = arith.maximumf %183, %184 : vector<32x64xf32>
    %186 = vector.extract_strided_slice %185 {offsets = [0, 0], sizes = [4, 64], strides = [1, 1]} : vector<32x64xf32> to vector<4x64xf32>
    %187 = vector.extract_strided_slice %185 {offsets = [4, 0], sizes = [4, 64], strides = [1, 1]} : vector<32x64xf32> to vector<4x64xf32>
    %188 = arith.maximumf %186, %187 : vector<4x64xf32>
    %189 = vector.extract_strided_slice %185 {offsets = [8, 0], sizes = [4, 64], strides = [1, 1]} : vector<32x64xf32> to vector<4x64xf32>
    %190 = vector.extract_strided_slice %185 {offsets = [12, 0], sizes = [4, 64], strides = [1, 1]} : vector<32x64xf32> to vector<4x64xf32>
    %191 = arith.maximumf %189, %190 : vector<4x64xf32>
    %192 = vector.extract_strided_slice %185 {offsets = [16, 0], sizes = [4, 64], strides = [1, 1]} : vector<32x64xf32> to vector<4x64xf32>
    %193 = vector.extract_strided_slice %185 {offsets = [20, 0], sizes = [4, 64], strides = [1, 1]} : vector<32x64xf32> to vector<4x64xf32>
    %194 = arith.maximumf %192, %193 : vector<4x64xf32>
    %195 = vector.extract_strided_slice %185 {offsets = [24, 0], sizes = [4, 64], strides = [1, 1]} : vector<32x64xf32> to vector<4x64xf32>
    %196 = vector.extract_strided_slice %185 {offsets = [28, 0], sizes = [4, 64], strides = [1, 1]} : vector<32x64xf32> to vector<4x64xf32>
    %197 = arith.maximumf %195, %196 : vector<4x64xf32>
    %198 = vector.shape_cast %188 : vector<4x64xf32> to vector<1x4x64xf32>
    %199 = vector.shape_cast %191 : vector<4x64xf32> to vector<1x4x64xf32>
    %200 = vector.shape_cast %194 : vector<4x64xf32> to vector<1x4x64xf32>
    %201 = vector.shape_cast %197 : vector<4x64xf32> to vector<1x4x64xf32>
    %202 = tpu.concatenate %198, %199, %200, %201 in 0 : vector<1x4x64xf32>, vector<1x4x64xf32>, vector<1x4x64xf32>, vector<1x4x64xf32> -> vector<4x4x64xf32>
    %cst_40 = arith.constant 0.000000e+00 : f32
    %203 = vector.broadcast %cst_40 : f32 to vector<1x4x64xf32>
    %204 = tpu.concatenate %203, %202, %203 in 0 : vector<1x4x64xf32>, vector<4x4x64xf32>, vector<1x4x64xf32> -> vector<6x4x64xf32>
    %cst_41 = arith.constant 0.000000e+00 : f32
    %205 = vector.broadcast %cst_41 : f32 to vector<6x1x64xf32>
    %206 = tpu.concatenate %205, %204, %205 in 1 : vector<6x1x64xf32>, vector<6x4x64xf32>, vector<6x1x64xf32> -> vector<6x6x64xf32>
    %207 = vector.extract_strided_slice %206 {offsets = [0, 0, 0], sizes = [4, 4, 64], strides = [1, 1, 1]} : vector<6x6x64xf32> to vector<4x4x64xf32>
    %208 = vector.extract_strided_slice %206 {offsets = [0, 1, 0], sizes = [4, 4, 64], strides = [1, 1, 1]} : vector<6x6x64xf32> to vector<4x4x64xf32>
    %209 = vector.extract_strided_slice %206 {offsets = [0, 2, 0], sizes = [4, 4, 64], strides = [1, 1, 1]} : vector<6x6x64xf32> to vector<4x4x64xf32>
    %210 = vector.extract_strided_slice %206 {offsets = [1, 0, 0], sizes = [4, 4, 64], strides = [1, 1, 1]} : vector<6x6x64xf32> to vector<4x4x64xf32>
    %211 = vector.extract_strided_slice %206 {offsets = [1, 1, 0], sizes = [4, 4, 64], strides = [1, 1, 1]} : vector<6x6x64xf32> to vector<4x4x64xf32>
    %212 = vector.extract_strided_slice %206 {offsets = [1, 2, 0], sizes = [4, 4, 64], strides = [1, 1, 1]} : vector<6x6x64xf32> to vector<4x4x64xf32>
    %213 = vector.extract_strided_slice %206 {offsets = [2, 0, 0], sizes = [4, 4, 64], strides = [1, 1, 1]} : vector<6x6x64xf32> to vector<4x4x64xf32>
    %214 = vector.extract_strided_slice %206 {offsets = [2, 1, 0], sizes = [4, 4, 64], strides = [1, 1, 1]} : vector<6x6x64xf32> to vector<4x4x64xf32>
    %215 = vector.extract_strided_slice %206 {offsets = [2, 2, 0], sizes = [4, 4, 64], strides = [1, 1, 1]} : vector<6x6x64xf32> to vector<4x4x64xf32>
    %216 = tpu.concatenate %207, %208, %209, %210, %211, %212, %213, %214, %215 in 2 : vector<4x4x64xf32>, vector<4x4x64xf32>, vector<4x4x64xf32>, vector<4x4x64xf32>, vector<4x4x64xf32>, vector<4x4x64xf32>, vector<4x4x64xf32>, vector<4x4x64xf32>, vector<4x4x64xf32> -> vector<4x4x576xf32>
    %217 = vector.extract_strided_slice %216 {offsets = [0, 0, 0], sizes = [1, 4, 576], strides = [1, 1, 1]} : vector<4x4x576xf32> to vector<1x4x576xf32>
    %218 = vector.shape_cast %217 : vector<1x4x576xf32> to vector<4x576xf32>
    %219 = vector.extract_strided_slice %216 {offsets = [1, 0, 0], sizes = [1, 4, 576], strides = [1, 1, 1]} : vector<4x4x576xf32> to vector<1x4x576xf32>
    %220 = vector.shape_cast %219 : vector<1x4x576xf32> to vector<4x576xf32>
    %221 = vector.extract_strided_slice %216 {offsets = [2, 0, 0], sizes = [1, 4, 576], strides = [1, 1, 1]} : vector<4x4x576xf32> to vector<1x4x576xf32>
    %222 = vector.shape_cast %221 : vector<1x4x576xf32> to vector<4x576xf32>
    %223 = vector.extract_strided_slice %216 {offsets = [3, 0, 0], sizes = [1, 4, 576], strides = [1, 1, 1]} : vector<4x4x576xf32> to vector<1x4x576xf32>
    %224 = vector.shape_cast %223 : vector<1x4x576xf32> to vector<4x576xf32>
    %225 = tpu.concatenate %218, %220, %222, %224 in 0 : vector<4x576xf32>, vector<4x576xf32>, vector<4x576xf32>, vector<4x576xf32> -> vector<16x576xf32>
    %226 = arith.truncf %225 : vector<16x576xf32> to vector<16x576xbf16>
    %c0_42 = arith.constant 0 : index
    %c0_43 = arith.constant 0 : index
    %227 = vector.load %arg8[%c0_42, %c0_43] : memref<576x128xbf16, #tpu.memory_space<vmem>>, vector<576x128xbf16>
    %cst_44 = arith.constant dense<0.000000e+00> : vector<16x128xf32>
    %228 = tpu.matmul %226, %227, %cst_44 {dimension_numbers = #tpu.dot_dimension_numbers<[1], [0], [0], [1], [0, 0, 1, 1], [], []>} : vector<16x576xbf16>, vector<576x128xbf16>, vector<16x128xf32> -> vector<16x128xf32>
    %c0_45 = arith.constant 0 : index
    %c0_46 = arith.constant 0 : index
    %229 = vector.load %arg9[%c0_45, %c0_46] : memref<1x128xf32, #tpu.memory_space<vmem>>, vector<1x128xf32>
    %230 = vector.broadcast %229 : vector<1x128xf32> to vector<16x128xf32>
    %231 = arith.addf %228, %230 : vector<16x128xf32>
    %cst_47 = arith.constant 0.000000e+00 : f32
    %232 = vector.broadcast %cst_47 : f32 to vector<16x128xf32>
    %233 = arith.maximumf %231, %232 : vector<16x128xf32>
    %c0_48 = arith.constant 0 : index
    %c0_49 = arith.constant 0 : index
    %234 = vector.load %arg20[%c0_48, %c0_49] : memref<16x128xf32, #tpu.memory_space<vmem>>, vector<16x128xf32>
    tpu.vector_store %arg20[%c0_48, %c0_49], %233 {strides = array<i32>} : memref<16x128xf32, #tpu.memory_space<vmem>>, vector<16x128xf32>,
    %c0_50 = arith.constant 0 : index
    %c0_51 = arith.constant 0 : index
    %235 = tpu.strided_load %arg20[%c0_50, %c0_51] {strides = array<i32: 2, 1>} : memref<16x128xf32, #tpu.memory_space<vmem>>, vector<8x128xf32>
    %c1_52 = arith.constant 1 : index
    %c0_53 = arith.constant 0 : index
    %236 = tpu.strided_load %arg20[%c1_52, %c0_53] {strides = array<i32: 2, 1>} : memref<16x128xf32, #tpu.memory_space<vmem>>, vector<8x128xf32>
    %237 = arith.maximumf %235, %236 : vector<8x128xf32>
    %238 = vector.extract_strided_slice %237 {offsets = [0, 0], sizes = [2, 128], strides = [1, 1]} : vector<8x128xf32> to vector<2x128xf32>
    %239 = vector.extract_strided_slice %237 {offsets = [2, 0], sizes = [2, 128], strides = [1, 1]} : vector<8x128xf32> to vector<2x128xf32>
    %240 = arith.maximumf %238, %239 : vector<2x128xf32>
    %241 = vector.extract_strided_slice %237 {offsets = [4, 0], sizes = [2, 128], strides = [1, 1]} : vector<8x128xf32> to vector<2x128xf32>
    %242 = vector.extract_strided_slice %237 {offsets = [6, 0], sizes = [2, 128], strides = [1, 1]} : vector<8x128xf32> to vector<2x128xf32>
    %243 = arith.maximumf %241, %242 : vector<2x128xf32>
    %244 = vector.shape_cast %240 : vector<2x128xf32> to vector<1x2x128xf32>
    %245 = vector.shape_cast %243 : vector<2x128xf32> to vector<1x2x128xf32>
    %246 = tpu.concatenate %244, %245 in 0 : vector<1x2x128xf32>, vector<1x2x128xf32> -> vector<2x2x128xf32>
    %247 = vector.extract_strided_slice %246 {offsets = [0, 0, 0], sizes = [1, 1, 128], strides = [1, 1, 1]} : vector<2x2x128xf32> to vector<1x1x128xf32>
    %248 = vector.shape_cast %247 : vector<1x1x128xf32> to vector<1x128xf32>
    %249 = vector.extract_strided_slice %246 {offsets = [0, 1, 0], sizes = [1, 1, 128], strides = [1, 1, 1]} : vector<2x2x128xf32> to vector<1x1x128xf32>
    %250 = vector.shape_cast %249 : vector<1x1x128xf32> to vector<1x128xf32>
    %251 = vector.extract_strided_slice %246 {offsets = [1, 0, 0], sizes = [1, 1, 128], strides = [1, 1, 1]} : vector<2x2x128xf32> to vector<1x1x128xf32>
    %252 = vector.shape_cast %251 : vector<1x1x128xf32> to vector<1x128xf32>
    %253 = vector.extract_strided_slice %246 {offsets = [1, 1, 0], sizes = [1, 1, 128], strides = [1, 1, 1]} : vector<2x2x128xf32> to vector<1x1x128xf32>
    %254 = vector.shape_cast %253 : vector<1x1x128xf32> to vector<1x128xf32>
    %255 = tpu.concatenate %248, %250, %252, %254 in 1 : vector<1x128xf32>, vector<1x128xf32>, vector<1x128xf32>, vector<1x128xf32> -> vector<1x512xf32>
    %256 = arith.truncf %255 : vector<1x512xf32> to vector<1x512xbf16>
    %c0_54 = arith.constant 0 : index
    %c0_55 = arith.constant 0 : index
    %257 = vector.load %arg10[%c0_54, %c0_55] : memref<512x256xbf16, #tpu.memory_space<vmem>>, vector<512x256xbf16>
    %cst_56 = arith.constant dense<0.000000e+00> : vector<1x256xf32>
    %258 = tpu.matmul %256, %257, %cst_56 {dimension_numbers = #tpu.dot_dimension_numbers<[1], [0], [0], [1], [0, 0, 1, 1], [], []>} : vector<1x512xbf16>, vector<512x256xbf16>, vector<1x256xf32> -> vector<1x256xf32>
    %c0_57 = arith.constant 0 : index
    %c0_58 = arith.constant 0 : index
    %259 = vector.load %arg11[%c0_57, %c0_58] : memref<1x256xf32, #tpu.memory_space<vmem>>, vector<1x256xf32>
    %260 = arith.addf %258, %259 : vector<1x256xf32>
    %cst_59 = arith.constant 0.000000e+00 : f32
    %261 = vector.broadcast %cst_59 : f32 to vector<1x256xf32>
    %262 = arith.maximumf %260, %261 : vector<1x256xf32>
    %263 = arith.truncf %262 : vector<1x256xf32> to vector<1x256xbf16>
    %c0_60 = arith.constant 0 : index
    %c0_61 = arith.constant 0 : index
    %264 = vector.load %arg12[%c0_60, %c0_61] : memref<256x64xbf16, #tpu.memory_space<vmem>>, vector<256x64xbf16>
    %cst_62 = arith.constant dense<0.000000e+00> : vector<1x64xf32>
    %265 = tpu.matmul %263, %264, %cst_62 {dimension_numbers = #tpu.dot_dimension_numbers<[1], [0], [0], [1], [0, 0, 1, 1], [], []>} : vector<1x256xbf16>, vector<256x64xbf16>, vector<1x64xf32> -> vector<1x64xf32>
    %c0_63 = arith.constant 0 : index
    %c0_64 = arith.constant 0 : index
    %266 = vector.load %arg13[%c0_63, %c0_64] : memref<1x64xf32, #tpu.memory_space<vmem>>, vector<1x64xf32>
    %267 = arith.addf %265, %266 : vector<1x64xf32>
    %cst_65 = arith.constant 0.000000e+00 : f32
    %268 = vector.broadcast %cst_65 : f32 to vector<1x64xf32>
    %269 = arith.maximumf %267, %268 : vector<1x64xf32>
    %c0_66 = arith.constant 0 : index
    %c0_67 = arith.constant 0 : index
    %270 = vector.load %arg14[%c0_66, %c0_67] : memref<1x64xf32, #tpu.memory_space<vmem>>, vector<1x64xf32>
    %271 = arith.mulf %269, %270 : vector<1x64xf32>
    %cst_68 = arith.constant dense<0.000000e+00> : vector<1xf32>
    %272 = vector.multi_reduction <add>, %271, %cst_68 [1] : vector<1x64xf32> to vector<1xf32>
    %273 = vector.shape_cast %272 : vector<1xf32> to vector<1x1xf32>
    %c0_69 = arith.constant 0 : index
    %c0_70 = arith.constant 0 : index
    %274 = vector.load %arg15[%c0_69, %c0_70] : memref<1x1xf32, #tpu.memory_space<vmem>>, vector<1x1xf32>
    %275 = arith.addf %273, %274 : vector<1x1xf32>
    %276 = vector.shape_cast %275 : vector<1x1xf32> to vector<1x1x1xf32>
    %c0_71 = arith.constant 0 : index
    %c0_72 = arith.constant 0 : index
    %c0_73 = arith.constant 0 : index
    %277 = vector.load %arg16[%c0_71, %c0_72, %c0_73] : memref<1x1x1xf32, #tpu.memory_space<vmem>>, vector<1x1x1xf32>
    tpu.vector_store %arg16[%c0_71, %c0_72, %c0_73], %276 {strides = array<i32>} : memref<1x1x1xf32, #tpu.memory_space<vmem>>, vector<1x1x1xf32>,
    return
  }
  func.func @transform_0(%arg0: i32) -> (i32, i32, i32) {
    %c0_i32 = arith.constant 0 : i32
    %c0_i32_0 = arith.constant 0 : i32
    %c0_i32_1 = arith.constant 0 : i32
    return %arg0, %c0_i32, %c0_i32_0 : i32, i32, i32
  }
  func.func @transform_1(%arg0: i32) -> (i32, i32) {
    %c0_i32 = arith.constant 0 : i32
    %c0_i32_0 = arith.constant 0 : i32
    %c0_i32_1 = arith.constant 0 : i32
    return %c0_i32, %c0_i32_0 : i32, i32
  }
  func.func @transform_2(%arg0: i32) -> (i32, i32) {
    %c0_i32 = arith.constant 0 : i32
    %c0_i32_0 = arith.constant 0 : i32
    %c0_i32_1 = arith.constant 0 : i32
    return %c0_i32, %c0_i32_0 : i32, i32
  }
  func.func @transform_3(%arg0: i32) -> (i32, i32) {
    %c0_i32 = arith.constant 0 : i32
    %c0_i32_0 = arith.constant 0 : i32
    %c0_i32_1 = arith.constant 0 : i32
    return %c0_i32, %c0_i32_0 : i32, i32
  }
  func.func @transform_4(%arg0: i32) -> (i32, i32) {
    %c0_i32 = arith.constant 0 : i32
    %c0_i32_0 = arith.constant 0 : i32
    %c0_i32_1 = arith.constant 0 : i32
    return %c0_i32, %c0_i32_0 : i32, i32
  }
  func.func @transform_5(%arg0: i32) -> (i32, i32) {
    %c0_i32 = arith.constant 0 : i32
    %c0_i32_0 = arith.constant 0 : i32
    %c0_i32_1 = arith.constant 0 : i32
    return %c0_i32, %c0_i32_0 : i32, i32
  }
  func.func @transform_6(%arg0: i32) -> (i32, i32) {
    %c0_i32 = arith.constant 0 : i32
    %c0_i32_0 = arith.constant 0 : i32
    %c0_i32_1 = arith.constant 0 : i32
    return %c0_i32, %c0_i32_0 : i32, i32
  }
  func.func @transform_7(%arg0: i32) -> (i32, i32) {
    %c0_i32 = arith.constant 0 : i32
    %c0_i32_0 = arith.constant 0 : i32
    %c0_i32_1 = arith.constant 0 : i32
    return %c0_i32, %c0_i32_0 : i32, i32
  }
  func.func @transform_8(%arg0: i32) -> (i32, i32) {
    %c0_i32 = arith.constant 0 : i32
    %c0_i32_0 = arith.constant 0 : i32
    %c0_i32_1 = arith.constant 0 : i32
    return %c0_i32, %c0_i32_0 : i32, i32
  }
  func.func @transform_9(%arg0: i32) -> (i32, i32) {
    %c0_i32 = arith.constant 0 : i32
    %c0_i32_0 = arith.constant 0 : i32
    %c0_i32_1 = arith.constant 0 : i32
    return %c0_i32, %c0_i32_0 : i32, i32
  }
  func.func @transform_10(%arg0: i32) -> (i32, i32) {
    %c0_i32 = arith.constant 0 : i32
    %c0_i32_0 = arith.constant 0 : i32
    %c0_i32_1 = arith.constant 0 : i32
    return %c0_i32, %c0_i32_0 : i32, i32
  }
  func.func @transform_11(%arg0: i32) -> (i32, i32) {
    %c0_i32 = arith.constant 0 : i32
    %c0_i32_0 = arith.constant 0 : i32
    %c0_i32_1 = arith.constant 0 : i32
    return %c0_i32, %c0_i32_0 : i32, i32
  }
  func.func @transform_12(%arg0: i32) -> (i32, i32) {
    %c0_i32 = arith.constant 0 : i32
    %c0_i32_0 = arith.constant 0 : i32
    %c0_i32_1 = arith.constant 0 : i32
    return %c0_i32, %c0_i32_0 : i32, i32
  }
  func.func @transform_13(%arg0: i32) -> (i32, i32) {
    %c0_i32 = arith.constant 0 : i32
    %c0_i32_0 = arith.constant 0 : i32
    %c0_i32_1 = arith.constant 0 : i32
    return %c0_i32, %c0_i32_0 : i32, i32
  }
  func.func @transform_14(%arg0: i32) -> (i32, i32) {
    %c0_i32 = arith.constant 0 : i32
    %c0_i32_0 = arith.constant 0 : i32
    %c0_i32_1 = arith.constant 0 : i32
    return %c0_i32, %c0_i32_0 : i32, i32
  }
  func.func @transform_15(%arg0: i32) -> (i32, i32, i32) {
    %c0_i32 = arith.constant 0 : i32
    %c0_i32_0 = arith.constant 0 : i32
    %c0_i32_1 = arith.constant 0 : i32
    return %arg0, %c0_i32, %c0_i32_0 : i32, i32, i32
  }
}

</mosaic_0001>

<llo_original>
// kernel: _lambda_.1
$region0: #{_lambda_.1}
  #allocation0 [shape = 'u32[]', space=smem, size = 0x4, offset = 0x4, fixed_abs, tag = 'smem constant byte address 0x4 - core index']
  #allocation1 [shape = 'u32[144,128]{1,0:T(1,128)}', space=vmem, size = 0x12000, scoped, tag = 'internal scratch']
  #allocation2 [shape = 'f32[1024,16]{1,0:T(8,128)}', space=vmem, size = 0x80000, scoped, tag = 'scratch operand']
  #allocation3 [shape = 'f32[256,32]{1,0:T(8,128)}', space=vmem, size = 0x20000, scoped, tag = 'scratch operand']
  #allocation4 [shape = 'f32[64,64]{1,0:T(8,128)}', space=vmem, size = 0x8000, scoped, tag = 'scratch operand']
  #allocation5 [shape = 'f32[16,128]{1,0:T(8,128)}', space=vmem, size = 0x2000, scoped, tag = 'scratch operand']
  #allocation6 [shape = 'f32[1,1]{1,0:T(1,128)S(1)}', space=vmem, size = 0x200, scoped, tag = 'scoped memory for _lambda_.1']
  %s0 = inlined_call_operand.vmem [shape: f32[2,34,34], index: 0, kind: input, shape index: {}]
  %s1 = inlined_call_operand.vmem [shape: bf16[9,16], index: 1, kind: input, shape index: {}]
  %s2 = inlined_call_operand.vmem [shape: f32[1,16], index: 2, kind: input, shape index: {}]
  %s3 = inlined_call_operand.vmem [shape: bf16[144,32], index: 3, kind: input, shape index: {}]
  %s4 = inlined_call_operand.vmem [shape: f32[1,32], index: 4, kind: input, shape index: {}]
  %s5 = inlined_call_operand.vmem [shape: bf16[288,64], index: 5, kind: input, shape index: {}]
  %s6 = inlined_call_operand.vmem [shape: f32[1,64], index: 6, kind: input, shape index: {}]
  %s7 = inlined_call_operand.vmem [shape: bf16[576,128], index: 7, kind: input, shape index: {}]
  %s8 = inlined_call_operand.vmem [shape: f32[1,128], index: 8, kind: input, shape index: {}]
  %s9 = inlined_call_operand.vmem [shape: bf16[512,256], index: 9, kind: input, shape index: {}]
  %s10 = inlined_call_operand.vmem [shape: f32[1,256], index: 10, kind: input, shape index: {}]
  %s11 = inlined_call_operand.vmem [shape: bf16[256,64], index: 11, kind: input, shape index: {}]
  %s12 = inlined_call_operand.vmem [shape: f32[1,64], index: 12, kind: input, shape index: {}]
  %s13 = inlined_call_operand.vmem [shape: f32[1,64], index: 13, kind: input, shape index: {}]
  %s14 = inlined_call_operand.<no memory space> [shape: f32[1,1], index: 14, kind: input, shape index: {}]
  %s15 = inlined_call_operand.vmem [shape: f32[2,1,1], index: 15, kind: output, shape index: {}]
  %s16 = sld [smem:[#allocation0]]
  $region93: #{_lambda_.1} parent=0
    _
  %s18 = ssub.s32 1, %s16
  %s19 = scalar_select 0, %s18, %s16
  %v20 = vstv %s14
  %21 = vst [vmem:[#allocation6] sm:$0x1] %v20
  loop: start=0, step=1, limit=4
  $region2: #{_lambda_.1} parent=0 // loop_pre_header
    _
  $region3: #{_lambda_.1} parent=0 // loop_header
    %s23 = sphi 0, %s27
    %p24 = scmp.ge.s32.totalorder %s23, 4
    %s33 = sphi 0, %s35
    %s36 = sphi 0, %s33
    %s37 = sphi 0, %s36
    %s53 = sphi 0, %s37
    %s57 = sphi 0, %s57
    %s59 = sphi 0, %s57
    %s60 = sphi 0, %s59
    %s74 = sphi 0, %s60
    %s78 = sphi 0, %s78
    %s80 = sphi 0, %s78
    %s81 = sphi 0, %s80
    %s95 = sphi 0, %s81
    %s99 = sphi 0, %s99
    %s101 = sphi 0, %s99
    %s102 = sphi 0, %s101
    %s116 = sphi 0, %s102
    %s120 = sphi 0, %s120
    %s122 = sphi 0, %s120
    %s123 = sphi 0, %s122
    %s137 = sphi 0, %s123
    %s141 = sphi 0, %s141
    %s143 = sphi 0, %s141
    %s144 = sphi 0, %s143
    %s158 = sphi 0, %s144
    %s162 = sphi 0, %s162
    %s164 = sphi 0, %s162
    %s165 = sphi 0, %s164
    %s179 = sphi 0, %s165
    %s183 = sphi 0, %s183
    %s185 = sphi 0, %s183
    %s186 = sphi 0, %s185
    %s200 = sphi 0, %s186
    %s204 = sphi 0, %s204
    %s206 = sphi 0, %s204
    %s207 = sphi 0, %s206
    %s221 = sphi 0, %s207
    %s225 = sphi 0, %s225
    %s227 = sphi 0, %s225
    %s228 = sphi 0, %s227
    %s242 = sphi 0, %s228
    %s246 = sphi 0, %s246
    %s248 = sphi 0, %s246
    %s249 = sphi 0, %s248
    %s263 = sphi 0, %s249
    %s267 = sphi 0, %s267
    %s269 = sphi 0, %s267
    %s270 = sphi 0, %s269
    %s284 = sphi 0, %s270
    %s288 = sphi 0, %s288
    %s290 = sphi 0, %s288
    %s291 = sphi 0, %s290
    %s305 = sphi 0, %s291
    %s309 = sphi 0, %s309
    %s311 = sphi 0, %s309
    %s312 = sphi 0, %s311
    %s326 = sphi 0, %s312
    %s330 = sphi 0, %s330
    %s332 = sphi 0, %s330
    %s333 = sphi 0, %s332
    %s347 = sphi 0, %s333
    %s353 = sphi 0, %s355
    %s356 = sphi 0, %s353
    %s357 = sphi 0, %s356
    %s373 = sphi 0, %s357
  $region4: #{_lambda_.1} parent=0 // loop_header_branch
    %26 = sbr.rel (%p24) target = $region8
  $region5: #{_lambda_.1} parent=0 // loop_body
    %s28 = ssub.s32 %s23, 1
    %s29 = ssub.s32 %s23, 2
    %s30 = sadd.s32 %s23, 1
    %s31 = ssub.s32 %s23, %s30
    %p32 = scmp.eq.s32.totalorder %s31, 0
    %s34 = sadd.s32 %s33, 1
    %s35 = scalar_select %p32, %s33, %s34
    %p38 = pneg %p32
    %p39 = scmp.eq.s32.totalorder %s23, 1
    %p40 = por %p38, %p39
    %p41 = scmp.ne.s32.totalorder %s33, %s36
    %p42 = scmp.eq.s32.totalorder %s23, 0
    %p43 = por %p41, %p42
    %p44 = scmp.ne.s32.totalorder %s33, %s36
    %p45 = scmp.eq.s32.totalorder %s28, 1
    %p46 = por %p44, %p45
    %p47 = scmp.ne.s32.totalorder %s36, %s37
    %p48 = scmp.eq.s32.totalorder %s28, 0
    %p49 = por %p47, %p48
    %p50 = scmp.ne.s32.totalorder %s36, %s37
    %p51 = scmp.eq.s32.totalorder %s29, 1
    %p52 = por %p50, %p51
    %p54 = scmp.ne.s32.totalorder %s37, %s53
    %p55 = scmp.eq.s32.totalorder %s29, 0
    %p56 = por %p54, %p55
    %s58 = sadd.s32 %s57, 1
    %p61 = scmp.eq.s32.totalorder %s23, 1
    %p62 = scmp.ne.s32.totalorder %s57, %s59
    %p63 = scmp.eq.s32.totalorder %s23, 0
    %p64 = por %p62, %p63
    %p65 = scmp.ne.s32.totalorder %s57, %s59
    %p66 = scmp.eq.s32.totalorder %s28, 1
    %p67 = por %p65, %p66
    %p68 = scmp.ne.s32.totalorder %s59, %s60
    %p69 = scmp.eq.s32.totalorder %s28, 0
    %p70 = por %p68, %p69
    %p71 = scmp.ne.s32.totalorder %s59, %s60
    %p72 = scmp.eq.s32.totalorder %s29, 1
    %p73 = por %p71, %p72
    %p75 = scmp.ne.s32.totalorder %s60, %s74
    %p76 = scmp.eq.s32.totalorder %s29, 0
    %p77 = por %p75, %p76
    %s79 = sadd.s32 %s78, 1
    %p82 = scmp.eq.s32.totalorder %s23, 1
    %p83 = scmp.ne.s32.totalorder %s78, %s80
    %p84 = scmp.eq.s32.totalorder %s23, 0
    %p85 = por %p83, %p84
    %p86 = scmp.ne.s32.totalorder %s78, %s80
    %p87 = scmp.eq.s32.totalorder %s28, 1
    %p88 = por %p86, %p87
    %p89 = scmp.ne.s32.totalorder %s80, %s81
    %p90 = scmp.eq.s32.totalorder %s28, 0
    %p91 = por %p89, %p90
    %p92 = scmp.ne.s32.totalorder %s80, %s81
    %p93 = scmp.eq.s32.totalorder %s29, 1
    %p94 = por %p92, %p93
    %p96 = scmp.ne.s32.totalorder %s81, %s95
    %p97 = scmp.eq.s32.totalorder %s29, 0
    %p98 = por %p96, %p97
    %s100 = sadd.s32 %s99, 1
    %p103 = scmp.eq.s32.totalorder %s23, 1
    %p104 = scmp.ne.s32.totalorder %s99, %s101
    %p105 = scmp.eq.s32.totalorder %s23, 0
    %p106 = por %p104, %p105
    %p107 = scmp.ne.s32.totalorder %s99, %s101
    %p108 = scmp.eq.s32.totalorder %s28, 1
    %p109 = por %p107, %p108
    %p110 = scmp.ne.s32.totalorder %s101, %s102
    %p111 = scmp.eq.s32.totalorder %s28, 0
    %p112 = por %p110, %p111
    %p113 = scmp.ne.s32.totalorder %s101, %s102
    %p114 = scmp.eq.s32.totalorder %s29, 1
    %p115 = por %p113, %p114
    %p117 = scmp.ne.s32.totalorder %s102, %s116
    %p118 = scmp.eq.s32.totalorder %s29, 0
    %p119 = por %p117, %p118
    %s121 = sadd.s32 %s120, 1
    %p124 = scmp.eq.s32.totalorder %s23, 1
    %p125 = scmp.ne.s32.totalorder %s120, %s122
    %p126 = scmp.eq.s32.totalorder %s23, 0
    %p127 = por %p125, %p126
    %p128 = scmp.ne.s32.totalorder %s120, %s122
    %p129 = scmp.eq.s32.totalorder %s28, 1
    %p130 = por %p128, %p129
    %p131 = scmp.ne.s32.totalorder %s122, %s123
    %p132 = scmp.eq.s32.totalorder %s28, 0
    %p133 = por %p131, %p132
    %p134 = scmp.ne.s32.totalorder %s122, %s123
    %p135 = scmp.eq.s32.totalorder %s29, 1
    %p136 = por %p134, %p135
    %p138 = scmp.ne.s32.totalorder %s123, %s137
    %p139 = scmp.eq.s32.totalorder %s29, 0
    %p140 = por %p138, %p139
    %s142 = sadd.s32 %s141, 1
    %p145 = scmp.eq.s32.totalorder %s23, 1
    %p146 = scmp.ne.s32.totalorder %s141, %s143
    %p147 = scmp.eq.s32.totalorder %s23, 0
    %p148 = por %p146, %p147
    %p149 = scmp.ne.s32.totalorder %s141, %s143
    %p150 = scmp.eq.s32.totalorder %s28, 1
    %p151 = por %p149, %p150
    %p152 = scmp.ne.s32.totalorder %s143, %s144
    %p153 = scmp.eq.s32.totalorder %s28, 0
    %p154 = por %p152, %p153
    %p155 = scmp.ne.s32.totalorder %s143, %s144
    %p156 = scmp.eq.s32.totalorder %s29, 1
    %p157 = por %p155, %p156
    %p159 = scmp.ne.s32.totalorder %s144, %s158
    %p160 = scmp.eq.s32.totalorder %s29, 0
    %p161 = por %p159, %p160
    %s163 = sadd.s32 %s162, 1
    %p166 = scmp.eq.s32.totalorder %s23, 1
    %p167 = scmp.ne.s32.totalorder %s162, %s164
    %p168 = scmp.eq.s32.totalorder %s23, 0
    %p169 = por %p167, %p168
    %p170 = scmp.ne.s32.totalorder %s162, %s164
    %p171 = scmp.eq.s32.totalorder %s28, 1
    %p172 = por %p170, %p171
    %p173 = scmp.ne.s32.totalorder %s164, %s165
    %p174 = scmp.eq.s32.totalorder %s28, 0
    %p175 = por %p173, %p174
    %p176 = scmp.ne.s32.totalorder %s164, %s165
    %p177 = scmp.eq.s32.totalorder %s29, 1
    %p178 = por %p176, %p177
    %p180 = scmp.ne.s32.totalorder %s165, %s179
    %p181 = scmp.eq.s32.totalorder %s29, 0
    %p182 = por %p180, %p181
    %s184 = sadd.s32 %s183, 1
    %p187 = scmp.eq.s32.totalorder %s23, 1
    %p188 = scmp.ne.s32.totalorder %s183, %s185
    %p189 = scmp.eq.s32.totalorder %s23, 0
    %p190 = por %p188, %p189
    %p191 = scmp.ne.s32.totalorder %s183, %s185
    %p192 = scmp.eq.s32.totalorder %s28, 1
    %p193 = por %p191, %p192
    %p194 = scmp.ne.s32.totalorder %s185, %s186
    %p195 = scmp.eq.s32.totalorder %s28, 0
    %p196 = por %p194, %p195
    %p197 = scmp.ne.s32.totalorder %s185, %s186
    %p198 = scmp.eq.s32.totalorder %s29, 1
    %p199 = por %p197, %p198
    %p201 = scmp.ne.s32.totalorder %s186, %s200
    %p202 = scmp.eq.s32.totalorder %s29, 0
    %p203 = por %p201, %p202
    %s205 = sadd.s32 %s204, 1
    %p208 = scmp.eq.s32.totalorder %s23, 1
    %p209 = scmp.ne.s32.totalorder %s204, %s206
    %p210 = scmp.eq.s32.totalorder %s23, 0
    %p211 = por %p209, %p210
    %p212 = scmp.ne.s32.totalorder %s204, %s206
    %p213 = scmp.eq.s32.totalorder %s28, 1
    %p214 = por %p212, %p213
    %p215 = scmp.ne.s32.totalorder %s206, %s207
    %p216 = scmp.eq.s32.totalorder %s28, 0
    %p217 = por %p215, %p216
    %p218 = scmp.ne.s32.totalorder %s206, %s207
    %p219 = scmp.eq.s32.totalorder %s29, 1
    %p220 = por %p218, %p219
    %p222 = scmp.ne.s32.totalorder %s207, %s221
    %p223 = scmp.eq.s32.totalorder %s29, 0
    %p224 = por %p222, %p223
    %s226 = sadd.s32 %s225, 1
    %p229 = scmp.eq.s32.totalorder %s23, 1
    %p230 = scmp.ne.s32.totalorder %s225, %s227
    %p231 = scmp.eq.s32.totalorder %s23, 0
    %p232 = por %p230, %p231
    %p233 = scmp.ne.s32.totalorder %s225, %s227
    %p234 = scmp.eq.s32.totalorder %s28, 1
    %p235 = por %p233, %p234
    %p236 = scmp.ne.s32.totalorder %s227, %s228
    %p237 = scmp.eq.s32.totalorder %s28, 0
    %p238 = por %p236, %p237
    %p239 = scmp.ne.s32.totalorder %s227, %s228
    %p240 = scmp.eq.s32.totalorder %s29, 1
    %p241 = por %p239, %p240
    %p243 = scmp.ne.s32.totalorder %s228, %s242
    %p244 = scmp.eq.s32.totalorder %s29, 0
    %p245 = por %p243, %p244
    %s247 = sadd.s32 %s246, 1
    %p250 = scmp.eq.s32.totalorder %s23, 1
    %p251 = scmp.ne.s32.totalorder %s246, %s248
    %p252 = scmp.eq.s32.totalorder %s23, 0
    %p253 = por %p251, %p252
    %p254 = scmp.ne.s32.totalorder %s246, %s248
    %p255 = scmp.eq.s32.totalorder %s28, 1
    %p256 = por %p254, %p255
    %p257 = scmp.ne.s32.totalorder %s248, %s249
    %p258 = scmp.eq.s32.totalorder %s28, 0
    %p259 = por %p257, %p258
    %p260 = scmp.ne.s32.totalorder %s248, %s249
    %p261 = scmp.eq.s32.totalorder %s29, 1
    %p262 = por %p260, %p261
    %p264 = scmp.ne.s32.totalorder %s249, %s263
    %p265 = scmp.eq.s32.totalorder %s29, 0
    %p266 = por %p264, %p265
    %s268 = sadd.s32 %s267, 1
    %p271 = scmp.eq.s32.totalorder %s23, 1
    %p272 = scmp.ne.s32.totalorder %s267, %s269
    %p273 = scmp.eq.s32.totalorder %s23, 0
    %p274 = por %p272, %p273
    %p275 = scmp.ne.s32.totalorder %s267, %s269
    %p276 = scmp.eq.s32.totalorder %s28, 1
    %p277 = por %p275, %p276
    %p278 = scmp.ne.s32.totalorder %s269, %s270
    %p279 = scmp.eq.s32.totalorder %s28, 0
    %p280 = por %p278, %p279
    %p281 = scmp.ne.s32.totalorder %s269, %s270
    %p282 = scmp.eq.s32.totalorder %s29, 1
    %p283 = por %p281, %p282
    %p285 = scmp.ne.s32.totalorder %s270, %s284
    %p286 = scmp.eq.s32.totalorder %s29, 0
    %p287 = por %p285, %p286
    %s289 = sadd.s32 %s288, 1
    %p292 = scmp.eq.s32.totalorder %s23, 1
    %p293 = scmp.ne.s32.totalorder %s288, %s290
    %p294 = scmp.eq.s32.totalorder %s23, 0
    %p295 = por %p293, %p294
    %p296 = scmp.ne.s32.totalorder %s288, %s290
    %p297 = scmp.eq.s32.totalorder %s28, 1
    %p298 = por %p296, %p297
    %p299 = scmp.ne.s32.totalorder %s290, %s291
    %p300 = scmp.eq.s32.totalorder %s28, 0
    %p301 = por %p299, %p300
    %p302 = scmp.ne.s32.totalorder %s290, %s291
    %p303 = scmp.eq.s32.totalorder %s29, 1
    %p304 = por %p302, %p303
    %p306 = scmp.ne.s32.totalorder %s291, %s305
    %p307 = scmp.eq.s32.totalorder %s29, 0
    %p308 = por %p306, %p307
    %s310 = sadd.s32 %s309, 1
    %p313 = scmp.eq.s32.totalorder %s23, 1
    %p314 = scmp.ne.s32.totalorder %s309, %s311
    %p315 = scmp.eq.s32.totalorder %s23, 0
    %p316 = por %p314, %p315
    %p317 = scmp.ne.s32.totalorder %s309, %s311
    %p318 = scmp.eq.s32.totalorder %s28, 1
    %p319 = por %p317, %p318
    %p320 = scmp.ne.s32.totalorder %s311, %s312
    %p321 = scmp.eq.s32.totalorder %s28, 0
    %p322 = por %p320, %p321
    %p323 = scmp.ne.s32.totalorder %s311, %s312
    %p324 = scmp.eq.s32.totalorder %s29, 1
    %p325 = por %p323, %p324
    %p327 = scmp.ne.s32.totalorder %s312, %s326
    %p328 = scmp.eq.s32.totalorder %s29, 0
    %p329 = por %p327, %p328
    %s331 = sadd.s32 %s330, 1
    %p334 = scmp.eq.s32.totalorder %s23, 1
    %p335 = scmp.ne.s32.totalorder %s330, %s332
    %p336 = scmp.eq.s32.totalorder %s23, 0
    %p337 = por %p335, %p336
    %p338 = scmp.ne.s32.totalorder %s330, %s332
    %p339 = scmp.eq.s32.totalorder %s28, 1
    %p340 = por %p338, %p339
    %p341 = scmp.ne.s32.totalorder %s332, %s333
    %p342 = scmp.eq.s32.totalorder %s28, 0
    %p343 = por %p341, %p342
    %p344 = scmp.ne.s32.totalorder %s332, %s333
    %p345 = scmp.eq.s32.totalorder %s29, 1
    %p346 = por %p344, %p345
    %p348 = scmp.ne.s32.totalorder %s333, %s347
    %p349 = scmp.eq.s32.totalorder %s29, 0
    %p350 = por %p348, %p349
    %s351 = ssub.s32 %s23, %s30
    %p352 = scmp.eq.s32.totalorder %s351, 0
    %s354 = sadd.s32 %s353, 1
    %s355 = scalar_select %p352, %s353, %s354
    %p358 = pneg %p352
    %p359 = scmp.eq.s32.totalorder %s23, 1
    %p360 = por %p358, %p359
    %p361 = scmp.ne.s32.totalorder %s353, %s356
    %p362 = scmp.eq.s32.totalorder %s23, 0
    %p363 = por %p361, %p362
    %p364 = scmp.ne.s32.totalorder %s353, %s356
    %p365 = scmp.eq.s32.totalorder %s28, 1
    %p366 = por %p364, %p365
    %p367 = scmp.ne.s32.totalorder %s356, %s357
    %p368 = scmp.eq.s32.totalorder %s28, 0
    %p369 = por %p367, %p368
    %p370 = scmp.ne.s32.totalorder %s356, %s357
    %p371 = scmp.eq.s32.totalorder %s29, 1
    %p372 = por %p370, %p371
    %p374 = scmp.ne.s32.totalorder %s357, %s373
    %p375 = scmp.eq.s32.totalorder %s29, 0
    %p376 = por %p374, %p375
    %p377 = scmp.le.s32.totalorder 1, %s23
    %p378 = scmp.lt.s32.totalorder %s23, 3
    %p379 = pnand %p377, %p378
    %p380 = pneg %p379
    // Predicated region
    $region9: #{_lambda_.1} parent=5 // pred_check
      _
    $region10: #{_lambda_.1} parent=5 // pred_check_branch
      %382 = sbr.rel (%p379) target = $region12
    $region11: #{_lambda_.1} parent=5 // pred_region
      %s383 = ssub.s32 %s23, 1
      // Predicated region
      $region13: #{_lambda_.1} parent=11 // pred_check
        %p384 = pneg %p70
      $region14: #{_lambda_.1} parent=11 // pred_check_branch
        %386 = sbr.rel (%p384) target = $region16
      $region15: #{_lambda_.1} parent=11 // pred_region
        _
      $region16: #{_lambda_.1} parent=11 // pred_fallthru
        _
      // Predicated region
      $region17: #{_lambda_.1} parent=11 // pred_check
        %p387 = pneg %p91
      $region18: #{_lambda_.1} parent=11 // pred_check_branch
        %389 = sbr.rel (%p387) target = $region20
      $region19: #{_lambda_.1} parent=11 // pred_region
        _
      $region20: #{_lambda_.1} parent=11 // pred_fallthru
        _
      // Predicated region
      $region21: #{_lambda_.1} parent=11 // pred_check
        %p390 = pneg %p112
      $region22: #{_lambda_.1} parent=11 // pred_check_branch
        %392 = sbr.rel (%p390) target = $region24
      $region23: #{_lambda_.1} parent=11 // pred_region
        _
      $region24: #{_lambda_.1} parent=11 // pred_fallthru
        _
      // Predicated region
      $region25: #{_lambda_.1} parent=11 // pred_check
        %p393 = pneg %p133
      $region26: #{_lambda_.1} parent=11 // pred_check_branch
        %395 = sbr.rel (%p393) target = $region28
      $region27: #{_lambda_.1} parent=11 // pred_region
        _
      $region28: #{_lambda_.1} parent=11 // pred_fallthru
        _
      // Predicated region
      $region29: #{_lambda_.1} parent=11 // pred_check
        %p396 = pneg %p154
      $region30: #{_lambda_.1} parent=11 // pred_check_branch
        %398 = sbr.rel (%p396) target = $region32
      $region31: #{_lambda_.1} parent=11 // pred_region
        _
      $region32: #{_lambda_.1} parent=11 // pred_fallthru
        _
      // Predicated region
      $region33: #{_lambda_.1} parent=11 // pred_check
        %p399 = pneg %p175
      $region34: #{_lambda_.1} parent=11 // pred_check_branch
        %401 = sbr.rel (%p399) target = $region36
      $region35: #{_lambda_.1} parent=11 // pred_region
        _
      $region36: #{_lambda_.1} parent=11 // pred_fallthru
        _
      // Predicated region
      $region37: #{_lambda_.1} parent=11 // pred_check
        %p402 = pneg %p196
      $region38: #{_lambda_.1} parent=11 // pred_check_branch
        %404 = sbr.rel (%p402) target = $region40
      $region39: #{_lambda_.1} parent=11 // pred_region
        _
      $region40: #{_lambda_.1} parent=11 // pred_fallthru
        _
      // Predicated region
      $region41: #{_lambda_.1} parent=11 // pred_check
        %p405 = pneg %p217
      $region42: #{_lambda_.1} parent=11 // pred_check_branch
        %407 = sbr.rel (%p405) target = $region44
      $region43: #{_lambda_.1} parent=11 // pred_region
        _
      $region44: #{_lambda_.1} parent=11 // pred_fallthru
        _
      // Predicated region
      $region45: #{_lambda_.1} parent=11 // pred_check
        %p408 = pneg %p238
      $region46: #{_lambda_.1} parent=11 // pred_check_branch
        %410 = sbr.rel (%p408) target = $region48
      $region47: #{_lambda_.1} parent=11 // pred_region
        _
      $region48: #{_lambda_.1} parent=11 // pred_fallthru
        _
      // Predicated region
      $region49: #{_lambda_.1} parent=11 // pred_check
        %p411 = pneg %p259
      $region50: #{_lambda_.1} parent=11 // pred_check_branch
        %413 = sbr.rel (%p411) target = $region52
      $region51: #{_lambda_.1} parent=11 // pred_region
        _
      $region52: #{_lambda_.1} parent=11 // pred_fallthru
        _
      // Predicated region
      $region53: #{_lambda_.1} parent=11 // pred_check
        %p414 = pneg %p280
      $region54: #{_lambda_.1} parent=11 // pred_check_branch
        %416 = sbr.rel (%p414) target = $region56
      $region55: #{_lambda_.1} parent=11 // pred_region
        _
      $region56: #{_lambda_.1} parent=11 // pred_fallthru
        _
      // Predicated region
      $region57: #{_lambda_.1} parent=11 // pred_check
        %p417 = pneg %p301
      $region58: #{_lambda_.1} parent=11 // pred_check_branch
        %419 = sbr.rel (%p417) target = $region60
      $region59: #{_lambda_.1} parent=11 // pred_region
        _
      $region60: #{_lambda_.1} parent=11 // pred_fallthru
        _
      // Predicated region
      $region61: #{_lambda_.1} parent=11 // pred_check
        %p420 = pneg %p322
      $region62: #{_lambda_.1} parent=11 // pred_check_branch
        %422 = sbr.rel (%p420) target = $region64
      $region63: #{_lambda_.1} parent=11 // pred_region
        _
      $region64: #{_lambda_.1} parent=11 // pred_fallthru
        _
      // Predicated region
      $region65: #{_lambda_.1} parent=11 // pred_check
        %p423 = pneg %p343
      $region66: #{_lambda_.1} parent=11 // pred_check_branch
        %425 = sbr.rel (%p423) target = $region68
      $region67: #{_lambda_.1} parent=11 // pred_region
        _
      $region68: #{_lambda_.1} parent=11 // pred_fallthru
        _
    $region12: #{_lambda_.1} parent=5 // pred_fallthru
      _
    %p426 = scmp.lt.s32.totalorder %s23, 2
    // Predicated region
    $region69: #{_lambda_.1} parent=5 // pred_check
      %p427 = pneg %p426
    $region70: #{_lambda_.1} parent=5 // pred_check_branch
      %429 = sbr.rel (%p427) target = $region72
    $region71: #{_lambda_.1} parent=5 // pred_region
      // Predicated region
      $region73: #{_lambda_.1} parent=71 // pred_check
        %p430 = pneg %p43
      $region74: #{_lambda_.1} parent=71 // pred_check_branch
        %432 = sbr.rel (%p430) target = $region76
      $region75: #{_lambda_.1} parent=71 // pred_region
        %p433 = scmp.lt.s32.totalorder %s23, 1
        %s434 = scalar_select %p433, %s23, 1
        %s435 = smul.addr %s434, 5
        %s436 = smul.addr %s435, 8
        %s437 = scalar_lea.vmem %s0, %s436
      $region76: #{_lambda_.1} parent=71 // pred_fallthru
        _
    $region72: #{_lambda_.1} parent=5 // pred_fallthru
      _
    %p438 = scmp.le.s32.totalorder 1, %s23
    %p439 = scmp.lt.s32.totalorder %s23, 3
    %p440 = pnand %p438, %p439
    %p441 = pneg %p440
    // Predicated region
    $region77: #{_lambda_.1} parent=5 // pred_check
      _
    $region78: #{_lambda_.1} parent=5 // pred_check_branch
      %443 = sbr.rel (%p440) target = $region80
    $region79: #{_lambda_.1} parent=5 // pred_region
      %s444 = ssub.s32 %s23, 1
      %p445 = scmp.lt.s32.totalorder %s28, 1
      %s446 = scalar_select %p445, %s28, 1
      %s447 = smul.addr %s446, 5
      %s448 = smul.addr %s447, 8
      %s449 = scalar_lea.vmem %s0, %s448
      %p450 = pneg %p49
      %p451 = pneg %p46
      %p452 = pneg %p70
      %p453 = pneg %p67
      %p454 = pneg %p91
      %p455 = pneg %p88
      %p456 = pneg %p112
      %p457 = pneg %p109
      %p458 = pneg %p133
      %p459 = pneg %p130
      %p460 = pneg %p154
      %p461 = pneg %p151
      %p462 = pneg %p175
      %p463 = pneg %p172
      %p464 = pneg %p196
      %p465 = pneg %p193
      %p466 = pneg %p217
      %p467 = pneg %p214
      %p468 = pneg %p238
      %p469 = pneg %p235
      %p470 = pneg %p259
      %p471 = pneg %p256
      %p472 = pneg %p280
      %p473 = pneg %p277
      %p474 = pneg %p301
      %p475 = pneg %p298
      %p476 = pneg %p322
      %p477 = pneg %p319
      %p478 = pneg %p343
      %p479 = pneg %p340
      %p480 = pneg %p369
      %p481 = pneg %p366
      %p482 = scmp.lt.s32.totalorder %s28, 1
      %s483 = scalar_select %p482, %s28, 1
      %s484 = scalar_lea.vmem %s15, %s483
      %p485 = scmp.lt.s32.totalorder %s28, 1
      %s486 = scalar_select %p485, %s28, 1
      %s487 = smul.addr %s486, 5
      %s488 = smul.addr %s487, 8
      %s489 = scalar_lea.vmem %s0, %s488
      %p490 = scmp.lt.s32.totalorder %s28, 1
      %s491 = scalar_select %p490, %s28, 1
      %s492 = scalar_lea.vmem %s15, %s491
      %v494 = vld [vmem:[%s489] sm:$0xff]
      %v495 = vld [vmem:[%s489 + $0x8] sm:$0xff]
      %v496 = vld [vmem:[%s489 + $0x10] sm:$0xff]
      %v497 = vld [vmem:[%s489 + $0x18] sm:$0xff]
      %v498 = vld [vmem:[%s489 + $0x20] sm:$0x3]
      %v499 = vlaneseq
      %v500 = vshrl.u32 %v499, 7
      %v501 = vsub.s32 0, %v500
      %v502 = vrot.slane %v494, %v501
      %504 = vbcast.lane.b32.xlu0 %v502, 256
      %v505 = vpop.permute.xlu0 %504
      %s507 = sor.u32 256, 8
      %508 = vbcast.lane.b32.xlu0 %v502, %s507
      %v509 = vpop.permute.xlu0 %508
      %s511 = sor.u32 256, 16
      %512 = vbcast.lane.b32.xlu0 %v502, %s511
      %v513 = vpop.permute.xlu0 %512
      %s515 = sor.u32 256, 24
      %516 = vbcast.lane.b32.xlu0 %v502, %s515
      %v517 = vpop.permute.xlu0 %516
      %v518 = vlaneseq
      %v519 = vshrl.u32 %v518, 7
      %v520 = vsub.s32 1, %v519
      %v521 = vrot.slane %v494, %v520
      %523 = vbcast.lane.b32.xlu0 %v521, 256
      %v524 = vpop.permute.xlu0 %523
      %s526 = sor.u32 256, 8
      %527 = vbcast.lane.b32.xlu0 %v521, %s526
      %v528 = vpop.permute.xlu0 %527
      %s530 = sor.u32 256, 16
      %531 = vbcast.lane.b32.xlu0 %v521, %s530
      %v532 = vpop.permute.xlu0 %531
      %s534 = sor.u32 256, 24
      %535 = vbcast.lane.b32.xlu0 %v521, %s534
      %v536 = vpop.permute.xlu0 %535
      %v537 = vlaneseq
      %v538 = vshrl.u32 %v537, 7
      %v539 = vsub.s32 2, %v538
      %v540 = vrot.slane %v494, %v539
      %542 = vbcast.lane.b32.xlu0 %v540, 256
      %v543 = vpop.permute.xlu0 %542
      %s545 = sor.u32 256, 8
      %546 = vbcast.lane.b32.xlu0 %v540, %s545
      %v547 = vpop.permute.xlu0 %546
      %s549 = sor.u32 256, 16
      %550 = vbcast.lane.b32.xlu0 %v540, %s549
      %v551 = vpop.permute.xlu0 %550
      %s553 = sor.u32 256, 24
      %554 = vbcast.lane.b32.xlu0 %v540, %s553
      %v555 = vpop.permute.xlu0 %554
      %v556 = vlaneseq
      %v557 = vshrl.u32 %v556, 7
      %v558 = vsub.s32 3, %v557
      %v559 = vrot.slane %v494, %v558
      %561 = vbcast.lane.b32.xlu0 %v559, 256
      %v562 = vpop.permute.xlu0 %561
      %s564 = sor.u32 256, 8
      %565 = vbcast.lane.b32.xlu0 %v559, %s564
      %v566 = vpop.permute.xlu0 %565
      %s568 = sor.u32 256, 16
      %569 = vbcast.lane.b32.xlu0 %v559, %s568
      %v570 = vpop.permute.xlu0 %569
      %s572 = sor.u32 256, 24
      %573 = vbcast.lane.b32.xlu0 %v559, %s572
      %v574 = vpop.permute.xlu0 %573
      %v575 = vlaneseq
      %v576 = vshrl.u32 %v575, 7
      %v577 = vsub.s32 4, %v576
      %v578 = vrot.slane %v494, %v577
      %580 = vbcast.lane.b32.xlu0 %v578, 256
      %v581 = vpop.permute.xlu0 %580
      %s583 = sor.u32 256, 8
      %584 = vbcast.lane.b32.xlu0 %v578, %s583
      %v585 = vpop.permute.xlu0 %584
      %s587 = sor.u32 256, 16
      %588 = vbcast.lane.b32.xlu0 %v578, %s587
      %v589 = vpop.permute.xlu0 %588
      %s591 = sor.u32 256, 24
      %592 = vbcast.lane.b32.xlu0 %v578, %s591
      %v593 = vpop.permute.xlu0 %592
      %v594 = vlaneseq
      %v595 = vshrl.u32 %v594, 7
      %v596 = vsub.s32 5, %v595
      %v597 = vrot.slane %v494, %v596
      %599 = vbcast.lane.b32.xlu0 %v597, 256
      %v600 = vpop.permute.xlu0 %599
      %s602 = sor.u32 256, 8
      %603 = vbcast.lane.b32.xlu0 %v597, %s602
      %v604 = vpop.permute.xlu0 %603
      %s606 = sor.u32 256, 16
      %607 = vbcast.lane.b32.xlu0 %v597, %s606
      %v608 = vpop.permute.xlu0 %607
      %s610 = sor.u32 256, 24
      %611 = vbcast.lane.b32.xlu0 %v597, %s610
      %v612 = vpop.permute.xlu0 %611
      %v613 = vlaneseq
      %v614 = vshrl.u32 %v613, 7
      %v615 = vsub.s32 6, %v614
      %v616 = vrot.slane %v494, %v615
      %618 = vbcast.lane.b32.xlu0 %v616, 256
      %v619 = vpop.permute.xlu0 %618
      %s621 = sor.u32 256, 8
      %622 = vbcast.lane.b32.xlu0 %v616, %s621
      %v623 = vpop.permute.xlu0 %622
      %s625 = sor.u32 256, 16
      %626 = vbcast.lane.b32.xlu0 %v616, %s625
      %v627 = vpop.permute.xlu0 %626
      %s629 = sor.u32 256, 24
      %630 = vbcast.lane.b32.xlu0 %v616, %s629
      %v631 = vpop.permute.xlu0 %630
      %v632 = vlaneseq
      %v633 = vshrl.u32 %v632, 7
      %v634 = vsub.s32 7, %v633
      %v635 = vrot.slane %v494, %v634
      %637 = vbcast.lane.b32.xlu0 %v635, 256
      %v638 = vpop.permute.xlu0 %637
      %s640 = sor.u32 256, 8
      %641 = vbcast.lane.b32.xlu0 %v635, %s640
      %v642 = vpop.permute.xlu0 %641
      %s644 = sor.u32 256, 16
      %645 = vbcast.lane.b32.xlu0 %v635, %s644
      %v646 = vpop.permute.xlu0 %645
      %s648 = sor.u32 256, 24
      %649 = vbcast.lane.b32.xlu0 %v635, %s648
      %v650 = vpop.permute.xlu0 %649
      %v651 = vlaneseq
      %v652 = vshrl.u32 %v651, 7
      %v653 = vsub.s32 0, %v652
      %v654 = vrot.slane %v495, %v653
      %656 = vbcast.lane.b32.xlu0 %v654, 256
      %v657 = vpop.permute.xlu0 %656
      %s659 = sor.u32 256, 8
      %660 = vbcast.lane.b32.xlu0 %v654, %s659
      %v661 = vpop.permute.xlu0 %660
      %s663 = sor.u32 256, 16
      %664 = vbcast.lane.b32.xlu0 %v654, %s663
      %v665 = vpop.permute.xlu0 %664
      %s667 = sor.u32 256, 24
      %668 = vbcast.lane.b32.xlu0 %v654, %s667
      %v669 = vpop.permute.xlu0 %668
      %v670 = vlaneseq
      %v671 = vshrl.u32 %v670, 7
      %v672 = vsub.s32 1, %v671
      %v673 = vrot.slane %v495, %v672
      %675 = vbcast.lane.b32.xlu0 %v673, 256
      %v676 = vpop.permute.xlu0 %675
      %s678 = sor.u32 256, 8
      %679 = vbcast.lane.b32.xlu0 %v673, %s678
      %v680 = vpop.permute.xlu0 %679
      %s682 = sor.u32 256, 16
      %683 = vbcast.lane.b32.xlu0 %v673, %s682
      %v684 = vpop.permute.xlu0 %683
      %s686 = sor.u32 256, 24
      %687 = vbcast.lane.b32.xlu0 %v673, %s686
      %v688 = vpop.permute.xlu0 %687
      %v689 = vlaneseq
      %v690 = vshrl.u32 %v689, 7
      %v691 = vsub.s32 2, %v690
      %v692 = vrot.slane %v495, %v691
      %694 = vbcast.lane.b32.xlu0 %v692, 256
      %v695 = vpop.permute.xlu0 %694
      %s697 = sor.u32 256, 8
      %698 = vbcast.lane.b32.xlu0 %v692, %s697
      %v699 = vpop.permute.xlu0 %698
      %s701 = sor.u32 256, 16
      %702 = vbcast.lane.b32.xlu0 %v692, %s701
      %v703 = vpop.permute.xlu0 %702
      %s705 = sor.u32 256, 24
      %706 = vbcast.lane.b32.xlu0 %v692, %s705
      %v707 = vpop.permute.xlu0 %706
      %v708 = vlaneseq
      %v709 = vshrl.u32 %v708, 7
      %v710 = vsub.s32 3, %v709
      %v711 = vrot.slane %v495, %v710
      %713 = vbcast.lane.b32.xlu0 %v711, 256
      %v714 = vpop.permute.xlu0 %713
      %s716 = sor.u32 256, 8
      %717 = vbcast.lane.b32.xlu0 %v711, %s716
      %v718 = vpop.permute.xlu0 %717
      %s720 = sor.u32 256, 16
      %721 = vbcast.lane.b32.xlu0 %v711, %s720
      %v722 = vpop.permute.xlu0 %721
      %s724 = sor.u32 256, 24
      %725 = vbcast.lane.b32.xlu0 %v711, %s724
      %v726 = vpop.permute.xlu0 %725
      %v727 = vlaneseq
      %v728 = vshrl.u32 %v727, 7
      %v729 = vsub.s32 4, %v728
      %v730 = vrot.slane %v495, %v729
      %732 = vbcast.lane.b32.xlu0 %v730, 256
      %v733 = vpop.permute.xlu0 %732
      %s735 = sor.u32 256, 8
      %736 = vbcast.lane.b32.xlu0 %v730, %s735
      %v737 = vpop.permute.xlu0 %736
      %s739 = sor.u32 256, 16
      %740 = vbcast.lane.b32.xlu0 %v730, %s739
      %v741 = vpop.permute.xlu0 %740
      %s743 = sor.u32 256, 24
      %744 = vbcast.lane.b32.xlu0 %v730, %s743
      %v745 = vpop.permute.xlu0 %744
      %v746 = vlaneseq
      %v747 = vshrl.u32 %v746, 7
      %v748 = vsub.s32 5, %v747
      %v749 = vrot.slane %v495, %v748
      %751 = vbcast.lane.b32.xlu0 %v749, 256
      %v752 = vpop.permute.xlu0 %751
      %s754 = sor.u32 256, 8
      %755 = vbcast.lane.b32.xlu0 %v749, %s754
      %v756 = vpop.permute.xlu0 %755
      %s758 = sor.u32 256, 16
      %759 = vbcast.lane.b32.xlu0 %v749, %s758
      %v760 = vpop.permute.xlu0 %759
      %s762 = sor.u32 256, 24
      %763 = vbcast.lane.b32.xlu0 %v749, %s762
      %v764 = vpop.permute.xlu0 %763
      %v765 = vlaneseq
      %v766 = vshrl.u32 %v765, 7
      %v767 = vsub.s32 6, %v766
      %v768 = vrot.slane %v495, %v767
      %770 = vbcast.lane.b32.xlu0 %v768, 256
      %v771 = vpop.permute.xlu0 %770
      %s773 = sor.u32 256, 8
      %774 = vbcast.lane.b32.xlu0 %v768, %s773
      %v775 = vpop.permute.xlu0 %774
      %s777 = sor.u32 256, 16
      %778 = vbcast.lane.b32.xlu0 %v768, %s777
      %v779 = vpop.permute.xlu0 %778
      %s781 = sor.u32 256, 24
      %782 = vbcast.lane.b32.xlu0 %v768, %s781
      %v783 = vpop.permute.xlu0 %782
      %v784 = vlaneseq
      %v785 = vshrl.u32 %v784, 7
      %v786 = vsub.s32 7, %v785
      %v787 = vrot.slane %v495, %v786
      %789 = vbcast.lane.b32.xlu0 %v787, 256
      %v790 = vpop.permute.xlu0 %789
      %s792 = sor.u32 256, 8
      %793 = vbcast.lane.b32.xlu0 %v787, %s792
      %v794 = vpop.permute.xlu0 %793
      %s796 = sor.u32 256, 16
      %797 = vbcast.lane.b32.xlu0 %v787, %s796
      %v798 = vpop.permute.xlu0 %797
      %s800 = sor.u32 256, 24
      %801 = vbcast.lane.b32.xlu0 %v787, %s800
      %v802 = vpop.permute.xlu0 %801
      %v803 = vlaneseq
      %v804 = vshrl.u32 %v803, 7
      %v805 = vsub.s32 0, %v804
      %v806 = vrot.slane %v496, %v805
      %808 = vbcast.lane.b32.xlu0 %v806, 256
      %v809 = vpop.permute.xlu0 %808
      %s811 = sor.u32 256, 8
      %812 = vbcast.lane.b32.xlu0 %v806, %s811
      %v813 = vpop.permute.xlu0 %812
      %s815 = sor.u32 256, 16
      %816 = vbcast.lane.b32.xlu0 %v806, %s815
      %v817 = vpop.permute.xlu0 %816
      %s819 = sor.u32 256, 24
      %820 = vbcast.lane.b32.xlu0 %v806, %s819
      %v821 = vpop.permute.xlu0 %820
      %v822 = vlaneseq
      %v823 = vshrl.u32 %v822, 7
      %v824 = vsub.s32 1, %v823
      %v825 = vrot.slane %v496, %v824
      %827 = vbcast.lane.b32.xlu0 %v825, 256
      %v828 = vpop.permute.xlu0 %827
      %s830 = sor.u32 256, 8
      %831 = vbcast.lane.b32.xlu0 %v825, %s830
      %v832 = vpop.permute.xlu0 %831
      %s834 = sor.u32 256, 16
      %835 = vbcast.lane.b32.xlu0 %v825, %s834
      %v836 = vpop.permute.xlu0 %835
      %s838 = sor.u32 256, 24
      %839 = vbcast.lane.b32.xlu0 %v825, %s838
      %v840 = vpop.permute.xlu0 %839
      %v841 = vlaneseq
      %v842 = vshrl.u32 %v841, 7
      %v843 = vsub.s32 2, %v842
      %v844 = vrot.slane %v496, %v843
      %846 = vbcast.lane.b32.xlu0 %v844, 256
      %v847 = vpop.permute.xlu0 %846
      %s849 = sor.u32 256, 8
      %850 = vbcast.lane.b32.xlu0 %v844, %s849
      %v851 = vpop.permute.xlu0 %850
      %s853 = sor.u32 256, 16
      %854 = vbcast.lane.b32.xlu0 %v844, %s853
      %v855 = vpop.permute.xlu0 %854
      %s857 = sor.u32 256, 24
      %858 = vbcast.lane.b32.xlu0 %v844, %s857
      %v859 = vpop.permute.xlu0 %858
      %v860 = vlaneseq
      %v861 = vshrl.u32 %v860, 7
      %v862 = vsub.s32 3, %v861
      %v863 = vrot.slane %v496, %v862
      %865 = vbcast.lane.b32.xlu0 %v863, 256
      %v866 = vpop.permute.xlu0 %865
      %s868 = sor.u32 256, 8
      %869 = vbcast.lane.b32.xlu0 %v863, %s868
      %v870 = vpop.permute.xlu0 %869
      %s872 = sor.u32 256, 16
      %873 = vbcast.lane.b32.xlu0 %v863, %s872
      %v874 = vpop.permute.xlu0 %873
      %s876 = sor.u32 256, 24
      %877 = vbcast.lane.b32.xlu0 %v863, %s876
      %v878 = vpop.permute.xlu0 %877
      %v879 = vlaneseq
      %v880 = vshrl.u32 %v879, 7
      %v881 = vsub.s32 4, %v880
      %v882 = vrot.slane %v496, %v881
      %884 = vbcast.lane.b32.xlu0 %v882, 256
      %v885 = vpop.permute.xlu0 %884
      %s887 = sor.u32 256, 8
      %888 = vbcast.lane.b32.xlu0 %v882, %s887
      %v889 = vpop.permute.xlu0 %888
      %s891 = sor.u32 256, 16
      %892 = vbcast.lane.b32.xlu0 %v882, %s891
      %v893 = vpop.permute.xlu0 %892
      %s895 = sor.u32 256, 24
      %896 = vbcast.lane.b32.xlu0 %v882, %s895
      %v897 = vpop.permute.xlu0 %896
      %v898 = vlaneseq
      %v899 = vshrl.u32 %v898, 7
      %v900 = vsub.s32 5, %v899
      %v901 = vrot.slane %v496, %v900
      %903 = vbcast.lane.b32.xlu0 %v901, 256
      %v904 = vpop.permute.xlu0 %903
      %s906 = sor.u32 256, 8
      %907 = vbcast.lane.b32.xlu0 %v901, %s906
      %v908 = vpop.permute.xlu0 %907
      %s910 = sor.u32 256, 16
      %911 = vbcast.lane.b32.xlu0 %v901, %s910
      %v912 = vpop.permute.xlu0 %911
      %s914 = sor.u32 256, 24
      %915 = vbcast.lane.b32.xlu0 %v901, %s914
      %v916 = vpop.permute.xlu0 %915
      %v917 = vlaneseq
      %v918 = vshrl.u32 %v917, 7
      %v919 = vsub.s32 6, %v918
      %v920 = vrot.slane %v496, %v919
      %922 = vbcast.lane.b32.xlu0 %v920, 256
      %v923 = vpop.permute.xlu0 %922
      %s925 = sor.u32 256, 8
      %926 = vbcast.lane.b32.xlu0 %v920, %s925
      %v927 = vpop.permute.xlu0 %926
      %s929 = sor.u32 256, 16
      %930 = vbcast.lane.b32.xlu0 %v920, %s929
      %v931 = vpop.permute.xlu0 %930
      %s933 = sor.u32 256, 24
      %934 = vbcast.lane.b32.xlu0 %v920, %s933
      %v935 = vpop.permute.xlu0 %934
      %v936 = vlaneseq
      %v937 = vshrl.u32 %v936, 7
      %v938 = vsub.s32 7, %v937
      %v939 = vrot.slane %v496, %v938
      %941 = vbcast.lane.b32.xlu0 %v939, 256
      %v942 = vpop.permute.xlu0 %941
      %s944 = sor.u32 256, 8
      %945 = vbcast.lane.b32.xlu0 %v939, %s944
      %v946 = vpop.permute.xlu0 %945
      %s948 = sor.u32 256, 16
      %949 = vbcast.lane.b32.xlu0 %v939, %s948
      %v950 = vpop.permute.xlu0 %949
      %s952 = sor.u32 256, 24
      %953 = vbcast.lane.b32.xlu0 %v939, %s952
      %v954 = vpop.permute.xlu0 %953
      %v955 = vlaneseq
      %v956 = vshrl.u32 %v955, 7
      %v957 = vsub.s32 0, %v956
      %v958 = vrot.slane %v497, %v957
      %960 = vbcast.lane.b32.xlu0 %v958, 256
      %v961 = vpop.permute.xlu0 %960
      %s963 = sor.u32 256, 8
      %964 = vbcast.lane.b32.xlu0 %v958, %s963
      %v965 = vpop.permute.xlu0 %964
      %s967 = sor.u32 256, 16
      %968 = vbcast.lane.b32.xlu0 %v958, %s967
      %v969 = vpop.permute.xlu0 %968
      %s971 = sor.u32 256, 24
      %972 = vbcast.lane.b32.xlu0 %v958, %s971
      %v973 = vpop.permute.xlu0 %972
      %v974 = vlaneseq
      %v975 = vshrl.u32 %v974, 7
      %v976 = vsub.s32 1, %v975
      %v977 = vrot.slane %v497, %v976
      %979 = vbcast.lane.b32.xlu0 %v977, 256
      %v980 = vpop.permute.xlu0 %979
      %s982 = sor.u32 256, 8
      %983 = vbcast.lane.b32.xlu0 %v977, %s982
      %v984 = vpop.permute.xlu0 %983
      %s986 = sor.u32 256, 16
      %987 = vbcast.lane.b32.xlu0 %v977, %s986
      %v988 = vpop.permute.xlu0 %987
      %s990 = sor.u32 256, 24
      %991 = vbcast.lane.b32.xlu0 %v977, %s990
      %v992 = vpop.permute.xlu0 %991
      %v993 = vlaneseq
      %v994 = vshrl.u32 %v993, 7
      %v995 = vsub.s32 2, %v994
      %v996 = vrot.slane %v497, %v995
      %998 = vbcast.lane.b32.xlu0 %v996, 256
      %v999 = vpop.permute.xlu0 %998
      %s1001 = sor.u32 256, 8
      %1002 = vbcast.lane.b32.xlu0 %v996, %s1001
      %v1003 = vpop.permute.xlu0 %1002
      %s1005 = sor.u32 256, 16
      %1006 = vbcast.lane.b32.xlu0 %v996, %s1005
      %v1007 = vpop.permute.xlu0 %1006
      %s1009 = sor.u32 256, 24
      %1010 = vbcast.lane.b32.xlu0 %v996, %s1009
      %v1011 = vpop.permute.xlu0 %1010
      %v1012 = vlaneseq
      %v1013 = vshrl.u32 %v1012, 7
      %v1014 = vsub.s32 3, %v1013
      %v1015 = vrot.slane %v497, %v1014
      %1017 = vbcast.lane.b32.xlu0 %v1015, 256
      %v1018 = vpop.permute.xlu0 %1017
      %s1020 = sor.u32 256, 8
      %1021 = vbcast.lane.b32.xlu0 %v1015, %s1020
      %v1022 = vpop.permute.xlu0 %1021
      %s1024 = sor.u32 256, 16
      %1025 = vbcast.lane.b32.xlu0 %v1015, %s1024
      %v1026 = vpop.permute.xlu0 %1025
      %s1028 = sor.u32 256, 24
      %1029 = vbcast.lane.b32.xlu0 %v1015, %s1028
      %v1030 = vpop.permute.xlu0 %1029
      %v1031 = vlaneseq
      %v1032 = vshrl.u32 %v1031, 7
      %v1033 = vsub.s32 4, %v1032
      %v1034 = vrot.slane %v497, %v1033
      %1036 = vbcast.lane.b32.xlu0 %v1034, 256
      %v1037 = vpop.permute.xlu0 %1036
      %s1039 = sor.u32 256, 8
      %1040 = vbcast.lane.b32.xlu0 %v1034, %s1039
      %v1041 = vpop.permute.xlu0 %1040
      %s1043 = sor.u32 256, 16
      %1044 = vbcast.lane.b32.xlu0 %v1034, %s1043
      %v1045 = vpop.permute.xlu0 %1044
      %s1047 = sor.u32 256, 24
      %1048 = vbcast.lane.b32.xlu0 %v1034, %s1047
      %v1049 = vpop.permute.xlu0 %1048
      %v1050 = vlaneseq
      %v1051 = vshrl.u32 %v1050, 7
      %v1052 = vsub.s32 5, %v1051
      %v1053 = vrot.slane %v497, %v1052
      %1055 = vbcast.lane.b32.xlu0 %v1053, 256
      %v1056 = vpop.permute.xlu0 %1055
      %s1058 = sor.u32 256, 8
      %1059 = vbcast.lane.b32.xlu0 %v1053, %s1058
      %v1060 = vpop.permute.xlu0 %1059
      %s1062 = sor.u32 256, 16
      %1063 = vbcast.lane.b32.xlu0 %v1053, %s1062
      %v1064 = vpop.permute.xlu0 %1063
      %s1066 = sor.u32 256, 24
      %1067 = vbcast.lane.b32.xlu0 %v1053, %s1066
      %v1068 = vpop.permute.xlu0 %1067
      %v1069 = vlaneseq
      %v1070 = vshrl.u32 %v1069, 7
      %v1071 = vsub.s32 6, %v1070
      %v1072 = vrot.slane %v497, %v1071
      %1074 = vbcast.lane.b32.xlu0 %v1072, 256
      %v1075 = vpop.permute.xlu0 %1074
      %s1077 = sor.u32 256, 8
      %1078 = vbcast.lane.b32.xlu0 %v1072, %s1077
      %v1079 = vpop.permute.xlu0 %1078
      %s1081 = sor.u32 256, 16
      %1082 = vbcast.lane.b32.xlu0 %v1072, %s1081
      %v1083 = vpop.permute.xlu0 %1082
      %s1085 = sor.u32 256, 24
      %1086 = vbcast.lane.b32.xlu0 %v1072, %s1085
      %v1087 = vpop.permute.xlu0 %1086
      %v1088 = vlaneseq
      %v1089 = vshrl.u32 %v1088, 7
      %v1090 = vsub.s32 7, %v1089
      %v1091 = vrot.slane %v497, %v1090
      %1093 = vbcast.lane.b32.xlu0 %v1091, 256
      %v1094 = vpop.permute.xlu0 %1093
      %s1096 = sor.u32 256, 8
      %1097 = vbcast.lane.b32.xlu0 %v1091, %s1096
      %v1098 = vpop.permute.xlu0 %1097
      %s1100 = sor.u32 256, 16
      %1101 = vbcast.lane.b32.xlu0 %v1091, %s1100
      %v1102 = vpop.permute.xlu0 %1101
      %s1104 = sor.u32 256, 24
      %1105 = vbcast.lane.b32.xlu0 %v1091, %s1104
      %v1106 = vpop.permute.xlu0 %1105
      %s1108 = sor.u32 256, 1
      %1109 = vbcast.lane.b32.xlu0 %v502, %s1108
      %v1110 = vpop.permute.xlu0 %1109
      %s1112 = sor.u32 256, 9
      %1113 = vbcast.lane.b32.xlu0 %v502, %s1112
      %v1114 = vpop.permute.xlu0 %1113
      %s1116 = sor.u32 256, 17
      %1117 = vbcast.lane.b32.xlu0 %v502, %s1116
      %v1118 = vpop.permute.xlu0 %1117
      %s1120 = sor.u32 256, 25
      %1121 = vbcast.lane.b32.xlu0 %v502, %s1120
      %v1122 = vpop.permute.xlu0 %1121
      %s1124 = sor.u32 256, 1
      %1125 = vbcast.lane.b32.xlu0 %v521, %s1124
      %v1126 = vpop.permute.xlu0 %1125
      %s1128 = sor.u32 256, 9
      %1129 = vbcast.lane.b32.xlu0 %v521, %s1128
      %v1130 = vpop.permute.xlu0 %1129
      %s1132 = sor.u32 256, 17
      %1133 = vbcast.lane.b32.xlu0 %v521, %s1132
      %v1134 = vpop.permute.xlu0 %1133
      %s1136 = sor.u32 256, 25
      %1137 = vbcast.lane.b32.xlu0 %v521, %s1136
      %v1138 = vpop.permute.xlu0 %1137
      %s1140 = sor.u32 256, 1
      %1141 = vbcast.lane.b32.xlu0 %v540, %s1140
      %v1142 = vpop.permute.xlu0 %1141
      %s1144 = sor.u32 256, 9
      %1145 = vbcast.lane.b32.xlu0 %v540, %s1144
      %v1146 = vpop.permute.xlu0 %1145
      %s1148 = sor.u32 256, 17
      %1149 = vbcast.lane.b32.xlu0 %v540, %s1148
      %v1150 = vpop.permute.xlu0 %1149
      %s1152 = sor.u32 256, 25
      %1153 = vbcast.lane.b32.xlu0 %v540, %s1152
      %v1154 = vpop.permute.xlu0 %1153
      %s1156 = sor.u32 256, 1
      %1157 = vbcast.lane.b32.xlu0 %v559, %s1156
      %v1158 = vpop.permute.xlu0 %1157
      %s1160 = sor.u32 256, 9
      %1161 = vbcast.lane.b32.xlu0 %v559, %s1160
      %v1162 = vpop.permute.xlu0 %1161
      %s1164 = sor.u32 256, 17
      %1165 = vbcast.lane.b32.xlu0 %v559, %s1164
      %v1166 = vpop.permute.xlu0 %1165
      %s1168 = sor.u32 256, 25
      %1169 = vbcast.lane.b32.xlu0 %v559, %s1168
      %v1170 = vpop.permute.xlu0 %1169
      %s1172 = sor.u32 256, 1
      %1173 = vbcast.lane.b32.xlu0 %v578, %s1172
      %v1174 = vpop.permute.xlu0 %1173
      %s1176 = sor.u32 256, 9
      %1177 = vbcast.lane.b32.xlu0 %v578, %s1176
      %v1178 = vpop.permute.xlu0 %1177
      %s1180 = sor.u32 256, 17
      %1181 = vbcast.lane.b32.xlu0 %v578, %s1180
      %v1182 = vpop.permute.xlu0 %1181
      %s1184 = sor.u32 256, 25
      %1185 = vbcast.lane.b32.xlu0 %v578, %s1184
      %v1186 = vpop.permute.xlu0 %1185
      %s1188 = sor.u32 256, 1
      %1189 = vbcast.lane.b32.xlu0 %v597, %s1188
      %v1190 = vpop.permute.xlu0 %1189
      %s1192 = sor.u32 256, 9
      %1193 = vbcast.lane.b32.xlu0 %v597, %s1192
      %v1194 = vpop.permute.xlu0 %1193
      %s1196 = sor.u32 256, 17
      %1197 = vbcast.lane.b32.xlu0 %v597, %s1196
      %v1198 = vpop.permute.xlu0 %1197
      %s1200 = sor.u32 256, 25
      %1201 = vbcast.lane.b32.xlu0 %v597, %s1200
      %v1202 = vpop.permute.xlu0 %1201
      %s1204 = sor.u32 256, 1
      %1205 = vbcast.lane.b32.xlu0 %v616, %s1204
      %v1206 = vpop.permute.xlu0 %1205
      %s1208 = sor.u32 256, 9
      %1209 = vbcast.lane.b32.xlu0 %v616, %s1208
      %v1210 = vpop.permute.xlu0 %1209
      %s1212 = sor.u32 256, 17
      %1213 = vbcast.lane.b32.xlu0 %v616, %s1212
      %v1214 = vpop.permute.xlu0 %1213
      %s1216 = sor.u32 256, 25
      %1217 = vbcast.lane.b32.xlu0 %v616, %s1216
      %v1218 = vpop.permute.xlu0 %1217
      %s1220 = sor.u32 256, 1
      %1221 = vbcast.lane.b32.xlu0 %v635, %s1220
      %v1222 = vpop.permute.xlu0 %1221
      %s1224 = sor.u32 256, 9
      %1225 = vbcast.lane.b32.xlu0 %v635, %s1224
      %v1226 = vpop.permute.xlu0 %1225
      %s1228 = sor.u32 256, 17
      %1229 = vbcast.lane.b32.xlu0 %v635, %s1228
      %v1230 = vpop.permute.xlu0 %1229
      %s1232 = sor.u32 256, 25
      %1233 = vbcast.lane.b32.xlu0 %v635, %s1232
      %v1234 = vpop.permute.xlu0 %1233
      %s1236 = sor.u32 256, 1
      %1237 = vbcast.lane.b32.xlu0 %v654, %s1236
      %v1238 = vpop.permute.xlu0 %1237
      %s1240 = sor.u32 256, 9
      %1241 = vbcast.lane.b32.xlu0 %v654, %s1240
      %v1242 = vpop.permute.xlu0 %1241
      %s1244 = sor.u32 256, 17
      %1245 = vbcast.lane.b32.xlu0 %v654, %s1244
      %v1246 = vpop.permute.xlu0 %1245
      %s1248 = sor.u32 256, 25
      %1249 = vbcast.lane.b32.xlu0 %v654, %s1248
      %v1250 = vpop.permute.xlu0 %1249
      %s1252 = sor.u32 256, 1
      %1253 = vbcast.lane.b32.xlu0 %v673, %s1252
      %v1254 = vpop.permute.xlu0 %1253
      %s1256 = sor.u32 256, 9
      %1257 = vbcast.lane.b32.xlu0 %v673, %s1256
      %v1258 = vpop.permute.xlu0 %1257
      %s1260 = sor.u32 256, 17
      %1261 = vbcast.lane.b32.xlu0 %v673, %s1260
      %v1262 = vpop.permute.xlu0 %1261
      %s1264 = sor.u32 256, 25
      %1265 = vbcast.lane.b32.xlu0 %v673, %s1264
      %v1266 = vpop.permute.xlu0 %1265
      %s1268 = sor.u32 256, 1
      %1269 = vbcast.lane.b32.xlu0 %v692, %s1268
      %v1270 = vpop.permute.xlu0 %1269
      %s1272 = sor.u32 256, 9
      %1273 = vbcast.lane.b32.xlu0 %v692, %s1272
      %v1274 = vpop.permute.xlu0 %1273
      %s1276 = sor.u32 256, 17
      %1277 = vbcast.lane.b32.xlu0 %v692, %s1276
      %v1278 = vpop.permute.xlu0 %1277
      %s1280 = sor.u32 256, 25
      %1281 = vbcast.lane.b32.xlu0 %v692, %s1280
      %v1282 = vpop.permute.xlu0 %1281
      %s1284 = sor.u32 256, 1
      %1285 = vbcast.lane.b32.xlu0 %v711, %s1284
      %v1286 = vpop.permute.xlu0 %1285
      %s1288 = sor.u32 256, 9
      %1289 = vbcast.lane.b32.xlu0 %v711, %s1288
      %v1290 = vpop.permute.xlu0 %1289
      %s1292 = sor.u32 256, 17
      %1293 = vbcast.lane.b32.xlu0 %v711, %s1292
      %v1294 = vpop.permute.xlu0 %1293
      %s1296 = sor.u32 256, 25
      %1297 = vbcast.lane.b32.xlu0 %v711, %s1296
      %v1298 = vpop.permute.xlu0 %1297
      %s1300 = sor.u32 256, 1
      %1301 = vbcast.lane.b32.xlu0 %v730, %s1300
      %v1302 = vpop.permute.xlu0 %1301
      %s1304 = sor.u32 256, 9
      %1305 = vbcast.lane.b32.xlu0 %v730, %s1304
      %v1306 = vpop.permute.xlu0 %1305
      %s1308 = sor.u32 256, 17
      %1309 = vbcast.lane.b32.xlu0 %v730, %s1308
      %v1310 = vpop.permute.xlu0 %1309
      %s1312 = sor.u32 256, 25
      %1313 = vbcast.lane.b32.xlu0 %v730, %s1312
      %v1314 = vpop.permute.xlu0 %1313
      %s1316 = sor.u32 256, 1
      %1317 = vbcast.lane.b32.xlu0 %v749, %s1316
      %v1318 = vpop.permute.xlu0 %1317
      %s1320 = sor.u32 256, 9
      %1321 = vbcast.lane.b32.xlu0 %v749, %s1320
      %v1322 = vpop.permute.xlu0 %1321
      %s1324 = sor.u32 256, 17
      %1325 = vbcast.lane.b32.xlu0 %v749, %s1324
      %v1326 = vpop.permute.xlu0 %1325
      %s1328 = sor.u32 256, 25
      %1329 = vbcast.lane.b32.xlu0 %v749, %s1328
      %v1330 = vpop.permute.xlu0 %1329
      %s1332 = sor.u32 256, 1
      %1333 = vbcast.lane.b32.xlu0 %v768, %s1332
      %v1334 = vpop.permute.xlu0 %1333
      %s1336 = sor.u32 256, 9
      %1337 = vbcast.lane.b32.xlu0 %v768, %s1336
      %v1338 = vpop.permute.xlu0 %1337
      %s1340 = sor.u32 256, 17
      %1341 = vbcast.lane.b32.xlu0 %v768, %s1340
      %v1342 = vpop.permute.xlu0 %1341
      %s1344 = sor.u32 256, 25
      %1345 = vbcast.lane.b32.xlu0 %v768, %s1344
      %v1346 = vpop.permute.xlu0 %1345
      %s1348 = sor.u32 256, 1
      %1349 = vbcast.lane.b32.xlu0 %v787, %s1348
      %v1350 = vpop.permute.xlu0 %1349
      %s1352 = sor.u32 256, 9
      %1353 = vbcast.lane.b32.xlu0 %v787, %s1352
      %v1354 = vpop.permute.xlu0 %1353
      %s1356 = sor.u32 256, 17
      %1357 = vbcast.lane.b32.xlu0 %v787, %s1356
      %v1358 = vpop.permute.xlu0 %1357
      %s1360 = sor.u32 256, 25
      %1361 = vbcast.lane.b32.xlu0 %v787, %s1360
      %v1362 = vpop.permute.xlu0 %1361
      %s1364 = sor.u32 256, 1
      %1365 = vbcast.lane.b32.xlu0 %v806, %s1364
      %v1366 = vpop.permute.xlu0 %1365
      %s1368 = sor.u32 256, 9
      %1369 = vbcast.lane.b32.xlu0 %v806, %s1368
      %v1370 = vpop.permute.xlu0 %1369
      %s1372 = sor.u32 256, 17
      %1373 = vbcast.lane.b32.xlu0 %v806, %s1372
      %v1374 = vpop.permute.xlu0 %1373
      %s1376 = sor.u32 256, 25
      %1377 = vbcast.lane.b32.xlu0 %v806, %s1376
      %v1378 = vpop.permute.xlu0 %1377
      %s1380 = sor.u32 256, 1
      %1381 = vbcast.lane.b32.xlu0 %v825, %s1380
      %v1382 = vpop.permute.xlu0 %1381
      %s1384 = sor.u32 256, 9
      %1385 = vbcast.lane.b32.xlu0 %v825, %s1384
      %v1386 = vpop.permute.xlu0 %1385
      %s1388 = sor.u32 256, 17
      %1389 = vbcast.lane.b32.xlu0 %v825, %s1388
      %v1390 = vpop.permute.xlu0 %1389
      %s1392 = sor.u32 256, 25
      %1393 = vbcast.lane.b32.xlu0 %v825, %s1392
      %v1394 = vpop.permute.xlu0 %1393
      %s1396 = sor.u32 256, 1
      %1397 = vbcast.lane.b32.xlu0 %v844, %s1396
      %v1398 = vpop.permute.xlu0 %1397
      %s1400 = sor.u32 256, 9
      %1401 = vbcast.lane.b32.xlu0 %v844, %s1400
      %v1402 = vpop.permute.xlu0 %1401
      %s1404 = sor.u32 256, 17
      %1405 = vbcast.lane.b32.xlu0 %v844, %s1404
      %v1406 = vpop.permute.xlu0 %1405
      %s1408 = sor.u32 256, 25
      %1409 = vbcast.lane.b32.xlu0 %v844, %s1408
      %v1410 = vpop.permute.xlu0 %1409
      %s1412 = sor.u32 256, 1
      %1413 = vbcast.lane.b32.xlu0 %v863, %s1412
      %v1414 = vpop.permute.xlu0 %1413
      %s1416 = sor.u32 256, 9
      %1417 = vbcast.lane.b32.xlu0 %v863, %s1416
      %v1418 = vpop.permute.xlu0 %1417
      %s1420 = sor.u32 256, 17
      %1421 = vbcast.lane.b32.xlu0 %v863, %s1420
      %v1422 = vpop.permute.xlu0 %1421
      %s1424 = sor.u32 256, 25
      %1425 = vbcast.lane.b32.xlu0 %v863, %s1424
      %v1426 = vpop.permute.xlu0 %1425
      %s1428 = sor.u32 256, 1
      %1429 = vbcast.lane.b32.xlu0 %v882, %s1428
      %v1430 = vpop.permute.xlu0 %1429
      %s1432 = sor.u32 256, 9
      %1433 = vbcast.lane.b32.xlu0 %v882, %s1432
      %v1434 = vpop.permute.xlu0 %1433
      %s1436 = sor.u32 256, 17
      %1437 = vbcast.lane.b32.xlu0 %v882, %s1436
      %v1438 = vpop.permute.xlu0 %1437
      %s1440 = sor.u32 256, 25
      %1441 = vbcast.lane.b32.xlu0 %v882, %s1440
      %v1442 = vpop.permute.xlu0 %1441
      %s1444 = sor.u32 256, 1
      %1445 = vbcast.lane.b32.xlu0 %v901, %s1444
      %v1446 = vpop.permute.xlu0 %1445
      %s1448 = sor.u32 256, 9
      %1449 = vbcast.lane.b32.xlu0 %v901, %s1448
      %v1450 = vpop.permute.xlu0 %1449
      %s1452 = sor.u32 256, 17
      %1453 = vbcast.lane.b32.xlu0 %v901, %s1452
      %v1454 = vpop.permute.xlu0 %1453
      %s1456 = sor.u32 256, 25
      %1457 = vbcast.lane.b32.xlu0 %v901, %s1456
      %v1458 = vpop.permute.xlu0 %1457
      %s1460 = sor.u32 256, 1
      %1461 = vbcast.lane.b32.xlu0 %v920, %s1460
      %v1462 = vpop.permute.xlu0 %1461
      %s1464 = sor.u32 256, 9
      %1465 = vbcast.lane.b32.xlu0 %v920, %s1464
      %v1466 = vpop.permute.xlu0 %1465
      %s1468 = sor.u32 256, 17
      %1469 = vbcast.lane.b32.xlu0 %v920, %s1468
      %v1470 = vpop.permute.xlu0 %1469
      %s1472 = sor.u32 256, 25
      %1473 = vbcast.lane.b32.xlu0 %v920, %s1472
      %v1474 = vpop.permute.xlu0 %1473
      %s1476 = sor.u32 256, 1
      %1477 = vbcast.lane.b32.xlu0 %v939, %s1476
      %v1478 = vpop.permute.xlu0 %1477
      %s1480 = sor.u32 256, 9
      %1481 = vbcast.lane.b32.xlu0 %v939, %s1480
      %v1482 = vpop.permute.xlu0 %1481
      %s1484 = sor.u32 256, 17
      %1485 = vbcast.lane.b32.xlu0 %v939, %s1484
      %v1486 = vpop.permute.xlu0 %1485
      %s1488 = sor.u32 256, 25
      %1489 = vbcast.lane.b32.xlu0 %v939, %s1488
      %v1490 = vpop.permute.xlu0 %1489
      %s1492 = sor.u32 256, 1
      %1493 = vbcast.lane.b32.xlu0 %v958, %s1492
      %v1494 = vpop.permute.xlu0 %1493
      %s1496 = sor.u32 256, 9
      %1497 = vbcast.lane.b32.xlu0 %v958, %s1496
      %v1498 = vpop.permute.xlu0 %1497
      %s1500 = sor.u32 256, 17
      %1501 = vbcast.lane.b32.xlu0 %v958, %s1500
      %v1502 = vpop.permute.xlu0 %1501
      %s1504 = sor.u32 256, 25
      %1505 = vbcast.lane.b32.xlu0 %v958, %s1504
      %v1506 = vpop.permute.xlu0 %1505
      %s1508 = sor.u32 256, 1
      %1509 = vbcast.lane.b32.xlu0 %v977, %s1508
      %v1510 = vpop.permute.xlu0 %1509
      %s1512 = sor.u32 256, 9
      %1513 = vbcast.lane.b32.xlu0 %v977, %s1512
      %v1514 = vpop.permute.xlu0 %1513
      %s1516 = sor.u32 256, 17
      %1517 = vbcast.lane.b32.xlu0 %v977, %s1516
      %v1518 = vpop.permute.xlu0 %1517
      %s1520 = sor.u32 256, 25
      %1521 = vbcast.lane.b32.xlu0 %v977, %s1520
      %v1522 = vpop.permute.xlu0 %1521
      %s1524 = sor.u32 256, 1
      %1525 = vbcast.lane.b32.xlu0 %v996, %s1524
      %v1526 = vpop.permute.xlu0 %1525
      %s1528 = sor.u32 256, 9
      %1529 = vbcast.lane.b32.xlu0 %v996, %s1528
      %v1530 = vpop.permute.xlu0 %1529
      %s1532 = sor.u32 256, 17
      %1533 = vbcast.lane.b32.xlu0 %v996, %s1532
      %v1534 = vpop.permute.xlu0 %1533
      %s1536 = sor.u32 256, 25
      %1537 = vbcast.lane.b32.xlu0 %v996, %s1536
      %v1538 = vpop.permute.xlu0 %1537
      %s1540 = sor.u32 256, 1
      %1541 = vbcast.lane.b32.xlu0 %v1015, %s1540
      %v1542 = vpop.permute.xlu0 %1541
      %s1544 = sor.u32 256, 9
      %1545 = vbcast.lane.b32.xlu0 %v1015, %s1544
      %v1546 = vpop.permute.xlu0 %1545
      %s1548 = sor.u32 256, 17
      %1549 = vbcast.lane.b32.xlu0 %v1015, %s1548
      %v1550 = vpop.permute.xlu0 %1549
      %s1552 = sor.u32 256, 25
      %1553 = vbcast.lane.b32.xlu0 %v1015, %s1552
      %v1554 = vpop.permute.xlu0 %1553
      %s1556 = sor.u32 256, 1
      %1557 = vbcast.lane.b32.xlu0 %v1034, %s1556
      %v1558 = vpop.permute.xlu0 %1557
      %s1560 = sor.u32 256, 9
      %1561 = vbcast.lane.b32.xlu0 %v1034, %s1560
      %v1562 = vpop.permute.xlu0 %1561
      %s1564 = sor.u32 256, 17
      %1565 = vbcast.lane.b32.xlu0 %v1034, %s1564
      %v1566 = vpop.permute.xlu0 %1565
      %s1568 = sor.u32 256, 25
      %1569 = vbcast.lane.b32.xlu0 %v1034, %s1568
      %v1570 = vpop.permute.xlu0 %1569
      %s1572 = sor.u32 256, 1
      %1573 = vbcast.lane.b32.xlu0 %v1053, %s1572
      %v1574 = vpop.permute.xlu0 %1573
      %s1576 = sor.u32 256, 9
      %1577 = vbcast.lane.b32.xlu0 %v1053, %s1576
      %v1578 = vpop.permute.xlu0 %1577
      %s1580 = sor.u32 256, 17
      %1581 = vbcast.lane.b32.xlu0 %v1053, %s1580
      %v1582 = vpop.permute.xlu0 %1581
      %s1584 = sor.u32 256, 25
      %1585 = vbcast.lane.b32.xlu0 %v1053, %s1584
      %v1586 = vpop.permute.xlu0 %1585
      %s1588 = sor.u32 256, 1
      %1589 = vbcast.lane.b32.xlu0 %v1072, %s1588
      %v1590 = vpop.permute.xlu0 %1589
      %s1592 = sor.u32 256, 9
      %1593 = vbcast.lane.b32.xlu0 %v1072, %s1592
      %v1594 = vpop.permute.xlu0 %1593
      %s1596 = sor.u32 256, 17
      %1597 = vbcast.lane.b32.xlu0 %v1072, %s1596
      %v1598 = vpop.permute.xlu0 %1597
      %s1600 = sor.u32 256, 25
      %1601 = vbcast.lane.b32.xlu0 %v1072, %s1600
      %v1602 = vpop.permute.xlu0 %1601
      %s1604 = sor.u32 256, 1
      %1605 = vbcast.lane.b32.xlu0 %v1091, %s1604
      %v1606 = vpop.permute.xlu0 %1605
      %s1608 = sor.u32 256, 9
      %1609 = vbcast.lane.b32.xlu0 %v1091, %s1608
      %v1610 = vpop.permute.xlu0 %1609
      %s1612 = sor.u32 256, 17
      %1613 = vbcast.lane.b32.xlu0 %v1091, %s1612
      %v1614 = vpop.permute.xlu0 %1613
      %s1616 = sor.u32 256, 25
      %1617 = vbcast.lane.b32.xlu0 %v1091, %s1616
      %v1618 = vpop.permute.xlu0 %1617
      %s1620 = sor.u32 256, 2
      %1621 = vbcast.lane.b32.xlu0 %v502, %s1620
      %v1622 = vpop.permute.xlu0 %1621
      %s1624 = sor.u32 256, 10
      %1625 = vbcast.lane.b32.xlu0 %v502, %s1624
      %v1626 = vpop.permute.xlu0 %1625
      %s1628 = sor.u32 256, 18
      %1629 = vbcast.lane.b32.xlu0 %v502, %s1628
      %v1630 = vpop.permute.xlu0 %1629
      %s1632 = sor.u32 256, 26
      %1633 = vbcast.lane.b32.xlu0 %v502, %s1632
      %v1634 = vpop.permute.xlu0 %1633
      %s1636 = sor.u32 256, 2
      %1637 = vbcast.lane.b32.xlu0 %v521, %s1636
      %v1638 = vpop.permute.xlu0 %1637
      %s1640 = sor.u32 256, 10
      %1641 = vbcast.lane.b32.xlu0 %v521, %s1640
      %v1642 = vpop.permute.xlu0 %1641
      %s1644 = sor.u32 256, 18
      %1645 = vbcast.lane.b32.xlu0 %v521, %s1644
      %v1646 = vpop.permute.xlu0 %1645
      %s1648 = sor.u32 256, 26
      %1649 = vbcast.lane.b32.xlu0 %v521, %s1648
      %v1650 = vpop.permute.xlu0 %1649
      %s1652 = sor.u32 256, 2
      %1653 = vbcast.lane.b32.xlu0 %v540, %s1652
      %v1654 = vpop.permute.xlu0 %1653
      %s1656 = sor.u32 256, 10
      %1657 = vbcast.lane.b32.xlu0 %v540, %s1656
      %v1658 = vpop.permute.xlu0 %1657
      %s1660 = sor.u32 256, 18
      %1661 = vbcast.lane.b32.xlu0 %v540, %s1660
      %v1662 = vpop.permute.xlu0 %1661
      %s1664 = sor.u32 256, 26
      %1665 = vbcast.lane.b32.xlu0 %v540, %s1664
      %v1666 = vpop.permute.xlu0 %1665
      %s1668 = sor.u32 256, 2
      %1669 = vbcast.lane.b32.xlu0 %v559, %s1668
      %v1670 = vpop.permute.xlu0 %1669
      %s1672 = sor.u32 256, 10
      %1673 = vbcast.lane.b32.xlu0 %v559, %s1672
      %v1674 = vpop.permute.xlu0 %1673
      %s1676 = sor.u32 256, 18
      %1677 = vbcast.lane.b32.xlu0 %v559, %s1676
      %v1678 = vpop.permute.xlu0 %1677
      %s1680 = sor.u32 256, 26
      %1681 = vbcast.lane.b32.xlu0 %v559, %s1680
      %v1682 = vpop.permute.xlu0 %1681
      %s1684 = sor.u32 256, 2
      %1685 = vbcast.lane.b32.xlu0 %v578, %s1684
      %v1686 = vpop.permute.xlu0 %1685
      %s1688 = sor.u32 256, 10
      %1689 = vbcast.lane.b32.xlu0 %v578, %s1688
      %v1690 = vpop.permute.xlu0 %1689
      %s1692 = sor.u32 256, 18
      %1693 = vbcast.lane.b32.xlu0 %v578, %s1692
      %v1694 = vpop.permute.xlu0 %1693
      %s1696 = sor.u32 256, 26
      %1697 = vbcast.lane.b32.xlu0 %v578, %s1696
      %v1698 = vpop.permute.xlu0 %1697
      %s1700 = sor.u32 256, 2
      %1701 = vbcast.lane.b32.xlu0 %v597, %s1700
      %v1702 = vpop.permute.xlu0 %1701
      %s1704 = sor.u32 256, 10
      %1705 = vbcast.lane.b32.xlu0 %v597, %s1704
      %v1706 = vpop.permute.xlu0 %1705
      %s1708 = sor.u32 256, 18
      %1709 = vbcast.lane.b32.xlu0 %v597, %s1708
      %v1710 = vpop.permute.xlu0 %1709
      %s1712 = sor.u32 256, 26
      %1713 = vbcast.lane.b32.xlu0 %v597, %s1712
      %v1714 = vpop.permute.xlu0 %1713
      %s1716 = sor.u32 256, 2
      %1717 = vbcast.lane.b32.xlu0 %v616, %s1716
      %v1718 = vpop.permute.xlu0 %1717
      %s1720 = sor.u32 256, 10
      %1721 = vbcast.lane.b32.xlu0 %v616, %s1720
      %v1722 = vpop.permute.xlu0 %1721
      %s1724 = sor.u32 256, 18
      %1725 = vbcast.lane.b32.xlu0 %v616, %s1724
      %v1726 = vpop.permute.xlu0 %1725
      %s1728 = sor.u32 256, 26
      %1729 = vbcast.lane.b32.xlu0 %v616, %s1728
      %v1730 = vpop.permute.xlu0 %1729
      %s1732 = sor.u32 256, 2
      %1733 = vbcast.lane.b32.xlu0 %v635, %s1732
      %v1734 = vpop.permute.xlu0 %1733
      %s1736 = sor.u32 256, 10
      %1737 = vbcast.lane.b32.xlu0 %v635, %s1736
      %v1738 = vpop.permute.xlu0 %1737
      %s1740 = sor.u32 256, 18
      %1741 = vbcast.lane.b32.xlu0 %v635, %s1740
      %v1742 = vpop.permute.xlu0 %1741
      %s1744 = sor.u32 256, 26
      %1745 = vbcast.lane.b32.xlu0 %v635, %s1744
      %v1746 = vpop.permute.xlu0 %1745
      %s1748 = sor.u32 256, 2
      %1749 = vbcast.lane.b32.xlu0 %v654, %s1748
      %v1750 = vpop.permute.xlu0 %1749
      %s1752 = sor.u32 256, 10
      %1753 = vbcast.lane.b32.xlu0 %v654, %s1752
      %v1754 = vpop.permute.xlu0 %1753
      %s1756 = sor.u32 256, 18
      %1757 = vbcast.lane.b32.xlu0 %v654, %s1756
      %v1758 = vpop.permute.xlu0 %1757
      %s1760 = sor.u32 256, 26
      %1761 = vbcast.lane.b32.xlu0 %v654, %s1760
      %v1762 = vpop.permute.xlu0 %1761
      %s1764 = sor.u32 256, 2
      %1765 = vbcast.lane.b32.xlu0 %v673, %s1764
      %v1766 = vpop.permute.xlu0 %1765
      %s1768 = sor.u32 256, 10
      %1769 = vbcast.lane.b32.xlu0 %v673, %s1768
      %v1770 = vpop.permute.xlu0 %1769
      %s1772 = sor.u32 256, 18
      %1773 = vbcast.lane.b32.xlu0 %v673, %s1772
      %v1774 = vpop.permute.xlu0 %1773
      %s1776 = sor.u32 256, 26
      %1777 = vbcast.lane.b32.xlu0 %v673, %s1776
      %v1778 = vpop.permute.xlu0 %1777
      %s1780 = sor.u32 256, 2
      %1781 = vbcast.lane.b32.xlu0 %v692, %s1780
      %v1782 = vpop.permute.xlu0 %1781
      %s1784 = sor.u32 256, 10
      %1785 = vbcast.lane.b32.xlu0 %v692, %s1784
      %v1786 = vpop.permute.xlu0 %1785
      %s1788 = sor.u32 256, 18
      %1789 = vbcast.lane.b32.xlu0 %v692, %s1788
      %v1790 = vpop.permute.xlu0 %1789
      %s1792 = sor.u32 256, 26
      %1793 = vbcast.lane.b32.xlu0 %v692, %s1792
      %v1794 = vpop.permute.xlu0 %1793
      %s1796 = sor.u32 256, 2
      %1797 = vbcast.lane.b32.xlu0 %v711, %s1796
      %v1798 = vpop.permute.xlu0 %1797
      %s1800 = sor.u32 256, 10
      %1801 = vbcast.lane.b32.xlu0 %v711, %s1800
      %v1802 = vpop.permute.xlu0 %1801
      %s1804 = sor.u32 256, 18
      %1805 = vbcast.lane.b32.xlu0 %v711, %s1804
      %v1806 = vpop.permute.xlu0 %1805
      %s1808 = sor.u32 256, 26
      %1809 = vbcast.lane.b32.xlu0 %v711, %s1808
      %v1810 = vpop.permute.xlu0 %1809
      %s1812 = sor.u32 256, 2
      %1813 = vbcast.lane.b32.xlu0 %v730, %s1812
      %v1814 = vpop.permute.xlu0 %1813
      %s1816 = sor.u32 256, 10
      %1817 = vbcast.lane.b32.xlu0 %v730, %s1816
      %v1818 = vpop.permute.xlu0 %1817
      %s1820 = sor.u32 256, 18
      %1821 = vbcast.lane.b32.xlu0 %v730, %s1820
      %v1822 = vpop.permute.xlu0 %1821
      %s1824 = sor.u32 256, 26
      %1825 = vbcast.lane.b32.xlu0 %v730, %s1824
      %v1826 = vpop.permute.xlu0 %1825
      %s1828 = sor.u32 256, 2
      %1829 = vbcast.lane.b32.xlu0 %v749, %s1828
      %v1830 = vpop.permute.xlu0 %1829
      %s1832 = sor.u32 256, 10
      %1833 = vbcast.lane.b32.xlu0 %v749, %s1832
      %v1834 = vpop.permute.xlu0 %1833
      %s1836 = sor.u32 256, 18
      %1837 = vbcast.lane.b32.xlu0 %v749, %s1836
      %v1838 = vpop.permute.xlu0 %1837
      %s1840 = sor.u32 256, 26
      %1841 = vbcast.lane.b32.xlu0 %v749, %s1840
      %v1842 = vpop.permute.xlu0 %1841
      %s1844 = sor.u32 256, 2
      %1845 = vbcast.lane.b32.xlu0 %v768, %s1844
      %v1846 = vpop.permute.xlu0 %1845
      %s1848 = sor.u32 256, 10
      %1849 = vbcast.lane.b32.xlu0 %v768, %s1848
      %v1850 = vpop.permute.xlu0 %1849
      %s1852 = sor.u32 256, 18
      %1853 = vbcast.lane.b32.xlu0 %v768, %s1852
      %v1854 = vpop.permute.xlu0 %1853
      %s1856 = sor.u32 256, 26
      %1857 = vbcast.lane.b32.xlu0 %v768, %s1856
      %v1858 = vpop.permute.xlu0 %1857
      %s1860 = sor.u32 256, 2
      %1861 = vbcast.lane.b32.xlu0 %v787, %s1860
      %v1862 = vpop.permute.xlu0 %1861
      %s1864 = sor.u32 256, 10
      %1865 = vbcast.lane.b32.xlu0 %v787, %s1864
      %v1866 = vpop.permute.xlu0 %1865
      %s1868 = sor.u32 256, 18
      %1869 = vbcast.lane.b32.xlu0 %v787, %s1868
      %v1870 = vpop.permute.xlu0 %1869
      %s1872 = sor.u32 256, 26
      %1873 = vbcast.lane.b32.xlu0 %v787, %s1872
      %v1874 = vpop.permute.xlu0 %1873
      %s1876 = sor.u32 256, 2
      %1877 = vbcast.lane.b32.xlu0 %v806, %s1876
      %v1878 = vpop.permute.xlu0 %1877
      %s1880 = sor.u32 256, 10
      %1881 = vbcast.lane.b32.xlu0 %v806, %s1880
      %v1882 = vpop.permute.xlu0 %1881
      %s1884 = sor.u32 256, 18
      %1885 = vbcast.lane.b32.xlu0 %v806, %s1884
      %v1886 = vpop.permute.xlu0 %1885
      %s1888 = sor.u32 256, 26
      %1889 = vbcast.lane.b32.xlu0 %v806, %s1888
      %v1890 = vpop.permute.xlu0 %1889
      %s1892 = sor.u32 256, 2
      %1893 = vbcast.lane.b32.xlu0 %v825, %s1892
      %v1894 = vpop.permute.xlu0 %1893
      %s1896 = sor.u32 256, 10
      %1897 = vbcast.lane.b32.xlu0 %v825, %s1896
      %v1898 = vpop.permute.xlu0 %1897
      %s1900 = sor.u32 256, 18
      %1901 = vbcast.lane.b32.xlu0 %v825, %s1900
      %v1902 = vpop.permute.xlu0 %1901
      %s1904 = sor.u32 256, 26
      %1905 = vbcast.lane.b32.xlu0 %v825, %s1904
      %v1906 = vpop.permute.xlu0 %1905
      %s1908 = sor.u32 256, 2
      %1909 = vbcast.lane.b32.xlu0 %v844, %s1908
      %v1910 = vpop.permute.xlu0 %1909
      %s1912 = sor.u32 256, 10
      %1913 = vbcast.lane.b32.xlu0 %v844, %s1912
      %v1914 = vpop.permute.xlu0 %1913
      %s1916 = sor.u32 256, 18
      %1917 = vbcast.lane.b32.xlu0 %v844, %s1916
      %v1918 = vpop.permute.xlu0 %1917
      %s1920 = sor.u32 256, 26
      %1921 = vbcast.lane.b32.xlu0 %v844, %s1920
      %v1922 = vpop.permute.xlu0 %1921
      %s1924 = sor.u32 256, 2
      %1925 = vbcast.lane.b32.xlu0 %v863, %s1924
      %v1926 = vpop.permute.xlu0 %1925
      %s1928 = sor.u32 256, 10
      %1929 = vbcast.lane.b32.xlu0 %v863, %s1928
      %v1930 = vpop.permute.xlu0 %1929
      %s1932 = sor.u32 256, 18
      %1933 = vbcast.lane.b32.xlu0 %v863, %s1932
      %v1934 = vpop.permute.xlu0 %1933
      %s1936 = sor.u32 256, 26
      %1937 = vbcast.lane.b32.xlu0 %v863, %s1936
      %v1938 = vpop.permute.xlu0 %1937
      %s1940 = sor.u32 256, 2
      %1941 = vbcast.lane.b32.xlu0 %v882, %s1940
      %v1942 = vpop.permute.xlu0 %1941
      %s1944 = sor.u32 256, 10
      %1945 = vbcast.lane.b32.xlu0 %v882, %s1944
      %v1946 = vpop.permute.xlu0 %1945
      %s1948 = sor.u32 256, 18
      %1949 = vbcast.lane.b32.xlu0 %v882, %s1948
      %v1950 = vpop.permute.xlu0 %1949
      %s1952 = sor.u32 256, 26
      %1953 = vbcast.lane.b32.xlu0 %v882, %s1952
      %v1954 = vpop.permute.xlu0 %1953
      %s1956 = sor.u32 256, 2
      %1957 = vbcast.lane.b32.xlu0 %v901, %s1956
      %v1958 = vpop.permute.xlu0 %1957
      %s1960 = sor.u32 256, 10
      %1961 = vbcast.lane.b32.xlu0 %v901, %s1960
      %v1962 = vpop.permute.xlu0 %1961
      %s1964 = sor.u32 256, 18
      %1965 = vbcast.lane.b32.xlu0 %v901, %s1964
      %v1966 = vpop.permute.xlu0 %1965
      %s1968 = sor.u32 256, 26
      %1969 = vbcast.lane.b32.xlu0 %v901, %s1968
      %v1970 = vpop.permute.xlu0 %1969
      %s1972 = sor.u32 256, 2
      %1973 = vbcast.lane.b32.xlu0 %v920, %s1972
      %v1974 = vpop.permute.xlu0 %1973
      %s1976 = sor.u32 256, 10
      %1977 = vbcast.lane.b32.xlu0 %v920, %s1976
      %v1978 = vpop.permute.xlu0 %1977
      %s1980 = sor.u32 256, 18
      %1981 = vbcast.lane.b32.xlu0 %v920, %s1980
      %v1982 = vpop.permute.xlu0 %1981
      %s1984 = sor.u32 256, 26
      %1985 = vbcast.lane.b32.xlu0 %v920, %s1984
      %v1986 = vpop.permute.xlu0 %1985
      %s1988 = sor.u32 256, 2
      %1989 = vbcast.lane.b32.xlu0 %v939, %s1988
      %v1990 = vpop.permute.xlu0 %1989
      %s1992 = sor.u32 256, 10
      %1993 = vbcast.lane.b32.xlu0 %v939, %s1992
      %v1994 = vpop.permute.xlu0 %1993
      %s1996 = sor.u32 256, 18
      %1997 = vbcast.lane.b32.xlu0 %v939, %s1996
      %v1998 = vpop.permute.xlu0 %1997
      %s2000 = sor.u32 256, 26
      %2001 = vbcast.lane.b32.xlu0 %v939, %s2000
      %v2002 = vpop.permute.xlu0 %2001
      %s2004 = sor.u32 256, 2
      %2005 = vbcast.lane.b32.xlu0 %v958, %s2004
      %v2006 = vpop.permute.xlu0 %2005
      %s2008 = sor.u32 256, 10
      %2009 = vbcast.lane.b32.xlu0 %v958, %s2008
      %v2010 = vpop.permute.xlu0 %2009
      %s2012 = sor.u32 256, 18
      %2013 = vbcast.lane.b32.xlu0 %v958, %s2012
      %v2014 = vpop.permute.xlu0 %2013
      %s2016 = sor.u32 256, 26
      %2017 = vbcast.lane.b32.xlu0 %v958, %s2016
      %v2018 = vpop.permute.xlu0 %2017
      %s2020 = sor.u32 256, 2
      %2021 = vbcast.lane.b32.xlu0 %v977, %s2020
      %v2022 = vpop.permute.xlu0 %2021
      %s2024 = sor.u32 256, 10
      %2025 = vbcast.lane.b32.xlu0 %v977, %s2024
      %v2026 = vpop.permute.xlu0 %2025
      %s2028 = sor.u32 256, 18
      %2029 = vbcast.lane.b32.xlu0 %v977, %s2028
      %v2030 = vpop.permute.xlu0 %2029
      %s2032 = sor.u32 256, 26
      %2033 = vbcast.lane.b32.xlu0 %v977, %s2032
      %v2034 = vpop.permute.xlu0 %2033
      %s2036 = sor.u32 256, 2
      %2037 = vbcast.lane.b32.xlu0 %v996, %s2036
      %v2038 = vpop.permute.xlu0 %2037
      %s2040 = sor.u32 256, 10
      %2041 = vbcast.lane.b32.xlu0 %v996, %s2040
      %v2042 = vpop.permute.xlu0 %2041
      %s2044 = sor.u32 256, 18
      %2045 = vbcast.lane.b32.xlu0 %v996, %s2044
      %v2046 = vpop.permute.xlu0 %2045
      %s2048 = sor.u32 256, 26
      %2049 = vbcast.lane.b32.xlu0 %v996, %s2048
      %v2050 = vpop.permute.xlu0 %2049
      %s2052 = sor.u32 256, 2
      %2053 = vbcast.lane.b32.xlu0 %v1015, %s2052
      %v2054 = vpop.permute.xlu0 %2053
      %s2056 = sor.u32 256, 10
      %2057 = vbcast.lane.b32.xlu0 %v1015, %s2056
      %v2058 = vpop.permute.xlu0 %2057
      %s2060 = sor.u32 256, 18
      %2061 = vbcast.lane.b32.xlu0 %v1015, %s2060
      %v2062 = vpop.permute.xlu0 %2061
      %s2064 = sor.u32 256, 26
      %2065 = vbcast.lane.b32.xlu0 %v1015, %s2064
      %v2066 = vpop.permute.xlu0 %2065
      %s2068 = sor.u32 256, 2
      %2069 = vbcast.lane.b32.xlu0 %v1034, %s2068
      %v2070 = vpop.permute.xlu0 %2069
      %s2072 = sor.u32 256, 10
      %2073 = vbcast.lane.b32.xlu0 %v1034, %s2072
      %v2074 = vpop.permute.xlu0 %2073
      %s2076 = sor.u32 256, 18
      %2077 = vbcast.lane.b32.xlu0 %v1034, %s2076
      %v2078 = vpop.permute.xlu0 %2077
      %s2080 = sor.u32 256, 26
      %2081 = vbcast.lane.b32.xlu0 %v1034, %s2080
      %v2082 = vpop.permute.xlu0 %2081
      %s2084 = sor.u32 256, 2
      %2085 = vbcast.lane.b32.xlu0 %v1053, %s2084
      %v2086 = vpop.permute.xlu0 %2085
      %s2088 = sor.u32 256, 10
      %2089 = vbcast.lane.b32.xlu0 %v1053, %s2088
      %v2090 = vpop.permute.xlu0 %2089
      %s2092 = sor.u32 256, 18
      %2093 = vbcast.lane.b32.xlu0 %v1053, %s2092
      %v2094 = vpop.permute.xlu0 %2093
      %s2096 = sor.u32 256, 26
      %2097 = vbcast.lane.b32.xlu0 %v1053, %s2096
      %v2098 = vpop.permute.xlu0 %2097
      %s2100 = sor.u32 256, 2
      %2101 = vbcast.lane.b32.xlu0 %v1072, %s2100
      %v2102 = vpop.permute.xlu0 %2101
      %s2104 = sor.u32 256, 10
      %2105 = vbcast.lane.b32.xlu0 %v1072, %s2104
      %v2106 = vpop.permute.xlu0 %2105
      %s2108 = sor.u32 256, 18
      %2109 = vbcast.lane.b32.xlu0 %v1072, %s2108
      %v2110 = vpop.permute.xlu0 %2109
      %s2112 = sor.u32 256, 26
      %2113 = vbcast.lane.b32.xlu0 %v1072, %s2112
      %v2114 = vpop.permute.xlu0 %2113
      %s2116 = sor.u32 256, 2
      %2117 = vbcast.lane.b32.xlu0 %v1091, %s2116
      %v2118 = vpop.permute.xlu0 %2117
      %s2120 = sor.u32 256, 10
      %2121 = vbcast.lane.b32.xlu0 %v1091, %s2120
      %v2122 = vpop.permute.xlu0 %2121
      %s2124 = sor.u32 256, 18
      %2125 = vbcast.lane.b32.xlu0 %v1091, %s2124
      %v2126 = vpop.permute.xlu0 %2125
      %s2128 = sor.u32 256, 26
      %2129 = vbcast.lane.b32.xlu0 %v1091, %s2128
      %v2130 = vpop.permute.xlu0 %2129
      %v2131 = vlaneseq
      %v2132 = vshrl.u32 %v2131, 7
      %v2133 = vsub.s32 0, %v2132
      %v2134 = vrot.slane %v498, %v2133
      %2136 = vbcast.lane.b32.xlu0 %v2134, 256
      %v2137 = vpop.permute.xlu0 %2136
      %s2139 = sor.u32 256, 8
      %2140 = vbcast.lane.b32.xlu0 %v2134, %s2139
      %v2141 = vpop.permute.xlu0 %2140
      %s2143 = sor.u32 256, 16
      %2144 = vbcast.lane.b32.xlu0 %v2134, %s2143
      %v2145 = vpop.permute.xlu0 %2144
      %s2147 = sor.u32 256, 24
      %2148 = vbcast.lane.b32.xlu0 %v2134, %s2147
      %v2149 = vpop.permute.xlu0 %2148
      %s2151 = sor.u32 256, 1
      %2152 = vbcast.lane.b32.xlu0 %v2134, %s2151
      %v2153 = vpop.permute.xlu0 %2152
      %s2155 = sor.u32 256, 9
      %2156 = vbcast.lane.b32.xlu0 %v2134, %s2155
      %v2157 = vpop.permute.xlu0 %2156
      %s2159 = sor.u32 256, 17
      %2160 = vbcast.lane.b32.xlu0 %v2134, %s2159
      %v2161 = vpop.permute.xlu0 %2160
      %s2163 = sor.u32 256, 25
      %2164 = vbcast.lane.b32.xlu0 %v2134, %s2163
      %v2165 = vpop.permute.xlu0 %2164
      %s2167 = sor.u32 256, 2
      %2168 = vbcast.lane.b32.xlu0 %v2134, %s2167
      %v2169 = vpop.permute.xlu0 %2168
      %s2171 = sor.u32 256, 10
      %2172 = vbcast.lane.b32.xlu0 %v2134, %s2171
      %v2173 = vpop.permute.xlu0 %2172
      %s2175 = sor.u32 256, 18
      %2176 = vbcast.lane.b32.xlu0 %v2134, %s2175
      %v2177 = vpop.permute.xlu0 %2176
      %s2179 = sor.u32 256, 26
      %2180 = vbcast.lane.b32.xlu0 %v2134, %s2179
      %v2181 = vpop.permute.xlu0 %2180
      %v2182 = vlaneseq
      %v2183 = vshrl.u32 %v2182, 7
      %v2184 = vsub.s32 1, %v2183
      %v2185 = vrot.slane %v498, %v2184
      %2187 = vbcast.lane.b32.xlu0 %v2185, 256
      %v2188 = vpop.permute.xlu0 %2187
      %s2190 = sor.u32 256, 8
      %2191 = vbcast.lane.b32.xlu0 %v2185, %s2190
      %v2192 = vpop.permute.xlu0 %2191
      %s2194 = sor.u32 256, 16
      %2195 = vbcast.lane.b32.xlu0 %v2185, %s2194
      %v2196 = vpop.permute.xlu0 %2195
      %s2198 = sor.u32 256, 24
      %2199 = vbcast.lane.b32.xlu0 %v2185, %s2198
      %v2200 = vpop.permute.xlu0 %2199
      %s2202 = sor.u32 256, 1
      %2203 = vbcast.lane.b32.xlu0 %v2185, %s2202
      %v2204 = vpop.permute.xlu0 %2203
      %s2206 = sor.u32 256, 9
      %2207 = vbcast.lane.b32.xlu0 %v2185, %s2206
      %v2208 = vpop.permute.xlu0 %2207
      %s2210 = sor.u32 256, 17
      %2211 = vbcast.lane.b32.xlu0 %v2185, %s2210
      %v2212 = vpop.permute.xlu0 %2211
      %s2214 = sor.u32 256, 25
      %2215 = vbcast.lane.b32.xlu0 %v2185, %s2214
      %v2216 = vpop.permute.xlu0 %2215
      %s2218 = sor.u32 256, 2
      %2219 = vbcast.lane.b32.xlu0 %v2185, %s2218
      %v2220 = vpop.permute.xlu0 %2219
      %s2222 = sor.u32 256, 10
      %2223 = vbcast.lane.b32.xlu0 %v2185, %s2222
      %v2224 = vpop.permute.xlu0 %2223
      %s2226 = sor.u32 256, 18
      %2227 = vbcast.lane.b32.xlu0 %v2185, %s2226
      %v2228 = vpop.permute.xlu0 %2227
      %s2230 = sor.u32 256, 26
      %2231 = vbcast.lane.b32.xlu0 %v2185, %s2230
      %v2232 = vpop.permute.xlu0 %2231
      %vm2233 = vcmask 7168
      %v2234 = vsel %vm2233, %v505, %v1110
      %v2235 = vsel %vm2233, %v509, %v1114
      %v2236 = vsel %vm2233, %v513, %v1118
      %v2237 = vsel %vm2233, %v517, %v1122
      %v2238 = vsel %vm2233, %v524, %v1126
      %v2239 = vsel %vm2233, %v528, %v1130
      %v2240 = vsel %vm2233, %v532, %v1134
      %v2241 = vsel %vm2233, %v536, %v1138
      %v2242 = vsel %vm2233, %v543, %v1142
      %v2243 = vsel %vm2233, %v547, %v1146
      %v2244 = vsel %vm2233, %v551, %v1150
      %v2245 = vsel %vm2233, %v555, %v1154
      %v2246 = vsel %vm2233, %v562, %v1158
      %v2247 = vsel %vm2233, %v566, %v1162
      %v2248 = vsel %vm2233, %v570, %v1166
      %v2249 = vsel %vm2233, %v574, %v1170
      %v2250 = vsel %vm2233, %v581, %v1174
      %v2251 = vsel %vm2233, %v585, %v1178
      %v2252 = vsel %vm2233, %v589, %v1182
      %v2253 = vsel %vm2233, %v593, %v1186
      %v2254 = vsel %vm2233, %v600, %v1190
      %v2255 = vsel %vm2233, %v604, %v1194
      %v2256 = vsel %vm2233, %v608, %v1198
      %v2257 = vsel %vm2233, %v612, %v1202
      %v2258 = vsel %vm2233, %v619, %v1206
      %v2259 = vsel %vm2233, %v623, %v1210
      %v2260 = vsel %vm2233, %v627, %v1214
      %v2261 = vsel %vm2233, %v631, %v1218
      %v2262 = vsel %vm2233, %v638, %v1222
      %v2263 = vsel %vm2233, %v642, %v1226
      %v2264 = vsel %vm2233, %v646, %v1230
      %v2265 = vsel %vm2233, %v650, %v1234
      %v2266 = vsel %vm2233, %v657, %v1238
      %v2267 = vsel %vm2233, %v661, %v1242
      %v2268 = vsel %vm2233, %v665, %v1246
      %v2269 = vsel %vm2233, %v669, %v1250
      %v2270 = vsel %vm2233, %v676, %v1254
      %v2271 = vsel %vm2233, %v680, %v1258
      %v2272 = vsel %vm2233, %v684, %v1262
      %v2273 = vsel %vm2233, %v688, %v1266
      %v2274 = vsel %vm2233, %v695, %v1270
      %v2275 = vsel %vm2233, %v699, %v1274
      %v2276 = vsel %vm2233, %v703, %v1278
      %v2277 = vsel %vm2233, %v707, %v1282
      %v2278 = vsel %vm2233, %v714, %v1286
      %v2279 = vsel %vm2233, %v718, %v1290
      %v2280 = vsel %vm2233, %v722, %v1294
      %v2281 = vsel %vm2233, %v726, %v1298
      %v2282 = vsel %vm2233, %v733, %v1302
      %v2283 = vsel %vm2233, %v737, %v1306
      %v2284 = vsel %vm2233, %v741, %v1310
      %v2285 = vsel %vm2233, %v745, %v1314
      %v2286 = vsel %vm2233, %v752, %v1318
      %v2287 = vsel %vm2233, %v756, %v1322
      %v2288 = vsel %vm2233, %v760, %v1326
      %v2289 = vsel %vm2233, %v764, %v1330
      %v2290 = vsel %vm2233, %v771, %v1334
      %v2291 = vsel %vm2233, %v775, %v1338
      %v2292 = vsel %vm2233, %v779, %v1342
      %v2293 = vsel %vm2233, %v783, %v1346
      %v2294 = vsel %vm2233, %v790, %v1350
      %v2295 = vsel %vm2233, %v794, %v1354
      %v2296 = vsel %vm2233, %v798, %v1358
      %v2297 = vsel %vm2233, %v802, %v1362
      %v2298 = vsel %vm2233, %v809, %v1366
      %v2299 = vsel %vm2233, %v813, %v1370
      %v2300 = vsel %vm2233, %v817, %v1374
      %v2301 = vsel %vm2233, %v821, %v1378
      %v2302 = vsel %vm2233, %v828, %v1382
      %v2303 = vsel %vm2233, %v832, %v1386
      %v2304 = vsel %vm2233, %v836, %v1390
      %v2305 = vsel %vm2233, %v840, %v1394
      %v2306 = vsel %vm2233, %v847, %v1398
      %v2307 = vsel %vm2233, %v851, %v1402
      %v2308 = vsel %vm2233, %v855, %v1406
      %v2309 = vsel %vm2233, %v859, %v1410
      %v2310 = vsel %vm2233, %v866, %v1414
      %v2311 = vsel %vm2233, %v870, %v1418
      %v2312 = vsel %vm2233, %v874, %v1422
      %v2313 = vsel %vm2233, %v878, %v1426
      %v2314 = vsel %vm2233, %v885, %v1430
      %v2315 = vsel %vm2233, %v889, %v1434
      %v2316 = vsel %vm2233, %v893, %v1438
      %v2317 = vsel %vm2233, %v897, %v1442
      %v2318 = vsel %vm2233, %v904, %v1446
      %v2319 = vsel %vm2233, %v908, %v1450
      %v2320 = vsel %vm2233, %v912, %v1454
      %v2321 = vsel %vm2233, %v916, %v1458
      %v2322 = vsel %vm2233, %v923, %v1462
      %v2323 = vsel %vm2233, %v927, %v1466
      %v2324 = vsel %vm2233, %v931, %v1470
      %v2325 = vsel %vm2233, %v935, %v1474
      %v2326 = vsel %vm2233, %v942, %v1478
      %v2327 = vsel %vm2233, %v946, %v1482
      %v2328 = vsel %vm2233, %v950, %v1486
      %v2329 = vsel %vm2233, %v954, %v1490
      %v2330 = vsel %vm2233, %v961, %v1494
      %v2331 = vsel %vm2233, %v965, %v1498
      %v2332 = vsel %vm2233, %v969, %v1502
      %v2333 = vsel %vm2233, %v973, %v1506
      %v2334 = vsel %vm2233, %v980, %v1510
      %v2335 = vsel %vm2233, %v984, %v1514
      %v2336 = vsel %vm2233, %v988, %v1518
      %v2337 = vsel %vm2233, %v992, %v1522
      %v2338 = vsel %vm2233, %v999, %v1526
      %v2339 = vsel %vm2233, %v1003, %v1530
      %v2340 = vsel %vm2233, %v1007, %v1534
      %v2341 = vsel %vm2233, %v1011, %v1538
      %v2342 = vsel %vm2233, %v1018, %v1542
      %v2343 = vsel %vm2233, %v1022, %v1546
      %v2344 = vsel %vm2233, %v1026, %v1550
      %v2345 = vsel %vm2233, %v1030, %v1554
      %v2346 = vsel %vm2233, %v1037, %v1558
      %v2347 = vsel %vm2233, %v1041, %v1562
      %v2348 = vsel %vm2233, %v1045, %v1566
      %v2349 = vsel %vm2233, %v1049, %v1570
      %v2350 = vsel %vm2233, %v1056, %v1574
      %v2351 = vsel %vm2233, %v1060, %v1578
      %v2352 = vsel %vm2233, %v1064, %v1582
      %v2353 = vsel %vm2233, %v1068, %v1586
      %v2354 = vsel %vm2233, %v1075, %v1590
      %v2355 = vsel %vm2233, %v1079, %v1594
      %v2356 = vsel %vm2233, %v1083, %v1598
      %v2357 = vsel %vm2233, %v1087, %v1602
      %v2358 = vsel %vm2233, %v1094, %v1606
      %v2359 = vsel %vm2233, %v1098, %v1610
      %v2360 = vsel %vm2233, %v1102, %v1614
      %v2361 = vsel %vm2233, %v1106, %v1618
      %vm2362 = vcmask 15360
      %v2363 = vsel %vm2362, %v2234, %v1622
      %v2364 = vsel %vm2362, %v2235, %v1626
      %v2365 = vsel %vm2362, %v2236, %v1630
      %v2366 = vsel %vm2362, %v2237, %v1634
      %v2367 = vsel %vm2362, %v2238, %v1638
      %v2368 = vsel %vm2362, %v2239, %v1642
      %v2369 = vsel %vm2362, %v2240, %v1646
      %v2370 = vsel %vm2362, %v2241, %v1650
      %v2371 = vsel %vm2362, %v2242, %v1654
      %v2372 = vsel %vm2362, %v2243, %v1658
      %v2373 = vsel %vm2362, %v2244, %v1662
      %v2374 = vsel %vm2362, %v2245, %v1666
      %v2375 = vsel %vm2362, %v2246, %v1670
      %v2376 = vsel %vm2362, %v2247, %v1674
      %v2377 = vsel %vm2362, %v2248, %v1678
      %v2378 = vsel %vm2362, %v2249, %v1682
      %v2379 = vsel %vm2362, %v2250, %v1686
      %v2380 = vsel %vm2362, %v2251, %v1690
      %v2381 = vsel %vm2362, %v2252, %v1694
      %v2382 = vsel %vm2362, %v2253, %v1698
      %v2383 = vsel %vm2362, %v2254, %v1702
      %v2384 = vsel %vm2362, %v2255, %v1706
      %v2385 = vsel %vm2362, %v2256, %v1710
      %v2386 = vsel %vm2362, %v2257, %v1714
      %v2387 = vsel %vm2362, %v2258, %v1718
      %v2388 = vsel %vm2362, %v2259, %v1722
      %v2389 = vsel %vm2362, %v2260, %v1726
      %v2390 = vsel %vm2362, %v2261, %v1730
      %v2391 = vsel %vm2362, %v2262, %v1734
      %v2392 = vsel %vm2362, %v2263, %v1738
      %v2393 = vsel %vm2362, %v2264, %v1742
      %v2394 = vsel %vm2362, %v2265, %v1746
      %v2395 = vsel %vm2362, %v2266, %v1750
      %v2396 = vsel %vm2362, %v2267, %v1754
      %v2397 = vsel %vm2362, %v2268, %v1758
      %v2398 = vsel %vm2362, %v2269, %v1762
      %v2399 = vsel %vm2362, %v2270, %v1766
      %v2400 = vsel %vm2362, %v2271, %v1770
      %v2401 = vsel %vm2362, %v2272, %v1774
      %v2402 = vsel %vm2362, %v2273, %v1778
      %v2403 = vsel %vm2362, %v2274, %v1782
      %v2404 = vsel %vm2362, %v2275, %v1786
      %v2405 = vsel %vm2362, %v2276, %v1790
      %v2406 = vsel %vm2362, %v2277, %v1794
      %v2407 = vsel %vm2362, %v2278, %v1798
      %v2408 = vsel %vm2362, %v2279, %v1802
      %v2409 = vsel %vm2362, %v2280, %v1806
      %v2410 = vsel %vm2362, %v2281, %v1810
      %v2411 = vsel %vm2362, %v2282, %v1814
      %v2412 = vsel %vm2362, %v2283, %v1818
      %v2413 = vsel %vm2362, %v2284, %v1822
      %v2414 = vsel %vm2362, %v2285, %v1826
      %v2415 = vsel %vm2362, %v2286, %v1830
      %v2416 = vsel %vm2362, %v2287, %v1834
      %v2417 = vsel %vm2362, %v2288, %v1838
      %v2418 = vsel %vm2362, %v2289, %v1842
      %v2419 = vsel %vm2362, %v2290, %v1846
      %v2420 = vsel %vm2362, %v2291, %v1850
      %v2421 = vsel %vm2362, %v2292, %v1854
      %v2422 = vsel %vm2362, %v2293, %v1858
      %v2423 = vsel %vm2362, %v2294, %v1862
      %v2424 = vsel %vm2362, %v2295, %v1866
      %v2425 = vsel %vm2362, %v2296, %v1870
      %v2426 = vsel %vm2362, %v2297, %v1874
      %v2427 = vsel %vm2362, %v2298, %v1878
      %v2428 = vsel %vm2362, %v2299, %v1882
      %v2429 = vsel %vm2362, %v2300, %v1886
      %v2430 = vsel %vm2362, %v2301, %v1890
      %v2431 = vsel %vm2362, %v2302, %v1894
      %v2432 = vsel %vm2362, %v2303, %v1898
      %v2433 = vsel %vm2362, %v2304, %v1902
      %v2434 = vsel %vm2362, %v2305, %v1906
      %v2435 = vsel %vm2362, %v2306, %v1910
      %v2436 = vsel %vm2362, %v2307, %v1914
      %v2437 = vsel %vm2362, %v2308, %v1918
      %v2438 = vsel %vm2362, %v2309, %v1922
      %v2439 = vsel %vm2362, %v2310, %v1926
      %v2440 = vsel %vm2362, %v2311, %v1930
      %v2441 = vsel %vm2362, %v2312, %v1934
      %v2442 = vsel %vm2362, %v2313, %v1938
      %v2443 = vsel %vm2362, %v2314, %v1942
      %v2444 = vsel %vm2362, %v2315, %v1946
      %v2445 = vsel %vm2362, %v2316, %v1950
      %v2446 = vsel %vm2362, %v2317, %v1954
      %v2447 = vsel %vm2362, %v2318, %v1958
      %v2448 = vsel %vm2362, %v2319, %v1962
      %v2449 = vsel %vm2362, %v2320, %v1966
      %v2450 = vsel %vm2362, %v2321, %v1970
      %v2451 = vsel %vm2362, %v2322, %v1974
      %v2452 = vsel %vm2362, %v2323, %v1978
      %v2453 = vsel %vm2362, %v2324, %v1982
      %v2454 = vsel %vm2362, %v2325, %v1986
      %v2455 = vsel %vm2362, %v2326, %v1990
      %v2456 = vsel %vm2362, %v2327, %v1994
      %v2457 = vsel %vm2362, %v2328, %v1998
      %v2458 = vsel %vm2362, %v2329, %v2002
      %v2459 = vsel %vm2362, %v2330, %v2006
      %v2460 = vsel %vm2362, %v2331, %v2010
      %v2461 = vsel %vm2362, %v2332, %v2014
      %v2462 = vsel %vm2362, %v2333, %v2018
      %v2463 = vsel %vm2362, %v2334, %v2022
      %v2464 = vsel %vm2362, %v2335, %v2026
      %v2465 = vsel %vm2362, %v2336, %v2030
      %v2466 = vsel %vm2362, %v2337, %v2034
      %v2467 = vsel %vm2362, %v2338, %v2038
      %v2468 = vsel %vm2362, %v2339, %v2042
      %v2469 = vsel %vm2362, %v2340, %v2046
      %v2470 = vsel %vm2362, %v2341, %v2050
      %v2471 = vsel %vm2362, %v2342, %v2054
      %v2472 = vsel %vm2362, %v2343, %v2058
      %v2473 = vsel %vm2362, %v2344, %v2062
      %v2474 = vsel %vm2362, %v2345, %v2066
      %v2475 = vsel %vm2362, %v2346, %v2070
      %v2476 = vsel %vm2362, %v2347, %v2074
      %v2477 = vsel %vm2362, %v2348, %v2078
      %v2478 = vsel %vm2362, %v2349, %v2082
      %v2479 = vsel %vm2362, %v2350, %v2086
      %v2480 = vsel %vm2362, %v2351, %v2090
      %v2481 = vsel %vm2362, %v2352, %v2094
      %v2482 = vsel %vm2362, %v2353, %v2098
      %v2483 = vsel %vm2362, %v2354, %v2102
      %v2484 = vsel %vm2362, %v2355, %v2106
      %v2485 = vsel %vm2362, %v2356, %v2110
      %v2486 = vsel %vm2362, %v2357, %v2114
      %v2487 = vsel %vm2362, %v2358, %v2118
      %v2488 = vsel %vm2362, %v2359, %v2122
      %v2489 = vsel %vm2362, %v2360, %v2126
      %v2490 = vsel %vm2362, %v2361, %v2130
      %vm2491 = vcmask 23552
      %v2492 = vsel %vm2491, %v2363, %v524
      %v2493 = vsel %vm2491, %v2364, %v528
      %v2494 = vsel %vm2491, %v2365, %v532
      %v2495 = vsel %vm2491, %v2366, %v536
      %v2496 = vsel %vm2491, %v2367, %v543
      %v2497 = vsel %vm2491, %v2368, %v547
      %v2498 = vsel %vm2491, %v2369, %v551
      %v2499 = vsel %vm2491, %v2370, %v555
      %v2500 = vsel %vm2491, %v2371, %v562
      %v2501 = vsel %vm2491, %v2372, %v566
      %v2502 = vsel %vm2491, %v2373, %v570
      %v2503 = vsel %vm2491, %v2374, %v574
      %v2504 = vsel %vm2491, %v2375, %v581
      %v2505 = vsel %vm2491, %v2376, %v585
      %v2506 = vsel %vm2491, %v2377, %v589
      %v2507 = vsel %vm2491, %v2378, %v593
      %v2508 = vsel %vm2491, %v2379, %v600
      %v2509 = vsel %vm2491, %v2380, %v604
      %v2510 = vsel %vm2491, %v2381, %v608
      %v2511 = vsel %vm2491, %v2382, %v612
      %v2512 = vsel %vm2491, %v2383, %v619
      %v2513 = vsel %vm2491, %v2384, %v623
      %v2514 = vsel %vm2491, %v2385, %v627
      %v2515 = vsel %vm2491, %v2386, %v631
      %v2516 = vsel %vm2491, %v2387, %v638
      %v2517 = vsel %vm2491, %v2388, %v642
      %v2518 = vsel %vm2491, %v2389, %v646
      %v2519 = vsel %vm2491, %v2390, %v650
      %v2520 = vsel %vm2491, %v2391, %v657
      %v2521 = vsel %vm2491, %v2392, %v661
      %v2522 = vsel %vm2491, %v2393, %v665
      %v2523 = vsel %vm2491, %v2394, %v669
      %v2524 = vsel %vm2491, %v2395, %v676
      %v2525 = vsel %vm2491, %v2396, %v680
      %v2526 = vsel %vm2491, %v2397, %v684
      %v2527 = vsel %vm2491, %v2398, %v688
      %v2528 = vsel %vm2491, %v2399, %v695
      %v2529 = vsel %vm2491, %v2400, %v699
      %v2530 = vsel %vm2491, %v2401, %v703
      %v2531 = vsel %vm2491, %v2402, %v707
      %v2532 = vsel %vm2491, %v2403, %v714
      %v2533 = vsel %vm2491, %v2404, %v718
      %v2534 = vsel %vm2491, %v2405, %v722
      %v2535 = vsel %vm2491, %v2406, %v726
      %v2536 = vsel %vm2491, %v2407, %v733
      %v2537 = vsel %vm2491, %v2408, %v737
      %v2538 = vsel %vm2491, %v2409, %v741
      %v2539 = vsel %vm2491, %v2410, %v745
      %v2540 = vsel %vm2491, %v2411, %v752
      %v2541 = vsel %vm2491, %v2412, %v756
      %v2542 = vsel %vm2491, %v2413, %v760
      %v2543 = vsel %vm2491, %v2414, %v764
      %v2544 = vsel %vm2491, %v2415, %v771
      %v2545 = vsel %vm2491, %v2416, %v775
      %v2546 = vsel %vm2491, %v2417, %v779
      %v2547 = vsel %vm2491, %v2418, %v783
      %v2548 = vsel %vm2491, %v2419, %v790
      %v2549 = vsel %vm2491, %v2420, %v794
      %v2550 = vsel %vm2491, %v2421, %v798
      %v2551 = vsel %vm2491, %v2422, %v802
      %v2552 = vsel %vm2491, %v2423, %v809
      %v2553 = vsel %vm2491, %v2424, %v813
      %v2554 = vsel %vm2491, %v2425, %v817
      %v2555 = vsel %vm2491, %v2426, %v821
      %v2556 = vsel %vm2491, %v2427, %v828
      %v2557 = vsel %vm2491, %v2428, %v832
      %v2558 = vsel %vm2491, %v2429, %v836
      %v2559 = vsel %vm2491, %v2430, %v840
      %v2560 = vsel %vm2491, %v2431, %v847
      %v2561 = vsel %vm2491, %v2432, %v851
      %v2562 = vsel %vm2491, %v2433, %v855
      %v2563 = vsel %vm2491, %v2434, %v859
      %v2564 = vsel %vm2491, %v2435, %v866
      %v2565 = vsel %vm2491, %v2436, %v870
      %v2566 = vsel %vm2491, %v2437, %v874
      %v2567 = vsel %vm2491, %v2438, %v878
      %v2568 = vsel %vm2491, %v2439, %v885
      %v2569 = vsel %vm2491, %v2440, %v889
      %v2570 = vsel %vm2491, %v2441, %v893
      %v2571 = vsel %vm2491, %v2442, %v897
      %v2572 = vsel %vm2491, %v2443, %v904
      %v2573 = vsel %vm2491, %v2444, %v908
      %v2574 = vsel %vm2491, %v2445, %v912
      %v2575 = vsel %vm2491, %v2446, %v916
      %v2576 = vsel %vm2491, %v2447, %v923
      %v2577 = vsel %vm2491, %v2448, %v927
      %v2578 = vsel %vm2491, %v2449, %v931
      %v2579 = vsel %vm2491, %v2450, %v935
      %v2580 = vsel %vm2491, %v2451, %v942
      %v2581 = vsel %vm2491, %v2452, %v946
      %v2582 = vsel %vm2491, %v2453, %v950
      %v2583 = vsel %vm2491, %v2454, %v954
      %v2584 = vsel %vm2491, %v2455, %v961
      %v2585 = vsel %vm2491, %v2456, %v965
      %v2586 = vsel %vm2491, %v2457, %v969
      %v2587 = vsel %vm2491, %v2458, %v973
      %v2588 = vsel %vm2491, %v2459, %v980
      %v2589 = vsel %vm2491, %v2460, %v984
      %v2590 = vsel %vm2491, %v2461, %v988
      %v2591 = vsel %vm2491, %v2462, %v992
      %v2592 = vsel %vm2491, %v2463, %v999
      %v2593 = vsel %vm2491, %v2464, %v1003
      %v2594 = vsel %vm2491, %v2465, %v1007
      %v2595 = vsel %vm2491, %v2466, %v1011
      %v2596 = vsel %vm2491, %v2467, %v1018
      %v2597 = vsel %vm2491, %v2468, %v1022
      %v2598 = vsel %vm2491, %v2469, %v1026
      %v2599 = vsel %vm2491, %v2470, %v1030
      %v2600 = vsel %vm2491, %v2471, %v1037
      %v2601 = vsel %vm2491, %v2472, %v1041
      %v2602 = vsel %vm2491, %v2473, %v1045
      %v2603 = vsel %vm2491, %v2474, %v1049
      %v2604 = vsel %vm2491, %v2475, %v1056
      %v2605 = vsel %vm2491, %v2476, %v1060
      %v2606 = vsel %vm2491, %v2477, %v1064
      %v2607 = vsel %vm2491, %v2478, %v1068
      %v2608 = vsel %vm2491, %v2479, %v1075
      %v2609 = vsel %vm2491, %v2480, %v1079
      %v2610 = vsel %vm2491, %v2481, %v1083
      %v2611 = vsel %vm2491, %v2482, %v1087
      %v2612 = vsel %vm2491, %v2483, %v1094
      %v2613 = vsel %vm2491, %v2484, %v1098
      %v2614 = vsel %vm2491, %v2485, %v1102
      %v2615 = vsel %vm2491, %v2486, %v1106
      %v2616 = vsel %vm2491, %v2487, %v2137
      %v2617 = vsel %vm2491, %v2488, %v2141
      %v2618 = vsel %vm2491, %v2489, %v2145
      %v2619 = vsel %vm2491, %v2490, %v2149
      %vm2620 = vcmask 31744
      %v2621 = vsel %vm2620, %v2492, %v1126
      %v2622 = vsel %vm2620, %v2493, %v1130
      %v2623 = vsel %vm2620, %v2494, %v1134
      %v2624 = vsel %vm2620, %v2495, %v1138
      %v2625 = vsel %vm2620, %v2496, %v1142
      %v2626 = vsel %vm2620, %v2497, %v1146
      %v2627 = vsel %vm2620, %v2498, %v1150
      %v2628 = vsel %vm2620, %v2499, %v1154
      %v2629 = vsel %vm2620, %v2500, %v1158
      %v2630 = vsel %vm2620, %v2501, %v1162
      %v2631 = vsel %vm2620, %v2502, %v1166
      %v2632 = vsel %vm2620, %v2503, %v1170
      %v2633 = vsel %vm2620, %v2504, %v1174
      %v2634 = vsel %vm2620, %v2505, %v1178
      %v2635 = vsel %vm2620, %v2506, %v1182
      %v2636 = vsel %vm2620, %v2507, %v1186
      %v2637 = vsel %vm2620, %v2508, %v1190
      %v2638 = vsel %vm2620, %v2509, %v1194
      %v2639 = vsel %vm2620, %v2510, %v1198
      %v2640 = vsel %vm2620, %v2511, %v1202
      %v2641 = vsel %vm2620, %v2512, %v1206
      %v2642 = vsel %vm2620, %v2513, %v1210
      %v2643 = vsel %vm2620, %v2514, %v1214
      %v2644 = vsel %vm2620, %v2515, %v1218
      %v2645 = vsel %vm2620, %v2516, %v1222
      %v2646 = vsel %vm2620, %v2517, %v1226
      %v2647 = vsel %vm2620, %v2518, %v1230
      %v2648 = vsel %vm2620, %v2519, %v1234
      %v2649 = vsel %vm2620, %v2520, %v1238
      %v2650 = vsel %vm2620, %v2521, %v1242
      %v2651 = vsel %vm2620, %v2522, %v1246
      %v2652 = vsel %vm2620, %v2523, %v1250
      %v2653 = vsel %vm2620, %v2524, %v1254
      %v2654 = vsel %vm2620, %v2525, %v1258
      %v2655 = vsel %vm2620, %v2526, %v1262
      %v2656 = vsel %vm2620, %v2527, %v1266
      %v2657 = vsel %vm2620, %v2528, %v1270
      %v2658 = vsel %vm2620, %v2529, %v1274
      %v2659 = vsel %vm2620, %v2530, %v1278
      %v2660 = vsel %vm2620, %v2531, %v1282
      %v2661 = vsel %vm2620, %v2532, %v1286
      %v2662 = vsel %vm2620, %v2533, %v1290
      %v2663 = vsel %vm2620, %v2534, %v1294
      %v2664 = vsel %vm2620, %v2535, %v1298
      %v2665 = vsel %vm2620, %v2536, %v1302
      %v2666 = vsel %vm2620, %v2537, %v1306
      %v2667 = vsel %vm2620, %v2538, %v1310
      %v2668 = vsel %vm2620, %v2539, %v1314
      %v2669 = vsel %vm2620, %v2540, %v1318
      %v2670 = vsel %vm2620, %v2541, %v1322
      %v2671 = vsel %vm2620, %v2542, %v1326
      %v2672 = vsel %vm2620, %v2543, %v1330
      %v2673 = vsel %vm2620, %v2544, %v1334
      %v2674 = vsel %vm2620, %v2545, %v1338
      %v2675 = vsel %vm2620, %v2546, %v1342
      %v2676 = vsel %vm2620, %v2547, %v1346
      %v2677 = vsel %vm2620, %v2548, %v1350
      %v2678 = vsel %vm2620, %v2549, %v1354
      %v2679 = vsel %vm2620, %v2550, %v1358
      %v2680 = vsel %vm2620, %v2551, %v1362
      %v2681 = vsel %vm2620, %v2552, %v1366
      %v2682 = vsel %vm2620, %v2553, %v1370
      %v2683 = vsel %vm2620, %v2554, %v1374
      %v2684 = vsel %vm2620, %v2555, %v1378
      %v2685 = vsel %vm2620, %v2556, %v1382
      %v2686 = vsel %vm2620, %v2557, %v1386
      %v2687 = vsel %vm2620, %v2558, %v1390
      %v2688 = vsel %vm2620, %v2559, %v1394
      %v2689 = vsel %vm2620, %v2560, %v1398
      %v2690 = vsel %vm2620, %v2561, %v1402
      %v2691 = vsel %vm2620, %v2562, %v1406
      %v2692 = vsel %vm2620, %v2563, %v1410
      %v2693 = vsel %vm2620, %v2564, %v1414
      %v2694 = vsel %vm2620, %v2565, %v1418
      %v2695 = vsel %vm2620, %v2566, %v1422
      %v2696 = vsel %vm2620, %v2567, %v1426
      %v2697 = vsel %vm2620, %v2568, %v1430
      %v2698 = vsel %vm2620, %v2569, %v1434
      %v2699 = vsel %vm2620, %v2570, %v1438
      %v2700 = vsel %vm2620, %v2571, %v1442
      %v2701 = vsel %vm2620, %v2572, %v1446
      %v2702 = vsel %vm2620, %v2573, %v1450
      %v2703 = vsel %vm2620, %v2574, %v1454
      %v2704 = vsel %vm2620, %v2575, %v1458
      %v2705 = vsel %vm2620, %v2576, %v1462
      %v2706 = vsel %vm2620, %v2577, %v1466
      %v2707 = vsel %vm2620, %v2578, %v1470
      %v2708 = vsel %vm2620, %v2579, %v1474
      %v2709 = vsel %vm2620, %v2580, %v1478
      %v2710 = vsel %vm2620, %v2581, %v1482
      %v2711 = vsel %vm2620, %v2582, %v1486
      %v2712 = vsel %vm2620, %v2583, %v1490
      %v2713 = vsel %vm2620, %v2584, %v1494
      %v2714 = vsel %vm2620, %v2585, %v1498
      %v2715 = vsel %vm2620, %v2586, %v1502
      %v2716 = vsel %vm2620, %v2587, %v1506
      %v2717 = vsel %vm2620, %v2588, %v1510
      %v2718 = vsel %vm2620, %v2589, %v1514
      %v2719 = vsel %vm2620, %v2590, %v1518
      %v2720 = vsel %vm2620, %v2591, %v1522
      %v2721 = vsel %vm2620, %v2592, %v1526
      %v2722 = vsel %vm2620, %v2593, %v1530
      %v2723 = vsel %vm2620, %v2594, %v1534
      %v2724 = vsel %vm2620, %v2595, %v1538
      %v2725 = vsel %vm2620, %v2596, %v1542
      %v2726 = vsel %vm2620, %v2597, %v1546
      %v2727 = vsel %vm2620, %v2598, %v1550
      %v2728 = vsel %vm2620, %v2599, %v1554
      %v2729 = vsel %vm2620, %v2600, %v1558
      %v2730 = vsel %vm2620, %v2601, %v1562
      %v2731 = vsel %vm2620, %v2602, %v1566
      %v2732 = vsel %vm2620, %v2603, %v1570
      %v2733 = vsel %vm2620, %v2604, %v1574
      %v2734 = vsel %vm2620, %v2605, %v1578
      %v2735 = vsel %vm2620, %v2606, %v1582
      %v2736 = vsel %vm2620, %v2607, %v1586
      %v2737 = vsel %vm2620, %v2608, %v1590
      %v2738 = vsel %vm2620, %v2609, %v1594
      %v2739 = vsel %vm2620, %v2610, %v1598
      %v2740 = vsel %vm2620, %v2611, %v1602
      %v2741 = vsel %vm2620, %v2612, %v1606
      %v2742 = vsel %vm2620, %v2613, %v1610
      %v2743 = vsel %vm2620, %v2614, %v1614
      %v2744 = vsel %vm2620, %v2615, %v1618
      %v2745 = vsel %vm2620, %v2616, %v2153
      %v2746 = vsel %vm2620, %v2617, %v2157
      %v2747 = vsel %vm2620, %v2618, %v2161
      %v2748 = vsel %vm2620, %v2619, %v2165
      %vm2749 = vcmask 39936
      %v2750 = vsel %vm2749, %v2621, %v1638
      %v2751 = vsel %vm2749, %v2622, %v1642
      %v2752 = vsel %vm2749, %v2623, %v1646
      %v2753 = vsel %vm2749, %v2624, %v1650
      %v2754 = vsel %vm2749, %v2625, %v1654
      %v2755 = vsel %vm2749, %v2626, %v1658
      %v2756 = vsel %vm2749, %v2627, %v1662
      %v2757 = vsel %vm2749, %v2628, %v1666
      %v2758 = vsel %vm2749, %v2629, %v1670
      %v2759 = vsel %vm2749, %v2630, %v1674
      %v2760 = vsel %vm2749, %v2631, %v1678
      %v2761 = vsel %vm2749, %v2632, %v1682
      %v2762 = vsel %vm2749, %v2633, %v1686
      %v2763 = vsel %vm2749, %v2634, %v1690
      %v2764 = vsel %vm2749, %v2635, %v1694
      %v2765 = vsel %vm2749, %v2636, %v1698
      %v2766 = vsel %vm2749, %v2637, %v1702
      %v2767 = vsel %vm2749, %v2638, %v1706
      %v2768 = vsel %vm2749, %v2639, %v1710
      %v2769 = vsel %vm2749, %v2640, %v1714
      %v2770 = vsel %vm2749, %v2641, %v1718
      %v2771 = vsel %vm2749, %v2642, %v1722
      %v2772 = vsel %vm2749, %v2643, %v1726
      %v2773 = vsel %vm2749, %v2644, %v1730
      %v2774 = vsel %vm2749, %v2645, %v1734
      %v2775 = vsel %vm2749, %v2646, %v1738
      %v2776 = vsel %vm2749, %v2647, %v1742
      %v2777 = vsel %vm2749, %v2648, %v1746
      %v2778 = vsel %vm2749, %v2649, %v1750
      %v2779 = vsel %vm2749, %v2650, %v1754
      %v2780 = vsel %vm2749, %v2651, %v1758
      %v2781 = vsel %vm2749, %v2652, %v1762
      %v2782 = vsel %vm2749, %v2653, %v1766
      %v2783 = vsel %vm2749, %v2654, %v1770
      %v2784 = vsel %vm2749, %v2655, %v1774
      %v2785 = vsel %vm2749, %v2656, %v1778
      %v2786 = vsel %vm2749, %v2657, %v1782
      %v2787 = vsel %vm2749, %v2658, %v1786
      %v2788 = vsel %vm2749, %v2659, %v1790
      %v2789 = vsel %vm2749, %v2660, %v1794
      %v2790 = vsel %vm2749, %v2661, %v1798
      %v2791 = vsel %vm2749, %v2662, %v1802
      %v2792 = vsel %vm2749, %v2663, %v1806
      %v2793 = vsel %vm2749, %v2664, %v1810
      %v2794 = vsel %vm2749, %v2665, %v1814
      %v2795 = vsel %vm2749, %v2666, %v1818
      %v2796 = vsel %vm2749, %v2667, %v1822
      %v2797 = vsel %vm2749, %v2668, %v1826
      %v2798 = vsel %vm2749, %v2669, %v1830
      %v2799 = vsel %vm2749, %v2670, %v1834
      %v2800 = vsel %vm2749, %v2671, %v1838
      %v2801 = vsel %vm2749, %v2672, %v1842
      %v2802 = vsel %vm2749, %v2673, %v1846
      %v2803 = vsel %vm2749, %v2674, %v1850
      %v2804 = vsel %vm2749, %v2675, %v1854
      %v2805 = vsel %vm2749, %v2676, %v1858
      %v2806 = vsel %vm2749, %v2677, %v1862
      %v2807 = vsel %vm2749, %v2678, %v1866
      %v2808 = vsel %vm2749, %v2679, %v1870
      %v2809 = vsel %vm2749, %v2680, %v1874
      %v2810 = vsel %vm2749, %v2681, %v1878
      %v2811 = vsel %vm2749, %v2682, %v1882
      %v2812 = vsel %vm2749, %v2683, %v1886
      %v2813 = vsel %vm2749, %v2684, %v1890
      %v2814 = vsel %vm2749, %v2685, %v1894
      %v2815 = vsel %vm2749, %v2686, %v1898
      %v2816 = vsel %vm2749, %v2687, %v1902
      %v2817 = vsel %vm2749, %v2688, %v1906
      %v2818 = vsel %vm2749, %v2689, %v1910
      %v2819 = vsel %vm2749, %v2690, %v1914
      %v2820 = vsel %vm2749, %v2691, %v1918
      %v2821 = vsel %vm2749, %v2692, %v1922
      %v2822 = vsel %vm2749, %v2693, %v1926
      %v2823 = vsel %vm2749, %v2694, %v1930
      %v2824 = vsel %vm2749, %v2695, %v1934
      %v2825 = vsel %vm2749, %v2696, %v1938
      %v2826 = vsel %vm2749, %v2697, %v1942
      %v2827 = vsel %vm2749, %v2698, %v1946
      %v2828 = vsel %vm2749, %v2699, %v1950
      %v2829 = vsel %vm2749, %v2700, %v1954
      %v2830 = vsel %vm2749, %v2701, %v1958
      %v2831 = vsel %vm2749, %v2702, %v1962
      %v2832 = vsel %vm2749, %v2703, %v1966
      %v2833 = vsel %vm2749, %v2704, %v1970
      %v2834 = vsel %vm2749, %v2705, %v1974
      %v2835 = vsel %vm2749, %v2706, %v1978
      %v2836 = vsel %vm2749, %v2707, %v1982
      %v2837 = vsel %vm2749, %v2708, %v1986
      %v2838 = vsel %vm2749, %v2709, %v1990
      %v2839 = vsel %vm2749, %v2710, %v1994
      %v2840 = vsel %vm2749, %v2711, %v1998
      %v2841 = vsel %vm2749, %v2712, %v2002
      %v2842 = vsel %vm2749, %v2713, %v2006
      %v2843 = vsel %vm2749, %v2714, %v2010
      %v2844 = vsel %vm2749, %v2715, %v2014
      %v2845 = vsel %vm2749, %v2716, %v2018
      %v2846 = vsel %vm2749, %v2717, %v2022
      %v2847 = vsel %vm2749, %v2718, %v2026
      %v2848 = vsel %vm2749, %v2719, %v2030
      %v2849 = vsel %vm2749, %v2720, %v2034
      %v2850 = vsel %vm2749, %v2721, %v2038
      %v2851 = vsel %vm2749, %v2722, %v2042
      %v2852 = vsel %vm2749, %v2723, %v2046
      %v2853 = vsel %vm2749, %v2724, %v2050
      %v2854 = vsel %vm2749, %v2725, %v2054
      %v2855 = vsel %vm2749, %v2726, %v2058
      %v2856 = vsel %vm2749, %v2727, %v2062
      %v2857 = vsel %vm2749, %v2728, %v2066
      %v2858 = vsel %vm2749, %v2729, %v2070
      %v2859 = vsel %vm2749, %v2730, %v2074
      %v2860 = vsel %vm2749, %v2731, %v2078
      %v2861 = vsel %vm2749, %v2732, %v2082
      %v2862 = vsel %vm2749, %v2733, %v2086
      %v2863 = vsel %vm2749, %v2734, %v2090
      %v2864 = vsel %vm2749, %v2735, %v2094
      %v2865 = vsel %vm2749, %v2736, %v2098
      %v2866 = vsel %vm2749, %v2737, %v2102
      %v2867 = vsel %vm2749, %v2738, %v2106
      %v2868 = vsel %vm2749, %v2739, %v2110
      %v2869 = vsel %vm2749, %v2740, %v2114
      %v2870 = vsel %vm2749, %v2741, %v2118
      %v2871 = vsel %vm2749, %v2742, %v2122
      %v2872 = vsel %vm2749, %v2743, %v2126
      %v2873 = vsel %vm2749, %v2744, %v2130
      %v2874 = vsel %vm2749, %v2745, %v2169
      %v2875 = vsel %vm2749, %v2746, %v2173
      %v2876 = vsel %vm2749, %v2747, %v2177
      %v2877 = vsel %vm2749, %v2748, %v2181
      %vm2878 = vcmask 48128
      %v2879 = vsel %vm2878, %v2750, %v543
      %v2880 = vsel %vm2878, %v2751, %v547
      %v2881 = vsel %vm2878, %v2752, %v551
      %v2882 = vsel %vm2878, %v2753, %v555
      %v2883 = vsel %vm2878, %v2754, %v562
      %v2884 = vsel %vm2878, %v2755, %v566
      %v2885 = vsel %vm2878, %v2756, %v570
      %v2886 = vsel %vm2878, %v2757, %v574
      %v2887 = vsel %vm2878, %v2758, %v581
      %v2888 = vsel %vm2878, %v2759, %v585
      %v2889 = vsel %vm2878, %v2760, %v589
      %v2890 = vsel %vm2878, %v2761, %v593
      %v2891 = vsel %vm2878, %v2762, %v600
      %v2892 = vsel %vm2878, %v2763, %v604
      %v2893 = vsel %vm2878, %v2764, %v608
      %v2894 = vsel %vm2878, %v2765, %v612
      %v2895 = vsel %vm2878, %v2766, %v619
      %v2896 = vsel %vm2878, %v2767, %v623
      %v2897 = vsel %vm2878, %v2768, %v627
      %v2898 = vsel %vm2878, %v2769, %v631
      %v2899 = vsel %vm2878, %v2770, %v638
      %v2900 = vsel %vm2878, %v2771, %v642
      %v2901 = vsel %vm2878, %v2772, %v646
      %v2902 = vsel %vm2878, %v2773, %v650
      %v2903 = vsel %vm2878, %v2774, %v657
      %v2904 = vsel %vm2878, %v2775, %v661
      %v2905 = vsel %vm2878, %v2776, %v665
      %v2906 = vsel %vm2878, %v2777, %v669
      %v2907 = vsel %vm2878, %v2778, %v676
      %v2908 = vsel %vm2878, %v2779, %v680
      %v2909 = vsel %vm2878, %v2780, %v684
      %v2910 = vsel %vm2878, %v2781, %v688
      %v2911 = vsel %vm2878, %v2782, %v695
      %v2912 = vsel %vm2878, %v2783, %v699
      %v2913 = vsel %vm2878, %v2784, %v703
      %v2914 = vsel %vm2878, %v2785, %v707
      %v2915 = vsel %vm2878, %v2786, %v714
      %v2916 = vsel %vm2878, %v2787, %v718
      %v2917 = vsel %vm2878, %v2788, %v722
      %v2918 = vsel %vm2878, %v2789, %v726
      %v2919 = vsel %vm2878, %v2790, %v733
      %v2920 = vsel %vm2878, %v2791, %v737
      %v2921 = vsel %vm2878, %v2792, %v741
      %v2922 = vsel %vm2878, %v2793, %v745
      %v2923 = vsel %vm2878, %v2794, %v752
      %v2924 = vsel %vm2878, %v2795, %v756
      %v2925 = vsel %vm2878, %v2796, %v760
      %v2926 = vsel %vm2878, %v2797, %v764
      %v2927 = vsel %vm2878, %v2798, %v771
      %v2928 = vsel %vm2878, %v2799, %v775
      %v2929 = vsel %vm2878, %v2800, %v779
      %v2930 = vsel %vm2878, %v2801, %v783
      %v2931 = vsel %vm2878, %v2802, %v790
      %v2932 = vsel %vm2878, %v2803, %v794
      %v2933 = vsel %vm2878, %v2804, %v798
      %v2934 = vsel %vm2878, %v2805, %v802
      %v2935 = vsel %vm2878, %v2806, %v809
      %v2936 = vsel %vm2878, %v2807, %v813
      %v2937 = vsel %vm2878, %v2808, %v817
      %v2938 = vsel %vm2878, %v2809, %v821
      %v2939 = vsel %vm2878, %v2810, %v828
      %v2940 = vsel %vm2878, %v2811, %v832
      %v2941 = vsel %vm2878, %v2812, %v836
      %v2942 = vsel %vm2878, %v2813, %v840
      %v2943 = vsel %vm2878, %v2814, %v847
      %v2944 = vsel %vm2878, %v2815, %v851
      %v2945 = vsel %vm2878, %v2816, %v855
      %v2946 = vsel %vm2878, %v2817, %v859
      %v2947 = vsel %vm2878, %v2818, %v866
      %v2948 = vsel %vm2878, %v2819, %v870
      %v2949 = vsel %vm2878, %v2820, %v874
      %v2950 = vsel %vm2878, %v2821, %v878
      %v2951 = vsel %vm2878, %v2822, %v885
      %v2952 = vsel %vm2878, %v2823, %v889
      %v2953 = vsel %vm2878, %v2824, %v893
      %v2954 = vsel %vm2878, %v2825, %v897
      %v2955 = vsel %vm2878, %v2826, %v904
      %v2956 = vsel %vm2878, %v2827, %v908
      %v2957 = vsel %vm2878, %v2828, %v912
      %v2958 = vsel %vm2878, %v2829, %v916
      %v2959 = vsel %vm2878, %v2830, %v923
      %v2960 = vsel %vm2878, %v2831, %v927
      %v2961 = vsel %vm2878, %v2832, %v931
      %v2962 = vsel %vm2878, %v2833, %v935
      %v2963 = vsel %vm2878, %v2834, %v942
      %v2964 = vsel %vm2878, %v2835, %v946
      %v2965 = vsel %vm2878, %v2836, %v950
      %v2966 = vsel %vm2878, %v2837, %v954
      %v2967 = vsel %vm2878, %v2838, %v961
      %v2968 = vsel %vm2878, %v2839, %v965
      %v2969 = vsel %vm2878, %v2840, %v969
      %v2970 = vsel %vm2878, %v2841, %v973
      %v2971 = vsel %vm2878, %v2842, %v980
      %v2972 = vsel %vm2878, %v2843, %v984
      %v2973 = vsel %vm2878, %v2844, %v988
      %v2974 = vsel %vm2878, %v2845, %v992
      %v2975 = vsel %vm2878, %v2846, %v999
      %v2976 = vsel %vm2878, %v2847, %v1003
      %v2977 = vsel %vm2878, %v2848, %v1007
      %v2978 = vsel %vm2878, %v2849, %v1011
      %v2979 = vsel %vm2878, %v2850, %v1018
      %v2980 = vsel %vm2878, %v2851, %v1022
      %v2981 = vsel %vm2878, %v2852, %v1026
      %v2982 = vsel %vm2878, %v2853, %v1030
      %v2983 = vsel %vm2878, %v2854, %v1037
      %v2984 = vsel %vm2878, %v2855, %v1041
      %v2985 = vsel %vm2878, %v2856, %v1045
      %v2986 = vsel %vm2878, %v2857, %v1049
      %v2987 = vsel %vm2878, %v2858, %v1056
      %v2988 = vsel %vm2878, %v2859, %v1060
      %v2989 = vsel %vm2878, %v2860, %v1064
      %v2990 = vsel %vm2878, %v2861, %v1068
      %v2991 = vsel %vm2878, %v2862, %v1075
      %v2992 = vsel %vm2878, %v2863, %v1079
      %v2993 = vsel %vm2878, %v2864, %v1083
      %v2994 = vsel %vm2878, %v2865, %v1087
      %v2995 = vsel %vm2878, %v2866, %v1094
      %v2996 = vsel %vm2878, %v2867, %v1098
      %v2997 = vsel %vm2878, %v2868, %v1102
      %v2998 = vsel %vm2878, %v2869, %v1106
      %v2999 = vsel %vm2878, %v2870, %v2137
      %v3000 = vsel %vm2878, %v2871, %v2141
      %v3001 = vsel %vm2878, %v2872, %v2145
      %v3002 = vsel %vm2878, %v2873, %v2149
      %v3003 = vsel %vm2878, %v2874, %v2188
      %v3004 = vsel %vm2878, %v2875, %v2192
      %v3005 = vsel %vm2878, %v2876, %v2196
      %v3006 = vsel %vm2878, %v2877, %v2200
      %vm3007 = vcmask 56320
      %v3008 = vsel %vm3007, %v2879, %v1142
      %v3009 = vsel %vm3007, %v2880, %v1146
      %v3010 = vsel %vm3007, %v2881, %v1150
      %v3011 = vsel %vm3007, %v2882, %v1154
      %v3012 = vsel %vm3007, %v2883, %v1158
      %v3013 = vsel %vm3007, %v2884, %v1162
      %v3014 = vsel %vm3007, %v2885, %v1166
      %v3015 = vsel %vm3007, %v2886, %v1170
      %v3016 = vsel %vm3007, %v2887, %v1174
      %v3017 = vsel %vm3007, %v2888, %v1178
      %v3018 = vsel %vm3007, %v2889, %v1182
      %v3019 = vsel %vm3007, %v2890, %v1186
      %v3020 = vsel %vm3007, %v2891, %v1190
      %v3021 = vsel %vm3007, %v2892, %v1194
      %v3022 = vsel %vm3007, %v2893, %v1198
      %v3023 = vsel %vm3007, %v2894, %v1202
      %v3024 = vsel %vm3007, %v2895, %v1206
      %v3025 = vsel %vm3007, %v2896, %v1210
      %v3026 = vsel %vm3007, %v2897, %v1214
      %v3027 = vsel %vm3007, %v2898, %v1218
      %v3028 = vsel %vm3007, %v2899, %v1222
      %v3029 = vsel %vm3007, %v2900, %v1226
      %v3030 = vsel %vm3007, %v2901, %v1230
      %v3031 = vsel %vm3007, %v2902, %v1234
      %v3032 = vsel %vm3007, %v2903, %v1238
      %v3033 = vsel %vm3007, %v2904, %v1242
      %v3034 = vsel %vm3007, %v2905, %v1246
      %v3035 = vsel %vm3007, %v2906, %v1250
      %v3036 = vsel %vm3007, %v2907, %v1254
      %v3037 = vsel %vm3007, %v2908, %v1258
      %v3038 = vsel %vm3007, %v2909, %v1262
      %v3039 = vsel %vm3007, %v2910, %v1266
      %v3040 = vsel %vm3007, %v2911, %v1270
      %v3041 = vsel %vm3007, %v2912, %v1274
      %v3042 = vsel %vm3007, %v2913, %v1278
      %v3043 = vsel %vm3007, %v2914, %v1282
      %v3044 = vsel %vm3007, %v2915, %v1286
      %v3045 = vsel %vm3007, %v2916, %v1290
      %v3046 = vsel %vm3007, %v2917, %v1294
      %v3047 = vsel %vm3007, %v2918, %v1298
      %v3048 = vsel %vm3007, %v2919, %v1302
      %v3049 = vsel %vm3007, %v2920, %v1306
      %v3050 = vsel %vm3007, %v2921, %v1310
      %v3051 = vsel %vm3007, %v2922, %v1314
      %v3052 = vsel %vm3007, %v2923, %v1318
      %v3053 = vsel %vm3007, %v2924, %v1322
      %v3054 = vsel %vm3007, %v2925, %v1326
      %v3055 = vsel %vm3007, %v2926, %v1330
      %v3056 = vsel %vm3007, %v2927, %v1334
      %v3057 = vsel %vm3007, %v2928, %v1338
      %v3058 = vsel %vm3007, %v2929, %v1342
      %v3059 = vsel %vm3007, %v2930, %v1346
      %v3060 = vsel %vm3007, %v2931, %v1350
      %v3061 = vsel %vm3007, %v2932, %v1354
      %v3062 = vsel %vm3007, %v2933, %v1358
      %v3063 = vsel %vm3007, %v2934, %v1362
      %v3064 = vsel %vm3007, %v2935, %v1366
      %v3065 = vsel %vm3007, %v2936, %v1370
      %v3066 = vsel %vm3007, %v2937, %v1374
      %v3067 = vsel %vm3007, %v2938, %v1378
      %v3068 = vsel %vm3007, %v2939, %v1382
      %v3069 = vsel %vm3007, %v2940, %v1386
      %v3070 = vsel %vm3007, %v2941, %v1390
      %v3071 = vsel %vm3007, %v2942, %v1394
      %v3072 = vsel %vm3007, %v2943, %v1398
      %v3073 = vsel %vm3007, %v2944, %v1402
      %v3074 = vsel %vm3007, %v2945, %v1406
      %v3075 = vsel %vm3007, %v2946, %v1410
      %v3076 = vsel %vm3007, %v2947, %v1414
      %v3077 = vsel %vm3007, %v2948, %v1418
      %v3078 = vsel %vm3007, %v2949, %v1422
      %v3079 = vsel %vm3007, %v2950, %v1426
      %v3080 = vsel %vm3007, %v2951, %v1430
      %v3081 = vsel %vm3007, %v2952, %v1434
      %v3082 = vsel %vm3007, %v2953, %v1438
      %v3083 = vsel %vm3007, %v2954, %v1442
      %v3084 = vsel %vm3007, %v2955, %v1446
      %v3085 = vsel %vm3007, %v2956, %v1450
      %v3086 = vsel %vm3007, %v2957, %v1454
      %v3087 = vsel %vm3007, %v2958, %v1458
      %v3088 = vsel %vm3007, %v2959, %v1462
      %v3089 = vsel %vm3007, %v2960, %v1466
      %v3090 = vsel %vm3007, %v2961, %v1470
      %v3091 = vsel %vm3007, %v2962, %v1474
      %v3092 = vsel %vm3007, %v2963, %v1478
      %v3093 = vsel %vm3007, %v2964, %v1482
      %v3094 = vsel %vm3007, %v2965, %v1486
      %v3095 = vsel %vm3007, %v2966, %v1490
      %v3096 = vsel %vm3007, %v2967, %v1494
      %v3097 = vsel %vm3007, %v2968, %v1498
      %v3098 = vsel %vm3007, %v2969, %v1502
      %v3099 = vsel %vm3007, %v2970, %v1506
      %v3100 = vsel %vm3007, %v2971, %v1510
      %v3101 = vsel %vm3007, %v2972, %v1514
      %v3102 = vsel %vm3007, %v2973, %v1518
      %v3103 = vsel %vm3007, %v2974, %v1522
      %v3104 = vsel %vm3007, %v2975, %v1526
      %v3105 = vsel %vm3007, %v2976, %v1530
      %v3106 = vsel %vm3007, %v2977, %v1534
      %v3107 = vsel %vm3007, %v2978, %v1538
      %v3108 = vsel %vm3007, %v2979, %v1542
      %v3109 = vsel %vm3007, %v2980, %v1546
      %v3110 = vsel %vm3007, %v2981, %v1550
      %v3111 = vsel %vm3007, %v2982, %v1554
      %v3112 = vsel %vm3007, %v2983, %v1558
      %v3113 = vsel %vm3007, %v2984, %v1562
      %v3114 = vsel %vm3007, %v2985, %v1566
      %v3115 = vsel %vm3007, %v2986, %v1570
      %v3116 = vsel %vm3007, %v2987, %v1574
      %v3117 = vsel %vm3007, %v2988, %v1578
      %v3118 = vsel %vm3007, %v2989, %v1582
      %v3119 = vsel %vm3007, %v2990, %v1586
      %v3120 = vsel %vm3007, %v2991, %v1590
      %v3121 = vsel %vm3007, %v2992, %v1594
      %v3122 = vsel %vm3007, %v2993, %v1598
      %v3123 = vsel %vm3007, %v2994, %v1602
      %v3124 = vsel %vm3007, %v2995, %v1606
      %v3125 = vsel %vm3007, %v2996, %v1610
      %v3126 = vsel %vm3007, %v2997, %v1614
      %v3127 = vsel %vm3007, %v2998, %v1618
      %v3128 = vsel %vm3007, %v2999, %v2153
      %v3129 = vsel %vm3007, %v3000, %v2157
      %v3130 = vsel %vm3007, %v3001, %v2161
      %v3131 = vsel %vm3007, %v3002, %v2165
      %v3132 = vsel %vm3007, %v3003, %v2204
      %v3133 = vsel %vm3007, %v3004, %v2208
      %v3134 = vsel %vm3007, %v3005, %v2212
      %v3135 = vsel %vm3007, %v3006, %v2216
      %vm3136 = vcmask 64512
      %v3137 = vsel %vm3136, %v3008, %v1654
      %v3138 = vsel %vm3136, %v3009, %v1658
      %v3139 = vsel %vm3136, %v3010, %v1662
      %v3140 = vsel %vm3136, %v3011, %v1666
      %v3141 = vsel %vm3136, %v3012, %v1670
      %v3142 = vsel %vm3136, %v3013, %v1674
      %v3143 = vsel %vm3136, %v3014, %v1678
      %v3144 = vsel %vm3136, %v3015, %v1682
      %v3145 = vsel %vm3136, %v3016, %v1686
      %v3146 = vsel %vm3136, %v3017, %v1690
      %v3147 = vsel %vm3136, %v3018, %v1694
      %v3148 = vsel %vm3136, %v3019, %v1698
      %v3149 = vsel %vm3136, %v3020, %v1702
      %v3150 = vsel %vm3136, %v3021, %v1706
      %v3151 = vsel %vm3136, %v3022, %v1710
      %v3152 = vsel %vm3136, %v3023, %v1714
      %v3153 = vsel %vm3136, %v3024, %v1718
      %v3154 = vsel %vm3136, %v3025, %v1722
      %v3155 = vsel %vm3136, %v3026, %v1726
      %v3156 = vsel %vm3136, %v3027, %v1730
      %v3157 = vsel %vm3136, %v3028, %v1734
      %v3158 = vsel %vm3136, %v3029, %v1738
      %v3159 = vsel %vm3136, %v3030, %v1742
      %v3160 = vsel %vm3136, %v3031, %v1746
      %v3161 = vsel %vm3136, %v3032, %v1750
      %v3162 = vsel %vm3136, %v3033, %v1754
      %v3163 = vsel %vm3136, %v3034, %v1758
      %v3164 = vsel %vm3136, %v3035, %v1762
      %v3165 = vsel %vm3136, %v3036, %v1766
      %v3166 = vsel %vm3136, %v3037, %v1770
      %v3167 = vsel %vm3136, %v3038, %v1774
      %v3168 = vsel %vm3136, %v3039, %v1778
      %v3169 = vsel %vm3136, %v3040, %v1782
      %v3170 = vsel %vm3136, %v3041, %v1786
      %v3171 = vsel %vm3136, %v3042, %v1790
      %v3172 = vsel %vm3136, %v3043, %v1794
      %v3173 = vsel %vm3136, %v3044, %v1798
      %v3174 = vsel %vm3136, %v3045, %v1802
      %v3175 = vsel %vm3136, %v3046, %v1806
      %v3176 = vsel %vm3136, %v3047, %v1810
      %v3177 = vsel %vm3136, %v3048, %v1814
      %v3178 = vsel %vm3136, %v3049, %v1818
      %v3179 = vsel %vm3136, %v3050, %v1822
      %v3180 = vsel %vm3136, %v3051, %v1826
      %v3181 = vsel %vm3136, %v3052, %v1830
      %v3182 = vsel %vm3136, %v3053, %v1834
      %v3183 = vsel %vm3136, %v3054, %v1838
      %v3184 = vsel %vm3136, %v3055, %v1842
      %v3185 = vsel %vm3136, %v3056, %v1846
      %v3186 = vsel %vm3136, %v3057, %v1850
      %v3187 = vsel %vm3136, %v3058, %v1854
      %v3188 = vsel %vm3136, %v3059, %v1858
      %v3189 = vsel %vm3136, %v3060, %v1862
      %v3190 = vsel %vm3136, %v3061, %v1866
      %v3191 = vsel %vm3136, %v3062, %v1870
      %v3192 = vsel %vm3136, %v3063, %v1874
      %v3193 = vsel %vm3136, %v3064, %v1878
      %v3194 = vsel %vm3136, %v3065, %v1882
      %v3195 = vsel %vm3136, %v3066, %v1886
      %v3196 = vsel %vm3136, %v3067, %v1890
      %v3197 = vsel %vm3136, %v3068, %v1894
      %v3198 = vsel %vm3136, %v3069, %v1898
      %v3199 = vsel %vm3136, %v3070, %v1902
      %v3200 = vsel %vm3136, %v3071, %v1906
      %v3201 = vsel %vm3136, %v3072, %v1910
      %v3202 = vsel %vm3136, %v3073, %v1914
      %v3203 = vsel %vm3136, %v3074, %v1918
      %v3204 = vsel %vm3136, %v3075, %v1922
      %v3205 = vsel %vm3136, %v3076, %v1926
      %v3206 = vsel %vm3136, %v3077, %v1930
      %v3207 = vsel %vm3136, %v3078, %v1934
      %v3208 = vsel %vm3136, %v3079, %v1938
      %v3209 = vsel %vm3136, %v3080, %v1942
      %v3210 = vsel %vm3136, %v3081, %v1946
      %v3211 = vsel %vm3136, %v3082, %v1950
      %v3212 = vsel %vm3136, %v3083, %v1954
      %v3213 = vsel %vm3136, %v3084, %v1958
      %v3214 = vsel %vm3136, %v3085, %v1962
      %v3215 = vsel %vm3136, %v3086, %v1966
      %v3216 = vsel %vm3136, %v3087, %v1970
      %v3217 = vsel %vm3136, %v3088, %v1974
      %v3218 = vsel %vm3136, %v3089, %v1978
      %v3219 = vsel %vm3136, %v3090, %v1982
      %v3220 = vsel %vm3136, %v3091, %v1986
      %v3221 = vsel %vm3136, %v3092, %v1990
      %v3222 = vsel %vm3136, %v3093, %v1994
      %v3223 = vsel %vm3136, %v3094, %v1998
      %v3224 = vsel %vm3136, %v3095, %v2002
      %v3225 = vsel %vm3136, %v3096, %v2006
      %v3226 = vsel %vm3136, %v3097, %v2010
      %v3227 = vsel %vm3136, %v3098, %v2014
      %v3228 = vsel %vm3136, %v3099, %v2018
      %v3229 = vsel %vm3136, %v3100, %v2022
      %v3230 = vsel %vm3136, %v3101, %v2026
      %v3231 = vsel %vm3136, %v3102, %v2030
      %v3232 = vsel %vm3136, %v3103, %v2034
      %v3233 = vsel %vm3136, %v3104, %v2038
      %v3234 = vsel %vm3136, %v3105, %v2042
      %v3235 = vsel %vm3136, %v3106, %v2046
      %v3236 = vsel %vm3136, %v3107, %v2050
      %v3237 = vsel %vm3136, %v3108, %v2054
      %v3238 = vsel %vm3136, %v3109, %v2058
      %v3239 = vsel %vm3136, %v3110, %v2062
      %v3240 = vsel %vm3136, %v3111, %v2066
      %v3241 = vsel %vm3136, %v3112, %v2070
      %v3242 = vsel %vm3136, %v3113, %v2074
      %v3243 = vsel %vm3136, %v3114, %v2078
      %v3244 = vsel %vm3136, %v3115, %v2082
      %v3245 = vsel %vm3136, %v3116, %v2086
      %v3246 = vsel %vm3136, %v3117, %v2090
      %v3247 = vsel %vm3136, %v3118, %v2094
      %v3248 = vsel %vm3136, %v3119, %v2098
      %v3249 = vsel %vm3136, %v3120, %v2102
      %v3250 = vsel %vm3136, %v3121, %v2106
      %v3251 = vsel %vm3136, %v3122, %v2110
      %v3252 = vsel %vm3136, %v3123, %v2114
      %v3253 = vsel %vm3136, %v3124, %v2118
      %v3254 = vsel %vm3136, %v3125, %v2122
      %v3255 = vsel %vm3136, %v3126, %v2126
      %v3256 = vsel %vm3136, %v3127, %v2130
      %v3257 = vsel %vm3136, %v3128, %v2169
      %v3258 = vsel %vm3136, %v3129, %v2173
      %v3259 = vsel %vm3136, %v3130, %v2177
      %v3260 = vsel %vm3136, %v3131, %v2181
      %v3261 = vsel %vm3136, %v3132, %v2220
      %v3262 = vsel %vm3136, %v3133, %v2224
      %v3263 = vsel %vm3136, %v3134, %v2228
      %v3264 = vsel %vm3136, %v3135, %v2232
      %v3265 = vpack.c.bf16 %v3138, %v3137
      %v3266 = vpack.c.bf16 %v3140, %v3139
      %v3267 = vpack.c.bf16 %v3142, %v3141
      %v3268 = vpack.c.bf16 %v3144, %v3143
      %v3269 = vpack.c.bf16 %v3146, %v3145
      %v3270 = vpack.c.bf16 %v3148, %v3147
      %v3271 = vpack.c.bf16 %v3150, %v3149
      %v3272 = vpack.c.bf16 %v3152, %v3151
      %v3273 = vpack.c.bf16 %v3154, %v3153
      %v3274 = vpack.c.bf16 %v3156, %v3155
      %v3275 = vpack.c.bf16 %v3158, %v3157
      %v3276 = vpack.c.bf16 %v3160, %v3159
      %v3277 = vpack.c.bf16 %v3162, %v3161
      %v3278 = vpack.c.bf16 %v3164, %v3163
      %v3279 = vpack.c.bf16 %v3166, %v3165
      %v3280 = vpack.c.bf16 %v3168, %v3167
      %v3281 = vpack.c.bf16 %v3170, %v3169
      %v3282 = vpack.c.bf16 %v3172, %v3171
      %v3283 = vpack.c.bf16 %v3174, %v3173
      %v3284 = vpack.c.bf16 %v3176, %v3175
      %v3285 = vpack.c.bf16 %v3178, %v3177
      %v3286 = vpack.c.bf16 %v3180, %v3179
      %v3287 = vpack.c.bf16 %v3182, %v3181
      %v3288 = vpack.c.bf16 %v3184, %v3183
      %v3289 = vpack.c.bf16 %v3186, %v3185
      %v3290 = vpack.c.bf16 %v3188, %v3187
      %v3291 = vpack.c.bf16 %v3190, %v3189
      %v3292 = vpack.c.bf16 %v3192, %v3191
      %v3293 = vpack.c.bf16 %v3194, %v3193
      %v3294 = vpack.c.bf16 %v3196, %v3195
      %v3295 = vpack.c.bf16 %v3198, %v3197
      %v3296 = vpack.c.bf16 %v3200, %v3199
      %v3297 = vpack.c.bf16 %v3202, %v3201
      %v3298 = vpack.c.bf16 %v3204, %v3203
      %v3299 = vpack.c.bf16 %v3206, %v3205
      %v3300 = vpack.c.bf16 %v3208, %v3207
      %v3301 = vpack.c.bf16 %v3210, %v3209
      %v3302 = vpack.c.bf16 %v3212, %v3211
      %v3303 = vpack.c.bf16 %v3214, %v3213
      %v3304 = vpack.c.bf16 %v3216, %v3215
      %v3305 = vpack.c.bf16 %v3218, %v3217
      %v3306 = vpack.c.bf16 %v3220, %v3219
      %v3307 = vpack.c.bf16 %v3222, %v3221
      %v3308 = vpack.c.bf16 %v3224, %v3223
      %v3309 = vpack.c.bf16 %v3226, %v3225
      %v3310 = vpack.c.bf16 %v3228, %v3227
      %v3311 = vpack.c.bf16 %v3230, %v3229
      %v3312 = vpack.c.bf16 %v3232, %v3231
      %v3313 = vpack.c.bf16 %v3234, %v3233
      %v3314 = vpack.c.bf16 %v3236, %v3235
      %v3315 = vpack.c.bf16 %v3238, %v3237
      %v3316 = vpack.c.bf16 %v3240, %v3239
      %v3317 = vpack.c.bf16 %v3242, %v3241
      %v3318 = vpack.c.bf16 %v3244, %v3243
      %v3319 = vpack.c.bf16 %v3246, %v3245
      %v3320 = vpack.c.bf16 %v3248, %v3247
      %v3321 = vpack.c.bf16 %v3250, %v3249
      %v3322 = vpack.c.bf16 %v3252, %v3251
      %v3323 = vpack.c.bf16 %v3254, %v3253
      %v3324 = vpack.c.bf16 %v3256, %v3255
      %v3325 = vpack.c.bf16 %v3258, %v3257
      %v3326 = vpack.c.bf16 %v3260, %v3259
      %v3327 = vpack.c.bf16 %v3262, %v3261
      %v3328 = vpack.c.bf16 %v3264, %v3263
      %v3329 = vld [vmem:[%s1] sm:$0xf]
      %v3330 = vld [vmem:[%s1 + $0x4] sm:$0x1]
      %v3331 = vld [vmem:[%s2] sm:$0x1]
      %v3333 = vlaneseq
      %v3334 = vshrl.u32 %v3333, 7
      %v3335 = vsub.s32 0, %v3334
      %v3336 = vrot.slane %v3331, %v3335
      %v3340 = vunpack.c.l.b16 %v3329
      %v3341 = vunpack.c.l.b16 %v3330
      %v3342 = vpack.c.b16 %v3341, %v3340
      %vm3343 = vcmask 72704
      %v3345 = vsel %vm3343, %v3265, 0
      %v3348 = vsel %vm3343, %v3266, 0
      %v3351 = vsel %vm3343, %v3267, 0
      %v3354 = vsel %vm3343, %v3268, 0
      %v3357 = vsel %vm3343, %v3269, 0
      %v3360 = vsel %vm3343, %v3270, 0
      %v3363 = vsel %vm3343, %v3271, 0
      %v3366 = vsel %vm3343, %v3272, 0
      %v3369 = vsel %vm3343, %v3273, 0
      %v3372 = vsel %vm3343, %v3274, 0
      %v3375 = vsel %vm3343, %v3275, 0
      %v3378 = vsel %vm3343, %v3276, 0
      %v3381 = vsel %vm3343, %v3277, 0
      %v3384 = vsel %vm3343, %v3278, 0
      %v3387 = vsel %vm3343, %v3279, 0
      %v3390 = vsel %vm3343, %v3280, 0
      %v3393 = vsel %vm3343, %v3281, 0
      %v3396 = vsel %vm3343, %v3282, 0
      %v3399 = vsel %vm3343, %v3283, 0
      %v3402 = vsel %vm3343, %v3284, 0
      %v3405 = vsel %vm3343, %v3285, 0
      %v3408 = vsel %vm3343, %v3286, 0
      %v3411 = vsel %vm3343, %v3287, 0
      %v3414 = vsel %vm3343, %v3288, 0
      %v3417 = vsel %vm3343, %v3289, 0
      %v3420 = vsel %vm3343, %v3290, 0
      %v3423 = vsel %vm3343, %v3291, 0
      %v3426 = vsel %vm3343, %v3292, 0
      %v3429 = vsel %vm3343, %v3293, 0
      %v3432 = vsel %vm3343, %v3294, 0
      %v3435 = vsel %vm3343, %v3295, 0
      %v3438 = vsel %vm3343, %v3296, 0
      %v3441 = vsel %vm3343, %v3297, 0
      %v3444 = vsel %vm3343, %v3298, 0
      %v3447 = vsel %vm3343, %v3299, 0
      %v3450 = vsel %vm3343, %v3300, 0
      %v3453 = vsel %vm3343, %v3301, 0
      %v3456 = vsel %vm3343, %v3302, 0
      %v3459 = vsel %vm3343, %v3303, 0
      %v3462 = vsel %vm3343, %v3304, 0
      %v3465 = vsel %vm3343, %v3305, 0
      %v3468 = vsel %vm3343, %v3306, 0
      %v3471 = vsel %vm3343, %v3307, 0
      %v3474 = vsel %vm3343, %v3308, 0
      %v3477 = vsel %vm3343, %v3309, 0
      %v3480 = vsel %vm3343, %v3310, 0
      %v3483 = vsel %vm3343, %v3311, 0
      %v3486 = vsel %vm3343, %v3312, 0
      %v3489 = vsel %vm3343, %v3313, 0
      %v3492 = vsel %vm3343, %v3314, 0
      %v3495 = vsel %vm3343, %v3315, 0
      %v3498 = vsel %vm3343, %v3316, 0
      %v3501 = vsel %vm3343, %v3317, 0
      %v3504 = vsel %vm3343, %v3318, 0
      %v3507 = vsel %vm3343, %v3319, 0
      %v3510 = vsel %vm3343, %v3320, 0
      %v3513 = vsel %vm3343, %v3321, 0
      %v3516 = vsel %vm3343, %v3322, 0
      %v3519 = vsel %vm3343, %v3323, 0
      %v3522 = vsel %vm3343, %v3324, 0
      %v3525 = vsel %vm3343, %v3325, 0
      %v3528 = vsel %vm3343, %v3326, 0
      %v3531 = vsel %vm3343, %v3327, 0
      %v3534 = vsel %vm3343, %v3328, 0
      %vm3536 = vcmask 1043456
      %vm3537 = vcmask 1044480
      %v3538 = vsel %vm3536, 4294967295, 65535
      %v3539 = vsel %vm3537, %v3538, 0
      %v3541 = vand.u32 %v3342, %v3539
      %3543 = vmatprep.subr.bf16.mxu0 0
      %3544 = vmatpush1.bf16.msra.mxu0 %v3541
      %3545 = vmatprep.subr.bf16.mxu0 0
      %3546 = vmatpush1.bf16.msra.mxu0 0
      %3547 = vmatprep.subr.bf16.mxu0 0
      %3548 = vmatpush1.bf16.msra.mxu0 0
      %3549 = vmatprep.subr.bf16.mxu0 0
      %3550 = vmatpush1.bf16.msra.mxu0 0
      %3551 = vmatprep.subr.bf16.mxu0 0
      %3552 = vmatpush1.bf16.msra.mxu0 0
      %3553 = vmatprep.subr.bf16.mxu0 0
      %3554 = vmatpush1.bf16.msra.mxu0 0
      %3555 = vmatprep.subr.bf16.mxu0 0
      %3556 = vmatpush1.bf16.msra.mxu0 0
      %3557 = vmatprep.subr.bf16.mxu0 0
      %3558 = vmatpush1.bf16.msra.mxu0 0
      %3559 = vmatprep.subr.bf16.mxu0 0
      %3560 = vmatpush1.bf16.msra.mxu0 0
      %3561 = vmatprep.subr.bf16.mxu0 0
      %3562 = vmatpush1.bf16.msra.mxu0 0
      %3563 = vmatprep.subr.bf16.mxu0 0
      %3564 = vmatpush1.bf16.msra.mxu0 0
      %3565 = vmatprep.subr.bf16.mxu0 0
      %3566 = vmatpush1.bf16.msra.mxu0 0
      %3567 = vmatprep.subr.bf16.mxu0 0
      %3568 = vmatpush1.bf16.msra.mxu0 0
      %3569 = vmatprep.subr.bf16.mxu0 0
      %3570 = vmatpush1.bf16.msra.mxu0 0
      %3571 = vmatprep.subr.bf16.mxu0 0
      %3572 = vmatpush1.bf16.msra.mxu0 0
      %3573 = vmatprep.subr.bf16.mxu0 0
      %3574 = vmatpush1.bf16.msra.mxu0 0
      %3575 = vmatprep.mubr.bf16.mxu0 0
      %3576 = vmatmul.mubr.bf16.gmra.mrb[0].mxu0 %v3345
      %v3577 = vpop.f32.mrb[0].mxu0
      %v3578 = vadd.f32 %v3336, %v3577
      %v3579 = vpop.f32.mrb[0].mxu0
      %v3580 = vpop.f32.mrb[0].mxu0
      %v3581 = vadd.f32 %v3336, %v3580
      %v3582 = vpop.f32.mrb[0].mxu0
      %3583 = vmatprep.mubr.bf16.mxu0 0
      %3584 = vmatmul.mubr.bf16.gmra.mrb[0].mxu0 %v3348
      %v3585 = vpop.f32.mrb[0].mxu0
      %v3586 = vadd.f32 %v3336, %v3585
      %v3587 = vpop.f32.mrb[0].mxu0
      %v3588 = vpop.f32.mrb[0].mxu0
      %v3589 = vadd.f32 %v3336, %v3588
      %v3590 = vpop.f32.mrb[0].mxu0
      %3591 = vmatprep.mubr.bf16.mxu0 0
      %3592 = vmatmul.mubr.bf16.gmra.mrb[0].mxu0 %v3351
      %v3593 = vpop.f32.mrb[0].mxu0
      %v3594 = vadd.f32 %v3336, %v3593
      %v3595 = vpop.f32.mrb[0].mxu0
      %v3596 = vpop.f32.mrb[0].mxu0
      %v3597 = vadd.f32 %v3336, %v3596
      %v3598 = vpop.f32.mrb[0].mxu0
      %3599 = vmatprep.mubr.bf16.mxu0 0
      %3600 = vmatmul.mubr.bf16.gmra.mrb[0].mxu0 %v3354
      %v3601 = vpop.f32.mrb[0].mxu0
      %v3602 = vadd.f32 %v3336, %v3601
      %v3603 = vpop.f32.mrb[0].mxu0
      %v3604 = vpop.f32.mrb[0].mxu0
      %v3605 = vadd.f32 %v3336, %v3604
      %v3606 = vpop.f32.mrb[0].mxu0
      %3607 = vmatprep.mubr.bf16.mxu0 0
      %3608 = vmatmul.mubr.bf16.gmra.mrb[0].mxu0 %v3357
      %v3609 = vpop.f32.mrb[0].mxu0
      %v3610 = vadd.f32 %v3336, %v3609
      %v3611 = vpop.f32.mrb[0].mxu0
      %v3612 = vpop.f32.mrb[0].mxu0
      %v3613 = vadd.f32 %v3336, %v3612
      %v3614 = vpop.f32.mrb[0].mxu0
      %3615 = vmatprep.mubr.bf16.mxu0 0
      %3616 = vmatmul.mubr.bf16.gmra.mrb[0].mxu0 %v3360
      %v3617 = vpop.f32.mrb[0].mxu0
      %v3618 = vadd.f32 %v3336, %v3617
      %v3619 = vpop.f32.mrb[0].mxu0
      %v3620 = vpop.f32.mrb[0].mxu0
      %v3621 = vadd.f32 %v3336, %v3620
      %v3622 = vpop.f32.mrb[0].mxu0
      %3623 = vmatprep.mubr.bf16.mxu0 0
      %3624 = vmatmul.mubr.bf16.gmra.mrb[0].mxu0 %v3363
      %v3625 = vpop.f32.mrb[0].mxu0
      %v3626 = vadd.f32 %v3336, %v3625
      %v3627 = vpop.f32.mrb[0].mxu0
      %v3628 = vpop.f32.mrb[0].mxu0
      %v3629 = vadd.f32 %v3336, %v3628
      %v3630 = vpop.f32.mrb[0].mxu0
      %3631 = vmatprep.mubr.bf16.mxu0 0
      %3632 = vmatmul.mubr.bf16.gmra.mrb[0].mxu0 %v3366
      %v3633 = vpop.f32.mrb[0].mxu0
      %v3634 = vadd.f32 %v3336, %v3633
      %v3635 = vpop.f32.mrb[0].mxu0
      %v3636 = vpop.f32.mrb[0].mxu0
      %v3637 = vadd.f32 %v3336, %v3636
      %v3638 = vpop.f32.mrb[0].mxu0
      %3639 = vmatprep.mubr.bf16.mxu0 0
      %3640 = vmatmul.mubr.bf16.gmra.mrb[0].mxu0 %v3369
      %v3641 = vpop.f32.mrb[0].mxu0
      %v3642 = vadd.f32 %v3336, %v3641
      %v3643 = vpop.f32.mrb[0].mxu0
      %v3644 = vpop.f32.mrb[0].mxu0
      %v3645 = vadd.f32 %v3336, %v3644
      %v3646 = vpop.f32.mrb[0].mxu0
      %3647 = vmatprep.mubr.bf16.mxu0 0
      %3648 = vmatmul.mubr.bf16.gmra.mrb[0].mxu0 %v3372
      %v3649 = vpop.f32.mrb[0].mxu0
      %v3650 = vadd.f32 %v3336, %v3649
      %v3651 = vpop.f32.mrb[0].mxu0
      %v3652 = vpop.f32.mrb[0].mxu0
      %v3653 = vadd.f32 %v3336, %v3652
      %v3654 = vpop.f32.mrb[0].mxu0
      %3655 = vmatprep.mubr.bf16.mxu0 0
      %3656 = vmatmul.mubr.bf16.gmra.mrb[0].mxu0 %v3375
      %v3657 = vpop.f32.mrb[0].mxu0
      %v3658 = vadd.f32 %v3336, %v3657
      %v3659 = vpop.f32.mrb[0].mxu0
      %v3660 = vpop.f32.mrb[0].mxu0
      %v3661 = vadd.f32 %v3336, %v3660
      %v3662 = vpop.f32.mrb[0].mxu0
      %3663 = vmatprep.mubr.bf16.mxu0 0
      %3664 = vmatmul.mubr.bf16.gmra.mrb[0].mxu0 %v3378
      %v3665 = vpop.f32.mrb[0].mxu0
      %v3666 = vadd.f32 %v3336, %v3665
      %v3667 = vpop.f32.mrb[0].mxu0
      %v3668 = vpop.f32.mrb[0].mxu0
      %v3669 = vadd.f32 %v3336, %v3668
      %v3670 = vpop.f32.mrb[0].mxu0
      %3671 = vmatprep.mubr.bf16.mxu0 0
      %3672 = vmatmul.mubr.bf16.gmra.mrb[0].mxu0 %v3381
      %v3673 = vpop.f32.mrb[0].mxu0
      %v3674 = vadd.f32 %v3336, %v3673
      %v3675 = vpop.f32.mrb[0].mxu0
      %v3676 = vpop.f32.mrb[0].mxu0
      %v3677 = vadd.f32 %v3336, %v3676
      %v3678 = vpop.f32.mrb[0].mxu0
      %3679 = vmatprep.mubr.bf16.mxu0 0
      %3680 = vmatmul.mubr.bf16.gmra.mrb[0].mxu0 %v3384
      %v3681 = vpop.f32.mrb[0].mxu0
      %v3682 = vadd.f32 %v3336, %v3681
      %v3683 = vpop.f32.mrb[0].mxu0
      %v3684 = vpop.f32.mrb[0].mxu0
      %v3685 = vadd.f32 %v3336, %v3684
      %v3686 = vpop.f32.mrb[0].mxu0
      %3687 = vmatprep.mubr.bf16.mxu0 0
      %3688 = vmatmul.mubr.bf16.gmra.mrb[0].mxu0 %v3387
      %v3689 = vpop.f32.mrb[0].mxu0
      %v3690 = vadd.f32 %v3336, %v3689
      %v3691 = vpop.f32.mrb[0].mxu0
      %v3692 = vpop.f32.mrb[0].mxu0
      %v3693 = vadd.f32 %v3336, %v3692
      %v3694 = vpop.f32.mrb[0].mxu0
      %3695 = vmatprep.mubr.bf16.mxu0 0
      %3696 = vmatmul.mubr.bf16.gmra.mrb[0].mxu0 %v3390
      %v3697 = vpop.f32.mrb[0].mxu0
      %v3698 = vadd.f32 %v3336, %v3697
      %v3699 = vpop.f32.mrb[0].mxu0
      %v3700 = vpop.f32.mrb[0].mxu0
      %v3701 = vadd.f32 %v3336, %v3700
      %v3702 = vpop.f32.mrb[0].mxu0
      %3703 = vmatprep.mubr.bf16.mxu0 0
      %3704 = vmatmul.mubr.bf16.gmra.mrb[0].mxu0 %v3393
      %v3705 = vpop.f32.mrb[0].mxu0
      %v3706 = vadd.f32 %v3336, %v3705
      %v3707 = vpop.f32.mrb[0].mxu0
      %v3708 = vpop.f32.mrb[0].mxu0
      %v3709 = vadd.f32 %v3336, %v3708
      %v3710 = vpop.f32.mrb[0].mxu0
      %3711 = vmatprep.mubr.bf16.mxu0 0
      %3712 = vmatmul.mubr.bf16.gmra.mrb[0].mxu0 %v3396
      %v3713 = vpop.f32.mrb[0].mxu0
      %v3714 = vadd.f32 %v3336, %v3713
      %v3715 = vpop.f32.mrb[0].mxu0
      %v3716 = vpop.f32.mrb[0].mxu0
      %v3717 = vadd.f32 %v3336, %v3716
      %v3718 = vpop.f32.mrb[0].mxu0
      %3719 = vmatprep.mubr.bf16.mxu0 0
      %3720 = vmatmul.mubr.bf16.gmra.mrb[0].mxu0 %v3399
      %v3721 = vpop.f32.mrb[0].mxu0
      %v3722 = vadd.f32 %v3336, %v3721
      %v3723 = vpop.f32.mrb[0].mxu0
      %v3724 = vpop.f32.mrb[0].mxu0
      %v3725 = vadd.f32 %v3336, %v3724
      %v3726 = vpop.f32.mrb[0].mxu0
      %3727 = vmatprep.mubr.bf16.mxu0 0
      %3728 = vmatmul.mubr.bf16.gmra.mrb[0].mxu0 %v3402
      %v3729 = vpop.f32.mrb[0].mxu0
      %v3730 = vadd.f32 %v3336, %v3729
      %v3731 = vpop.f32.mrb[0].mxu0
      %v3732 = vpop.f32.mrb[0].mxu0
      %v3733 = vadd.f32 %v3336, %v3732
      %v3734 = vpop.f32.mrb[0].mxu0
      %3735 = vmatprep.mubr.bf16.mxu0 0
      %3736 = vmatmul.mubr.bf16.gmra.mrb[0].mxu0 %v3405
      %v3737 = vpop.f32.mrb[0].mxu0
      %v3738 = vadd.f32 %v3336, %v3737
      %v3739 = vpop.f32.mrb[0].mxu0
      %v3740 = vpop.f32.mrb[0].mxu0
      %v3741 = vadd.f32 %v3336, %v3740
      %v3742 = vpop.f32.mrb[0].mxu0
      %3743 = vmatprep.mubr.bf16.mxu0 0
      %3744 = vmatmul.mubr.bf16.gmra.mrb[0].mxu0 %v3408
      %v3745 = vpop.f32.mrb[0].mxu0
      %v3746 = vadd.f32 %v3336, %v3745
      %v3747 = vpop.f32.mrb[0].mxu0
      %v3748 = vpop.f32.mrb[0].mxu0
      %v3749 = vadd.f32 %v3336, %v3748
      %v3750 = vpop.f32.mrb[0].mxu0
      %3751 = vmatprep.mubr.bf16.mxu0 0
      %3752 = vmatmul.mubr.bf16.gmra.mrb[0].mxu0 %v3411
      %v3753 = vpop.f32.mrb[0].mxu0
      %v3754 = vadd.f32 %v3336, %v3753
      %v3755 = vpop.f32.mrb[0].mxu0
      %v3756 = vpop.f32.mrb[0].mxu0
      %v3757 = vadd.f32 %v3336, %v3756
      %v3758 = vpop.f32.mrb[0].mxu0
      %3759 = vmatprep.mubr.bf16.mxu0 0
      %3760 = vmatmul.mubr.bf16.gmra.mrb[0].mxu0 %v3414
      %v3761 = vpop.f32.mrb[0].mxu0
      %v3762 = vadd.f32 %v3336, %v3761
      %v3763 = vpop.f32.mrb[0].mxu0
      %v3764 = vpop.f32.mrb[0].mxu0
      %v3765 = vadd.f32 %v3336, %v3764
      %v3766 = vpop.f32.mrb[0].mxu0
      %3767 = vmatprep.mubr.bf16.mxu0 0
      %3768 = vmatmul.mubr.bf16.gmra.mrb[0].mxu0 %v3417
      %v3769 = vpop.f32.mrb[0].mxu0
      %v3770 = vadd.f32 %v3336, %v3769
      %v3771 = vpop.f32.mrb[0].mxu0
      %v3772 = vpop.f32.mrb[0].mxu0
      %v3773 = vadd.f32 %v3336, %v3772
      %v3774 = vpop.f32.mrb[0].mxu0
      %3775 = vmatprep.mubr.bf16.mxu0 0
      %3776 = vmatmul.mubr.bf16.gmra.mrb[0].mxu0 %v3420
      %v3777 = vpop.f32.mrb[0].mxu0
      %v3778 = vadd.f32 %v3336, %v3777
      %v3779 = vpop.f32.mrb[0].mxu0
      %v3780 = vpop.f32.mrb[0].mxu0
      %v3781 = vadd.f32 %v3336, %v3780
      %v3782 = vpop.f32.mrb[0].mxu0
      %3783 = vmatprep.mubr.bf16.mxu0 0
      %3784 = vmatmul.mubr.bf16.gmra.mrb[0].mxu0 %v3423
      %v3785 = vpop.f32.mrb[0].mxu0
      %v3786 = vadd.f32 %v3336, %v3785
      %v3787 = vpop.f32.mrb[0].mxu0
      %v3788 = vpop.f32.mrb[0].mxu0
      %v3789 = vadd.f32 %v3336, %v3788
      %v3790 = vpop.f32.mrb[0].mxu0
      %3791 = vmatprep.mubr.bf16.mxu0 0
      %3792 = vmatmul.mubr.bf16.gmra.mrb[0].mxu0 %v3426
      %v3793 = vpop.f32.mrb[0].mxu0
      %v3794 = vadd.f32 %v3336, %v3793
      %v3795 = vpop.f32.mrb[0].mxu0
      %v3796 = vpop.f32.mrb[0].mxu0
      %v3797 = vadd.f32 %v3336, %v3796
      %v3798 = vpop.f32.mrb[0].mxu0
      %3799 = vmatprep.mubr.bf16.mxu0 0
      %3800 = vmatmul.mubr.bf16.gmra.mrb[0].mxu0 %v3429
      %v3801 = vpop.f32.mrb[0].mxu0
      %v3802 = vadd.f32 %v3336, %v3801
      %v3803 = vpop.f32.mrb[0].mxu0
      %v3804 = vpop.f32.mrb[0].mxu0
      %v3805 = vadd.f32 %v3336, %v3804
      %v3806 = vpop.f32.mrb[0].mxu0
      %3807 = vmatprep.mubr.bf16.mxu0 0
      %3808 = vmatmul.mubr.bf16.gmra.mrb[0].mxu0 %v3432
      %v3809 = vpop.f32.mrb[0].mxu0
      %v3810 = vadd.f32 %v3336, %v3809
      %v3811 = vpop.f32.mrb[0].mxu0
      %v3812 = vpop.f32.mrb[0].mxu0
      %v3813 = vadd.f32 %v3336, %v3812
      %v3814 = vpop.f32.mrb[0].mxu0
      %3815 = vmatprep.mubr.bf16.mxu0 0
      %3816 = vmatmul.mubr.bf16.gmra.mrb[0].mxu0 %v3435
      %v3817 = vpop.f32.mrb[0].mxu0
      %v3818 = vadd.f32 %v3336, %v3817
      %v3819 = vpop.f32.mrb[0].mxu0
      %v3820 = vpop.f32.mrb[0].mxu0
      %v3821 = vadd.f32 %v3336, %v3820
      %v3822 = vpop.f32.mrb[0].mxu0
      %3823 = vmatprep.mubr.bf16.mxu0 0
      %3824 = vmatmul.mubr.bf16.gmra.mrb[0].mxu0 %v3438
      %v3825 = vpop.f32.mrb[0].mxu0
      %v3826 = vadd.f32 %v3336, %v3825
      %v3827 = vpop.f32.mrb[0].mxu0
      %v3828 = vpop.f32.mrb[0].mxu0
      %v3829 = vadd.f32 %v3336, %v3828
      %v3830 = vpop.f32.mrb[0].mxu0
      %3831 = vmatprep.mubr.bf16.mxu0 0
      %3832 = vmatmul.mubr.bf16.gmra.mrb[0].mxu0 %v3441
      %v3833 = vpop.f32.mrb[0].mxu0
      %v3834 = vadd.f32 %v3336, %v3833
      %v3835 = vpop.f32.mrb[0].mxu0
      %v3836 = vpop.f32.mrb[0].mxu0
      %v3837 = vadd.f32 %v3336, %v3836
      %v3838 = vpop.f32.mrb[0].mxu0
      %3839 = vmatprep.mubr.bf16.mxu0 0
      %3840 = vmatmul.mubr.bf16.gmra.mrb[0].mxu0 %v3444
      %v3841 = vpop.f32.mrb[0].mxu0
      %v3842 = vadd.f32 %v3336, %v3841
      %v3843 = vpop.f32.mrb[0].mxu0
      %v3844 = vpop.f32.mrb[0].mxu0
      %v3845 = vadd.f32 %v3336, %v3844
      %v3846 = vpop.f32.mrb[0].mxu0
      %3847 = vmatprep.mubr.bf16.mxu0 0
      %3848 = vmatmul.mubr.bf16.gmra.mrb[0].mxu0 %v3447
      %v3849 = vpop.f32.mrb[0].mxu0
      %v3850 = vadd.f32 %v3336, %v3849
      %v3851 = vpop.f32.mrb[0].mxu0
      %v3852 = vpop.f32.mrb[0].mxu0
      %v3853 = vadd.f32 %v3336, %v3852
      %v3854 = vpop.f32.mrb[0].mxu0
      %3855 = vmatprep.mubr.bf16.mxu0 0
      %3856 = vmatmul.mubr.bf16.gmra.mrb[0].mxu0 %v3450
      %v3857 = vpop.f32.mrb[0].mxu0
      %v3858 = vadd.f32 %v3336, %v3857
      %v3859 = vpop.f32.mrb[0].mxu0
      %v3860 = vpop.f32.mrb[0].mxu0
      %v3861 = vadd.f32 %v3336, %v3860
      %v3862 = vpop.f32.mrb[0].mxu0
      %3863 = vmatprep.mubr.bf16.mxu0 0
      %3864 = vmatmul.mubr.bf16.gmra.mrb[0].mxu0 %v3453
      %v3865 = vpop.f32.mrb[0].mxu0
      %v3866 = vadd.f32 %v3336, %v3865
      %v3867 = vpop.f32.mrb[0].mxu0
      %v3868 = vpop.f32.mrb[0].mxu0
      %v3869 = vadd.f32 %v3336, %v3868
      %v3870 = vpop.f32.mrb[0].mxu0
      %3871 = vmatprep.mubr.bf16.mxu0 0
      %3872 = vmatmul.mubr.bf16.gmra.mrb[0].mxu0 %v3456
      %v3873 = vpop.f32.mrb[0].mxu0
      %v3874 = vadd.f32 %v3336, %v3873
      %v3875 = vpop.f32.mrb[0].mxu0
      %v3876 = vpop.f32.mrb[0].mxu0
      %v3877 = vadd.f32 %v3336, %v3876
      %v3878 = vpop.f32.mrb[0].mxu0
      %3879 = vmatprep.mubr.bf16.mxu0 0
      %3880 = vmatmul.mubr.bf16.gmra.mrb[0].mxu0 %v3459
      %v3881 = vpop.f32.mrb[0].mxu0
      %v3882 = vadd.f32 %v3336, %v3881
      %v3883 = vpop.f32.mrb[0].mxu0
      %v3884 = vpop.f32.mrb[0].mxu0
      %v3885 = vadd.f32 %v3336, %v3884
      %v3886 = vpop.f32.mrb[0].mxu0
      %3887 = vmatprep.mubr.bf16.mxu0 0
      %3888 = vmatmul.mubr.bf16.gmra.mrb[0].mxu0 %v3462
      %v3889 = vpop.f32.mrb[0].mxu0
      %v3890 = vadd.f32 %v3336, %v3889
      %v3891 = vpop.f32.mrb[0].mxu0
      %v3892 = vpop.f32.mrb[0].mxu0
      %v3893 = vadd.f32 %v3336, %v3892
      %v3894 = vpop.f32.mrb[0].mxu0
      %3895 = vmatprep.mubr.bf16.mxu0 0
      %3896 = vmatmul.mubr.bf16.gmra.mrb[0].mxu0 %v3465
      %v3897 = vpop.f32.mrb[0].mxu0
      %v3898 = vadd.f32 %v3336, %v3897
      %v3899 = vpop.f32.mrb[0].mxu0
      %v3900 = vpop.f32.mrb[0].mxu0
      %v3901 = vadd.f32 %v3336, %v3900
      %v3902 = vpop.f32.mrb[0].mxu0
      %3903 = vmatprep.mubr.bf16.mxu0 0
      %3904 = vmatmul.mubr.bf16.gmra.mrb[0].mxu0 %v3468
      %v3905 = vpop.f32.mrb[0].mxu0
      %v3906 = vadd.f32 %v3336, %v3905
      %v3907 = vpop.f32.mrb[0].mxu0
      %v3908 = vpop.f32.mrb[0].mxu0
      %v3909 = vadd.f32 %v3336, %v3908
      %v3910 = vpop.f32.mrb[0].mxu0
      %3911 = vmatprep.mubr.bf16.mxu0 0
      %3912 = vmatmul.mubr.bf16.gmra.mrb[0].mxu0 %v3471
      %v3913 = vpop.f32.mrb[0].mxu0
      %v3914 = vadd.f32 %v3336, %v3913
      %v3915 = vpop.f32.mrb[0].mxu0
      %v3916 = vpop.f32.mrb[0].mxu0
      %v3917 = vadd.f32 %v3336, %v3916
      %v3918 = vpop.f32.mrb[0].mxu0
      %3919 = vmatprep.mubr.bf16.mxu0 0
      %3920 = vmatmul.mubr.bf16.gmra.mrb[0].mxu0 %v3474
      %v3921 = vpop.f32.mrb[0].mxu0
      %v3922 = vadd.f32 %v3336, %v3921
      %v3923 = vpop.f32.mrb[0].mxu0
      %v3924 = vpop.f32.mrb[0].mxu0
      %v3925 = vadd.f32 %v3336, %v3924
      %v3926 = vpop.f32.mrb[0].mxu0
      %3927 = vmatprep.mubr.bf16.mxu0 0
      %3928 = vmatmul.mubr.bf16.gmra.mrb[0].mxu0 %v3477
      %v3929 = vpop.f32.mrb[0].mxu0
      %v3930 = vadd.f32 %v3336, %v3929
      %v3931 = vpop.f32.mrb[0].mxu0
      %v3932 = vpop.f32.mrb[0].mxu0
      %v3933 = vadd.f32 %v3336, %v3932
      %v3934 = vpop.f32.mrb[0].mxu0
      %3935 = vmatprep.mubr.bf16.mxu0 0
      %3936 = vmatmul.mubr.bf16.gmra.mrb[0].mxu0 %v3480
      %v3937 = vpop.f32.mrb[0].mxu0
      %v3938 = vadd.f32 %v3336, %v3937
      %v3939 = vpop.f32.mrb[0].mxu0
      %v3940 = vpop.f32.mrb[0].mxu0
      %v3941 = vadd.f32 %v3336, %v3940
      %v3942 = vpop.f32.mrb[0].mxu0
      %3943 = vmatprep.mubr.bf16.mxu0 0
      %3944 = vmatmul.mubr.bf16.gmra.mrb[0].mxu0 %v3483
      %v3945 = vpop.f32.mrb[0].mxu0
      %v3946 = vadd.f32 %v3336, %v3945
      %v3947 = vpop.f32.mrb[0].mxu0
      %v3948 = vpop.f32.mrb[0].mxu0
      %v3949 = vadd.f32 %v3336, %v3948
      %v3950 = vpop.f32.mrb[0].mxu0
      %3951 = vmatprep.mubr.bf16.mxu0 0
      %3952 = vmatmul.mubr.bf16.gmra.mrb[0].mxu0 %v3486
      %v3953 = vpop.f32.mrb[0].mxu0
      %v3954 = vadd.f32 %v3336, %v3953
      %v3955 = vpop.f32.mrb[0].mxu0
      %v3956 = vpop.f32.mrb[0].mxu0
      %v3957 = vadd.f32 %v3336, %v3956
      %v3958 = vpop.f32.mrb[0].mxu0
      %3959 = vmatprep.mubr.bf16.mxu0 0
      %3960 = vmatmul.mubr.bf16.gmra.mrb[0].mxu0 %v3489
      %v3961 = vpop.f32.mrb[0].mxu0
      %v3962 = vadd.f32 %v3336, %v3961
      %v3963 = vpop.f32.mrb[0].mxu0
      %v3964 = vpop.f32.mrb[0].mxu0
      %v3965 = vadd.f32 %v3336, %v3964
      %v3966 = vpop.f32.mrb[0].mxu0
      %3967 = vmatprep.mubr.bf16.mxu0 0
      %3968 = vmatmul.mubr.bf16.gmra.mrb[0].mxu0 %v3492
      %v3969 = vpop.f32.mrb[0].mxu0
      %v3970 = vadd.f32 %v3336, %v3969
      %v3971 = vpop.f32.mrb[0].mxu0
      %v3972 = vpop.f32.mrb[0].mxu0
      %v3973 = vadd.f32 %v3336, %v3972
      %v3974 = vpop.f32.mrb[0].mxu0
      %3975 = vmatprep.mubr.bf16.mxu0 0
      %3976 = vmatmul.mubr.bf16.gmra.mrb[0].mxu0 %v3495
      %v3977 = vpop.f32.mrb[0].mxu0
      %v3978 = vadd.f32 %v3336, %v3977
      %v3979 = vpop.f32.mrb[0].mxu0
      %v3980 = vpop.f32.mrb[0].mxu0
      %v3981 = vadd.f32 %v3336, %v3980
      %v3982 = vpop.f32.mrb[0].mxu0
      %3983 = vmatprep.mubr.bf16.mxu0 0
      %3984 = vmatmul.mubr.bf16.gmra.mrb[0].mxu0 %v3498
      %v3985 = vpop.f32.mrb[0].mxu0
      %v3986 = vadd.f32 %v3336, %v3985
      %v3987 = vpop.f32.mrb[0].mxu0
      %v3988 = vpop.f32.mrb[0].mxu0
      %v3989 = vadd.f32 %v3336, %v3988
      %v3990 = vpop.f32.mrb[0].mxu0
      %3991 = vmatprep.mubr.bf16.mxu0 0
      %3992 = vmatmul.mubr.bf16.gmra.mrb[0].mxu0 %v3501
      %v3993 = vpop.f32.mrb[0].mxu0
      %v3994 = vadd.f32 %v3336, %v3993
      %v3995 = vpop.f32.mrb[0].mxu0
      %v3996 = vpop.f32.mrb[0].mxu0
      %v3997 = vadd.f32 %v3336, %v3996
      %v3998 = vpop.f32.mrb[0].mxu0
      %3999 = vmatprep.mubr.bf16.mxu0 0
      %4000 = vmatmul.mubr.bf16.gmra.mrb[0].mxu0 %v3504
      %v4001 = vpop.f32.mrb[0].mxu0
      %v4002 = vadd.f32 %v3336, %v4001
      %v4003 = vpop.f32.mrb[0].mxu0
      %v4004 = vpop.f32.mrb[0].mxu0
      %v4005 = vadd.f32 %v3336, %v4004
      %v4006 = vpop.f32.mrb[0].mxu0
      %4007 = vmatprep.mubr.bf16.mxu0 0
      %4008 = vmatmul.mubr.bf16.gmra.mrb[0].mxu0 %v3507
      %v4009 = vpop.f32.mrb[0].mxu0
      %v4010 = vadd.f32 %v3336, %v4009
      %v4011 = vpop.f32.mrb[0].mxu0
      %v4012 = vpop.f32.mrb[0].mxu0
      %v4013 = vadd.f32 %v3336, %v4012
      %v4014 = vpop.f32.mrb[0].mxu0
      %4015 = vmatprep.mubr.bf16.mxu0 0
      %4016 = vmatmul.mubr.bf16.gmra.mrb[0].mxu0 %v3510
      %v4017 = vpop.f32.mrb[0].mxu0
      %v4018 = vadd.f32 %v3336, %v4017
      %v4019 = vpop.f32.mrb[0].mxu0
      %v4020 = vpop.f32.mrb[0].mxu0
      %v4021 = vadd.f32 %v3336, %v4020
      %v4022 = vpop.f32.mrb[0].mxu0
      %4023 = vmatprep.mubr.bf16.mxu0 0
      %4024 = vmatmul.mubr.bf16.gmra.mrb[0].mxu0 %v3513
      %v4025 = vpop.f32.mrb[0].mxu0
      %v4026 = vadd.f32 %v3336, %v4025
      %v4027 = vpop.f32.mrb[0].mxu0
      %v4028 = vpop.f32.mrb[0].mxu0
      %v4029 = vadd.f32 %v3336, %v4028
      %v4030 = vpop.f32.mrb[0].mxu0
      %4031 = vmatprep.mubr.bf16.mxu0 0
      %4032 = vmatmul.mubr.bf16.gmra.mrb[0].mxu0 %v3516
      %v4033 = vpop.f32.mrb[0].mxu0
      %v4034 = vadd.f32 %v3336, %v4033
      %v4035 = vpop.f32.mrb[0].mxu0
      %v4036 = vpop.f32.mrb[0].mxu0
      %v4037 = vadd.f32 %v3336, %v4036
      %v4038 = vpop.f32.mrb[0].mxu0
      %4039 = vmatprep.mubr.bf16.mxu0 0
      %4040 = vmatmul.mubr.bf16.gmra.mrb[0].mxu0 %v3519
      %v4041 = vpop.f32.mrb[0].mxu0
      %v4042 = vadd.f32 %v3336, %v4041
      %v4043 = vpop.f32.mrb[0].mxu0
      %v4044 = vpop.f32.mrb[0].mxu0
      %v4045 = vadd.f32 %v3336, %v4044
      %v4046 = vpop.f32.mrb[0].mxu0
      %4047 = vmatprep.mubr.bf16.mxu0 0
      %4048 = vmatmul.mubr.bf16.gmra.mrb[0].mxu0 %v3522
      %v4049 = vpop.f32.mrb[0].mxu0
      %v4050 = vadd.f32 %v3336, %v4049
      %v4051 = vpop.f32.mrb[0].mxu0
      %v4052 = vpop.f32.mrb[0].mxu0
      %v4053 = vadd.f32 %v3336, %v4052
      %v4054 = vpop.f32.mrb[0].mxu0
      %4055 = vmatprep.mubr.bf16.mxu0 0
      %4056 = vmatmul.mubr.bf16.gmra.mrb[0].mxu0 %v3525
      %v4057 = vpop.f32.mrb[0].mxu0
      %v4058 = vadd.f32 %v3336, %v4057
      %v4059 = vpop.f32.mrb[0].mxu0
      %v4060 = vpop.f32.mrb[0].mxu0
      %v4061 = vadd.f32 %v3336, %v4060
      %v4062 = vpop.f32.mrb[0].mxu0
      %4063 = vmatprep.mubr.bf16.mxu0 0
      %4064 = vmatmul.mubr.bf16.gmra.mrb[0].mxu0 %v3528
      %v4065 = vpop.f32.mrb[0].mxu0
      %v4066 = vadd.f32 %v3336, %v4065
      %v4067 = vpop.f32.mrb[0].mxu0
      %v4068 = vpop.f32.mrb[0].mxu0
      %v4069 = vadd.f32 %v3336, %v4068
      %v4070 = vpop.f32.mrb[0].mxu0
      %4071 = vmatprep.mubr.bf16.mxu0 0
      %4072 = vmatmul.mubr.bf16.gmra.mrb[0].mxu0 %v3531
      %v4073 = vpop.f32.mrb[0].mxu0
      %v4074 = vadd.f32 %v3336, %v4073
      %v4075 = vpop.f32.mrb[0].mxu0
      %v4076 = vpop.f32.mrb[0].mxu0
      %v4077 = vadd.f32 %v3336, %v4076
      %v4078 = vpop.f32.mrb[0].mxu0
      %4079 = vmatprep.mubr.bf16.mxu0 0
      %4080 = vmatmul.mubr.bf16.gmra.mrb[0].mxu0 %v3534
      %v4081 = vpop.f32.mrb[0].mxu0
      %v4082 = vadd.f32 %v3336, %v4081
      %v4083 = vpop.f32.mrb[0].mxu0
      %v4084 = vpop.f32.mrb[0].mxu0
      %v4085 = vadd.f32 %v3336, %v4084
      %v4086 = vpop.f32.mrb[0].mxu0
      %4087 = vdwg.mxu0
      %v4088 = vmax.f32 %v3578, 0.0
      %v4089 = vmax.f32 %v3581, 0.0
      %v4090 = vmax.f32 %v3586, 0.0
      %v4091 = vmax.f32 %v3589, 0.0
      %v4092 = vmax.f32 %v3594, 0.0
      %v4093 = vmax.f32 %v3597, 0.0
      %v4094 = vmax.f32 %v3602, 0.0
      %v4095 = vmax.f32 %v3605, 0.0
      %v4096 = vmax.f32 %v3610, 0.0
      %v4097 = vmax.f32 %v3613, 0.0
      %v4098 = vmax.f32 %v3618, 0.0
      %v4099 = vmax.f32 %v3621, 0.0
      %v4100 = vmax.f32 %v3626, 0.0
      %v4101 = vmax.f32 %v3629, 0.0
      %v4102 = vmax.f32 %v3634, 0.0
      %v4103 = vmax.f32 %v3637, 0.0
      %v4104 = vmax.f32 %v3642, 0.0
      %v4105 = vmax.f32 %v3645, 0.0
      %v4106 = vmax.f32 %v3650, 0.0
      %v4107 = vmax.f32 %v3653, 0.0
      %v4108 = vmax.f32 %v3658, 0.0
      %v4109 = vmax.f32 %v3661, 0.0
      %v4110 = vmax.f32 %v3666, 0.0
      %v4111 = vmax.f32 %v3669, 0.0
      %v4112 = vmax.f32 %v3674, 0.0
      %v4113 = vmax.f32 %v3677, 0.0
      %v4114 = vmax.f32 %v3682, 0.0
      %v4115 = vmax.f32 %v3685, 0.0
      %v4116 = vmax.f32 %v3690, 0.0
      %v4117 = vmax.f32 %v3693, 0.0
      %v4118 = vmax.f32 %v3698, 0.0
      %v4119 = vmax.f32 %v3701, 0.0
      %v4120 = vmax.f32 %v3706, 0.0
      %v4121 = vmax.f32 %v3709, 0.0
      %v4122 = vmax.f32 %v3714, 0.0
      %v4123 = vmax.f32 %v3717, 0.0
      %v4124 = vmax.f32 %v3722, 0.0
      %v4125 = vmax.f32 %v3725, 0.0
      %v4126 = vmax.f32 %v3730, 0.0
      %v4127 = vmax.f32 %v3733, 0.0
      %v4128 = vmax.f32 %v3738, 0.0
      %v4129 = vmax.f32 %v3741, 0.0
      %v4130 = vmax.f32 %v3746, 0.0
      %v4131 = vmax.f32 %v3749, 0.0
      %v4132 = vmax.f32 %v3754, 0.0
      %v4133 = vmax.f32 %v3757, 0.0
      %v4134 = vmax.f32 %v3762, 0.0
      %v4135 = vmax.f32 %v3765, 0.0
      %v4136 = vmax.f32 %v3770, 0.0
      %v4137 = vmax.f32 %v3773, 0.0
      %v4138 = vmax.f32 %v3778, 0.0
      %v4139 = vmax.f32 %v3781, 0.0
      %v4140 = vmax.f32 %v3786, 0.0
      %v4141 = vmax.f32 %v3789, 0.0
      %v4142 = vmax.f32 %v3794, 0.0
      %v4143 = vmax.f32 %v3797, 0.0
      %v4144 = vmax.f32 %v3802, 0.0
      %v4145 = vmax.f32 %v3805, 0.0
      %v4146 = vmax.f32 %v3810, 0.0
      %v4147 = vmax.f32 %v3813, 0.0
      %v4148 = vmax.f32 %v3818, 0.0
      %v4149 = vmax.f32 %v3821, 0.0
      %v4150 = vmax.f32 %v3826, 0.0
      %v4151 = vmax.f32 %v3829, 0.0
      %v4152 = vmax.f32 %v3834, 0.0
      %v4153 = vmax.f32 %v3837, 0.0
      %v4154 = vmax.f32 %v3842, 0.0
      %v4155 = vmax.f32 %v3845, 0.0
      %v4156 = vmax.f32 %v3850, 0.0
      %v4157 = vmax.f32 %v3853, 0.0
      %v4158 = vmax.f32 %v3858, 0.0
      %v4159 = vmax.f32 %v3861, 0.0
      %v4160 = vmax.f32 %v3866, 0.0
      %v4161 = vmax.f32 %v3869, 0.0
      %v4162 = vmax.f32 %v3874, 0.0
      %v4163 = vmax.f32 %v3877, 0.0
      %v4164 = vmax.f32 %v3882, 0.0
      %v4165 = vmax.f32 %v3885, 0.0
      %v4166 = vmax.f32 %v3890, 0.0
      %v4167 = vmax.f32 %v3893, 0.0
      %v4168 = vmax.f32 %v3898, 0.0
      %v4169 = vmax.f32 %v3901, 0.0
      %v4170 = vmax.f32 %v3906, 0.0
      %v4171 = vmax.f32 %v3909, 0.0
      %v4172 = vmax.f32 %v3914, 0.0
      %v4173 = vmax.f32 %v3917, 0.0
      %v4174 = vmax.f32 %v3922, 0.0
      %v4175 = vmax.f32 %v3925, 0.0
      %v4176 = vmax.f32 %v3930, 0.0
      %v4177 = vmax.f32 %v3933, 0.0
      %v4178 = vmax.f32 %v3938, 0.0
      %v4179 = vmax.f32 %v3941, 0.0
      %v4180 = vmax.f32 %v3946, 0.0
      %v4181 = vmax.f32 %v3949, 0.0
      %v4182 = vmax.f32 %v3954, 0.0
      %v4183 = vmax.f32 %v3957, 0.0
      %v4184 = vmax.f32 %v3962, 0.0
      %v4185 = vmax.f32 %v3965, 0.0
      %v4186 = vmax.f32 %v3970, 0.0
      %v4187 = vmax.f32 %v3973, 0.0
      %v4188 = vmax.f32 %v3978, 0.0
      %v4189 = vmax.f32 %v3981, 0.0
      %v4190 = vmax.f32 %v3986, 0.0
      %v4191 = vmax.f32 %v3989, 0.0
      %v4192 = vmax.f32 %v3994, 0.0
      %v4193 = vmax.f32 %v3997, 0.0
      %v4194 = vmax.f32 %v4002, 0.0
      %v4195 = vmax.f32 %v4005, 0.0
      %v4196 = vmax.f32 %v4010, 0.0
      %v4197 = vmax.f32 %v4013, 0.0
      %v4198 = vmax.f32 %v4018, 0.0
      %v4199 = vmax.f32 %v4021, 0.0
      %v4200 = vmax.f32 %v4026, 0.0
      %v4201 = vmax.f32 %v4029, 0.0
      %v4202 = vmax.f32 %v4034, 0.0
      %v4203 = vmax.f32 %v4037, 0.0
      %v4204 = vmax.f32 %v4042, 0.0
      %v4205 = vmax.f32 %v4045, 0.0
      %v4206 = vmax.f32 %v4050, 0.0
      %v4207 = vmax.f32 %v4053, 0.0
      %v4208 = vmax.f32 %v4058, 0.0
      %v4209 = vmax.f32 %v4061, 0.0
      %v4210 = vmax.f32 %v4066, 0.0
      %v4211 = vmax.f32 %v4069, 0.0
      %v4212 = vmax.f32 %v4074, 0.0
      %v4213 = vmax.f32 %v4077, 0.0
      %v4214 = vmax.f32 %v4082, 0.0
      %v4215 = vmax.f32 %v4085, 0.0
      %vm4216 = vcmask 130048
      %4217 = vst.msk [vmem:[#allocation2] sm:$0xff] %vm4216, %v4088
      %4218 = vst.msk [vmem:[#allocation2 + $0x8] sm:$0xff] %vm4216, %v4089
      %4219 = vst.msk [vmem:[#allocation2 + $0x10] sm:$0xff] %vm4216, %v4090
      %4220 = vst.msk [vmem:[#allocation2 + $0x18] sm:$0xff] %vm4216, %v4091
      %4221 = vst.msk [vmem:[#allocation2 + $0x20] sm:$0xff] %vm4216, %v4092
      %4222 = vst.msk [vmem:[#allocation2 + $0x28] sm:$0xff] %vm4216, %v4093
      %4223 = vst.msk [vmem:[#allocation2 + $0x30] sm:$0xff] %vm4216, %v4094
      %4224 = vst.msk [vmem:[#allocation2 + $0x38] sm:$0xff] %vm4216, %v4095
      %4225 = vst.msk [vmem:[#allocation2 + $0x40] sm:$0xff] %vm4216, %v4096
      %4226 = vst.msk [vmem:[#allocation2 + $0x48] sm:$0xff] %vm4216, %v4097
      %4227 = vst.msk [vmem:[#allocation2 + $0x50] sm:$0xff] %vm4216, %v4098
      %4228 = vst.msk [vmem:[#allocation2 + $0x58] sm:$0xff] %vm4216, %v4099
      %4229 = vst.msk [vmem:[#allocation2 + $0x60] sm:$0xff] %vm4216, %v4100
      %4230 = vst.msk [vmem:[#allocation2 + $0x68] sm:$0xff] %vm4216, %v4101
      %4231 = vst.msk [vmem:[#allocation2 + $0x70] sm:$0xff] %vm4216, %v4102
      %4232 = vst.msk [vmem:[#allocation2 + $0x78] sm:$0xff] %vm4216, %v4103
      %4233 = vst.msk [vmem:[#allocation2 + $0x80] sm:$0xff] %vm4216, %v4104
      %4234 = vst.msk [vmem:[#allocation2 + $0x88] sm:$0xff] %vm4216, %v4105
      %4235 = vst.msk [vmem:[#allocation2 + $0x90] sm:$0xff] %vm4216, %v4106
      %4236 = vst.msk [vmem:[#allocation2 + $0x98] sm:$0xff] %vm4216, %v4107
      %4237 = vst.msk [vmem:[#allocation2 + $0xa0] sm:$0xff] %vm4216, %v4108
      %4238 = vst.msk [vmem:[#allocation2 + $0xa8] sm:$0xff] %vm4216, %v4109
      %4239 = vst.msk [vmem:[#allocation2 + $0xb0] sm:$0xff] %vm4216, %v4110
      %4240 = vst.msk [vmem:[#allocation2 + $0xb8] sm:$0xff] %vm4216, %v4111
      %4241 = vst.msk [vmem:[#allocation2 + $0xc0] sm:$0xff] %vm4216, %v4112
      %4242 = vst.msk [vmem:[#allocation2 + $0xc8] sm:$0xff] %vm4216, %v4113
      %4243 = vst.msk [vmem:[#allocation2 + $0xd0] sm:$0xff] %vm4216, %v4114
      %4244 = vst.msk [vmem:[#allocation2 + $0xd8] sm:$0xff] %vm4216, %v4115
      %4245 = vst.msk [vmem:[#allocation2 + $0xe0] sm:$0xff] %vm4216, %v4116
      %4246 = vst.msk [vmem:[#allocation2 + $0xe8] sm:$0xff] %vm4216, %v4117
      %4247 = vst.msk [vmem:[#allocation2 + $0xf0] sm:$0xff] %vm4216, %v4118
      %4248 = vst.msk [vmem:[#allocation2 + $0xf8] sm:$0xff] %vm4216, %v4119
      %4249 = vst.msk [vmem:[#allocation2 + $0x100] sm:$0xff] %vm4216, %v4120
      %4250 = vst.msk [vmem:[#allocation2 + $0x108] sm:$0xff] %vm4216, %v4121
      %4251 = vst.msk [vmem:[#allocation2 + $0x110] sm:$0xff] %vm4216, %v4122
      %4252 = vst.msk [vmem:[#allocation2 + $0x118] sm:$0xff] %vm4216, %v4123
      %4253 = vst.msk [vmem:[#allocation2 + $0x120] sm:$0xff] %vm4216, %v4124
      %4254 = vst.msk [vmem:[#allocation2 + $0x128] sm:$0xff] %vm4216, %v4125
      %4255 = vst.msk [vmem:[#allocation2 + $0x130] sm:$0xff] %vm4216, %v4126
      %4256 = vst.msk [vmem:[#allocation2 + $0x138] sm:$0xff] %vm4216, %v4127
      %4257 = vst.msk [vmem:[#allocation2 + $0x140] sm:$0xff] %vm4216, %v4128
      %4258 = vst.msk [vmem:[#allocation2 + $0x148] sm:$0xff] %vm4216, %v4129
      %4259 = vst.msk [vmem:[#allocation2 + $0x150] sm:$0xff] %vm4216, %v4130
      %4260 = vst.msk [vmem:[#allocation2 + $0x158] sm:$0xff] %vm4216, %v4131
      %4261 = vst.msk [vmem:[#allocation2 + $0x160] sm:$0xff] %vm4216, %v4132
      %4262 = vst.msk [vmem:[#allocation2 + $0x168] sm:$0xff] %vm4216, %v4133
      %4263 = vst.msk [vmem:[#allocation2 + $0x170] sm:$0xff] %vm4216, %v4134
      %4264 = vst.msk [vmem:[#allocation2 + $0x178] sm:$0xff] %vm4216, %v4135
      %4265 = vst.msk [vmem:[#allocation2 + $0x180] sm:$0xff] %vm4216, %v4136
      %4266 = vst.msk [vmem:[#allocation2 + $0x188] sm:$0xff] %vm4216, %v4137
      %4267 = vst.msk [vmem:[#allocation2 + $0x190] sm:$0xff] %vm4216, %v4138
      %4268 = vst.msk [vmem:[#allocation2 + $0x198] sm:$0xff] %vm4216, %v4139
      %4269 = vst.msk [vmem:[#allocation2 + $0x1a0] sm:$0xff] %vm4216, %v4140
      %4270 = vst.msk [vmem:[#allocation2 + $0x1a8] sm:$0xff] %vm4216, %v4141
      %4271 = vst.msk [vmem:[#allocation2 + $0x1b0] sm:$0xff] %vm4216, %v4142
      %4272 = vst.msk [vmem:[#allocation2 + $0x1b8] sm:$0xff] %vm4216, %v4143
      %4273 = vst.msk [vmem:[#allocation2 + $0x1c0] sm:$0xff] %vm4216, %v4144
      %4274 = vst.msk [vmem:[#allocation2 + $0x1c8] sm:$0xff] %vm4216, %v4145
      %4275 = vst.msk [vmem:[#allocation2 + $0x1d0] sm:$0xff] %vm4216, %v4146
      %4276 = vst.msk [vmem:[#allocation2 + $0x1d8] sm:$0xff] %vm4216, %v4147
      %4277 = vst.msk [vmem:[#allocation2 + $0x1e0] sm:$0xff] %vm4216, %v4148
      %4278 = vst.msk [vmem:[#allocation2 + $0x1e8] sm:$0xff] %vm4216, %v4149
      %4279 = vst.msk [vmem:[#allocation2 + $0x1f0] sm:$0xff] %vm4216, %v4150
      %4280 = vst.msk [vmem:[#allocation2 + $0x1f8] sm:$0xff] %vm4216, %v4151
      %4281 = vst.msk [vmem:[#allocation2 + $0x200] sm:$0xff] %vm4216, %v4152
      %4282 = vst.msk [vmem:[#allocation2 + $0x208] sm:$0xff] %vm4216, %v4153
      %4283 = vst.msk [vmem:[#allocation2 + $0x210] sm:$0xff] %vm4216, %v4154
      %4284 = vst.msk [vmem:[#allocation2 + $0x218] sm:$0xff] %vm4216, %v4155
      %4285 = vst.msk [vmem:[#allocation2 + $0x220] sm:$0xff] %vm4216, %v4156
      %4286 = vst.msk [vmem:[#allocation2 + $0x228] sm:$0xff] %vm4216, %v4157
      %4287 = vst.msk [vmem:[#allocation2 + $0x230] sm:$0xff] %vm4216, %v4158
      %4288 = vst.msk [vmem:[#allocation2 + $0x238] sm:$0xff] %vm4216, %v4159
      %4289 = vst.msk [vmem:[#allocation2 + $0x240] sm:$0xff] %vm4216, %v4160
      %4290 = vst.msk [vmem:[#allocation2 + $0x248] sm:$0xff] %vm4216, %v4161
      %4291 = vst.msk [vmem:[#allocation2 + $0x250] sm:$0xff] %vm4216, %v4162
      %4292 = vst.msk [vmem:[#allocation2 + $0x258] sm:$0xff] %vm4216, %v4163
      %4293 = vst.msk [vmem:[#allocation2 + $0x260] sm:$0xff] %vm4216, %v4164
      %4294 = vst.msk [vmem:[#allocation2 + $0x268] sm:$0xff] %vm4216, %v4165
      %4295 = vst.msk [vmem:[#allocation2 + $0x270] sm:$0xff] %vm4216, %v4166
      %4296 = vst.msk [vmem:[#allocation2 + $0x278] sm:$0xff] %vm4216, %v4167
      %4297 = vst.msk [vmem:[#allocation2 + $0x280] sm:$0xff] %vm4216, %v4168
      %4298 = vst.msk [vmem:[#allocation2 + $0x288] sm:$0xff] %vm4216, %v4169
      %4299 = vst.msk [vmem:[#allocation2 + $0x290] sm:$0xff] %vm4216, %v4170
      %4300 = vst.msk [vmem:[#allocation2 + $0x298] sm:$0xff] %vm4216, %v4171
      %4301 = vst.msk [vmem:[#allocation2 + $0x2a0] sm:$0xff] %vm4216, %v4172
      %4302 = vst.msk [vmem:[#allocation2 + $0x2a8] sm:$0xff] %vm4216, %v4173
      %4303 = vst.msk [vmem:[#allocation2 + $0x2b0] sm:$0xff] %vm4216, %v4174
      %4304 = vst.msk [vmem:[#allocation2 + $0x2b8] sm:$0xff] %vm4216, %v4175
      %4305 = vst.msk [vmem:[#allocation2 + $0x2c0] sm:$0xff] %vm4216, %v4176
      %4306 = vst.msk [vmem:[#allocation2 + $0x2c8] sm:$0xff] %vm4216, %v4177
      %4307 = vst.msk [vmem:[#allocation2 + $0x2d0] sm:$0xff] %vm4216, %v4178
      %4308 = vst.msk [vmem:[#allocation2 + $0x2d8] sm:$0xff] %vm4216, %v4179
      %4309 = vst.msk [vmem:[#allocation2 + $0x2e0] sm:$0xff] %vm4216, %v4180
      %4310 = vst.msk [vmem:[#allocation2 + $0x2e8] sm:$0xff] %vm4216, %v4181
      %4311 = vst.msk [vmem:[#allocation2 + $0x2f0] sm:$0xff] %vm4216, %v4182
      %4312 = vst.msk [vmem:[#allocation2 + $0x2f8] sm:$0xff] %vm4216, %v4183
      %4313 = vst.msk [vmem:[#allocation2 + $0x300] sm:$0xff] %vm4216, %v4184
      %4314 = vst.msk [vmem:[#allocation2 + $0x308] sm:$0xff] %vm4216, %v4185
      %4315 = vst.msk [vmem:[#allocation2 + $0x310] sm:$0xff] %vm4216, %v4186
      %4316 = vst.msk [vmem:[#allocation2 + $0x318] sm:$0xff] %vm4216, %v4187
      %4317 = vst.msk [vmem:[#allocation2 + $0x320] sm:$0xff] %vm4216, %v4188
      %4318 = vst.msk [vmem:[#allocation2 + $0x328] sm:$0xff] %vm4216, %v4189
      %4319 = vst.msk [vmem:[#allocation2 + $0x330] sm:$0xff] %vm4216, %v4190
      %4320 = vst.msk [vmem:[#allocation2 + $0x338] sm:$0xff] %vm4216, %v4191
      %4321 = vst.msk [vmem:[#allocation2 + $0x340] sm:$0xff] %vm4216, %v4192
      %4322 = vst.msk [vmem:[#allocation2 + $0x348] sm:$0xff] %vm4216, %v4193
      %4323 = vst.msk [vmem:[#allocation2 + $0x350] sm:$0xff] %vm4216, %v4194
      %4324 = vst.msk [vmem:[#allocation2 + $0x358] sm:$0xff] %vm4216, %v4195
      %4325 = vst.msk [vmem:[#allocation2 + $0x360] sm:$0xff] %vm4216, %v4196
      %4326 = vst.msk [vmem:[#allocation2 + $0x368] sm:$0xff] %vm4216, %v4197
      %4327 = vst.msk [vmem:[#allocation2 + $0x370] sm:$0xff] %vm4216, %v4198
      %4328 = vst.msk [vmem:[#allocation2 + $0x378] sm:$0xff] %vm4216, %v4199
      %4329 = vst.msk [vmem:[#allocation2 + $0x380] sm:$0xff] %vm4216, %v4200
      %4330 = vst.msk [vmem:[#allocation2 + $0x388] sm:$0xff] %vm4216, %v4201
      %4331 = vst.msk [vmem:[#allocation2 + $0x390] sm:$0xff] %vm4216, %v4202
      %4332 = vst.msk [vmem:[#allocation2 + $0x398] sm:$0xff] %vm4216, %v4203
      %4333 = vst.msk [vmem:[#allocation2 + $0x3a0] sm:$0xff] %vm4216, %v4204
      %4334 = vst.msk [vmem:[#allocation2 + $0x3a8] sm:$0xff] %vm4216, %v4205
      %4335 = vst.msk [vmem:[#allocation2 + $0x3b0] sm:$0xff] %vm4216, %v4206
      %4336 = vst.msk [vmem:[#allocation2 + $0x3b8] sm:$0xff] %vm4216, %v4207
      %4337 = vst.msk [vmem:[#allocation2 + $0x3c0] sm:$0xff] %vm4216, %v4208
      %4338 = vst.msk [vmem:[#allocation2 + $0x3c8] sm:$0xff] %vm4216, %v4209
      %4339 = vst.msk [vmem:[#allocation2 + $0x3d0] sm:$0xff] %vm4216, %v4210
      %4340 = vst.msk [vmem:[#allocation2 + $0x3d8] sm:$0xff] %vm4216, %v4211
      %4341 = vst.msk [vmem:[#allocation2 + $0x3e0] sm:$0xff] %vm4216, %v4212
      %4342 = vst.msk [vmem:[#allocation2 + $0x3e8] sm:$0xff] %vm4216, %v4213
      %4343 = vst.msk [vmem:[#allocation2 + $0x3f0] sm:$0xff] %vm4216, %v4214
      %4344 = vst.msk [vmem:[#allocation2 + $0x3f8] sm:$0xff] %vm4216, %v4215
      %v4345 = vld [vmem:[#allocation2] ss:$2 sm:$0xff]
      %s4346 = scalar_lea.vmem [#allocation2], 16
      %v4347 = vld [vmem:[%s4346] ss:$2 sm:$0xff]
      %s4348 = scalar_lea.vmem [#allocation2], 32
      %v4349 = vld [vmem:[%s4348] ss:$2 sm:$0xff]
      %s4350 = scalar_lea.vmem [#allocation2], 48
      %v4351 = vld [vmem:[%s4350] ss:$2 sm:$0xff]
      %s4352 = scalar_lea.vmem [#allocation2], 64
      %v4353 = vld [vmem:[%s4352] ss:$2 sm:$0xff]
      %s4354 = scalar_lea.vmem [#allocation2], 80
      %v4355 = vld [vmem:[%s4354] ss:$2 sm:$0xff]
      %s4356 = scalar_lea.vmem [#allocation2], 96
      %v4357 = vld [vmem:[%s4356] ss:$2 sm:$0xff]
      %s4358 = scalar_lea.vmem [#allocation2], 112
      %v4359 = vld [vmem:[%s4358] ss:$2 sm:$0xff]
      %s4360 = scalar_lea.vmem [#allocation2], 128
      %v4361 = vld [vmem:[%s4360] ss:$2 sm:$0xff]
      %s4362 = scalar_lea.vmem [#allocation2], 144
      %v4363 = vld [vmem:[%s4362] ss:$2 sm:$0xff]
      %s4364 = scalar_lea.vmem [#allocation2], 160
      %v4365 = vld [vmem:[%s4364] ss:$2 sm:$0xff]
      %s4366 = scalar_lea.vmem [#allocation2], 176
      %v4367 = vld [vmem:[%s4366] ss:$2 sm:$0xff]
      %s4368 = scalar_lea.vmem [#allocation2], 192
      %v4369 = vld [vmem:[%s4368] ss:$2 sm:$0xff]
      %s4370 = scalar_lea.vmem [#allocation2], 208
      %v4371 = vld [vmem:[%s4370] ss:$2 sm:$0xff]
      %s4372 = scalar_lea.vmem [#allocation2], 224
      %v4373 = vld [vmem:[%s4372] ss:$2 sm:$0xff]
      %s4374 = scalar_lea.vmem [#allocation2], 240
      %v4375 = vld [vmem:[%s4374] ss:$2 sm:$0xff]
      %s4376 = scalar_lea.vmem [#allocation2], 256
      %v4377 = vld [vmem:[%s4376] ss:$2 sm:$0xff]
      %s4378 = scalar_lea.vmem [#allocation2], 272
      %v4379 = vld [vmem:[%s4378] ss:$2 sm:$0xff]
      %s4380 = scalar_lea.vmem [#allocation2], 288
      %v4381 = vld [vmem:[%s4380] ss:$2 sm:$0xff]
      %s4382 = scalar_lea.vmem [#allocation2], 304
      %v4383 = vld [vmem:[%s4382] ss:$2 sm:$0xff]
      %s4384 = scalar_lea.vmem [#allocation2], 320
      %v4385 = vld [vmem:[%s4384] ss:$2 sm:$0xff]
      %s4386 = scalar_lea.vmem [#allocation2], 336
      %v4387 = vld [vmem:[%s4386] ss:$2 sm:$0xff]
      %s4388 = scalar_lea.vmem [#allocation2], 352
      %v4389 = vld [vmem:[%s4388] ss:$2 sm:$0xff]
      %s4390 = scalar_lea.vmem [#allocation2], 368
      %v4391 = vld [vmem:[%s4390] ss:$2 sm:$0xff]
      %s4392 = scalar_lea.vmem [#allocation2], 384
      %v4393 = vld [vmem:[%s4392] ss:$2 sm:$0xff]
      %s4394 = scalar_lea.vmem [#allocation2], 400
      %v4395 = vld [vmem:[%s4394] ss:$2 sm:$0xff]
      %s4396 = scalar_lea.vmem [#allocation2], 416
      %v4397 = vld [vmem:[%s4396] ss:$2 sm:$0xff]
      %s4398 = scalar_lea.vmem [#allocation2], 432
      %v4399 = vld [vmem:[%s4398] ss:$2 sm:$0xff]
      %s4400 = scalar_lea.vmem [#allocation2], 448
      %v4401 = vld [vmem:[%s4400] ss:$2 sm:$0xff]
      %s4402 = scalar_lea.vmem [#allocation2], 464
      %v4403 = vld [vmem:[%s4402] ss:$2 sm:$0xff]
      %s4404 = scalar_lea.vmem [#allocation2], 480
      %v4405 = vld [vmem:[%s4404] ss:$2 sm:$0xff]
      %s4406 = scalar_lea.vmem [#allocation2], 496
      %v4407 = vld [vmem:[%s4406] ss:$2 sm:$0xff]
      %s4408 = scalar_lea.vmem [#allocation2], 512
      %v4409 = vld [vmem:[%s4408] ss:$2 sm:$0xff]
      %s4410 = scalar_lea.vmem [#allocation2], 528
      %v4411 = vld [vmem:[%s4410] ss:$2 sm:$0xff]
      %s4412 = scalar_lea.vmem [#allocation2], 544
      %v4413 = vld [vmem:[%s4412] ss:$2 sm:$0xff]
      %s4414 = scalar_lea.vmem [#allocation2], 560
      %v4415 = vld [vmem:[%s4414] ss:$2 sm:$0xff]
      %s4416 = scalar_lea.vmem [#allocation2], 576
      %v4417 = vld [vmem:[%s4416] ss:$2 sm:$0xff]
      %s4418 = scalar_lea.vmem [#allocation2], 592
      %v4419 = vld [vmem:[%s4418] ss:$2 sm:$0xff]
      %s4420 = scalar_lea.vmem [#allocation2], 608
      %v4421 = vld [vmem:[%s4420] ss:$2 sm:$0xff]
      %s4422 = scalar_lea.vmem [#allocation2], 624
      %v4423 = vld [vmem:[%s4422] ss:$2 sm:$0xff]
      %s4424 = scalar_lea.vmem [#allocation2], 640
      %v4425 = vld [vmem:[%s4424] ss:$2 sm:$0xff]
      %s4426 = scalar_lea.vmem [#allocation2], 656
      %v4427 = vld [vmem:[%s4426] ss:$2 sm:$0xff]
      %s4428 = scalar_lea.vmem [#allocation2], 672
      %v4429 = vld [vmem:[%s4428] ss:$2 sm:$0xff]
      %s4430 = scalar_lea.vmem [#allocation2], 688
      %v4431 = vld [vmem:[%s4430] ss:$2 sm:$0xff]
      %s4432 = scalar_lea.vmem [#allocation2], 704
      %v4433 = vld [vmem:[%s4432] ss:$2 sm:$0xff]
      %s4434 = scalar_lea.vmem [#allocation2], 720
      %v4435 = vld [vmem:[%s4434] ss:$2 sm:$0xff]
      %s4436 = scalar_lea.vmem [#allocation2], 736
      %v4437 = vld [vmem:[%s4436] ss:$2 sm:$0xff]
      %s4438 = scalar_lea.vmem [#allocation2], 752
      %v4439 = vld [vmem:[%s4438] ss:$2 sm:$0xff]
      %s4440 = scalar_lea.vmem [#allocation2], 768
      %v4441 = vld [vmem:[%s4440] ss:$2 sm:$0xff]
      %s4442 = scalar_lea.vmem [#allocation2], 784
      %v4443 = vld [vmem:[%s4442] ss:$2 sm:$0xff]
      %s4444 = scalar_lea.vmem [#allocation2], 800
      %v4445 = vld [vmem:[%s4444] ss:$2 sm:$0xff]
      %s4446 = scalar_lea.vmem [#allocation2], 816
      %v4447 = vld [vmem:[%s4446] ss:$2 sm:$0xff]
      %s4448 = scalar_lea.vmem [#allocation2], 832
      %v4449 = vld [vmem:[%s4448] ss:$2 sm:$0xff]
      %s4450 = scalar_lea.vmem [#allocation2], 848
      %v4451 = vld [vmem:[%s4450] ss:$2 sm:$0xff]
      %s4452 = scalar_lea.vmem [#allocation2], 864
      %v4453 = vld [vmem:[%s4452] ss:$2 sm:$0xff]
      %s4454 = scalar_lea.vmem [#allocation2], 880
      %v4455 = vld [vmem:[%s4454] ss:$2 sm:$0xff]
      %s4456 = scalar_lea.vmem [#allocation2], 896
      %v4457 = vld [vmem:[%s4456] ss:$2 sm:$0xff]
      %s4458 = scalar_lea.vmem [#allocation2], 912
      %v4459 = vld [vmem:[%s4458] ss:$2 sm:$0xff]
      %s4460 = scalar_lea.vmem [#allocation2], 928
      %v4461 = vld [vmem:[%s4460] ss:$2 sm:$0xff]
      %s4462 = scalar_lea.vmem [#allocation2], 944
      %v4463 = vld [vmem:[%s4462] ss:$2 sm:$0xff]
      %s4464 = scalar_lea.vmem [#allocation2], 960
      %v4465 = vld [vmem:[%s4464] ss:$2 sm:$0xff]
      %s4466 = scalar_lea.vmem [#allocation2], 976
      %v4467 = vld [vmem:[%s4466] ss:$2 sm:$0xff]
      %s4468 = scalar_lea.vmem [#allocation2], 992
      %v4469 = vld [vmem:[%s4468] ss:$2 sm:$0xff]
      %s4470 = scalar_lea.vmem [#allocation2], 1008
      %v4471 = vld [vmem:[%s4470] ss:$2 sm:$0xff]
      %s4472 = scalar_lea.vmem [#allocation2], 1
      %v4473 = vld [vmem:[%s4472] ss:$2 sm:$0xff]
      %s4474 = scalar_lea.vmem [#allocation2], 17
      %v4475 = vld [vmem:[%s4474] ss:$2 sm:$0xff]
      %s4476 = scalar_lea.vmem [#allocation2], 33
      %v4477 = vld [vmem:[%s4476] ss:$2 sm:$0xff]
      %s4478 = scalar_lea.vmem [#allocation2], 49
      %v4479 = vld [vmem:[%s4478] ss:$2 sm:$0xff]
      %s4480 = scalar_lea.vmem [#allocation2], 65
      %v4481 = vld [vmem:[%s4480] ss:$2 sm:$0xff]
      %s4482 = scalar_lea.vmem [#allocation2], 81
      %v4483 = vld [vmem:[%s4482] ss:$2 sm:$0xff]
      %s4484 = scalar_lea.vmem [#allocation2], 97
      %v4485 = vld [vmem:[%s4484] ss:$2 sm:$0xff]
      %s4486 = scalar_lea.vmem [#allocation2], 113
      %v4487 = vld [vmem:[%s4486] ss:$2 sm:$0xff]
      %s4488 = scalar_lea.vmem [#allocation2], 129
      %v4489 = vld [vmem:[%s4488] ss:$2 sm:$0xff]
      %s4490 = scalar_lea.vmem [#allocation2], 145
      %v4491 = vld [vmem:[%s4490] ss:$2 sm:$0xff]
      %s4492 = scalar_lea.vmem [#allocation2], 161
      %v4493 = vld [vmem:[%s4492] ss:$2 sm:$0xff]
      %s4494 = scalar_lea.vmem [#allocation2], 177
      %v4495 = vld [vmem:[%s4494] ss:$2 sm:$0xff]
      %s4496 = scalar_lea.vmem [#allocation2], 193
      %v4497 = vld [vmem:[%s4496] ss:$2 sm:$0xff]
      %s4498 = scalar_lea.vmem [#allocation2], 209
      %v4499 = vld [vmem:[%s4498] ss:$2 sm:$0xff]
      %s4500 = scalar_lea.vmem [#allocation2], 225
      %v4501 = vld [vmem:[%s4500] ss:$2 sm:$0xff]
      %s4502 = scalar_lea.vmem [#allocation2], 241
      %v4503 = vld [vmem:[%s4502] ss:$2 sm:$0xff]
      %s4504 = scalar_lea.vmem [#allocation2], 257
      %v4505 = vld [vmem:[%s4504] ss:$2 sm:$0xff]
      %s4506 = scalar_lea.vmem [#allocation2], 273
      %v4507 = vld [vmem:[%s4506] ss:$2 sm:$0xff]
      %s4508 = scalar_lea.vmem [#allocation2], 289
      %v4509 = vld [vmem:[%s4508] ss:$2 sm:$0xff]
      %s4510 = scalar_lea.vmem [#allocation2], 305
      %v4511 = vld [vmem:[%s4510] ss:$2 sm:$0xff]
      %s4512 = scalar_lea.vmem [#allocation2], 321
      %v4513 = vld [vmem:[%s4512] ss:$2 sm:$0xff]
      %s4514 = scalar_lea.vmem [#allocation2], 337
      %v4515 = vld [vmem:[%s4514] ss:$2 sm:$0xff]
      %s4516 = scalar_lea.vmem [#allocation2], 353
      %v4517 = vld [vmem:[%s4516] ss:$2 sm:$0xff]
      %s4518 = scalar_lea.vmem [#allocation2], 369
      %v4519 = vld [vmem:[%s4518] ss:$2 sm:$0xff]
      %s4520 = scalar_lea.vmem [#allocation2], 385
      %v4521 = vld [vmem:[%s4520] ss:$2 sm:$0xff]
      %s4522 = scalar_lea.vmem [#allocation2], 401
      %v4523 = vld [vmem:[%s4522] ss:$2 sm:$0xff]
      %s4524 = scalar_lea.vmem [#allocation2], 417
      %v4525 = vld [vmem:[%s4524] ss:$2 sm:$0xff]
      %s4526 = scalar_lea.vmem [#allocation2], 433
      %v4527 = vld [vmem:[%s4526] ss:$2 sm:$0xff]
      %s4528 = scalar_lea.vmem [#allocation2], 449
      %v4529 = vld [vmem:[%s4528] ss:$2 sm:$0xff]
      %s4530 = scalar_lea.vmem [#allocation2], 465
      %v4531 = vld [vmem:[%s4530] ss:$2 sm:$0xff]
      %s4532 = scalar_lea.vmem [#allocation2], 481
      %v4533 = vld [vmem:[%s4532] ss:$2 sm:$0xff]
      %s4534 = scalar_lea.vmem [#allocation2], 497
      %v4535 = vld [vmem:[%s4534] ss:$2 sm:$0xff]
      %s4536 = scalar_lea.vmem [#allocation2], 513
      %v4537 = vld [vmem:[%s4536] ss:$2 sm:$0xff]
      %s4538 = scalar_lea.vmem [#allocation2], 529
      %v4539 = vld [vmem:[%s4538] ss:$2 sm:$0xff]
      %s4540 = scalar_lea.vmem [#allocation2], 545
      %v4541 = vld [vmem:[%s4540] ss:$2 sm:$0xff]
      %s4542 = scalar_lea.vmem [#allocation2], 561
      %v4543 = vld [vmem:[%s4542] ss:$2 sm:$0xff]
      %s4544 = scalar_lea.vmem [#allocation2], 577
      %v4545 = vld [vmem:[%s4544] ss:$2 sm:$0xff]
      %s4546 = scalar_lea.vmem [#allocation2], 593
      %v4547 = vld [vmem:[%s4546] ss:$2 sm:$0xff]
      %s4548 = scalar_lea.vmem [#allocation2], 609
      %v4549 = vld [vmem:[%s4548] ss:$2 sm:$0xff]
      %s4550 = scalar_lea.vmem [#allocation2], 625
      %v4551 = vld [vmem:[%s4550] ss:$2 sm:$0xff]
      %s4552 = scalar_lea.vmem [#allocation2], 641
      %v4553 = vld [vmem:[%s4552] ss:$2 sm:$0xff]
      %s4554 = scalar_lea.vmem [#allocation2], 657
      %v4555 = vld [vmem:[%s4554] ss:$2 sm:$0xff]
      %s4556 = scalar_lea.vmem [#allocation2], 673
      %v4557 = vld [vmem:[%s4556] ss:$2 sm:$0xff]
      %s4558 = scalar_lea.vmem [#allocation2], 689
      %v4559 = vld [vmem:[%s4558] ss:$2 sm:$0xff]
      %s4560 = scalar_lea.vmem [#allocation2], 705
      %v4561 = vld [vmem:[%s4560] ss:$2 sm:$0xff]
      %s4562 = scalar_lea.vmem [#allocation2], 721
      %v4563 = vld [vmem:[%s4562] ss:$2 sm:$0xff]
      %s4564 = scalar_lea.vmem [#allocation2], 737
      %v4565 = vld [vmem:[%s4564] ss:$2 sm:$0xff]
      %s4566 = scalar_lea.vmem [#allocation2], 753
      %v4567 = vld [vmem:[%s4566] ss:$2 sm:$0xff]
      %s4568 = scalar_lea.vmem [#allocation2], 769
      %v4569 = vld [vmem:[%s4568] ss:$2 sm:$0xff]
      %s4570 = scalar_lea.vmem [#allocation2], 785
      %v4571 = vld [vmem:[%s4570] ss:$2 sm:$0xff]
      %s4572 = scalar_lea.vmem [#allocation2], 801
      %v4573 = vld [vmem:[%s4572] ss:$2 sm:$0xff]
      %s4574 = scalar_lea.vmem [#allocation2], 817
      %v4575 = vld [vmem:[%s4574] ss:$2 sm:$0xff]
      %s4576 = scalar_lea.vmem [#allocation2], 833
      %v4577 = vld [vmem:[%s4576] ss:$2 sm:$0xff]
      %s4578 = scalar_lea.vmem [#allocation2], 849
      %v4579 = vld [vmem:[%s4578] ss:$2 sm:$0xff]
      %s4580 = scalar_lea.vmem [#allocation2], 865
      %v4581 = vld [vmem:[%s4580] ss:$2 sm:$0xff]
      %s4582 = scalar_lea.vmem [#allocation2], 881
      %v4583 = vld [vmem:[%s4582] ss:$2 sm:$0xff]
      %s4584 = scalar_lea.vmem [#allocation2], 897
      %v4585 = vld [vmem:[%s4584] ss:$2 sm:$0xff]
      %s4586 = scalar_lea.vmem [#allocation2], 913
      %v4587 = vld [vmem:[%s4586] ss:$2 sm:$0xff]
      %s4588 = scalar_lea.vmem [#allocation2], 929
      %v4589 = vld [vmem:[%s4588] ss:$2 sm:$0xff]
      %s4590 = scalar_lea.vmem [#allocation2], 945
      %v4591 = vld [vmem:[%s4590] ss:$2 sm:$0xff]
      %s4592 = scalar_lea.vmem [#allocation2], 961
      %v4593 = vld [vmem:[%s4592] ss:$2 sm:$0xff]
      %s4594 = scalar_lea.vmem [#allocation2], 977
      %v4595 = vld [vmem:[%s4594] ss:$2 sm:$0xff]
      %s4596 = scalar_lea.vmem [#allocation2], 993
      %v4597 = vld [vmem:[%s4596] ss:$2 sm:$0xff]
      %s4598 = scalar_lea.vmem [#allocation2], 1009
      %v4599 = vld [vmem:[%s4598] ss:$2 sm:$0xff]
      %v4600 = vmax.f32 %v4345, %v4473
      %v4601 = vmax.f32 %v4347, %v4475
      %v4602 = vmax.f32 %v4349, %v4477
      %v4603 = vmax.f32 %v4351, %v4479
      %v4604 = vmax.f32 %v4353, %v4481
      %v4605 = vmax.f32 %v4355, %v4483
      %v4606 = vmax.f32 %v4357, %v4485
      %v4607 = vmax.f32 %v4359, %v4487
      %v4608 = vmax.f32 %v4361, %v4489
      %v4609 = vmax.f32 %v4363, %v4491
      %v4610 = vmax.f32 %v4365, %v4493
      %v4611 = vmax.f32 %v4367, %v4495
      %v4612 = vmax.f32 %v4369, %v4497
      %v4613 = vmax.f32 %v4371, %v4499
      %v4614 = vmax.f32 %v4373, %v4501
      %v4615 = vmax.f32 %v4375, %v4503
      %v4616 = vmax.f32 %v4377, %v4505
      %v4617 = vmax.f32 %v4379, %v4507
      %v4618 = vmax.f32 %v4381, %v4509
      %v4619 = vmax.f32 %v4383, %v4511
      %v4620 = vmax.f32 %v4385, %v4513
      %v4621 = vmax.f32 %v4387, %v4515
      %v4622 = vmax.f32 %v4389, %v4517
      %v4623 = vmax.f32 %v4391, %v4519
      %v4624 = vmax.f32 %v4393, %v4521
      %v4625 = vmax.f32 %v4395, %v4523
      %v4626 = vmax.f32 %v4397, %v4525
      %v4627 = vmax.f32 %v4399, %v4527
      %v4628 = vmax.f32 %v4401, %v4529
      %v4629 = vmax.f32 %v4403, %v4531
      %v4630 = vmax.f32 %v4405, %v4533
      %v4631 = vmax.f32 %v4407, %v4535
      %v4632 = vmax.f32 %v4409, %v4537
      %v4633 = vmax.f32 %v4411, %v4539
      %v4634 = vmax.f32 %v4413, %v4541
      %v4635 = vmax.f32 %v4415, %v4543
      %v4636 = vmax.f32 %v4417, %v4545
      %v4637 = vmax.f32 %v4419, %v4547
      %v4638 = vmax.f32 %v4421, %v4549
      %v4639 = vmax.f32 %v4423, %v4551
      %v4640 = vmax.f32 %v4425, %v4553
      %v4641 = vmax.f32 %v4427, %v4555
      %v4642 = vmax.f32 %v4429, %v4557
      %v4643 = vmax.f32 %v4431, %v4559
      %v4644 = vmax.f32 %v4433, %v4561
      %v4645 = vmax.f32 %v4435, %v4563
      %v4646 = vmax.f32 %v4437, %v4565
      %v4647 = vmax.f32 %v4439, %v4567
      %v4648 = vmax.f32 %v4441, %v4569
      %v4649 = vmax.f32 %v4443, %v4571
      %v4650 = vmax.f32 %v4445, %v4573
      %v4651 = vmax.f32 %v4447, %v4575
      %v4652 = vmax.f32 %v4449, %v4577
      %v4653 = vmax.f32 %v4451, %v4579
      %v4654 = vmax.f32 %v4453, %v4581
      %v4655 = vmax.f32 %v4455, %v4583
      %v4656 = vmax.f32 %v4457, %v4585
      %v4657 = vmax.f32 %v4459, %v4587
      %v4658 = vmax.f32 %v4461, %v4589
      %v4659 = vmax.f32 %v4463, %v4591
      %v4660 = vmax.f32 %v4465, %v4593
      %v4661 = vmax.f32 %v4467, %v4595
      %v4662 = vmax.f32 %v4469, %v4597
      %v4663 = vmax.f32 %v4471, %v4599
      %v4664 = vmax.f32 %v4600, %v4602
      %v4665 = vmax.f32 %v4601, %v4603
      %v4666 = vmax.f32 %v4604, %v4606
      %v4667 = vmax.f32 %v4605, %v4607
      %v4668 = vmax.f32 %v4608, %v4610
      %v4669 = vmax.f32 %v4609, %v4611
      %v4670 = vmax.f32 %v4612, %v4614
      %v4671 = vmax.f32 %v4613, %v4615
      %v4672 = vmax.f32 %v4616, %v4618
      %v4673 = vmax.f32 %v4617, %v4619
      %v4674 = vmax.f32 %v4620, %v4622
      %v4675 = vmax.f32 %v4621, %v4623
      %v4676 = vmax.f32 %v4624, %v4626
      %v4677 = vmax.f32 %v4625, %v4627
      %v4678 = vmax.f32 %v4628, %v4630
      %v4679 = vmax.f32 %v4629, %v4631
      %v4680 = vmax.f32 %v4632, %v4634
      %v4681 = vmax.f32 %v4633, %v4635
      %v4682 = vmax.f32 %v4636, %v4638
      %v4683 = vmax.f32 %v4637, %v4639
      %v4684 = vmax.f32 %v4640, %v4642
      %v4685 = vmax.f32 %v4641, %v4643
      %v4686 = vmax.f32 %v4644, %v4646
      %v4687 = vmax.f32 %v4645, %v4647
      %v4688 = vmax.f32 %v4648, %v4650
      %v4689 = vmax.f32 %v4649, %v4651
      %v4690 = vmax.f32 %v4652, %v4654
      %v4691 = vmax.f32 %v4653, %v4655
      %v4692 = vmax.f32 %v4656, %v4658
      %v4693 = vmax.f32 %v4657, %v4659
      %v4694 = vmax.f32 %v4660, %v4662
      %v4695 = vmax.f32 %v4661, %v4663
      %vm4729 = vcmask 1040384
      %v4730 = vrot.slane 0.0, 7
      %v4731 = vsel %vm4729, %v4730, %v4730
      %v4732 = vrot.slane %v4664, 7
      %v4733 = vrot.slane %v4665, 7
      %v4734 = vsel %vm4729, %v4732, %v4733
      %v4735 = vrot.slane %v4666, 7
      %v4736 = vrot.slane %v4667, 7
      %v4737 = vsel %vm4729, %v4735, %v4736
      %v4738 = vrot.slane %v4668, 7
      %v4739 = vrot.slane %v4669, 7
      %v4740 = vsel %vm4729, %v4738, %v4739
      %v4741 = vrot.slane %v4670, 7
      %v4742 = vrot.slane %v4671, 7
      %v4743 = vsel %vm4729, %v4741, %v4742
      %v4744 = vrot.slane %v4672, 7
      %v4745 = vrot.slane %v4673, 7
      %v4746 = vsel %vm4729, %v4744, %v4745
      %v4747 = vrot.slane %v4674, 7
      %v4748 = vrot.slane %v4675, 7
      %v4749 = vsel %vm4729, %v4747, %v4748
      %v4750 = vrot.slane %v4676, 7
      %v4751 = vrot.slane %v4677, 7
      %v4752 = vsel %vm4729, %v4750, %v4751
      %v4753 = vrot.slane %v4678, 7
      %v4754 = vrot.slane %v4679, 7
      %v4755 = vsel %vm4729, %v4753, %v4754
      %v4756 = vrot.slane %v4680, 7
      %v4757 = vrot.slane %v4681, 7
      %v4758 = vsel %vm4729, %v4756, %v4757
      %v4759 = vrot.slane %v4682, 7
      %v4760 = vrot.slane %v4683, 7
      %v4761 = vsel %vm4729, %v4759, %v4760
      %v4762 = vrot.slane %v4684, 7
      %v4763 = vrot.slane %v4685, 7
      %v4764 = vsel %vm4729, %v4762, %v4763
      %v4765 = vrot.slane %v4686, 7
      %v4766 = vrot.slane %v4687, 7
      %v4767 = vsel %vm4729, %v4765, %v4766
      %v4768 = vrot.slane %v4688, 7
      %v4769 = vrot.slane %v4689, 7
      %v4770 = vsel %vm4729, %v4768, %v4769
      %v4771 = vrot.slane %v4690, 7
      %v4772 = vrot.slane %v4691, 7
      %v4773 = vsel %vm4729, %v4771, %v4772
      %v4774 = vrot.slane %v4692, 7
      %v4775 = vrot.slane %v4693, 7
      %v4776 = vsel %vm4729, %v4774, %v4775
      %v4777 = vrot.slane %v4694, 7
      %v4778 = vrot.slane %v4695, 7
      %v4779 = vsel %vm4729, %v4777, %v4778
      %v4829 = vsel %vm4729, 0.0, %v4730
      %v4830 = vsel %vm4729, 0.0, %v4732
      %v4831 = vsel %vm4729, 0.0, %v4735
      %v4832 = vsel %vm4729, 0.0, %v4738
      %v4833 = vsel %vm4729, 0.0, %v4741
      %v4834 = vsel %vm4729, 0.0, %v4744
      %v4835 = vsel %vm4729, 0.0, %v4747
      %v4836 = vsel %vm4729, 0.0, %v4750
      %v4837 = vsel %vm4729, 0.0, %v4753
      %v4838 = vsel %vm4729, 0.0, %v4756
      %v4839 = vsel %vm4729, 0.0, %v4759
      %v4840 = vsel %vm4729, 0.0, %v4762
      %v4841 = vsel %vm4729, 0.0, %v4765
      %v4842 = vsel %vm4729, 0.0, %v4768
      %v4843 = vsel %vm4729, 0.0, %v4771
      %v4844 = vsel %vm4729, 0.0, %v4774
      %v4845 = vsel %vm4729, 0.0, %v4777
      %v4846 = vsel %vm4729, %v4730, 0.0
      %v4847 = vsel %vm4729, %v4733, 0.0
      %v4848 = vsel %vm4729, %v4736, 0.0
      %v4849 = vsel %vm4729, %v4739, 0.0
      %v4850 = vsel %vm4729, %v4742, 0.0
      %v4851 = vsel %vm4729, %v4745, 0.0
      %v4852 = vsel %vm4729, %v4748, 0.0
      %v4853 = vsel %vm4729, %v4751, 0.0
      %v4854 = vsel %vm4729, %v4754, 0.0
      %v4855 = vsel %vm4729, %v4757, 0.0
      %v4856 = vsel %vm4729, %v4760, 0.0
      %v4857 = vsel %vm4729, %v4763, 0.0
      %v4858 = vsel %vm4729, %v4766, 0.0
      %v4859 = vsel %vm4729, %v4769, 0.0
      %v4860 = vsel %vm4729, %v4772, 0.0
      %v4861 = vsel %vm4729, %v4775, 0.0
      %v4862 = vsel %vm4729, %v4778, 0.0
      %vm4895 = vcmask 1046528
      %v4896 = vrot.slane %v4829, 1
      %v4897 = vrot.slane %v4731, 1
      %v4898 = vsel %vm4895, %v4896, %v4897
      %v4899 = vrot.slane %v4846, 1
      %v4900 = vsel %vm4895, %v4897, %v4899
      %v4901 = vrot.slane %v4830, 1
      %v4902 = vrot.slane %v4734, 1
      %v4903 = vsel %vm4895, %v4901, %v4902
      %v4904 = vrot.slane %v4847, 1
      %v4905 = vsel %vm4895, %v4902, %v4904
      %v4906 = vrot.slane %v4831, 1
      %v4907 = vrot.slane %v4737, 1
      %v4908 = vsel %vm4895, %v4906, %v4907
      %v4909 = vrot.slane %v4848, 1
      %v4910 = vsel %vm4895, %v4907, %v4909
      %v4911 = vrot.slane %v4832, 1
      %v4912 = vrot.slane %v4740, 1
      %v4913 = vsel %vm4895, %v4911, %v4912
      %v4914 = vrot.slane %v4849, 1
      %v4915 = vsel %vm4895, %v4912, %v4914
      %v4916 = vrot.slane %v4833, 1
      %v4917 = vrot.slane %v4743, 1
      %v4918 = vsel %vm4895, %v4916, %v4917
      %v4919 = vrot.slane %v4850, 1
      %v4920 = vsel %vm4895, %v4917, %v4919
      %v4921 = vrot.slane %v4834, 1
      %v4922 = vrot.slane %v4746, 1
      %v4923 = vsel %vm4895, %v4921, %v4922
      %v4924 = vrot.slane %v4851, 1
      %v4925 = vsel %vm4895, %v4922, %v4924
      %v4926 = vrot.slane %v4835, 1
      %v4927 = vrot.slane %v4749, 1
      %v4928 = vsel %vm4895, %v4926, %v4927
      %v4929 = vrot.slane %v4852, 1
      %v4930 = vsel %vm4895, %v4927, %v4929
      %v4931 = vrot.slane %v4836, 1
      %v4932 = vrot.slane %v4752, 1
      %v4933 = vsel %vm4895, %v4931, %v4932
      %v4934 = vrot.slane %v4853, 1
      %v4935 = vsel %vm4895, %v4932, %v4934
      %v4936 = vrot.slane %v4837, 1
      %v4937 = vrot.slane %v4755, 1
      %v4938 = vsel %vm4895, %v4936, %v4937
      %v4939 = vrot.slane %v4854, 1
      %v4940 = vsel %vm4895, %v4937, %v4939
      %v4941 = vrot.slane %v4838, 1
      %v4942 = vrot.slane %v4758, 1
      %v4943 = vsel %vm4895, %v4941, %v4942
      %v4944 = vrot.slane %v4855, 1
      %v4945 = vsel %vm4895, %v4942, %v4944
      %v4946 = vrot.slane %v4839, 1
      %v4947 = vrot.slane %v4761, 1
      %v4948 = vsel %vm4895, %v4946, %v4947
      %v4949 = vrot.slane %v4856, 1
      %v4950 = vsel %vm4895, %v4947, %v4949
      %v4951 = vrot.slane %v4840, 1
      %v4952 = vrot.slane %v4764, 1
      %v4953 = vsel %vm4895, %v4951, %v4952
      %v4954 = vrot.slane %v4857, 1
      %v4955 = vsel %vm4895, %v4952, %v4954
      %v4956 = vrot.slane %v4841, 1
      %v4957 = vrot.slane %v4767, 1
      %v4958 = vsel %vm4895, %v4956, %v4957
      %v4959 = vrot.slane %v4858, 1
      %v4960 = vsel %vm4895, %v4957, %v4959
      %v4961 = vrot.slane %v4842, 1
      %v4962 = vrot.slane %v4770, 1
      %v4963 = vsel %vm4895, %v4961, %v4962
      %v4964 = vrot.slane %v4859, 1
      %v4965 = vsel %vm4895, %v4962, %v4964
      %v4966 = vrot.slane %v4843, 1
      %v4967 = vrot.slane %v4773, 1
      %v4968 = vsel %vm4895, %v4966, %v4967
      %v4969 = vrot.slane %v4860, 1
      %v4970 = vsel %vm4895, %v4967, %v4969
      %v4971 = vrot.slane %v4844, 1
      %v4972 = vrot.slane %v4776, 1
      %v4973 = vsel %vm4895, %v4971, %v4972
      %v4974 = vrot.slane %v4861, 1
      %v4975 = vsel %vm4895, %v4972, %v4974
      %4976 = vrot.lane.b32.xlu0 %v4898, 16
      %v4977 = vpop.permute.xlu0 %4976
      %4978 = vrot.lane.b32.xlu0 %v4900, 16
      %v4979 = vpop.permute.xlu0 %4978
      %4980 = vrot.lane.b32.xlu0 %v4903, 16
      %v4981 = vpop.permute.xlu0 %4980
      %4982 = vrot.lane.b32.xlu0 %v4905, 16
      %v4983 = vpop.permute.xlu0 %4982
      %4984 = vrot.lane.b32.xlu0 %v4908, 16
      %v4985 = vpop.permute.xlu0 %4984
      %4986 = vrot.lane.b32.xlu0 %v4910, 16
      %v4987 = vpop.permute.xlu0 %4986
      %4988 = vrot.lane.b32.xlu0 %v4913, 16
      %v4989 = vpop.permute.xlu0 %4988
      %4990 = vrot.lane.b32.xlu0 %v4915, 16
      %v4991 = vpop.permute.xlu0 %4990
      %4992 = vrot.lane.b32.xlu0 %v4918, 16
      %v4993 = vpop.permute.xlu0 %4992
      %4994 = vrot.lane.b32.xlu0 %v4920, 16
      %v4995 = vpop.permute.xlu0 %4994
      %4996 = vrot.lane.b32.xlu0 %v4923, 16
      %v4997 = vpop.permute.xlu0 %4996
      %4998 = vrot.lane.b32.xlu0 %v4925, 16
      %v4999 = vpop.permute.xlu0 %4998
      %5000 = vrot.lane.b32.xlu0 %v4928, 16
      %v5001 = vpop.permute.xlu0 %5000
      %5002 = vrot.lane.b32.xlu0 %v4930, 16
      %v5003 = vpop.permute.xlu0 %5002
      %5004 = vrot.lane.b32.xlu0 %v4933, 16
      %v5005 = vpop.permute.xlu0 %5004
      %5006 = vrot.lane.b32.xlu0 %v4935, 16
      %v5007 = vpop.permute.xlu0 %5006
      %5008 = vrot.lane.b32.xlu0 %v4938, 16
      %v5009 = vpop.permute.xlu0 %5008
      %5010 = vrot.lane.b32.xlu0 %v4940, 16
      %v5011 = vpop.permute.xlu0 %5010
      %5012 = vrot.lane.b32.xlu0 %v4943, 16
      %v5013 = vpop.permute.xlu0 %5012
      %5014 = vrot.lane.b32.xlu0 %v4945, 16
      %v5015 = vpop.permute.xlu0 %5014
      %5016 = vrot.lane.b32.xlu0 %v4948, 16
      %v5017 = vpop.permute.xlu0 %5016
      %5018 = vrot.lane.b32.xlu0 %v4950, 16
      %v5019 = vpop.permute.xlu0 %5018
      %5020 = vrot.lane.b32.xlu0 %v4953, 16
      %v5021 = vpop.permute.xlu0 %5020
      %5022 = vrot.lane.b32.xlu0 %v4955, 16
      %v5023 = vpop.permute.xlu0 %5022
      %5024 = vrot.lane.b32.xlu0 %v4958, 16
      %v5025 = vpop.permute.xlu0 %5024
      %5026 = vrot.lane.b32.xlu0 %v4960, 16
      %v5027 = vpop.permute.xlu0 %5026
      %5028 = vrot.lane.b32.xlu0 %v4963, 16
      %v5029 = vpop.permute.xlu0 %5028
      %5030 = vrot.lane.b32.xlu0 %v4965, 16
      %v5031 = vpop.permute.xlu0 %5030
      %5032 = vrot.lane.b32.xlu0 %v4968, 16
      %v5033 = vpop.permute.xlu0 %5032
      %5034 = vrot.lane.b32.xlu0 %v4970, 16
      %v5035 = vpop.permute.xlu0 %5034
      %5036 = vrot.lane.b32.xlu0 %v4973, 16
      %v5037 = vpop.permute.xlu0 %5036
      %5038 = vrot.lane.b32.xlu0 %v4975, 16
      %v5039 = vpop.permute.xlu0 %5038
      %vm5072 = vcmask 1045504
      %v5073 = vrot.slane %v4829, 2
      %v5074 = vrot.slane %v4731, 2
      %v5075 = vsel %vm5072, %v5073, %v5074
      %v5076 = vrot.slane %v4846, 2
      %v5077 = vsel %vm5072, %v5074, %v5076
      %v5078 = vrot.slane %v4830, 2
      %v5079 = vrot.slane %v4734, 2
      %v5080 = vsel %vm5072, %v5078, %v5079
      %v5081 = vrot.slane %v4847, 2
      %v5082 = vsel %vm5072, %v5079, %v5081
      %v5083 = vrot.slane %v4831, 2
      %v5084 = vrot.slane %v4737, 2
      %v5085 = vsel %vm5072, %v5083, %v5084
      %v5086 = vrot.slane %v4848, 2
      %v5087 = vsel %vm5072, %v5084, %v5086
      %v5088 = vrot.slane %v4832, 2
      %v5089 = vrot.slane %v4740, 2
      %v5090 = vsel %vm5072, %v5088, %v5089
      %v5091 = vrot.slane %v4849, 2
      %v5092 = vsel %vm5072, %v5089, %v5091
      %v5093 = vrot.slane %v4833, 2
      %v5094 = vrot.slane %v4743, 2
      %v5095 = vsel %vm5072, %v5093, %v5094
      %v5096 = vrot.slane %v4850, 2
      %v5097 = vsel %vm5072, %v5094, %v5096
      %v5098 = vrot.slane %v4834, 2
      %v5099 = vrot.slane %v4746, 2
      %v5100 = vsel %vm5072, %v5098, %v5099
      %v5101 = vrot.slane %v4851, 2
      %v5102 = vsel %vm5072, %v5099, %v5101
      %v5103 = vrot.slane %v4835, 2
      %v5104 = vrot.slane %v4749, 2
      %v5105 = vsel %vm5072, %v5103, %v5104
      %v5106 = vrot.slane %v4852, 2
      %v5107 = vsel %vm5072, %v5104, %v5106
      %v5108 = vrot.slane %v4836, 2
      %v5109 = vrot.slane %v4752, 2
      %v5110 = vsel %vm5072, %v5108, %v5109
      %v5111 = vrot.slane %v4853, 2
      %v5112 = vsel %vm5072, %v5109, %v5111
      %v5113 = vrot.slane %v4837, 2
      %v5114 = vrot.slane %v4755, 2
      %v5115 = vsel %vm5072, %v5113, %v5114
      %v5116 = vrot.slane %v4854, 2
      %v5117 = vsel %vm5072, %v5114, %v5116
      %v5118 = vrot.slane %v4838, 2
      %v5119 = vrot.slane %v4758, 2
      %v5120 = vsel %vm5072, %v5118, %v5119
      %v5121 = vrot.slane %v4855, 2
      %v5122 = vsel %vm5072, %v5119, %v5121
      %v5123 = vrot.slane %v4839, 2
      %v5124 = vrot.slane %v4761, 2
      %v5125 = vsel %vm5072, %v5123, %v5124
      %v5126 = vrot.slane %v4856, 2
      %v5127 = vsel %vm5072, %v5124, %v5126
      %v5128 = vrot.slane %v4840, 2
      %v5129 = vrot.slane %v4764, 2
      %v5130 = vsel %vm5072, %v5128, %v5129
      %v5131 = vrot.slane %v4857, 2
      %v5132 = vsel %vm5072, %v5129, %v5131
      %v5133 = vrot.slane %v4841, 2
      %v5134 = vrot.slane %v4767, 2
      %v5135 = vsel %vm5072, %v5133, %v5134
      %v5136 = vrot.slane %v4858, 2
      %v5137 = vsel %vm5072, %v5134, %v5136
      %v5138 = vrot.slane %v4842, 2
      %v5139 = vrot.slane %v4770, 2
      %v5140 = vsel %vm5072, %v5138, %v5139
      %v5141 = vrot.slane %v4859, 2
      %v5142 = vsel %vm5072, %v5139, %v5141
      %v5143 = vrot.slane %v4843, 2
      %v5144 = vrot.slane %v4773, 2
      %v5145 = vsel %vm5072, %v5143, %v5144
      %v5146 = vrot.slane %v4860, 2
      %v5147 = vsel %vm5072, %v5144, %v5146
      %v5148 = vrot.slane %v4844, 2
      %v5149 = vrot.slane %v4776, 2
      %v5150 = vsel %vm5072, %v5148, %v5149
      %v5151 = vrot.slane %v4861, 2
      %v5152 = vsel %vm5072, %v5149, %v5151
      %5153 = vrot.lane.b32.xlu0 %v5075, 32
      %v5154 = vpop.permute.xlu0 %5153
      %5155 = vrot.lane.b32.xlu0 %v5077, 32
      %v5156 = vpop.permute.xlu0 %5155
      %5157 = vrot.lane.b32.xlu0 %v5080, 32
      %v5158 = vpop.permute.xlu0 %5157
      %5159 = vrot.lane.b32.xlu0 %v5082, 32
      %v5160 = vpop.permute.xlu0 %5159
      %5161 = vrot.lane.b32.xlu0 %v5085, 32
      %v5162 = vpop.permute.xlu0 %5161
      %5163 = vrot.lane.b32.xlu0 %v5087, 32
      %v5164 = vpop.permute.xlu0 %5163
      %5165 = vrot.lane.b32.xlu0 %v5090, 32
      %v5166 = vpop.permute.xlu0 %5165
      %5167 = vrot.lane.b32.xlu0 %v5092, 32
      %v5168 = vpop.permute.xlu0 %5167
      %5169 = vrot.lane.b32.xlu0 %v5095, 32
      %v5170 = vpop.permute.xlu0 %5169
      %5171 = vrot.lane.b32.xlu0 %v5097, 32
      %v5172 = vpop.permute.xlu0 %5171
      %5173 = vrot.lane.b32.xlu0 %v5100, 32
      %v5174 = vpop.permute.xlu0 %5173
      %5175 = vrot.lane.b32.xlu0 %v5102, 32
      %v5176 = vpop.permute.xlu0 %5175
      %5177 = vrot.lane.b32.xlu0 %v5105, 32
      %v5178 = vpop.permute.xlu0 %5177
      %5179 = vrot.lane.b32.xlu0 %v5107, 32
      %v5180 = vpop.permute.xlu0 %5179
      %5181 = vrot.lane.b32.xlu0 %v5110, 32
      %v5182 = vpop.permute.xlu0 %5181
      %5183 = vrot.lane.b32.xlu0 %v5112, 32
      %v5184 = vpop.permute.xlu0 %5183
      %5185 = vrot.lane.b32.xlu0 %v5115, 32
      %v5186 = vpop.permute.xlu0 %5185
      %5187 = vrot.lane.b32.xlu0 %v5117, 32
      %v5188 = vpop.permute.xlu0 %5187
      %5189 = vrot.lane.b32.xlu0 %v5120, 32
      %v5190 = vpop.permute.xlu0 %5189
      %5191 = vrot.lane.b32.xlu0 %v5122, 32
      %v5192 = vpop.permute.xlu0 %5191
      %5193 = vrot.lane.b32.xlu0 %v5125, 32
      %v5194 = vpop.permute.xlu0 %5193
      %5195 = vrot.lane.b32.xlu0 %v5127, 32
      %v5196 = vpop.permute.xlu0 %5195
      %5197 = vrot.lane.b32.xlu0 %v5130, 32
      %v5198 = vpop.permute.xlu0 %5197
      %5199 = vrot.lane.b32.xlu0 %v5132, 32
      %v5200 = vpop.permute.xlu0 %5199
      %5201 = vrot.lane.b32.xlu0 %v5135, 32
      %v5202 = vpop.permute.xlu0 %5201
      %5203 = vrot.lane.b32.xlu0 %v5137, 32
      %v5204 = vpop.permute.xlu0 %5203
      %5205 = vrot.lane.b32.xlu0 %v5140, 32
      %v5206 = vpop.permute.xlu0 %5205
      %5207 = vrot.lane.b32.xlu0 %v5142, 32
      %v5208 = vpop.permute.xlu0 %5207
      %5209 = vrot.lane.b32.xlu0 %v5145, 32
      %v5210 = vpop.permute.xlu0 %5209
      %5211 = vrot.lane.b32.xlu0 %v5147, 32
      %v5212 = vpop.permute.xlu0 %5211
      %5213 = vrot.lane.b32.xlu0 %v5150, 32
      %v5214 = vpop.permute.xlu0 %5213
      %5215 = vrot.lane.b32.xlu0 %v5152, 32
      %v5216 = vpop.permute.xlu0 %5215
      %5250 = vrot.lane.b32.xlu0 %v4830, 48
      %v5251 = vpop.permute.xlu0 %5250
      %5252 = vrot.lane.b32.xlu0 %v4734, 48
      %v5253 = vpop.permute.xlu0 %5252
      %5254 = vrot.lane.b32.xlu0 %v4831, 48
      %v5255 = vpop.permute.xlu0 %5254
      %5256 = vrot.lane.b32.xlu0 %v4737, 48
      %v5257 = vpop.permute.xlu0 %5256
      %5258 = vrot.lane.b32.xlu0 %v4832, 48
      %v5259 = vpop.permute.xlu0 %5258
      %5260 = vrot.lane.b32.xlu0 %v4740, 48
      %v5261 = vpop.permute.xlu0 %5260
      %5262 = vrot.lane.b32.xlu0 %v4833, 48
      %v5263 = vpop.permute.xlu0 %5262
      %5264 = vrot.lane.b32.xlu0 %v4743, 48
      %v5265 = vpop.permute.xlu0 %5264
      %5266 = vrot.lane.b32.xlu0 %v4834, 48
      %v5267 = vpop.permute.xlu0 %5266
      %5268 = vrot.lane.b32.xlu0 %v4746, 48
      %v5269 = vpop.permute.xlu0 %5268
      %5270 = vrot.lane.b32.xlu0 %v4835, 48
      %v5271 = vpop.permute.xlu0 %5270
      %5272 = vrot.lane.b32.xlu0 %v4749, 48
      %v5273 = vpop.permute.xlu0 %5272
      %5274 = vrot.lane.b32.xlu0 %v4836, 48
      %v5275 = vpop.permute.xlu0 %5274
      %5276 = vrot.lane.b32.xlu0 %v4752, 48
      %v5277 = vpop.permute.xlu0 %5276
      %5278 = vrot.lane.b32.xlu0 %v4837, 48
      %v5279 = vpop.permute.xlu0 %5278
      %5280 = vrot.lane.b32.xlu0 %v4755, 48
      %v5281 = vpop.permute.xlu0 %5280
      %5282 = vrot.lane.b32.xlu0 %v4838, 48
      %v5283 = vpop.permute.xlu0 %5282
      %5284 = vrot.lane.b32.xlu0 %v4758, 48
      %v5285 = vpop.permute.xlu0 %5284
      %5286 = vrot.lane.b32.xlu0 %v4839, 48
      %v5287 = vpop.permute.xlu0 %5286
      %5288 = vrot.lane.b32.xlu0 %v4761, 48
      %v5289 = vpop.permute.xlu0 %5288
      %5290 = vrot.lane.b32.xlu0 %v4840, 48
      %v5291 = vpop.permute.xlu0 %5290
      %5292 = vrot.lane.b32.xlu0 %v4764, 48
      %v5293 = vpop.permute.xlu0 %5292
      %5294 = vrot.lane.b32.xlu0 %v4841, 48
      %v5295 = vpop.permute.xlu0 %5294
      %5296 = vrot.lane.b32.xlu0 %v4767, 48
      %v5297 = vpop.permute.xlu0 %5296
      %5298 = vrot.lane.b32.xlu0 %v4842, 48
      %v5299 = vpop.permute.xlu0 %5298
      %5300 = vrot.lane.b32.xlu0 %v4770, 48
      %v5301 = vpop.permute.xlu0 %5300
      %5302 = vrot.lane.b32.xlu0 %v4843, 48
      %v5303 = vpop.permute.xlu0 %5302
      %5304 = vrot.lane.b32.xlu0 %v4773, 48
      %v5305 = vpop.permute.xlu0 %5304
      %5306 = vrot.lane.b32.xlu0 %v4844, 48
      %v5307 = vpop.permute.xlu0 %5306
      %5308 = vrot.lane.b32.xlu0 %v4776, 48
      %v5309 = vpop.permute.xlu0 %5308
      %5310 = vrot.lane.b32.xlu0 %v4845, 48
      %v5311 = vpop.permute.xlu0 %5310
      %5312 = vrot.lane.b32.xlu0 %v4779, 48
      %v5313 = vpop.permute.xlu0 %5312
      %v5347 = vrot.slane %v4845, 1
      %v5348 = vrot.slane %v4779, 1
      %v5349 = vsel %vm4895, %v5347, %v5348
      %v5350 = vrot.slane %v4862, 1
      %v5351 = vsel %vm4895, %v5348, %v5350
      %5352 = vrot.lane.b32.xlu0 %v4903, 64
      %v5353 = vpop.permute.xlu0 %5352
      %5354 = vrot.lane.b32.xlu0 %v4905, 64
      %v5355 = vpop.permute.xlu0 %5354
      %5356 = vrot.lane.b32.xlu0 %v4908, 64
      %v5357 = vpop.permute.xlu0 %5356
      %5358 = vrot.lane.b32.xlu0 %v4910, 64
      %v5359 = vpop.permute.xlu0 %5358
      %5360 = vrot.lane.b32.xlu0 %v4913, 64
      %v5361 = vpop.permute.xlu0 %5360
      %5362 = vrot.lane.b32.xlu0 %v4915, 64
      %v5363 = vpop.permute.xlu0 %5362
      %5364 = vrot.lane.b32.xlu0 %v4918, 64
      %v5365 = vpop.permute.xlu0 %5364
      %5366 = vrot.lane.b32.xlu0 %v4920, 64
      %v5367 = vpop.permute.xlu0 %5366
      %5368 = vrot.lane.b32.xlu0 %v4923, 64
      %v5369 = vpop.permute.xlu0 %5368
      %5370 = vrot.lane.b32.xlu0 %v4925, 64
      %v5371 = vpop.permute.xlu0 %5370
      %5372 = vrot.lane.b32.xlu0 %v4928, 64
      %v5373 = vpop.permute.xlu0 %5372
      %5374 = vrot.lane.b32.xlu0 %v4930, 64
      %v5375 = vpop.permute.xlu0 %5374
      %5376 = vrot.lane.b32.xlu0 %v4933, 64
      %v5377 = vpop.permute.xlu0 %5376
      %5378 = vrot.lane.b32.xlu0 %v4935, 64
      %v5379 = vpop.permute.xlu0 %5378
      %5380 = vrot.lane.b32.xlu0 %v4938, 64
      %v5381 = vpop.permute.xlu0 %5380
      %5382 = vrot.lane.b32.xlu0 %v4940, 64
      %v5383 = vpop.permute.xlu0 %5382
      %5384 = vrot.lane.b32.xlu0 %v4943, 64
      %v5385 = vpop.permute.xlu0 %5384
      %5386 = vrot.lane.b32.xlu0 %v4945, 64
      %v5387 = vpop.permute.xlu0 %5386
      %5388 = vrot.lane.b32.xlu0 %v4948, 64
      %v5389 = vpop.permute.xlu0 %5388
      %5390 = vrot.lane.b32.xlu0 %v4950, 64
      %v5391 = vpop.permute.xlu0 %5390
      %5392 = vrot.lane.b32.xlu0 %v4953, 64
      %v5393 = vpop.permute.xlu0 %5392
      %5394 = vrot.lane.b32.xlu0 %v4955, 64
      %v5395 = vpop.permute.xlu0 %5394
      %5396 = vrot.lane.b32.xlu0 %v4958, 64
      %v5397 = vpop.permute.xlu0 %5396
      %5398 = vrot.lane.b32.xlu0 %v4960, 64
      %v5399 = vpop.permute.xlu0 %5398
      %5400 = vrot.lane.b32.xlu0 %v4963, 64
      %v5401 = vpop.permute.xlu0 %5400
      %5402 = vrot.lane.b32.xlu0 %v4965, 64
      %v5403 = vpop.permute.xlu0 %5402
      %5404 = vrot.lane.b32.xlu0 %v4968, 64
      %v5405 = vpop.permute.xlu0 %5404
      %5406 = vrot.lane.b32.xlu0 %v4970, 64
      %v5407 = vpop.permute.xlu0 %5406
      %5408 = vrot.lane.b32.xlu0 %v4973, 64
      %v5409 = vpop.permute.xlu0 %5408
      %5410 = vrot.lane.b32.xlu0 %v4975, 64
      %v5411 = vpop.permute.xlu0 %5410
      %5412 = vrot.lane.b32.xlu0 %v5349, 64
      %v5413 = vpop.permute.xlu0 %5412
      %5414 = vrot.lane.b32.xlu0 %v5351, 64
      %v5415 = vpop.permute.xlu0 %5414
      %v5448 = vrot.slane %v4845, 2
      %v5449 = vrot.slane %v4779, 2
      %v5450 = vsel %vm5072, %v5448, %v5449
      %v5451 = vrot.slane %v4862, 2
      %v5452 = vsel %vm5072, %v5449, %v5451
      %5453 = vrot.lane.b32.xlu0 %v5080, 80
      %v5454 = vpop.permute.xlu0 %5453
      %5455 = vrot.lane.b32.xlu0 %v5082, 80
      %v5456 = vpop.permute.xlu0 %5455
      %5457 = vrot.lane.b32.xlu0 %v5085, 80
      %v5458 = vpop.permute.xlu0 %5457
      %5459 = vrot.lane.b32.xlu0 %v5087, 80
      %v5460 = vpop.permute.xlu0 %5459
      %5461 = vrot.lane.b32.xlu0 %v5090, 80
      %v5462 = vpop.permute.xlu0 %5461
      %5463 = vrot.lane.b32.xlu0 %v5092, 80
      %v5464 = vpop.permute.xlu0 %5463
      %5465 = vrot.lane.b32.xlu0 %v5095, 80
      %v5466 = vpop.permute.xlu0 %5465
      %5467 = vrot.lane.b32.xlu0 %v5097, 80
      %v5468 = vpop.permute.xlu0 %5467
      %5469 = vrot.lane.b32.xlu0 %v5100, 80
      %v5470 = vpop.permute.xlu0 %5469
      %5471 = vrot.lane.b32.xlu0 %v5102, 80
      %v5472 = vpop.permute.xlu0 %5471
      %5473 = vrot.lane.b32.xlu0 %v5105, 80
      %v5474 = vpop.permute.xlu0 %5473
      %5475 = vrot.lane.b32.xlu0 %v5107, 80
      %v5476 = vpop.permute.xlu0 %5475
      %5477 = vrot.lane.b32.xlu0 %v5110, 80
      %v5478 = vpop.permute.xlu0 %5477
      %5479 = vrot.lane.b32.xlu0 %v5112, 80
      %v5480 = vpop.permute.xlu0 %5479
      %5481 = vrot.lane.b32.xlu0 %v5115, 80
      %v5482 = vpop.permute.xlu0 %5481
      %5483 = vrot.lane.b32.xlu0 %v5117, 80
      %v5484 = vpop.permute.xlu0 %5483
      %5485 = vrot.lane.b32.xlu0 %v5120, 80
      %v5486 = vpop.permute.xlu0 %5485
      %5487 = vrot.lane.b32.xlu0 %v5122, 80
      %v5488 = vpop.permute.xlu0 %5487
      %5489 = vrot.lane.b32.xlu0 %v5125, 80
      %v5490 = vpop.permute.xlu0 %5489
      %5491 = vrot.lane.b32.xlu0 %v5127, 80
      %v5492 = vpop.permute.xlu0 %5491
      %5493 = vrot.lane.b32.xlu0 %v5130, 80
      %v5494 = vpop.permute.xlu0 %5493
      %5495 = vrot.lane.b32.xlu0 %v5132, 80
      %v5496 = vpop.permute.xlu0 %5495
      %5497 = vrot.lane.b32.xlu0 %v5135, 80
      %v5498 = vpop.permute.xlu0 %5497
      %5499 = vrot.lane.b32.xlu0 %v5137, 80
      %v5500 = vpop.permute.xlu0 %5499
      %5501 = vrot.lane.b32.xlu0 %v5140, 80
      %v5502 = vpop.permute.xlu0 %5501
      %5503 = vrot.lane.b32.xlu0 %v5142, 80
      %v5504 = vpop.permute.xlu0 %5503
      %5505 = vrot.lane.b32.xlu0 %v5145, 80
      %v5506 = vpop.permute.xlu0 %5505
      %5507 = vrot.lane.b32.xlu0 %v5147, 80
      %v5508 = vpop.permute.xlu0 %5507
      %5509 = vrot.lane.b32.xlu0 %v5150, 80
      %v5510 = vpop.permute.xlu0 %5509
      %5511 = vrot.lane.b32.xlu0 %v5152, 80
      %v5512 = vpop.permute.xlu0 %5511
      %5513 = vrot.lane.b32.xlu0 %v5450, 80
      %v5514 = vpop.permute.xlu0 %5513
      %5515 = vrot.lane.b32.xlu0 %v5452, 80
      %v5516 = vpop.permute.xlu0 %5515
      %5549 = vrot.lane.b32.xlu0 %v4831, 96
      %v5550 = vpop.permute.xlu0 %5549
      %5551 = vrot.lane.b32.xlu0 %v4737, 96
      %v5552 = vpop.permute.xlu0 %5551
      %5553 = vrot.lane.b32.xlu0 %v4832, 96
      %v5554 = vpop.permute.xlu0 %5553
      %5555 = vrot.lane.b32.xlu0 %v4740, 96
      %v5556 = vpop.permute.xlu0 %5555
      %5557 = vrot.lane.b32.xlu0 %v4833, 96
      %v5558 = vpop.permute.xlu0 %5557
      %5559 = vrot.lane.b32.xlu0 %v4743, 96
      %v5560 = vpop.permute.xlu0 %5559
      %5561 = vrot.lane.b32.xlu0 %v4834, 96
      %v5562 = vpop.permute.xlu0 %5561
      %5563 = vrot.lane.b32.xlu0 %v4746, 96
      %v5564 = vpop.permute.xlu0 %5563
      %5565 = vrot.lane.b32.xlu0 %v4835, 96
      %v5566 = vpop.permute.xlu0 %5565
      %5567 = vrot.lane.b32.xlu0 %v4749, 96
      %v5568 = vpop.permute.xlu0 %5567
      %5569 = vrot.lane.b32.xlu0 %v4836, 96
      %v5570 = vpop.permute.xlu0 %5569
      %5571 = vrot.lane.b32.xlu0 %v4752, 96
      %v5572 = vpop.permute.xlu0 %5571
      %5573 = vrot.lane.b32.xlu0 %v4837, 96
      %v5574 = vpop.permute.xlu0 %5573
      %5575 = vrot.lane.b32.xlu0 %v4755, 96
      %v5576 = vpop.permute.xlu0 %5575
      %5577 = vrot.lane.b32.xlu0 %v4838, 96
      %v5578 = vpop.permute.xlu0 %5577
      %5579 = vrot.lane.b32.xlu0 %v4758, 96
      %v5580 = vpop.permute.xlu0 %5579
      %5581 = vrot.lane.b32.xlu0 %v4839, 96
      %v5582 = vpop.permute.xlu0 %5581
      %5583 = vrot.lane.b32.xlu0 %v4761, 96
      %v5584 = vpop.permute.xlu0 %5583
      %5585 = vrot.lane.b32.xlu0 %v4840, 96
      %v5586 = vpop.permute.xlu0 %5585
      %5587 = vrot.lane.b32.xlu0 %v4764, 96
      %v5588 = vpop.permute.xlu0 %5587
      %5589 = vrot.lane.b32.xlu0 %v4841, 96
      %v5590 = vpop.permute.xlu0 %5589
      %5591 = vrot.lane.b32.xlu0 %v4767, 96
      %v5592 = vpop.permute.xlu0 %5591
      %5593 = vrot.lane.b32.xlu0 %v4842, 96
      %v5594 = vpop.permute.xlu0 %5593
      %5595 = vrot.lane.b32.xlu0 %v4770, 96
      %v5596 = vpop.permute.xlu0 %5595
      %5597 = vrot.lane.b32.xlu0 %v4843, 96
      %v5598 = vpop.permute.xlu0 %5597
      %5599 = vrot.lane.b32.xlu0 %v4773, 96
      %v5600 = vpop.permute.xlu0 %5599
      %5601 = vrot.lane.b32.xlu0 %v4844, 96
      %v5602 = vpop.permute.xlu0 %5601
      %5603 = vrot.lane.b32.xlu0 %v4776, 96
      %v5604 = vpop.permute.xlu0 %5603
      %5605 = vrot.lane.b32.xlu0 %v4845, 96
      %v5606 = vpop.permute.xlu0 %5605
      %5607 = vrot.lane.b32.xlu0 %v4779, 96
      %v5608 = vpop.permute.xlu0 %5607
      %5609 = vrot.lane.b32.xlu0 %v4829, 96
      %v5610 = vpop.permute.xlu0 %5609
      %5611 = vrot.lane.b32.xlu0 %v4731, 96
      %v5612 = vpop.permute.xlu0 %5611
      %5645 = vrot.lane.b32.xlu0 %v4908, 112
      %v5646 = vpop.permute.xlu0 %5645
      %5647 = vrot.lane.b32.xlu0 %v4910, 112
      %v5648 = vpop.permute.xlu0 %5647
      %5649 = vrot.lane.b32.xlu0 %v4913, 112
      %v5650 = vpop.permute.xlu0 %5649
      %5651 = vrot.lane.b32.xlu0 %v4915, 112
      %v5652 = vpop.permute.xlu0 %5651
      %5653 = vrot.lane.b32.xlu0 %v4918, 112
      %v5654 = vpop.permute.xlu0 %5653
      %5655 = vrot.lane.b32.xlu0 %v4920, 112
      %v5656 = vpop.permute.xlu0 %5655
      %5657 = vrot.lane.b32.xlu0 %v4923, 112
      %v5658 = vpop.permute.xlu0 %5657
      %5659 = vrot.lane.b32.xlu0 %v4925, 112
      %v5660 = vpop.permute.xlu0 %5659
      %5661 = vrot.lane.b32.xlu0 %v4928, 112
      %v5662 = vpop.permute.xlu0 %5661
      %5663 = vrot.lane.b32.xlu0 %v4930, 112
      %v5664 = vpop.permute.xlu0 %5663
      %5665 = vrot.lane.b32.xlu0 %v4933, 112
      %v5666 = vpop.permute.xlu0 %5665
      %5667 = vrot.lane.b32.xlu0 %v4935, 112
      %v5668 = vpop.permute.xlu0 %5667
      %5669 = vrot.lane.b32.xlu0 %v4938, 112
      %v5670 = vpop.permute.xlu0 %5669
      %5671 = vrot.lane.b32.xlu0 %v4940, 112
      %v5672 = vpop.permute.xlu0 %5671
      %5673 = vrot.lane.b32.xlu0 %v4943, 112
      %v5674 = vpop.permute.xlu0 %5673
      %5675 = vrot.lane.b32.xlu0 %v4945, 112
      %v5676 = vpop.permute.xlu0 %5675
      %5677 = vrot.lane.b32.xlu0 %v4948, 112
      %v5678 = vpop.permute.xlu0 %5677
      %5679 = vrot.lane.b32.xlu0 %v4950, 112
      %v5680 = vpop.permute.xlu0 %5679
      %5681 = vrot.lane.b32.xlu0 %v4953, 112
      %v5682 = vpop.permute.xlu0 %5681
      %5683 = vrot.lane.b32.xlu0 %v4955, 112
      %v5684 = vpop.permute.xlu0 %5683
      %5685 = vrot.lane.b32.xlu0 %v4958, 112
      %v5686 = vpop.permute.xlu0 %5685
      %5687 = vrot.lane.b32.xlu0 %v4960, 112
      %v5688 = vpop.permute.xlu0 %5687
      %5689 = vrot.lane.b32.xlu0 %v4963, 112
      %v5690 = vpop.permute.xlu0 %5689
      %5691 = vrot.lane.b32.xlu0 %v4965, 112
      %v5692 = vpop.permute.xlu0 %5691
      %5693 = vrot.lane.b32.xlu0 %v4968, 112
      %v5694 = vpop.permute.xlu0 %5693
      %5695 = vrot.lane.b32.xlu0 %v4970, 112
      %v5696 = vpop.permute.xlu0 %5695
      %5697 = vrot.lane.b32.xlu0 %v4973, 112
      %v5698 = vpop.permute.xlu0 %5697
      %5699 = vrot.lane.b32.xlu0 %v4975, 112
      %v5700 = vpop.permute.xlu0 %5699
      %5701 = vrot.lane.b32.xlu0 %v5349, 112
      %v5702 = vpop.permute.xlu0 %5701
      %5703 = vrot.lane.b32.xlu0 %v5351, 112
      %v5704 = vpop.permute.xlu0 %5703
      %5705 = vrot.lane.b32.xlu0 %v4898, 112
      %v5706 = vpop.permute.xlu0 %5705
      %5707 = vrot.lane.b32.xlu0 %v4900, 112
      %v5708 = vpop.permute.xlu0 %5707
      %v5773 = vsel %vm4216, %v4829, %v4977
      %v5774 = vsel %vm4216, %v4731, %v4979
      %v5775 = vsel %vm4216, %v4830, %v4981
      %v5776 = vsel %vm4216, %v4734, %v4983
      %v5777 = vsel %vm4216, %v4831, %v4985
      %v5778 = vsel %vm4216, %v4737, %v4987
      %v5779 = vsel %vm4216, %v4832, %v4989
      %v5780 = vsel %vm4216, %v4740, %v4991
      %v5781 = vsel %vm4216, %v4833, %v4993
      %v5782 = vsel %vm4216, %v4743, %v4995
      %v5783 = vsel %vm4216, %v4834, %v4997
      %v5784 = vsel %vm4216, %v4746, %v4999
      %v5785 = vsel %vm4216, %v4835, %v5001
      %v5786 = vsel %vm4216, %v4749, %v5003
      %v5787 = vsel %vm4216, %v4836, %v5005
      %v5788 = vsel %vm4216, %v4752, %v5007
      %v5789 = vsel %vm4216, %v4837, %v5009
      %v5790 = vsel %vm4216, %v4755, %v5011
      %v5791 = vsel %vm4216, %v4838, %v5013
      %v5792 = vsel %vm4216, %v4758, %v5015
      %v5793 = vsel %vm4216, %v4839, %v5017
      %v5794 = vsel %vm4216, %v4761, %v5019
      %v5795 = vsel %vm4216, %v4840, %v5021
      %v5796 = vsel %vm4216, %v4764, %v5023
      %v5797 = vsel %vm4216, %v4841, %v5025
      %v5798 = vsel %vm4216, %v4767, %v5027
      %v5799 = vsel %vm4216, %v4842, %v5029
      %v5800 = vsel %vm4216, %v4770, %v5031
      %v5801 = vsel %vm4216, %v4843, %v5033
      %v5802 = vsel %vm4216, %v4773, %v5035
      %v5803 = vsel %vm4216, %v4844, %v5037
      %v5804 = vsel %vm4216, %v4776, %v5039
      %vm5805 = vcmask 261120
      %v5806 = vsel %vm5805, %v5773, %v5154
      %v5807 = vsel %vm5805, %v5774, %v5156
      %v5808 = vsel %vm5805, %v5775, %v5158
      %v5809 = vsel %vm5805, %v5776, %v5160
      %v5810 = vsel %vm5805, %v5777, %v5162
      %v5811 = vsel %vm5805, %v5778, %v5164
      %v5812 = vsel %vm5805, %v5779, %v5166
      %v5813 = vsel %vm5805, %v5780, %v5168
      %v5814 = vsel %vm5805, %v5781, %v5170
      %v5815 = vsel %vm5805, %v5782, %v5172
      %v5816 = vsel %vm5805, %v5783, %v5174
      %v5817 = vsel %vm5805, %v5784, %v5176
      %v5818 = vsel %vm5805, %v5785, %v5178
      %v5819 = vsel %vm5805, %v5786, %v5180
      %v5820 = vsel %vm5805, %v5787, %v5182
      %v5821 = vsel %vm5805, %v5788, %v5184
      %v5822 = vsel %vm5805, %v5789, %v5186
      %v5823 = vsel %vm5805, %v5790, %v5188
      %v5824 = vsel %vm5805, %v5791, %v5190
      %v5825 = vsel %vm5805, %v5792, %v5192
      %v5826 = vsel %vm5805, %v5793, %v5194
      %v5827 = vsel %vm5805, %v5794, %v5196
      %v5828 = vsel %vm5805, %v5795, %v5198
      %v5829 = vsel %vm5805, %v5796, %v5200
      %v5830 = vsel %vm5805, %v5797, %v5202
      %v5831 = vsel %vm5805, %v5798, %v5204
      %v5832 = vsel %vm5805, %v5799, %v5206
      %v5833 = vsel %vm5805, %v5800, %v5208
      %v5834 = vsel %vm5805, %v5801, %v5210
      %v5835 = vsel %vm5805, %v5802, %v5212
      %v5836 = vsel %vm5805, %v5803, %v5214
      %v5837 = vsel %vm5805, %v5804, %v5216
      %vm5838 = vcmask 392192
      %v5839 = vsel %vm5838, %v5806, %v5251
      %v5840 = vsel %vm5838, %v5807, %v5253
      %v5841 = vsel %vm5838, %v5808, %v5255
      %v5842 = vsel %vm5838, %v5809, %v5257
      %v5843 = vsel %vm5838, %v5810, %v5259
      %v5844 = vsel %vm5838, %v5811, %v5261
      %v5845 = vsel %vm5838, %v5812, %v5263
      %v5846 = vsel %vm5838, %v5813, %v5265
      %v5847 = vsel %vm5838, %v5814, %v5267
      %v5848 = vsel %vm5838, %v5815, %v5269
      %v5849 = vsel %vm5838, %v5816, %v5271
      %v5850 = vsel %vm5838, %v5817, %v5273
      %v5851 = vsel %vm5838, %v5818, %v5275
      %v5852 = vsel %vm5838, %v5819, %v5277
      %v5853 = vsel %vm5838, %v5820, %v5279
      %v5854 = vsel %vm5838, %v5821, %v5281
      %v5855 = vsel %vm5838, %v5822, %v5283
      %v5856 = vsel %vm5838, %v5823, %v5285
      %v5857 = vsel %vm5838, %v5824, %v5287
      %v5858 = vsel %vm5838, %v5825, %v5289
      %v5859 = vsel %vm5838, %v5826, %v5291
      %v5860 = vsel %vm5838, %v5827, %v5293
      %v5861 = vsel %vm5838, %v5828, %v5295
      %v5862 = vsel %vm5838, %v5829, %v5297
      %v5863 = vsel %vm5838, %v5830, %v5299
      %v5864 = vsel %vm5838, %v5831, %v5301
      %v5865 = vsel %vm5838, %v5832, %v5303
      %v5866 = vsel %vm5838, %v5833, %v5305
      %v5867 = vsel %vm5838, %v5834, %v5307
      %v5868 = vsel %vm5838, %v5835, %v5309
      %v5869 = vsel %vm5838, %v5836, %v5311
      %v5870 = vsel %vm5838, %v5837, %v5313
      %vm5871 = vcmask 523264
      %v5872 = vsel %vm5871, %v5839, %v5353
      %v5873 = vsel %vm5871, %v5840, %v5355
      %v5874 = vsel %vm5871, %v5841, %v5357
      %v5875 = vsel %vm5871, %v5842, %v5359
      %v5876 = vsel %vm5871, %v5843, %v5361
      %v5877 = vsel %vm5871, %v5844, %v5363
      %v5878 = vsel %vm5871, %v5845, %v5365
      %v5879 = vsel %vm5871, %v5846, %v5367
      %v5880 = vsel %vm5871, %v5847, %v5369
      %v5881 = vsel %vm5871, %v5848, %v5371
      %v5882 = vsel %vm5871, %v5849, %v5373
      %v5883 = vsel %vm5871, %v5850, %v5375
      %v5884 = vsel %vm5871, %v5851, %v5377
      %v5885 = vsel %vm5871, %v5852, %v5379
      %v5886 = vsel %vm5871, %v5853, %v5381
      %v5887 = vsel %vm5871, %v5854, %v5383
      %v5888 = vsel %vm5871, %v5855, %v5385
      %v5889 = vsel %vm5871, %v5856, %v5387
      %v5890 = vsel %vm5871, %v5857, %v5389
      %v5891 = vsel %vm5871, %v5858, %v5391
      %v5892 = vsel %vm5871, %v5859, %v5393
      %v5893 = vsel %vm5871, %v5860, %v5395
      %v5894 = vsel %vm5871, %v5861, %v5397
      %v5895 = vsel %vm5871, %v5862, %v5399
      %v5896 = vsel %vm5871, %v5863, %v5401
      %v5897 = vsel %vm5871, %v5864, %v5403
      %v5898 = vsel %vm5871, %v5865, %v5405
      %v5899 = vsel %vm5871, %v5866, %v5407
      %v5900 = vsel %vm5871, %v5867, %v5409
      %v5901 = vsel %vm5871, %v5868, %v5411
      %v5902 = vsel %vm5871, %v5869, %v5413
      %v5903 = vsel %vm5871, %v5870, %v5415
      %vm5904 = vcmask 654336
      %v5905 = vsel %vm5904, %v5872, %v5454
      %v5906 = vsel %vm5904, %v5873, %v5456
      %v5907 = vsel %vm5904, %v5874, %v5458
      %v5908 = vsel %vm5904, %v5875, %v5460
      %v5909 = vsel %vm5904, %v5876, %v5462
      %v5910 = vsel %vm5904, %v5877, %v5464
      %v5911 = vsel %vm5904, %v5878, %v5466
      %v5912 = vsel %vm5904, %v5879, %v5468
      %v5913 = vsel %vm5904, %v5880, %v5470
      %v5914 = vsel %vm5904, %v5881, %v5472
      %v5915 = vsel %vm5904, %v5882, %v5474
      %v5916 = vsel %vm5904, %v5883, %v5476
      %v5917 = vsel %vm5904, %v5884, %v5478
      %v5918 = vsel %vm5904, %v5885, %v5480
      %v5919 = vsel %vm5904, %v5886, %v5482
      %v5920 = vsel %vm5904, %v5887, %v5484
      %v5921 = vsel %vm5904, %v5888, %v5486
      %v5922 = vsel %vm5904, %v5889, %v5488
      %v5923 = vsel %vm5904, %v5890, %v5490
      %v5924 = vsel %vm5904, %v5891, %v5492
      %v5925 = vsel %vm5904, %v5892, %v5494
      %v5926 = vsel %vm5904, %v5893, %v5496
      %v5927 = vsel %vm5904, %v5894, %v5498
      %v5928 = vsel %vm5904, %v5895, %v5500
      %v5929 = vsel %vm5904, %v5896, %v5502
      %v5930 = vsel %vm5904, %v5897, %v5504
      %v5931 = vsel %vm5904, %v5898, %v5506
      %v5932 = vsel %vm5904, %v5899, %v5508
      %v5933 = vsel %vm5904, %v5900, %v5510
      %v5934 = vsel %vm5904, %v5901, %v5512
      %v5935 = vsel %vm5904, %v5902, %v5514
      %v5936 = vsel %vm5904, %v5903, %v5516
      %vm5937 = vcmask 785408
      %v5938 = vsel %vm5937, %v5905, %v5550
      %v5939 = vsel %vm5937, %v5906, %v5552
      %v5940 = vsel %vm5937, %v5907, %v5554
      %v5941 = vsel %vm5937, %v5908, %v5556
      %v5942 = vsel %vm5937, %v5909, %v5558
      %v5943 = vsel %vm5937, %v5910, %v5560
      %v5944 = vsel %vm5937, %v5911, %v5562
      %v5945 = vsel %vm5937, %v5912, %v5564
      %v5946 = vsel %vm5937, %v5913, %v5566
      %v5947 = vsel %vm5937, %v5914, %v5568
      %v5948 = vsel %vm5937, %v5915, %v5570
      %v5949 = vsel %vm5937, %v5916, %v5572
      %v5950 = vsel %vm5937, %v5917, %v5574
      %v5951 = vsel %vm5937, %v5918, %v5576
      %v5952 = vsel %vm5937, %v5919, %v5578
      %v5953 = vsel %vm5937, %v5920, %v5580
      %v5954 = vsel %vm5937, %v5921, %v5582
      %v5955 = vsel %vm5937, %v5922, %v5584
      %v5956 = vsel %vm5937, %v5923, %v5586
      %v5957 = vsel %vm5937, %v5924, %v5588
      %v5958 = vsel %vm5937, %v5925, %v5590
      %v5959 = vsel %vm5937, %v5926, %v5592
      %v5960 = vsel %vm5937, %v5927, %v5594
      %v5961 = vsel %vm5937, %v5928, %v5596
      %v5962 = vsel %vm5937, %v5929, %v5598
      %v5963 = vsel %vm5937, %v5930, %v5600
      %v5964 = vsel %vm5937, %v5931, %v5602
      %v5965 = vsel %vm5937, %v5932, %v5604
      %v5966 = vsel %vm5937, %v5933, %v5606
      %v5967 = vsel %vm5937, %v5934, %v5608
      %v5968 = vsel %vm5937, %v5935, %v5610
      %v5969 = vsel %vm5937, %v5936, %v5612
      %vm5970 = vcmask 916480
      %v5971 = vsel %vm5970, %v5938, %v5646
      %v5972 = vsel %vm5970, %v5939, %v5648
      %v5973 = vsel %vm5970, %v5940, %v5650
      %v5974 = vsel %vm5970, %v5941, %v5652
      %v5975 = vsel %vm5970, %v5942, %v5654
      %v5976 = vsel %vm5970, %v5943, %v5656
      %v5977 = vsel %vm5970, %v5944, %v5658
      %v5978 = vsel %vm5970, %v5945, %v5660
      %v5979 = vsel %vm5970, %v5946, %v5662
      %v5980 = vsel %vm5970, %v5947, %v5664
      %v5981 = vsel %vm5970, %v5948, %v5666
      %v5982 = vsel %vm5970, %v5949, %v5668
      %v5983 = vsel %vm5970, %v5950, %v5670
      %v5984 = vsel %vm5970, %v5951, %v5672
      %v5985 = vsel %vm5970, %v5952, %v5674
      %v5986 = vsel %vm5970, %v5953, %v5676
      %v5987 = vsel %vm5970, %v5954, %v5678
      %v5988 = vsel %vm5970, %v5955, %v5680
      %v5989 = vsel %vm5970, %v5956, %v5682
      %v5990 = vsel %vm5970, %v5957, %v5684
      %v5991 = vsel %vm5970, %v5958, %v5686
      %v5992 = vsel %vm5970, %v5959, %v5688
      %v5993 = vsel %vm5970, %v5960, %v5690
      %v5994 = vsel %vm5970, %v5961, %v5692
      %v5995 = vsel %vm5970, %v5962, %v5694
      %v5996 = vsel %vm5970, %v5963, %v5696
      %v5997 = vsel %vm5970, %v5964, %v5698
      %v5998 = vsel %vm5970, %v5965, %v5700
      %v5999 = vsel %vm5970, %v5966, %v5702
      %v6000 = vsel %vm5970, %v5967, %v5704
      %v6001 = vsel %vm5970, %v5968, %v5706
      %v6002 = vsel %vm5970, %v5969, %v5708
      %v6003 = vpack.c.bf16 %v5972, %v5971
      %v6004 = vpack.c.bf16 %v5087, %v5085
      %v6005 = vpack.c.bf16 %v5974, %v5973
      %v6006 = vpack.c.bf16 %v5092, %v5090
      %v6007 = vpack.c.bf16 %v5976, %v5975
      %v6008 = vpack.c.bf16 %v5097, %v5095
      %v6009 = vpack.c.bf16 %v5978, %v5977
      %v6010 = vpack.c.bf16 %v5102, %v5100
      %v6011 = vpack.c.bf16 %v5980, %v5979
      %v6012 = vpack.c.bf16 %v5107, %v5105
      %v6013 = vpack.c.bf16 %v5982, %v5981
      %v6014 = vpack.c.bf16 %v5112, %v5110
      %v6015 = vpack.c.bf16 %v5984, %v5983
      %v6016 = vpack.c.bf16 %v5117, %v5115
      %v6017 = vpack.c.bf16 %v5986, %v5985
      %v6018 = vpack.c.bf16 %v5122, %v5120
      %v6019 = vpack.c.bf16 %v5988, %v5987
      %v6020 = vpack.c.bf16 %v5127, %v5125
      %v6021 = vpack.c.bf16 %v5990, %v5989
      %v6022 = vpack.c.bf16 %v5132, %v5130
      %v6023 = vpack.c.bf16 %v5992, %v5991
      %v6024 = vpack.c.bf16 %v5137, %v5135
      %v6025 = vpack.c.bf16 %v5994, %v5993
      %v6026 = vpack.c.bf16 %v5142, %v5140
      %v6027 = vpack.c.bf16 %v5996, %v5995
      %v6028 = vpack.c.bf16 %v5147, %v5145
      %v6029 = vpack.c.bf16 %v5998, %v5997
      %v6030 = vpack.c.bf16 %v5152, %v5150
      %v6031 = vpack.c.bf16 %v6000, %v5999
      %v6032 = vpack.c.bf16 %v5452, %v5450
      %v6033 = vpack.c.bf16 %v6002, %v6001
      %v6034 = vpack.c.bf16 %v5077, %v5075
      %v6035 = vld [vmem:[%s3] sm:$0xf]
      %v6036 = vld [vmem:[%s3 + $0x4] sm:$0xf]
      %v6037 = vld [vmem:[%s3 + $0x8] sm:$0xf]
      %v6038 = vld [vmem:[%s3 + $0xc] sm:$0xf]
      %v6039 = vld [vmem:[%s3 + $0x10] sm:$0xf]
      %v6040 = vld [vmem:[%s3 + $0x14] sm:$0xf]
      %v6041 = vld [vmem:[%s3 + $0x18] sm:$0xf]
      %v6042 = vld [vmem:[%s3 + $0x1c] sm:$0xf]
      %v6043 = vld [vmem:[%s3 + $0x20] sm:$0xf]
      %v6044 = vld [vmem:[%s3 + $0x24] sm:$0xf]
      %v6045 = vld [vmem:[%s3 + $0x28] sm:$0xf]
      %v6046 = vld [vmem:[%s3 + $0x2c] sm:$0xf]
      %v6047 = vld [vmem:[%s3 + $0x30] sm:$0xf]
      %v6048 = vld [vmem:[%s3 + $0x34] sm:$0xf]
      %v6049 = vld [vmem:[%s3 + $0x38] sm:$0xf]
      %v6050 = vld [vmem:[%s3 + $0x3c] sm:$0xf]
      %v6051 = vld [vmem:[%s3 + $0x40] sm:$0xf]
      %v6052 = vld [vmem:[%s3 + $0x44] sm:$0xf]
      %v6053 = vld [vmem:[%s4] sm:$0x1]
      %v6055 = vlaneseq
      %v6056 = vshrl.u32 %v6055, 7
      %v6057 = vsub.s32 0, %v6056
      %v6058 = vrot.slane %v6053, %v6057
      %v6078 = vunpack.c.l.b16 %v6035
      %v6079 = vunpack.c.l.b16 %v6036
      %v6080 = vunpack.c.l.b16 %v6037
      %v6081 = vunpack.c.l.b16 %v6038
      %v6082 = vunpack.c.l.b16 %v6039
      %v6083 = vunpack.c.l.b16 %v6040
      %v6084 = vunpack.c.l.b16 %v6041
      %v6085 = vunpack.c.l.b16 %v6042
      %v6086 = vunpack.c.l.b16 %v6043
      %v6087 = vunpack.c.l.b16 %v6044
      %v6088 = vunpack.c.l.b16 %v6045
      %v6089 = vunpack.c.l.b16 %v6046
      %v6090 = vunpack.c.l.b16 %v6047
      %v6091 = vunpack.c.l.b16 %v6048
      %v6092 = vunpack.c.l.b16 %v6049
      %v6093 = vunpack.c.l.b16 %v6050
      %v6094 = vunpack.c.l.b16 %v6051
      %v6095 = vunpack.c.l.b16 %v6052
      %v6096 = vpack.c.b16 %v6079, %v6078
      %v6097 = vpack.c.b16 %v6081, %v6080
      %v6098 = vpack.c.b16 %v6083, %v6082
      %v6099 = vpack.c.b16 %v6085, %v6084
      %v6100 = vpack.c.b16 %v6087, %v6086
      %v6101 = vpack.c.b16 %v6089, %v6088
      %v6102 = vpack.c.b16 %v6091, %v6090
      %v6103 = vpack.c.b16 %v6093, %v6092
      %v6104 = vpack.c.b16 %v6095, %v6094
      %v6115 = vsel %vm4216, %v6004, 0
      %v6118 = vsel %vm4216, %v6006, 0
      %v6121 = vsel %vm4216, %v6008, 0
      %v6124 = vsel %vm4216, %v6010, 0
      %v6127 = vsel %vm4216, %v6012, 0
      %v6130 = vsel %vm4216, %v6014, 0
      %v6133 = vsel %vm4216, %v6016, 0
      %v6136 = vsel %vm4216, %v6018, 0
      %v6139 = vsel %vm4216, %v6020, 0
      %v6142 = vsel %vm4216, %v6022, 0
      %v6145 = vsel %vm4216, %v6024, 0
      %v6148 = vsel %vm4216, %v6026, 0
      %v6151 = vsel %vm4216, %v6028, 0
      %v6154 = vsel %vm4216, %v6030, 0
      %v6157 = vsel %vm4216, %v6032, 0
      %v6160 = vsel %vm4216, %v6034, 0
      %6162 = vmatprep.subr.bf16.mxu0 0
      %6163 = vmatpush1.bf16.msra.mxu0 %v6096
      %6164 = vmatprep.subr.bf16.mxu0 0
      %6165 = vmatpush1.bf16.msra.mxu0 %v6097
      %6166 = vmatprep.subr.bf16.mxu0 0
      %6167 = vmatpush1.bf16.msra.mxu0 %v6098
      %6168 = vmatprep.subr.bf16.mxu0 0
      %6169 = vmatpush1.bf16.msra.mxu0 %v6099
      %6170 = vmatprep.subr.bf16.mxu0 0
      %6171 = vmatpush1.bf16.msra.mxu0 %v6100
      %6172 = vmatprep.subr.bf16.mxu0 0
      %6173 = vmatpush1.bf16.msra.mxu0 %v6101
      %6174 = vmatprep.subr.bf16.mxu0 0
      %6175 = vmatpush1.bf16.msra.mxu0 %v6102
      %6176 = vmatprep.subr.bf16.mxu0 0
      %6177 = vmatpush1.bf16.msra.mxu0 %v6103
      %6178 = vmatprep.subr.bf16.mxu0 0
      %6179 = vmatpush1.bf16.msra.mxu0 %v6104
      %6180 = vmatprep.subr.bf16.mxu0 0
      %6181 = vmatpush1.bf16.msra.mxu0 0
      %6182 = vmatprep.subr.bf16.mxu0 0
      %6183 = vmatpush1.bf16.msra.mxu0 0
      %6184 = vmatprep.subr.bf16.mxu0 0
      %6185 = vmatpush1.bf16.msra.mxu0 0
      %6186 = vmatprep.subr.bf16.mxu0 0
      %6187 = vmatpush1.bf16.msra.mxu0 0
      %6188 = vmatprep.subr.bf16.mxu0 0
      %6189 = vmatpush1.bf16.msra.mxu0 0
      %6190 = vmatprep.subr.bf16.mxu0 0
      %6191 = vmatpush1.bf16.msra.mxu0 0
      %6192 = vmatprep.subr.bf16.mxu0 0
      %6193 = vmatpush1.bf16.msra.mxu0 0
      %6194 = vmatprep.mubr.bf16.mxu0 %v6115
      %6195 = vmatmul.mubr.bf16.gmra.mrb[0].mxu0 %v6003
      %v6196 = vpop.f32.mrb[0].mxu0
      %v6197 = vadd.f32 %v6058, %v6196
      %v6198 = vpop.f32.mrb[0].mxu0
      %v6199 = vpop.f32.mrb[0].mxu0
      %v6200 = vadd.f32 %v6058, %v6199
      %v6201 = vpop.f32.mrb[0].mxu0
      %6202 = vmatprep.mubr.bf16.mxu0 %v6118
      %6203 = vmatmul.mubr.bf16.gmra.mrb[0].mxu0 %v6005
      %v6204 = vpop.f32.mrb[0].mxu0
      %v6205 = vadd.f32 %v6058, %v6204
      %v6206 = vpop.f32.mrb[0].mxu0
      %v6207 = vpop.f32.mrb[0].mxu0
      %v6208 = vadd.f32 %v6058, %v6207
      %v6209 = vpop.f32.mrb[0].mxu0
      %6210 = vmatprep.mubr.bf16.mxu0 %v6121
      %6211 = vmatmul.mubr.bf16.gmra.mrb[0].mxu0 %v6007
      %v6212 = vpop.f32.mrb[0].mxu0
      %v6213 = vadd.f32 %v6058, %v6212
      %v6214 = vpop.f32.mrb[0].mxu0
      %v6215 = vpop.f32.mrb[0].mxu0
      %v6216 = vadd.f32 %v6058, %v6215
      %v6217 = vpop.f32.mrb[0].mxu0
      %6218 = vmatprep.mubr.bf16.mxu0 %v6124
      %6219 = vmatmul.mubr.bf16.gmra.mrb[0].mxu0 %v6009
      %v6220 = vpop.f32.mrb[0].mxu0
      %v6221 = vadd.f32 %v6058, %v6220
      %v6222 = vpop.f32.mrb[0].mxu0
      %v6223 = vpop.f32.mrb[0].mxu0
      %v6224 = vadd.f32 %v6058, %v6223
      %v6225 = vpop.f32.mrb[0].mxu0
      %6226 = vmatprep.mubr.bf16.mxu0 %v6127
      %6227 = vmatmul.mubr.bf16.gmra.mrb[0].mxu0 %v6011
      %v6228 = vpop.f32.mrb[0].mxu0
      %v6229 = vadd.f32 %v6058, %v6228
      %v6230 = vpop.f32.mrb[0].mxu0
      %v6231 = vpop.f32.mrb[0].mxu0
      %v6232 = vadd.f32 %v6058, %v6231
      %v6233 = vpop.f32.mrb[0].mxu0
      %6234 = vmatprep.mubr.bf16.mxu0 %v6130
      %6235 = vmatmul.mubr.bf16.gmra.mrb[0].mxu0 %v6013
      %v6236 = vpop.f32.mrb[0].mxu0
      %v6237 = vadd.f32 %v6058, %v6236
      %v6238 = vpop.f32.mrb[0].mxu0
      %v6239 = vpop.f32.mrb[0].mxu0
      %v6240 = vadd.f32 %v6058, %v6239
      %v6241 = vpop.f32.mrb[0].mxu0
      %6242 = vmatprep.mubr.bf16.mxu0 %v6133
      %6243 = vmatmul.mubr.bf16.gmra.mrb[0].mxu0 %v6015
      %v6244 = vpop.f32.mrb[0].mxu0
      %v6245 = vadd.f32 %v6058, %v6244
      %v6246 = vpop.f32.mrb[0].mxu0
      %v6247 = vpop.f32.mrb[0].mxu0
      %v6248 = vadd.f32 %v6058, %v6247
      %v6249 = vpop.f32.mrb[0].mxu0
      %6250 = vmatprep.mubr.bf16.mxu0 %v6136
      %6251 = vmatmul.mubr.bf16.gmra.mrb[0].mxu0 %v6017
      %v6252 = vpop.f32.mrb[0].mxu0
      %v6253 = vadd.f32 %v6058, %v6252
      %v6254 = vpop.f32.mrb[0].mxu0
      %v6255 = vpop.f32.mrb[0].mxu0
      %v6256 = vadd.f32 %v6058, %v6255
      %v6257 = vpop.f32.mrb[0].mxu0
      %6258 = vmatprep.mubr.bf16.mxu0 %v6139
      %6259 = vmatmul.mubr.bf16.gmra.mrb[0].mxu0 %v6019
      %v6260 = vpop.f32.mrb[0].mxu0
      %v6261 = vadd.f32 %v6058, %v6260
      %v6262 = vpop.f32.mrb[0].mxu0
      %v6263 = vpop.f32.mrb[0].mxu0
      %v6264 = vadd.f32 %v6058, %v6263
      %v6265 = vpop.f32.mrb[0].mxu0
      %6266 = vmatprep.mubr.bf16.mxu0 %v6142
      %6267 = vmatmul.mubr.bf16.gmra.mrb[0].mxu0 %v6021
      %v6268 = vpop.f32.mrb[0].mxu0
      %v6269 = vadd.f32 %v6058, %v6268
      %v6270 = vpop.f32.mrb[0].mxu0
      %v6271 = vpop.f32.mrb[0].mxu0
      %v6272 = vadd.f32 %v6058, %v6271
      %v6273 = vpop.f32.mrb[0].mxu0
      %6274 = vmatprep.mubr.bf16.mxu0 %v6145
      %6275 = vmatmul.mubr.bf16.gmra.mrb[0].mxu0 %v6023
      %v6276 = vpop.f32.mrb[0].mxu0
      %v6277 = vadd.f32 %v6058, %v6276
      %v6278 = vpop.f32.mrb[0].mxu0
      %v6279 = vpop.f32.mrb[0].mxu0
      %v6280 = vadd.f32 %v6058, %v6279
      %v6281 = vpop.f32.mrb[0].mxu0
      %6282 = vmatprep.mubr.bf16.mxu0 %v6148
      %6283 = vmatmul.mubr.bf16.gmra.mrb[0].mxu0 %v6025
      %v6284 = vpop.f32.mrb[0].mxu0
      %v6285 = vadd.f32 %v6058, %v6284
      %v6286 = vpop.f32.mrb[0].mxu0
      %v6287 = vpop.f32.mrb[0].mxu0
      %v6288 = vadd.f32 %v6058, %v6287
      %v6289 = vpop.f32.mrb[0].mxu0
      %6290 = vmatprep.mubr.bf16.mxu0 %v6151
      %6291 = vmatmul.mubr.bf16.gmra.mrb[0].mxu0 %v6027
      %v6292 = vpop.f32.mrb[0].mxu0
      %v6293 = vadd.f32 %v6058, %v6292
      %v6294 = vpop.f32.mrb[0].mxu0
      %v6295 = vpop.f32.mrb[0].mxu0
      %v6296 = vadd.f32 %v6058, %v6295
      %v6297 = vpop.f32.mrb[0].mxu0
      %6298 = vmatprep.mubr.bf16.mxu0 %v6154
      %6299 = vmatmul.mubr.bf16.gmra.mrb[0].mxu0 %v6029
      %v6300 = vpop.f32.mrb[0].mxu0
      %v6301 = vadd.f32 %v6058, %v6300
      %v6302 = vpop.f32.mrb[0].mxu0
      %v6303 = vpop.f32.mrb[0].mxu0
      %v6304 = vadd.f32 %v6058, %v6303
      %v6305 = vpop.f32.mrb[0].mxu0
      %6306 = vmatprep.mubr.bf16.mxu0 %v6157
      %6307 = vmatmul.mubr.bf16.gmra.mrb[0].mxu0 %v6031
      %v6308 = vpop.f32.mrb[0].mxu0
      %v6309 = vadd.f32 %v6058, %v6308
      %v6310 = vpop.f32.mrb[0].mxu0
      %v6311 = vpop.f32.mrb[0].mxu0
      %v6312 = vadd.f32 %v6058, %v6311
      %v6313 = vpop.f32.mrb[0].mxu0
      %6314 = vmatprep.mubr.bf16.mxu0 %v6160
      %6315 = vmatmul.mubr.bf16.gmra.mrb[0].mxu0 %v6033
      %v6316 = vpop.f32.mrb[0].mxu0
      %v6317 = vadd.f32 %v6058, %v6316
      %v6318 = vpop.f32.mrb[0].mxu0
      %v6319 = vpop.f32.mrb[0].mxu0
      %v6320 = vadd.f32 %v6058, %v6319
      %v6321 = vpop.f32.mrb[0].mxu0
      %6322 = vdwg.mxu0
      %v6323 = vmax.f32 %v6197, 0.0
      %v6324 = vmax.f32 %v6200, 0.0
      %v6325 = vmax.f32 %v6205, 0.0
      %v6326 = vmax.f32 %v6208, 0.0
      %v6327 = vmax.f32 %v6213, 0.0
      %v6328 = vmax.f32 %v6216, 0.0
      %v6329 = vmax.f32 %v6221, 0.0
      %v6330 = vmax.f32 %v6224, 0.0
      %v6331 = vmax.f32 %v6229, 0.0
      %v6332 = vmax.f32 %v6232, 0.0
      %v6333 = vmax.f32 %v6237, 0.0
      %v6334 = vmax.f32 %v6240, 0.0
      %v6335 = vmax.f32 %v6245, 0.0
      %v6336 = vmax.f32 %v6248, 0.0
      %v6337 = vmax.f32 %v6253, 0.0
      %v6338 = vmax.f32 %v6256, 0.0
      %v6339 = vmax.f32 %v6261, 0.0
      %v6340 = vmax.f32 %v6264, 0.0
      %v6341 = vmax.f32 %v6269, 0.0
      %v6342 = vmax.f32 %v6272, 0.0
      %v6343 = vmax.f32 %v6277, 0.0
      %v6344 = vmax.f32 %v6280, 0.0
      %v6345 = vmax.f32 %v6285, 0.0
      %v6346 = vmax.f32 %v6288, 0.0
      %v6347 = vmax.f32 %v6293, 0.0
      %v6348 = vmax.f32 %v6296, 0.0
      %v6349 = vmax.f32 %v6301, 0.0
      %v6350 = vmax.f32 %v6304, 0.0
      %v6351 = vmax.f32 %v6309, 0.0
      %v6352 = vmax.f32 %v6312, 0.0
      %v6353 = vmax.f32 %v6317, 0.0
      %v6354 = vmax.f32 %v6320, 0.0
      %6355 = vst.msk [vmem:[#allocation3] sm:$0xff] %vm5805, %v6323
      %6356 = vst.msk [vmem:[#allocation3 + $0x8] sm:$0xff] %vm5805, %v6324
      %6357 = vst.msk [vmem:[#allocation3 + $0x10] sm:$0xff] %vm5805, %v6325
      %6358 = vst.msk [vmem:[#allocation3 + $0x18] sm:$0xff] %vm5805, %v6326
      %6359 = vst.msk [vmem:[#allocation3 + $0x20] sm:$0xff] %vm5805, %v6327
      %6360 = vst.msk [vmem:[#allocation3 + $0x28] sm:$0xff] %vm5805, %v6328
      %6361 = vst.msk [vmem:[#allocation3 + $0x30] sm:$0xff] %vm5805, %v6329
      %6362 = vst.msk [vmem:[#allocation3 + $0x38] sm:$0xff] %vm5805, %v6330
      %6363 = vst.msk [vmem:[#allocation3 + $0x40] sm:$0xff] %vm5805, %v6331
      %6364 = vst.msk [vmem:[#allocation3 + $0x48] sm:$0xff] %vm5805, %v6332
      %6365 = vst.msk [vmem:[#allocation3 + $0x50] sm:$0xff] %vm5805, %v6333
      %6366 = vst.msk [vmem:[#allocation3 + $0x58] sm:$0xff] %vm5805, %v6334
      %6367 = vst.msk [vmem:[#allocation3 + $0x60] sm:$0xff] %vm5805, %v6335
      %6368 = vst.msk [vmem:[#allocation3 + $0x68] sm:$0xff] %vm5805, %v6336
      %6369 = vst.msk [vmem:[#allocation3 + $0x70] sm:$0xff] %vm5805, %v6337
      %6370 = vst.msk [vmem:[#allocation3 + $0x78] sm:$0xff] %vm5805, %v6338
      %6371 = vst.msk [vmem:[#allocation3 + $0x80] sm:$0xff] %vm5805, %v6339
      %6372 = vst.msk [vmem:[#allocation3 + $0x88] sm:$0xff] %vm5805, %v6340
      %6373 = vst.msk [vmem:[#allocation3 + $0x90] sm:$0xff] %vm5805, %v6341
      %6374 = vst.msk [vmem:[#allocation3 + $0x98] sm:$0xff] %vm5805, %v6342
      %6375 = vst.msk [vmem:[#allocation3 + $0xa0] sm:$0xff] %vm5805, %v6343
      %6376 = vst.msk [vmem:[#allocation3 + $0xa8] sm:$0xff] %vm5805, %v6344
      %6377 = vst.msk [vmem:[#allocation3 + $0xb0] sm:$0xff] %vm5805, %v6345
      %6378 = vst.msk [vmem:[#allocation3 + $0xb8] sm:$0xff] %vm5805, %v6346
      %6379 = vst.msk [vmem:[#allocation3 + $0xc0] sm:$0xff] %vm5805, %v6347
      %6380 = vst.msk [vmem:[#allocation3 + $0xc8] sm:$0xff] %vm5805, %v6348
      %6381 = vst.msk [vmem:[#allocation3 + $0xd0] sm:$0xff] %vm5805, %v6349
      %6382 = vst.msk [vmem:[#allocation3 + $0xd8] sm:$0xff] %vm5805, %v6350
      %6383 = vst.msk [vmem:[#allocation3 + $0xe0] sm:$0xff] %vm5805, %v6351
      %6384 = vst.msk [vmem:[#allocation3 + $0xe8] sm:$0xff] %vm5805, %v6352
      %6385 = vst.msk [vmem:[#allocation3 + $0xf0] sm:$0xff] %vm5805, %v6353
      %6386 = vst.msk [vmem:[#allocation3 + $0xf8] sm:$0xff] %vm5805, %v6354
      %v6387 = vld [vmem:[#allocation3] ss:$2 sm:$0xff]
      %s6388 = scalar_lea.vmem [#allocation3], 16
      %v6389 = vld [vmem:[%s6388] ss:$2 sm:$0xff]
      %s6390 = scalar_lea.vmem [#allocation3], 32
      %v6391 = vld [vmem:[%s6390] ss:$2 sm:$0xff]
      %s6392 = scalar_lea.vmem [#allocation3], 48
      %v6393 = vld [vmem:[%s6392] ss:$2 sm:$0xff]
      %s6394 = scalar_lea.vmem [#allocation3], 64
      %v6395 = vld [vmem:[%s6394] ss:$2 sm:$0xff]
      %s6396 = scalar_lea.vmem [#allocation3], 80
      %v6397 = vld [vmem:[%s6396] ss:$2 sm:$0xff]
      %s6398 = scalar_lea.vmem [#allocation3], 96
      %v6399 = vld [vmem:[%s6398] ss:$2 sm:$0xff]
      %s6400 = scalar_lea.vmem [#allocation3], 112
      %v6401 = vld [vmem:[%s6400] ss:$2 sm:$0xff]
      %s6402 = scalar_lea.vmem [#allocation3], 128
      %v6403 = vld [vmem:[%s6402] ss:$2 sm:$0xff]
      %s6404 = scalar_lea.vmem [#allocation3], 144
      %v6405 = vld [vmem:[%s6404] ss:$2 sm:$0xff]
      %s6406 = scalar_lea.vmem [#allocation3], 160
      %v6407 = vld [vmem:[%s6406] ss:$2 sm:$0xff]
      %s6408 = scalar_lea.vmem [#allocation3], 176
      %v6409 = vld [vmem:[%s6408] ss:$2 sm:$0xff]
      %s6410 = scalar_lea.vmem [#allocation3], 192
      %v6411 = vld [vmem:[%s6410] ss:$2 sm:$0xff]
      %s6412 = scalar_lea.vmem [#allocation3], 208
      %v6413 = vld [vmem:[%s6412] ss:$2 sm:$0xff]
      %s6414 = scalar_lea.vmem [#allocation3], 224
      %v6415 = vld [vmem:[%s6414] ss:$2 sm:$0xff]
      %s6416 = scalar_lea.vmem [#allocation3], 240
      %v6417 = vld [vmem:[%s6416] ss:$2 sm:$0xff]
      %s6418 = scalar_lea.vmem [#allocation3], 1
      %v6419 = vld [vmem:[%s6418] ss:$2 sm:$0xff]
      %s6420 = scalar_lea.vmem [#allocation3], 17
      %v6421 = vld [vmem:[%s6420] ss:$2 sm:$0xff]
      %s6422 = scalar_lea.vmem [#allocation3], 33
      %v6423 = vld [vmem:[%s6422] ss:$2 sm:$0xff]
      %s6424 = scalar_lea.vmem [#allocation3], 49
      %v6425 = vld [vmem:[%s6424] ss:$2 sm:$0xff]
      %s6426 = scalar_lea.vmem [#allocation3], 65
      %v6427 = vld [vmem:[%s6426] ss:$2 sm:$0xff]
      %s6428 = scalar_lea.vmem [#allocation3], 81
      %v6429 = vld [vmem:[%s6428] ss:$2 sm:$0xff]
      %s6430 = scalar_lea.vmem [#allocation3], 97
      %v6431 = vld [vmem:[%s6430] ss:$2 sm:$0xff]
      %s6432 = scalar_lea.vmem [#allocation3], 113
      %v6433 = vld [vmem:[%s6432] ss:$2 sm:$0xff]
      %s6434 = scalar_lea.vmem [#allocation3], 129
      %v6435 = vld [vmem:[%s6434] ss:$2 sm:$0xff]
      %s6436 = scalar_lea.vmem [#allocation3], 145
      %v6437 = vld [vmem:[%s6436] ss:$2 sm:$0xff]
      %s6438 = scalar_lea.vmem [#allocation3], 161
      %v6439 = vld [vmem:[%s6438] ss:$2 sm:$0xff]
      %s6440 = scalar_lea.vmem [#allocation3], 177
      %v6441 = vld [vmem:[%s6440] ss:$2 sm:$0xff]
      %s6442 = scalar_lea.vmem [#allocation3], 193
      %v6443 = vld [vmem:[%s6442] ss:$2 sm:$0xff]
      %s6444 = scalar_lea.vmem [#allocation3], 209
      %v6445 = vld [vmem:[%s6444] ss:$2 sm:$0xff]
      %s6446 = scalar_lea.vmem [#allocation3], 225
      %v6447 = vld [vmem:[%s6446] ss:$2 sm:$0xff]
      %s6448 = scalar_lea.vmem [#allocation3], 241
      %v6449 = vld [vmem:[%s6448] ss:$2 sm:$0xff]
      %v6450 = vmax.f32 %v6387, %v6419
      %v6451 = vmax.f32 %v6389, %v6421
      %v6452 = vmax.f32 %v6391, %v6423
      %v6453 = vmax.f32 %v6393, %v6425
      %v6454 = vmax.f32 %v6395, %v6427
      %v6455 = vmax.f32 %v6397, %v6429
      %v6456 = vmax.f32 %v6399, %v6431
      %v6457 = vmax.f32 %v6401, %v6433
      %v6458 = vmax.f32 %v6403, %v6435
      %v6459 = vmax.f32 %v6405, %v6437
      %v6460 = vmax.f32 %v6407, %v6439
      %v6461 = vmax.f32 %v6409, %v6441
      %v6462 = vmax.f32 %v6411, %v6443
      %v6463 = vmax.f32 %v6413, %v6445
      %v6464 = vmax.f32 %v6415, %v6447
      %v6465 = vmax.f32 %v6417, %v6449
      %v6466 = vmax.f32 %v6450, %v6451
      %v6467 = vmax.f32 %v6452, %v6453
      %v6468 = vmax.f32 %v6454, %v6455
      %v6469 = vmax.f32 %v6456, %v6457
      %v6470 = vmax.f32 %v6458, %v6459
      %v6471 = vmax.f32 %v6460, %v6461
      %v6472 = vmax.f32 %v6462, %v6463
      %v6473 = vmax.f32 %v6464, %v6465
      %v6482 = vrot.slane %v6466, 7
      %v6483 = vrot.slane %v6467, 7
      %v6484 = vrot.slane %v6468, 7
      %v6485 = vrot.slane %v6469, 7
      %v6486 = vrot.slane %v6470, 7
      %v6487 = vrot.slane %v6471, 7
      %v6488 = vrot.slane %v6472, 7
      %v6489 = vrot.slane %v6473, 7
      %v6498 = vsel %vm4729, 0.0, %v6482
      %v6499 = vsel %vm4729, 0.0, %v6483
      %v6500 = vsel %vm4729, 0.0, %v6484
      %v6501 = vsel %vm4729, 0.0, %v6485
      %v6502 = vsel %vm4729, 0.0, %v6486
      %v6503 = vsel %vm4729, 0.0, %v6487
      %v6504 = vsel %vm4729, 0.0, %v6488
      %v6505 = vsel %vm4729, 0.0, %v6489
      %v6506 = vsel %vm4729, %v6482, 0.0
      %v6507 = vsel %vm4729, %v6483, 0.0
      %v6508 = vsel %vm4729, %v6484, 0.0
      %v6509 = vsel %vm4729, %v6485, 0.0
      %v6510 = vsel %vm4729, %v6486, 0.0
      %v6511 = vsel %vm4729, %v6487, 0.0
      %v6512 = vsel %vm4729, %v6488, 0.0
      %v6513 = vsel %vm4729, %v6489, 0.0
      %v6528 = vsel %vm4895, %v4896, %v4899
      %v6529 = vrot.slane %v6498, 1
      %v6530 = vrot.slane %v6506, 1
      %v6531 = vsel %vm4895, %v6529, %v6530
      %v6532 = vrot.slane %v6499, 1
      %v6533 = vrot.slane %v6507, 1
      %v6534 = vsel %vm4895, %v6532, %v6533
      %v6535 = vrot.slane %v6500, 1
      %v6536 = vrot.slane %v6508, 1
      %v6537 = vsel %vm4895, %v6535, %v6536
      %v6538 = vrot.slane %v6501, 1
      %v6539 = vrot.slane %v6509, 1
      %v6540 = vsel %vm4895, %v6538, %v6539
      %v6541 = vrot.slane %v6502, 1
      %v6542 = vrot.slane %v6510, 1
      %v6543 = vsel %vm4895, %v6541, %v6542
      %v6544 = vrot.slane %v6503, 1
      %v6545 = vrot.slane %v6511, 1
      %v6546 = vsel %vm4895, %v6544, %v6545
      %v6547 = vrot.slane %v6504, 1
      %v6548 = vrot.slane %v6512, 1
      %v6549 = vsel %vm4895, %v6547, %v6548
      %6550 = vrot.lane.b32.xlu0 %v6528, 32
      %v6551 = vpop.permute.xlu0 %6550
      %6552 = vrot.lane.b32.xlu0 %v6531, 32
      %v6553 = vpop.permute.xlu0 %6552
      %6554 = vrot.lane.b32.xlu0 %v6534, 32
      %v6555 = vpop.permute.xlu0 %6554
      %6556 = vrot.lane.b32.xlu0 %v6537, 32
      %v6557 = vpop.permute.xlu0 %6556
      %6558 = vrot.lane.b32.xlu0 %v6540, 32
      %v6559 = vpop.permute.xlu0 %6558
      %6560 = vrot.lane.b32.xlu0 %v6543, 32
      %v6561 = vpop.permute.xlu0 %6560
      %6562 = vrot.lane.b32.xlu0 %v6546, 32
      %v6563 = vpop.permute.xlu0 %6562
      %6564 = vrot.lane.b32.xlu0 %v6549, 32
      %v6565 = vpop.permute.xlu0 %6564
      %v6574 = vsel %vm5072, %v5073, %v5076
      %v6575 = vrot.slane %v6498, 2
      %v6576 = vrot.slane %v6506, 2
      %v6577 = vsel %vm5072, %v6575, %v6576
      %v6578 = vrot.slane %v6499, 2
      %v6579 = vrot.slane %v6507, 2
      %v6580 = vsel %vm5072, %v6578, %v6579
      %v6581 = vrot.slane %v6500, 2
      %v6582 = vrot.slane %v6508, 2
      %v6583 = vsel %vm5072, %v6581, %v6582
      %v6584 = vrot.slane %v6501, 2
      %v6585 = vrot.slane %v6509, 2
      %v6586 = vsel %vm5072, %v6584, %v6585
      %v6587 = vrot.slane %v6502, 2
      %v6588 = vrot.slane %v6510, 2
      %v6589 = vsel %vm5072, %v6587, %v6588
      %v6590 = vrot.slane %v6503, 2
      %v6591 = vrot.slane %v6511, 2
      %v6592 = vsel %vm5072, %v6590, %v6591
      %v6593 = vrot.slane %v6504, 2
      %v6594 = vrot.slane %v6512, 2
      %v6595 = vsel %vm5072, %v6593, %v6594
      %6596 = vrot.lane.b32.xlu0 %v6574, 64
      %v6597 = vpop.permute.xlu0 %6596
      %6598 = vrot.lane.b32.xlu0 %v6577, 64
      %v6599 = vpop.permute.xlu0 %6598
      %6600 = vrot.lane.b32.xlu0 %v6580, 64
      %v6601 = vpop.permute.xlu0 %6600
      %6602 = vrot.lane.b32.xlu0 %v6583, 64
      %v6603 = vpop.permute.xlu0 %6602
      %6604 = vrot.lane.b32.xlu0 %v6586, 64
      %v6605 = vpop.permute.xlu0 %6604
      %6606 = vrot.lane.b32.xlu0 %v6589, 64
      %v6607 = vpop.permute.xlu0 %6606
      %6608 = vrot.lane.b32.xlu0 %v6592, 64
      %v6609 = vpop.permute.xlu0 %6608
      %6610 = vrot.lane.b32.xlu0 %v6595, 64
      %v6611 = vpop.permute.xlu0 %6610
      %6621 = vrot.lane.b32.xlu0 %v6498, 96
      %v6622 = vpop.permute.xlu0 %6621
      %6623 = vrot.lane.b32.xlu0 %v6499, 96
      %v6624 = vpop.permute.xlu0 %6623
      %6625 = vrot.lane.b32.xlu0 %v6500, 96
      %v6626 = vpop.permute.xlu0 %6625
      %6627 = vrot.lane.b32.xlu0 %v6501, 96
      %v6628 = vpop.permute.xlu0 %6627
      %6629 = vrot.lane.b32.xlu0 %v6502, 96
      %v6630 = vpop.permute.xlu0 %6629
      %6631 = vrot.lane.b32.xlu0 %v6503, 96
      %v6632 = vpop.permute.xlu0 %6631
      %6633 = vrot.lane.b32.xlu0 %v6504, 96
      %v6634 = vpop.permute.xlu0 %6633
      %6635 = vrot.lane.b32.xlu0 %v6505, 96
      %v6636 = vpop.permute.xlu0 %6635
      %v6646 = vrot.slane %v6505, 1
      %v6647 = vrot.slane %v6513, 1
      %v6648 = vsel %vm4895, %v6646, %v6647
      %v6657 = vrot.slane %v6505, 2
      %v6658 = vrot.slane %v6513, 2
      %v6659 = vsel %vm5072, %v6657, %v6658
      %6660 = vrot.lane.b32.xlu0 %v6577, 32
      %v6661 = vpop.permute.xlu0 %6660
      %6662 = vrot.lane.b32.xlu0 %v6580, 32
      %v6663 = vpop.permute.xlu0 %6662
      %6664 = vrot.lane.b32.xlu0 %v6583, 32
      %v6665 = vpop.permute.xlu0 %6664
      %6666 = vrot.lane.b32.xlu0 %v6586, 32
      %v6667 = vpop.permute.xlu0 %6666
      %6668 = vrot.lane.b32.xlu0 %v6589, 32
      %v6669 = vpop.permute.xlu0 %6668
      %6670 = vrot.lane.b32.xlu0 %v6592, 32
      %v6671 = vpop.permute.xlu0 %6670
      %6672 = vrot.lane.b32.xlu0 %v6595, 32
      %v6673 = vpop.permute.xlu0 %6672
      %6674 = vrot.lane.b32.xlu0 %v6659, 32
      %v6675 = vpop.permute.xlu0 %6674
      %6684 = vrot.lane.b32.xlu0 %v6499, 64
      %v6685 = vpop.permute.xlu0 %6684
      %6686 = vrot.lane.b32.xlu0 %v6500, 64
      %v6687 = vpop.permute.xlu0 %6686
      %6688 = vrot.lane.b32.xlu0 %v6501, 64
      %v6689 = vpop.permute.xlu0 %6688
      %6690 = vrot.lane.b32.xlu0 %v6502, 64
      %v6691 = vpop.permute.xlu0 %6690
      %6692 = vrot.lane.b32.xlu0 %v6503, 64
      %v6693 = vpop.permute.xlu0 %6692
      %6694 = vrot.lane.b32.xlu0 %v6504, 64
      %v6695 = vpop.permute.xlu0 %6694
      %6696 = vrot.lane.b32.xlu0 %v6505, 64
      %v6697 = vpop.permute.xlu0 %6696
      %6698 = vrot.lane.b32.xlu0 %v4829, 64
      %v6699 = vpop.permute.xlu0 %6698
      %6708 = vrot.lane.b32.xlu0 %v6534, 96
      %v6709 = vpop.permute.xlu0 %6708
      %6710 = vrot.lane.b32.xlu0 %v6537, 96
      %v6711 = vpop.permute.xlu0 %6710
      %6712 = vrot.lane.b32.xlu0 %v6540, 96
      %v6713 = vpop.permute.xlu0 %6712
      %6714 = vrot.lane.b32.xlu0 %v6543, 96
      %v6715 = vpop.permute.xlu0 %6714
      %6716 = vrot.lane.b32.xlu0 %v6546, 96
      %v6717 = vpop.permute.xlu0 %6716
      %6718 = vrot.lane.b32.xlu0 %v6549, 96
      %v6719 = vpop.permute.xlu0 %6718
      %6720 = vrot.lane.b32.xlu0 %v6648, 96
      %v6721 = vpop.permute.xlu0 %6720
      %6722 = vrot.lane.b32.xlu0 %v6528, 96
      %v6723 = vpop.permute.xlu0 %6722
      %v6740 = vsel %vm5805, %v4829, %v6551
      %v6741 = vsel %vm5805, %v6498, %v6553
      %v6742 = vsel %vm5805, %v6499, %v6555
      %v6743 = vsel %vm5805, %v6500, %v6557
      %v6744 = vsel %vm5805, %v6501, %v6559
      %v6745 = vsel %vm5805, %v6502, %v6561
      %v6746 = vsel %vm5805, %v6503, %v6563
      %v6747 = vsel %vm5805, %v6504, %v6565
      %v6748 = vsel %vm5871, %v6740, %v6597
      %v6749 = vsel %vm5871, %v6741, %v6599
      %v6750 = vsel %vm5871, %v6742, %v6601
      %v6751 = vsel %vm5871, %v6743, %v6603
      %v6752 = vsel %vm5871, %v6744, %v6605
      %v6753 = vsel %vm5871, %v6745, %v6607
      %v6754 = vsel %vm5871, %v6746, %v6609
      %v6755 = vsel %vm5871, %v6747, %v6611
      %v6756 = vsel %vm5937, %v6748, %v6622
      %v6757 = vsel %vm5937, %v6749, %v6624
      %v6758 = vsel %vm5937, %v6750, %v6626
      %v6759 = vsel %vm5937, %v6751, %v6628
      %v6760 = vsel %vm5937, %v6752, %v6630
      %v6761 = vsel %vm5937, %v6753, %v6632
      %v6762 = vsel %vm5937, %v6754, %v6634
      %v6763 = vsel %vm5937, %v6755, %v6636
      %v6764 = vsel %vm5805, %v6531, %v6661
      %v6765 = vsel %vm5805, %v6534, %v6663
      %v6766 = vsel %vm5805, %v6537, %v6665
      %v6767 = vsel %vm5805, %v6540, %v6667
      %v6768 = vsel %vm5805, %v6543, %v6669
      %v6769 = vsel %vm5805, %v6546, %v6671
      %v6770 = vsel %vm5805, %v6549, %v6673
      %v6771 = vsel %vm5805, %v6648, %v6675
      %v6772 = vsel %vm5871, %v6764, %v6685
      %v6773 = vsel %vm5871, %v6765, %v6687
      %v6774 = vsel %vm5871, %v6766, %v6689
      %v6775 = vsel %vm5871, %v6767, %v6691
      %v6776 = vsel %vm5871, %v6768, %v6693
      %v6777 = vsel %vm5871, %v6769, %v6695
      %v6778 = vsel %vm5871, %v6770, %v6697
      %v6779 = vsel %vm5871, %v6771, %v6699
      %v6780 = vsel %vm5937, %v6772, %v6709
      %v6781 = vsel %vm5937, %v6773, %v6711
      %v6782 = vsel %vm5937, %v6774, %v6713
      %v6783 = vsel %vm5937, %v6775, %v6715
      %v6784 = vsel %vm5937, %v6776, %v6717
      %v6785 = vsel %vm5937, %v6777, %v6719
      %v6786 = vsel %vm5937, %v6778, %v6721
      %v6787 = vsel %vm5937, %v6779, %v6723
      %v6788 = vpack.c.bf16 %v6757, %v6756
      %v6789 = vpack.c.bf16 %v6781, %v6780
      %v6790 = vpack.c.bf16 %v6583, %v6580
      %v6791 = vpack.c.bf16 %v6759, %v6758
      %v6792 = vpack.c.bf16 %v6783, %v6782
      %v6793 = vpack.c.bf16 %v6589, %v6586
      %v6794 = vpack.c.bf16 %v6761, %v6760
      %v6795 = vpack.c.bf16 %v6785, %v6784
      %v6796 = vpack.c.bf16 %v6595, %v6592
      %v6797 = vpack.c.bf16 %v6763, %v6762
      %v6798 = vpack.c.bf16 %v6787, %v6786
      %v6799 = vpack.c.bf16 %v6574, %v6659
      %v6800 = vld [vmem:[%s5] sm:$0xf]
      %v6801 = vld [vmem:[%s5 + $0x4] sm:$0xf]
      %v6802 = vld [vmem:[%s5 + $0x8] sm:$0xf]
      %v6803 = vld [vmem:[%s5 + $0xc] sm:$0xf]
      %v6804 = vld [vmem:[%s5 + $0x10] sm:$0xf]
      %v6805 = vld [vmem:[%s5 + $0x14] sm:$0xf]
      %v6806 = vld [vmem:[%s5 + $0x18] sm:$0xf]
      %v6807 = vld [vmem:[%s5 + $0x1c] sm:$0xf]
      %v6808 = vld [vmem:[%s5 + $0x20] sm:$0xf]
      %v6809 = vld [vmem:[%s5 + $0x24] sm:$0xf]
      %v6810 = vld [vmem:[%s5 + $0x28] sm:$0xf]
      %v6811 = vld [vmem:[%s5 + $0x2c] sm:$0xf]
      %v6812 = vld [vmem:[%s5 + $0x30] sm:$0xf]
      %v6813 = vld [vmem:[%s5 + $0x34] sm:$0xf]
      %v6814 = vld [vmem:[%s5 + $0x38] sm:$0xf]
      %v6815 = vld [vmem:[%s5 + $0x3c] sm:$0xf]
      %v6816 = vld [vmem:[%s5 + $0x40] sm:$0xf]
      %v6817 = vld [vmem:[%s5 + $0x44] sm:$0xf]
      %v6818 = vld [vmem:[%s5 + $0x48] sm:$0xf]
      %v6819 = vld [vmem:[%s5 + $0x4c] sm:$0xf]
      %v6820 = vld [vmem:[%s5 + $0x50] sm:$0xf]
      %v6821 = vld [vmem:[%s5 + $0x54] sm:$0xf]
      %v6822 = vld [vmem:[%s5 + $0x58] sm:$0xf]
      %v6823 = vld [vmem:[%s5 + $0x5c] sm:$0xf]
      %v6824 = vld [vmem:[%s5 + $0x60] sm:$0xf]
      %v6825 = vld [vmem:[%s5 + $0x64] sm:$0xf]
      %v6826 = vld [vmem:[%s5 + $0x68] sm:$0xf]
      %v6827 = vld [vmem:[%s5 + $0x6c] sm:$0xf]
      %v6828 = vld [vmem:[%s5 + $0x70] sm:$0xf]
      %v6829 = vld [vmem:[%s5 + $0x74] sm:$0xf]
      %v6830 = vld [vmem:[%s5 + $0x78] sm:$0xf]
      %v6831 = vld [vmem:[%s5 + $0x7c] sm:$0xf]
      %v6832 = vld [vmem:[%s5 + $0x80] sm:$0xf]
      %v6833 = vld [vmem:[%s5 + $0x84] sm:$0xf]
      %v6834 = vld [vmem:[%s5 + $0x88] sm:$0xf]
      %v6835 = vld [vmem:[%s5 + $0x8c] sm:$0xf]
      %v6836 = vld [vmem:[%s6] sm:$0x1]
      %v6838 = vlaneseq
      %v6839 = vshrl.u32 %v6838, 7
      %v6840 = vsub.s32 0, %v6839
      %v6841 = vrot.slane %v6836, %v6840
      %v6879 = vunpack.c.l.b16 %v6800
      %v6880 = vunpack.c.l.b16 %v6801
      %v6881 = vunpack.c.l.b16 %v6802
      %v6882 = vunpack.c.l.b16 %v6803
      %v6883 = vunpack.c.l.b16 %v6804
      %v6884 = vunpack.c.l.b16 %v6805
      %v6885 = vunpack.c.l.b16 %v6806
      %v6886 = vunpack.c.l.b16 %v6807
      %v6887 = vunpack.c.l.b16 %v6808
      %v6888 = vunpack.c.l.b16 %v6809
      %v6889 = vunpack.c.l.b16 %v6810
      %v6890 = vunpack.c.l.b16 %v6811
      %v6891 = vunpack.c.l.b16 %v6812
      %v6892 = vunpack.c.l.b16 %v6813
      %v6893 = vunpack.c.l.b16 %v6814
      %v6894 = vunpack.c.l.b16 %v6815
      %v6895 = vunpack.c.l.b16 %v6816
      %v6896 = vunpack.c.l.b16 %v6817
      %v6897 = vunpack.c.l.b16 %v6818
      %v6898 = vunpack.c.l.b16 %v6819
      %v6899 = vunpack.c.l.b16 %v6820
      %v6900 = vunpack.c.l.b16 %v6821
      %v6901 = vunpack.c.l.b16 %v6822
      %v6902 = vunpack.c.l.b16 %v6823
      %v6903 = vunpack.c.l.b16 %v6824
      %v6904 = vunpack.c.l.b16 %v6825
      %v6905 = vunpack.c.l.b16 %v6826
      %v6906 = vunpack.c.l.b16 %v6827
      %v6907 = vunpack.c.l.b16 %v6828
      %v6908 = vunpack.c.l.b16 %v6829
      %v6909 = vunpack.c.l.b16 %v6830
      %v6910 = vunpack.c.l.b16 %v6831
      %v6911 = vunpack.c.l.b16 %v6832
      %v6912 = vunpack.c.l.b16 %v6833
      %v6913 = vunpack.c.l.b16 %v6834
      %v6914 = vunpack.c.l.b16 %v6835
      %v6915 = vpack.c.b16 %v6880, %v6879
      %v6916 = vpack.c.b16 %v6882, %v6881
      %v6917 = vpack.c.b16 %v6884, %v6883
      %v6918 = vpack.c.b16 %v6886, %v6885
      %v6919 = vpack.c.b16 %v6888, %v6887
      %v6920 = vpack.c.b16 %v6890, %v6889
      %v6921 = vpack.c.b16 %v6892, %v6891
      %v6922 = vpack.c.b16 %v6894, %v6893
      %v6923 = vpack.c.b16 %v6896, %v6895
      %v6924 = vpack.c.b16 %v6898, %v6897
      %v6925 = vpack.c.b16 %v6900, %v6899
      %v6926 = vpack.c.b16 %v6902, %v6901
      %v6927 = vpack.c.b16 %v6904, %v6903
      %v6928 = vpack.c.b16 %v6906, %v6905
      %v6929 = vpack.c.b16 %v6908, %v6907
      %v6930 = vpack.c.b16 %v6910, %v6909
      %v6931 = vpack.c.b16 %v6912, %v6911
      %v6932 = vpack.c.b16 %v6914, %v6913
      %v6952 = vsel %vm5805, %v6790, 0
      %v6955 = vsel %vm5805, %v6793, 0
      %v6958 = vsel %vm5805, %v6796, 0
      %v6961 = vsel %vm5805, %v6799, 0
      %6963 = vmatprep.subr.bf16.mxu0 0
      %6964 = vmatpush1.bf16.msra.mxu0 %v6915
      %6965 = vmatprep.subr.bf16.mxu0 0
      %6966 = vmatpush1.bf16.msra.mxu0 %v6916
      %6967 = vmatprep.subr.bf16.mxu0 0
      %6968 = vmatpush1.bf16.msra.mxu0 %v6917
      %6969 = vmatprep.subr.bf16.mxu0 0
      %6970 = vmatpush1.bf16.msra.mxu0 %v6918
      %6971 = vmatprep.subr.bf16.mxu0 0
      %6972 = vmatpush1.bf16.msra.mxu0 %v6919
      %6973 = vmatprep.subr.bf16.mxu0 0
      %6974 = vmatpush1.bf16.msra.mxu0 %v6920
      %6975 = vmatprep.subr.bf16.mxu0 0
      %6976 = vmatpush1.bf16.msra.mxu0 %v6921
      %6977 = vmatprep.subr.bf16.mxu0 0
      %6978 = vmatpush1.bf16.msra.mxu0 %v6922
      %6979 = vmatprep.subr.bf16.mxu0 0
      %6980 = vmatpush1.bf16.msra.mxu0 %v6923
      %6981 = vmatprep.subr.bf16.mxu0 0
      %6982 = vmatpush1.bf16.msra.mxu0 %v6924
      %6983 = vmatprep.subr.bf16.mxu0 0
      %6984 = vmatpush1.bf16.msra.mxu0 %v6925
      %6985 = vmatprep.subr.bf16.mxu0 0
      %6986 = vmatpush1.bf16.msra.mxu0 %v6926
      %6987 = vmatprep.subr.bf16.mxu0 0
      %6988 = vmatpush1.bf16.msra.mxu0 %v6927
      %6989 = vmatprep.subr.bf16.mxu0 0
      %6990 = vmatpush1.bf16.msra.mxu0 %v6928
      %6991 = vmatprep.subr.bf16.mxu0 0
      %6992 = vmatpush1.bf16.msra.mxu0 %v6929
      %6993 = vmatprep.subr.bf16.mxu0 0
      %6994 = vmatpush1.bf16.msra.mxu0 %v6930
      %6995 = vmatprep.mubr.bf16.mxu0 %v6789
      %6996 = vmatmul.mubr.bf16.gmra.mrb[0].mxu0 %v6788
      %v6997 = vpop.f32.mrb[0].mxu0
      %v6998 = vadd.f32 %v6841, %v6997
      %v6999 = vpop.f32.mrb[0].mxu0
      %v7000 = vpop.f32.mrb[0].mxu0
      %v7001 = vadd.f32 %v6841, %v7000
      %v7002 = vpop.f32.mrb[0].mxu0
      %7003 = vmatprep.mubr.bf16.mxu0 %v6792
      %7004 = vmatmul.mubr.bf16.gmra.mrb[0].mxu0 %v6791
      %v7005 = vpop.f32.mrb[0].mxu0
      %v7006 = vadd.f32 %v6841, %v7005
      %v7007 = vpop.f32.mrb[0].mxu0
      %v7008 = vpop.f32.mrb[0].mxu0
      %v7009 = vadd.f32 %v6841, %v7008
      %v7010 = vpop.f32.mrb[0].mxu0
      %7011 = vmatprep.mubr.bf16.mxu0 %v6795
      %7012 = vmatmul.mubr.bf16.gmra.mrb[0].mxu0 %v6794
      %v7013 = vpop.f32.mrb[0].mxu0
      %v7014 = vadd.f32 %v6841, %v7013
      %v7015 = vpop.f32.mrb[0].mxu0
      %v7016 = vpop.f32.mrb[0].mxu0
      %v7017 = vadd.f32 %v6841, %v7016
      %v7018 = vpop.f32.mrb[0].mxu0
      %7019 = vmatprep.mubr.bf16.mxu0 %v6798
      %7020 = vmatmul.mubr.bf16.gmra.mrb[0].mxu0 %v6797
      %v7021 = vpop.f32.mrb[0].mxu0
      %v7022 = vadd.f32 %v6841, %v7021
      %v7023 = vpop.f32.mrb[0].mxu0
      %v7024 = vpop.f32.mrb[0].mxu0
      %v7025 = vadd.f32 %v6841, %v7024
      %v7026 = vpop.f32.mrb[0].mxu0
      %7027 = vdwg.mxu0
      %7028 = vmatprep.subr.bf16.mxu0 0
      %7029 = vmatpush1.bf16.msra.mxu0 %v6931
      %7030 = vmatprep.subr.bf16.mxu0 0
      %7031 = vmatpush1.bf16.msra.mxu0 %v6932
      %7032 = vmatprep.subr.bf16.mxu0 0
      %7033 = vmatpush1.bf16.msra.mxu0 0
      %7034 = vmatprep.subr.bf16.mxu0 0
      %7035 = vmatpush1.bf16.msra.mxu0 0
      %7036 = vmatprep.subr.bf16.mxu0 0
      %7037 = vmatpush1.bf16.msra.mxu0 0
      %7038 = vmatprep.subr.bf16.mxu0 0
      %7039 = vmatpush1.bf16.msra.mxu0 0
      %7040 = vmatprep.subr.bf16.mxu0 0
      %7041 = vmatpush1.bf16.msra.mxu0 0
      %7042 = vmatprep.subr.bf16.mxu0 0
      %7043 = vmatpush1.bf16.msra.mxu0 0
      %7044 = vmatprep.subr.bf16.mxu0 0
      %7045 = vmatpush1.bf16.msra.mxu0 0
      %7046 = vmatprep.subr.bf16.mxu0 0
      %7047 = vmatpush1.bf16.msra.mxu0 0
      %7048 = vmatprep.subr.bf16.mxu0 0
      %7049 = vmatpush1.bf16.msra.mxu0 0
      %7050 = vmatprep.subr.bf16.mxu0 0
      %7051 = vmatpush1.bf16.msra.mxu0 0
      %7052 = vmatprep.subr.bf16.mxu0 0
      %7053 = vmatpush1.bf16.msra.mxu0 0
      %7054 = vmatprep.subr.bf16.mxu0 0
      %7055 = vmatpush1.bf16.msra.mxu0 0
      %7056 = vmatprep.subr.bf16.mxu0 0
      %7057 = vmatpush1.bf16.msra.mxu0 0
      %7058 = vmatprep.subr.bf16.mxu0 0
      %7059 = vmatpush1.bf16.msra.mxu0 0
      %7060 = vmatprep.mubr.bf16.mxu0 0
      %7061 = vmatmul.mubr.bf16.gmra.mrb[0].mxu0 %v6952
      %v7062 = vpop.f32.mrb[0].mxu0
      %v7063 = vadd.f32 %v6998, %v7062
      %v7064 = vpop.f32.mrb[0].mxu0
      %v7065 = vpop.f32.mrb[0].mxu0
      %v7066 = vadd.f32 %v7001, %v7065
      %v7067 = vpop.f32.mrb[0].mxu0
      %7068 = vmatprep.mubr.bf16.mxu0 0
      %7069 = vmatmul.mubr.bf16.gmra.mrb[0].mxu0 %v6955
      %v7070 = vpop.f32.mrb[0].mxu0
      %v7071 = vadd.f32 %v7006, %v7070
      %v7072 = vpop.f32.mrb[0].mxu0
      %v7073 = vpop.f32.mrb[0].mxu0
      %v7074 = vadd.f32 %v7009, %v7073
      %v7075 = vpop.f32.mrb[0].mxu0
      %7076 = vmatprep.mubr.bf16.mxu0 0
      %7077 = vmatmul.mubr.bf16.gmra.mrb[0].mxu0 %v6958
      %v7078 = vpop.f32.mrb[0].mxu0
      %v7079 = vadd.f32 %v7014, %v7078
      %v7080 = vpop.f32.mrb[0].mxu0
      %v7081 = vpop.f32.mrb[0].mxu0
      %v7082 = vadd.f32 %v7017, %v7081
      %v7083 = vpop.f32.mrb[0].mxu0
      %7084 = vmatprep.mubr.bf16.mxu0 0
      %7085 = vmatmul.mubr.bf16.gmra.mrb[0].mxu0 %v6961
      %v7086 = vpop.f32.mrb[0].mxu0
      %v7087 = vadd.f32 %v7022, %v7086
      %v7088 = vpop.f32.mrb[0].mxu0
      %v7089 = vpop.f32.mrb[0].mxu0
      %v7090 = vadd.f32 %v7025, %v7089
      %v7091 = vpop.f32.mrb[0].mxu0
      %7092 = vdwg.mxu0
      %v7093 = vmax.f32 %v7063, 0.0
      %v7094 = vmax.f32 %v7066, 0.0
      %v7095 = vmax.f32 %v7071, 0.0
      %v7096 = vmax.f32 %v7074, 0.0
      %v7097 = vmax.f32 %v7079, 0.0
      %v7098 = vmax.f32 %v7082, 0.0
      %v7099 = vmax.f32 %v7087, 0.0
      %v7100 = vmax.f32 %v7090, 0.0
      %7101 = vst.msk [vmem:[#allocation4] sm:$0xff] %vm5871, %v7093
      %7102 = vst.msk [vmem:[#allocation4 + $0x8] sm:$0xff] %vm5871, %v7094
      %7103 = vst.msk [vmem:[#allocation4 + $0x10] sm:$0xff] %vm5871, %v7095
      %7104 = vst.msk [vmem:[#allocation4 + $0x18] sm:$0xff] %vm5871, %v7096
      %7105 = vst.msk [vmem:[#allocation4 + $0x20] sm:$0xff] %vm5871, %v7097
      %7106 = vst.msk [vmem:[#allocation4 + $0x28] sm:$0xff] %vm5871, %v7098
      %7107 = vst.msk [vmem:[#allocation4 + $0x30] sm:$0xff] %vm5871, %v7099
      %7108 = vst.msk [vmem:[#allocation4 + $0x38] sm:$0xff] %vm5871, %v7100
      %v7109 = vld [vmem:[#allocation4] ss:$2 sm:$0xff]
      %s7110 = scalar_lea.vmem [#allocation4], 16
      %v7111 = vld [vmem:[%s7110] ss:$2 sm:$0xff]
      %s7112 = scalar_lea.vmem [#allocation4], 32
      %v7113 = vld [vmem:[%s7112] ss:$2 sm:$0xff]
      %s7114 = scalar_lea.vmem [#allocation4], 48
      %v7115 = vld [vmem:[%s7114] ss:$2 sm:$0xff]
      %s7116 = scalar_lea.vmem [#allocation4], 1
      %v7117 = vld [vmem:[%s7116] ss:$2 sm:$0xff]
      %s7118 = scalar_lea.vmem [#allocation4], 17
      %v7119 = vld [vmem:[%s7118] ss:$2 sm:$0xff]
      %s7120 = scalar_lea.vmem [#allocation4], 33
      %v7121 = vld [vmem:[%s7120] ss:$2 sm:$0xff]
      %s7122 = scalar_lea.vmem [#allocation4], 49
      %v7123 = vld [vmem:[%s7122] ss:$2 sm:$0xff]
      %v7124 = vmax.f32 %v7109, %v7117
      %v7125 = vmax.f32 %v7111, %v7119
      %v7126 = vmax.f32 %v7113, %v7121
      %v7127 = vmax.f32 %v7115, %v7123
      %v7129 = vrot.slane %v7124, 4
      %v7131 = vmax.f32 %v7124, %v7129
      %v7133 = vrot.slane %v7125, 4
      %v7135 = vmax.f32 %v7125, %v7133
      %v7137 = vrot.slane %v7126, 4
      %v7139 = vmax.f32 %v7126, %v7137
      %v7141 = vrot.slane %v7127, 4
      %v7143 = vmax.f32 %v7127, %v7141
      %v7148 = vrot.slane %v7131, 7
      %v7149 = vrot.slane %v7135, 7
      %v7150 = vrot.slane %v7139, 7
      %v7151 = vrot.slane %v7143, 7
      %v7156 = vsel %vm4729, 0.0, %v7148
      %v7157 = vsel %vm4729, 0.0, %v7149
      %v7158 = vsel %vm4729, 0.0, %v7150
      %v7159 = vsel %vm4729, 0.0, %v7151
      %v7160 = vsel %vm3537, %v4829, 0.0
      %v7161 = vsel %vm3537, %v7156, 0.0
      %v7162 = vsel %vm3537, %v7157, 0.0
      %v7163 = vsel %vm3537, %v7158, 0.0
      %v7164 = vsel %vm3537, %v7159, 0.0
      %v7169 = vrot.slane %v7160, 1
      %v7170 = vrot.slane %v7161, 1
      %v7171 = vrot.slane %v7162, 1
      %v7172 = vrot.slane %v7163, 1
      %7173 = vrot.lane.b32.xlu0 %v7169, 64
      %v7174 = vpop.permute.xlu0 %7173
      %7175 = vrot.lane.b32.xlu0 %v7170, 64
      %v7176 = vpop.permute.xlu0 %7175
      %7177 = vrot.lane.b32.xlu0 %v7171, 64
      %v7178 = vpop.permute.xlu0 %7177
      %7179 = vrot.lane.b32.xlu0 %v7172, 64
      %v7180 = vpop.permute.xlu0 %7179
      %v7185 = vrot.slane %v7160, 2
      %v7186 = vrot.slane %v7161, 2
      %v7187 = vrot.slane %v7162, 2
      %v7188 = vrot.slane %v7163, 2
      %7194 = vrot.lane.b32.xlu0 %v7161, 64
      %v7195 = vpop.permute.xlu0 %7194
      %7196 = vrot.lane.b32.xlu0 %v7162, 64
      %v7197 = vpop.permute.xlu0 %7196
      %7198 = vrot.lane.b32.xlu0 %v7163, 64
      %v7199 = vpop.permute.xlu0 %7198
      %7200 = vrot.lane.b32.xlu0 %v7164, 64
      %v7201 = vpop.permute.xlu0 %7200
      %v7206 = vrot.slane %v7164, 1
      %v7211 = vrot.slane %v7164, 2
      %7212 = vrot.lane.b32.xlu0 %v7186, 64
      %v7213 = vpop.permute.xlu0 %7212
      %7214 = vrot.lane.b32.xlu0 %v7187, 64
      %v7215 = vpop.permute.xlu0 %7214
      %7216 = vrot.lane.b32.xlu0 %v7188, 64
      %v7217 = vpop.permute.xlu0 %7216
      %7218 = vrot.lane.b32.xlu0 %v7211, 64
      %v7219 = vpop.permute.xlu0 %7218
      %7224 = vrot.lane.b32.xlu0 %v7206, 64
      %v7225 = vpop.permute.xlu0 %7224
      %v7228 = vsel %vm5871, %v7160, %v7174
      %v7229 = vsel %vm5871, %v7161, %v7176
      %v7230 = vsel %vm5871, %v7162, %v7178
      %v7231 = vsel %vm5871, %v7163, %v7180
      %v7232 = vsel %vm5871, %v7185, %v7195
      %v7233 = vsel %vm5871, %v7186, %v7197
      %v7234 = vsel %vm5871, %v7187, %v7199
      %v7235 = vsel %vm5871, %v7188, %v7201
      %v7236 = vsel %vm5871, %v7170, %v7213
      %v7237 = vsel %vm5871, %v7171, %v7215
      %v7238 = vsel %vm5871, %v7172, %v7217
      %v7239 = vsel %vm5871, %v7206, %v7219
      %v7240 = vsel %vm5871, %v7164, %v7225
      %v7245 = vrot.slane %v7229, 4
      %v7246 = vrot.slane %v7233, 4
      %v7247 = vrot.slane %v7237, 4
      %v7248 = vrot.slane %v7231, 4
      %v7249 = vrot.slane %v7188, 4
      %v7258 = vrot.slane %v7235, 4
      %v7259 = vrot.slane %v7239, 4
      %v7260 = vrot.slane %v7228, 4
      %v7261 = vrot.slane %v7185, 4
      %v7266 = vsel %vm3536, %v7228, %v7245
      %v7267 = vsel %vm3536, %v7232, %v7246
      %v7268 = vsel %vm3536, %v7236, %v7247
      %v7269 = vsel %vm3536, %v7230, %v7248
      %v7270 = vsel %vm3536, %v7187, %v7249
      %v7271 = vsel %vm3536, %v7234, %v7258
      %v7272 = vsel %vm3536, %v7238, %v7259
      %v7273 = vsel %vm3536, %v7240, %v7260
      %v7274 = vsel %vm3536, %v7211, %v7261
      %v7275 = vpack.c.bf16 %v7269, %v7266
      %v7276 = vpack.c.bf16 %v7271, %v7267
      %v7277 = vpack.c.bf16 %v7272, %v7268
      %v7278 = vpack.c.bf16 %v7273, %v7269
      %v7279 = vpack.c.bf16 %v7274, %v7270
      %v7280 = vld [vmem:[%s7] sm:$0xf]
      %v7281 = vld [vmem:[%s7 + $0x4] sm:$0xf]
      %v7282 = vld [vmem:[%s7 + $0x8] sm:$0xf]
      %v7283 = vld [vmem:[%s7 + $0xc] sm:$0xf]
      %v7284 = vld [vmem:[%s7 + $0x10] sm:$0xf]
      %v7285 = vld [vmem:[%s7 + $0x14] sm:$0xf]
      %v7286 = vld [vmem:[%s7 + $0x18] sm:$0xf]
      %v7287 = vld [vmem:[%s7 + $0x1c] sm:$0xf]
      %v7288 = vld [vmem:[%s7 + $0x20] sm:$0xf]
      %v7289 = vld [vmem:[%s7 + $0x24] sm:$0xf]
      %v7290 = vld [vmem:[%s7 + $0x28] sm:$0xf]
      %v7291 = vld [vmem:[%s7 + $0x2c] sm:$0xf]
      %v7292 = vld [vmem:[%s7 + $0x30] sm:$0xf]
      %v7293 = vld [vmem:[%s7 + $0x34] sm:$0xf]
      %v7294 = vld [vmem:[%s7 + $0x38] sm:$0xf]
      %v7295 = vld [vmem:[%s7 + $0x3c] sm:$0xf]
      %v7296 = vld [vmem:[%s7 + $0x40] sm:$0xf]
      %v7297 = vld [vmem:[%s7 + $0x44] sm:$0xf]
      %v7298 = vld [vmem:[%s7 + $0x48] sm:$0xf]
      %v7299 = vld [vmem:[%s7 + $0x4c] sm:$0xf]
      %v7300 = vld [vmem:[%s7 + $0x50] sm:$0xf]
      %v7301 = vld [vmem:[%s7 + $0x54] sm:$0xf]
      %v7302 = vld [vmem:[%s7 + $0x58] sm:$0xf]
      %v7303 = vld [vmem:[%s7 + $0x5c] sm:$0xf]
      %v7304 = vld [vmem:[%s7 + $0x60] sm:$0xf]
      %v7305 = vld [vmem:[%s7 + $0x64] sm:$0xf]
      %v7306 = vld [vmem:[%s7 + $0x68] sm:$0xf]
      %v7307 = vld [vmem:[%s7 + $0x6c] sm:$0xf]
      %v7308 = vld [vmem:[%s7 + $0x70] sm:$0xf]
      %v7309 = vld [vmem:[%s7 + $0x74] sm:$0xf]
      %v7310 = vld [vmem:[%s7 + $0x78] sm:$0xf]
      %v7311 = vld [vmem:[%s7 + $0x7c] sm:$0xf]
      %v7312 = vld [vmem:[%s7 + $0x80] sm:$0xf]
      %v7313 = vld [vmem:[%s7 + $0x84] sm:$0xf]
      %v7314 = vld [vmem:[%s7 + $0x88] sm:$0xf]
      %v7315 = vld [vmem:[%s7 + $0x8c] sm:$0xf]
      %v7316 = vld [vmem:[%s7 + $0x90] sm:$0xf]
      %v7317 = vld [vmem:[%s7 + $0x94] sm:$0xf]
      %v7318 = vld [vmem:[%s7 + $0x98] sm:$0xf]
      %v7319 = vld [vmem:[%s7 + $0x9c] sm:$0xf]
      %v7320 = vld [vmem:[%s7 + $0xa0] sm:$0xf]
      %v7321 = vld [vmem:[%s7 + $0xa4] sm:$0xf]
      %v7322 = vld [vmem:[%s7 + $0xa8] sm:$0xf]
      %v7323 = vld [vmem:[%s7 + $0xac] sm:$0xf]
      %v7324 = vld [vmem:[%s7 + $0xb0] sm:$0xf]
      %v7325 = vld [vmem:[%s7 + $0xb4] sm:$0xf]
      %v7326 = vld [vmem:[%s7 + $0xb8] sm:$0xf]
      %v7327 = vld [vmem:[%s7 + $0xbc] sm:$0xf]
      %v7328 = vld [vmem:[%s7 + $0xc0] sm:$0xf]
      %v7329 = vld [vmem:[%s7 + $0xc4] sm:$0xf]
      %v7330 = vld [vmem:[%s7 + $0xc8] sm:$0xf]
      %v7331 = vld [vmem:[%s7 + $0xcc] sm:$0xf]
      %v7332 = vld [vmem:[%s7 + $0xd0] sm:$0xf]
      %v7333 = vld [vmem:[%s7 + $0xd4] sm:$0xf]
      %v7334 = vld [vmem:[%s7 + $0xd8] sm:$0xf]
      %v7335 = vld [vmem:[%s7 + $0xdc] sm:$0xf]
      %v7336 = vld [vmem:[%s7 + $0xe0] sm:$0xf]
      %v7337 = vld [vmem:[%s7 + $0xe4] sm:$0xf]
      %v7338 = vld [vmem:[%s7 + $0xe8] sm:$0xf]
      %v7339 = vld [vmem:[%s7 + $0xec] sm:$0xf]
      %v7340 = vld [vmem:[%s7 + $0xf0] sm:$0xf]
      %v7341 = vld [vmem:[%s7 + $0xf4] sm:$0xf]
      %v7342 = vld [vmem:[%s7 + $0xf8] sm:$0xf]
      %v7343 = vld [vmem:[%s7 + $0xfc] sm:$0xf]
      %v7344 = vld [vmem:[%s7 + $0x100] sm:$0xf]
      %v7345 = vld [vmem:[%s7 + $0x104] sm:$0xf]
      %v7346 = vld [vmem:[%s7 + $0x108] sm:$0xf]
      %v7347 = vld [vmem:[%s7 + $0x10c] sm:$0xf]
      %v7348 = vld [vmem:[%s7 + $0x110] sm:$0xf]
      %v7349 = vld [vmem:[%s7 + $0x114] sm:$0xf]
      %v7350 = vld [vmem:[%s7 + $0x118] sm:$0xf]
      %v7351 = vld [vmem:[%s7 + $0x11c] sm:$0xf]
      %v7352 = vld [vmem:[%s8] sm:$0x1]
      %v7354 = vlaneseq
      %v7355 = vshrl.u32 %v7354, 7
      %v7356 = vsub.s32 0, %v7355
      %v7357 = vrot.slane %v7352, %v7356
      %v7431 = vunpack.c.l.b16 %v7280
      %v7432 = vunpack.c.l.b16 %v7281
      %v7433 = vunpack.c.l.b16 %v7282
      %v7434 = vunpack.c.l.b16 %v7283
      %v7435 = vunpack.c.l.b16 %v7284
      %v7436 = vunpack.c.l.b16 %v7285
      %v7437 = vunpack.c.l.b16 %v7286
      %v7438 = vunpack.c.l.b16 %v7287
      %v7439 = vunpack.c.l.b16 %v7288
      %v7440 = vunpack.c.l.b16 %v7289
      %v7441 = vunpack.c.l.b16 %v7290
      %v7442 = vunpack.c.l.b16 %v7291
      %v7443 = vunpack.c.l.b16 %v7292
      %v7444 = vunpack.c.l.b16 %v7293
      %v7445 = vunpack.c.l.b16 %v7294
      %v7446 = vunpack.c.l.b16 %v7295
      %v7447 = vunpack.c.l.b16 %v7296
      %v7448 = vunpack.c.l.b16 %v7297
      %v7449 = vunpack.c.l.b16 %v7298
      %v7450 = vunpack.c.l.b16 %v7299
      %v7451 = vunpack.c.l.b16 %v7300
      %v7452 = vunpack.c.l.b16 %v7301
      %v7453 = vunpack.c.l.b16 %v7302
      %v7454 = vunpack.c.l.b16 %v7303
      %v7455 = vunpack.c.l.b16 %v7304
      %v7456 = vunpack.c.l.b16 %v7305
      %v7457 = vunpack.c.l.b16 %v7306
      %v7458 = vunpack.c.l.b16 %v7307
      %v7459 = vunpack.c.l.b16 %v7308
      %v7460 = vunpack.c.l.b16 %v7309
      %v7461 = vunpack.c.l.b16 %v7310
      %v7462 = vunpack.c.l.b16 %v7311
      %v7463 = vunpack.c.l.b16 %v7312
      %v7464 = vunpack.c.l.b16 %v7313
      %v7465 = vunpack.c.l.b16 %v7314
      %v7466 = vunpack.c.l.b16 %v7315
      %v7467 = vunpack.c.l.b16 %v7316
      %v7468 = vunpack.c.l.b16 %v7317
      %v7469 = vunpack.c.l.b16 %v7318
      %v7470 = vunpack.c.l.b16 %v7319
      %v7471 = vunpack.c.l.b16 %v7320
      %v7472 = vunpack.c.l.b16 %v7321
      %v7473 = vunpack.c.l.b16 %v7322
      %v7474 = vunpack.c.l.b16 %v7323
      %v7475 = vunpack.c.l.b16 %v7324
      %v7476 = vunpack.c.l.b16 %v7325
      %v7477 = vunpack.c.l.b16 %v7326
      %v7478 = vunpack.c.l.b16 %v7327
      %v7479 = vunpack.c.l.b16 %v7328
      %v7480 = vunpack.c.l.b16 %v7329
      %v7481 = vunpack.c.l.b16 %v7330
      %v7482 = vunpack.c.l.b16 %v7331
      %v7483 = vunpack.c.l.b16 %v7332
      %v7484 = vunpack.c.l.b16 %v7333
      %v7485 = vunpack.c.l.b16 %v7334
      %v7486 = vunpack.c.l.b16 %v7335
      %v7487 = vunpack.c.l.b16 %v7336
      %v7488 = vunpack.c.l.b16 %v7337
      %v7489 = vunpack.c.l.b16 %v7338
      %v7490 = vunpack.c.l.b16 %v7339
      %v7491 = vunpack.c.l.b16 %v7340
      %v7492 = vunpack.c.l.b16 %v7341
      %v7493 = vunpack.c.l.b16 %v7342
      %v7494 = vunpack.c.l.b16 %v7343
      %v7495 = vunpack.c.l.b16 %v7344
      %v7496 = vunpack.c.l.b16 %v7345
      %v7497 = vunpack.c.l.b16 %v7346
      %v7498 = vunpack.c.l.b16 %v7347
      %v7499 = vunpack.c.l.b16 %v7348
      %v7500 = vunpack.c.l.b16 %v7349
      %v7501 = vunpack.c.l.b16 %v7350
      %v7502 = vunpack.c.l.b16 %v7351
      %v7503 = vpack.c.b16 %v7432, %v7431
      %v7504 = vpack.c.b16 %v7434, %v7433
      %v7505 = vpack.c.b16 %v7436, %v7435
      %v7506 = vpack.c.b16 %v7438, %v7437
      %v7507 = vpack.c.b16 %v7440, %v7439
      %v7508 = vpack.c.b16 %v7442, %v7441
      %v7509 = vpack.c.b16 %v7444, %v7443
      %v7510 = vpack.c.b16 %v7446, %v7445
      %v7511 = vpack.c.b16 %v7448, %v7447
      %v7512 = vpack.c.b16 %v7450, %v7449
      %v7513 = vpack.c.b16 %v7452, %v7451
      %v7514 = vpack.c.b16 %v7454, %v7453
      %v7515 = vpack.c.b16 %v7456, %v7455
      %v7516 = vpack.c.b16 %v7458, %v7457
      %v7517 = vpack.c.b16 %v7460, %v7459
      %v7518 = vpack.c.b16 %v7462, %v7461
      %v7519 = vpack.c.b16 %v7464, %v7463
      %v7520 = vpack.c.b16 %v7466, %v7465
      %v7521 = vpack.c.b16 %v7468, %v7467
      %v7522 = vpack.c.b16 %v7470, %v7469
      %v7523 = vpack.c.b16 %v7472, %v7471
      %v7524 = vpack.c.b16 %v7474, %v7473
      %v7525 = vpack.c.b16 %v7476, %v7475
      %v7526 = vpack.c.b16 %v7478, %v7477
      %v7527 = vpack.c.b16 %v7480, %v7479
      %v7528 = vpack.c.b16 %v7482, %v7481
      %v7529 = vpack.c.b16 %v7484, %v7483
      %v7530 = vpack.c.b16 %v7486, %v7485
      %v7531 = vpack.c.b16 %v7488, %v7487
      %v7532 = vpack.c.b16 %v7490, %v7489
      %v7533 = vpack.c.b16 %v7492, %v7491
      %v7534 = vpack.c.b16 %v7494, %v7493
      %v7535 = vpack.c.b16 %v7496, %v7495
      %v7536 = vpack.c.b16 %v7498, %v7497
      %v7537 = vpack.c.b16 %v7500, %v7499
      %v7538 = vpack.c.b16 %v7502, %v7501
      %v7576 = vsel %vm5871, %v7279, 0
      %7578 = vmatprep.subr.bf16.mxu0 0
      %7579 = vmatpush1.bf16.msra.mxu0 %v7503
      %7580 = vmatprep.subr.bf16.mxu0 0
      %7581 = vmatpush1.bf16.msra.mxu0 %v7504
      %7582 = vmatprep.subr.bf16.mxu0 0
      %7583 = vmatpush1.bf16.msra.mxu0 %v7505
      %7584 = vmatprep.subr.bf16.mxu0 0
      %7585 = vmatpush1.bf16.msra.mxu0 %v7506
      %7586 = vmatprep.subr.bf16.mxu0 0
      %7587 = vmatpush1.bf16.msra.mxu0 %v7507
      %7588 = vmatprep.subr.bf16.mxu0 0
      %7589 = vmatpush1.bf16.msra.mxu0 %v7508
      %7590 = vmatprep.subr.bf16.mxu0 0
      %7591 = vmatpush1.bf16.msra.mxu0 %v7509
      %7592 = vmatprep.subr.bf16.mxu0 0
      %7593 = vmatpush1.bf16.msra.mxu0 %v7510
      %7594 = vmatprep.subr.bf16.mxu0 0
      %7595 = vmatpush1.bf16.msra.mxu0 %v7511
      %7596 = vmatprep.subr.bf16.mxu0 0
      %7597 = vmatpush1.bf16.msra.mxu0 %v7512
      %7598 = vmatprep.subr.bf16.mxu0 0
      %7599 = vmatpush1.bf16.msra.mxu0 %v7513
      %7600 = vmatprep.subr.bf16.mxu0 0
      %7601 = vmatpush1.bf16.msra.mxu0 %v7514
      %7602 = vmatprep.subr.bf16.mxu0 0
      %7603 = vmatpush1.bf16.msra.mxu0 %v7515
      %7604 = vmatprep.subr.bf16.mxu0 0
      %7605 = vmatpush1.bf16.msra.mxu0 %v7516
      %7606 = vmatprep.subr.bf16.mxu0 0
      %7607 = vmatpush1.bf16.msra.mxu0 %v7517
      %7608 = vmatprep.subr.bf16.mxu0 0
      %7609 = vmatpush1.bf16.msra.mxu0 %v7518
      %7610 = vmatprep.mubr.bf16.mxu0 %v7276
      %7611 = vmatmul.mubr.bf16.gmra.mrb[0].mxu0 %v7275
      %v7612 = vpop.f32.mrb[0].mxu0
      %v7613 = vadd.f32 %v7357, %v7612
      %v7614 = vpop.f32.mrb[0].mxu0
      %v7615 = vpop.f32.mrb[0].mxu0
      %v7616 = vadd.f32 %v7357, %v7615
      %v7617 = vpop.f32.mrb[0].mxu0
      %7618 = vdwg.mxu0
      %7619 = vmatprep.subr.bf16.mxu0 0
      %7620 = vmatpush1.bf16.msra.mxu0 %v7519
      %7621 = vmatprep.subr.bf16.mxu0 0
      %7622 = vmatpush1.bf16.msra.mxu0 %v7520
      %7623 = vmatprep.subr.bf16.mxu0 0
      %7624 = vmatpush1.bf16.msra.mxu0 %v7521
      %7625 = vmatprep.subr.bf16.mxu0 0
      %7626 = vmatpush1.bf16.msra.mxu0 %v7522
      %7627 = vmatprep.subr.bf16.mxu0 0
      %7628 = vmatpush1.bf16.msra.mxu0 %v7523
      %7629 = vmatprep.subr.bf16.mxu0 0
      %7630 = vmatpush1.bf16.msra.mxu0 %v7524
      %7631 = vmatprep.subr.bf16.mxu0 0
      %7632 = vmatpush1.bf16.msra.mxu0 %v7525
      %7633 = vmatprep.subr.bf16.mxu0 0
      %7634 = vmatpush1.bf16.msra.mxu0 %v7526
      %7635 = vmatprep.subr.bf16.mxu0 0
      %7636 = vmatpush1.bf16.msra.mxu0 %v7527
      %7637 = vmatprep.subr.bf16.mxu0 0
      %7638 = vmatpush1.bf16.msra.mxu0 %v7528
      %7639 = vmatprep.subr.bf16.mxu0 0
      %7640 = vmatpush1.bf16.msra.mxu0 %v7529
      %7641 = vmatprep.subr.bf16.mxu0 0
      %7642 = vmatpush1.bf16.msra.mxu0 %v7530
      %7643 = vmatprep.subr.bf16.mxu0 0
      %7644 = vmatpush1.bf16.msra.mxu0 %v7531
      %7645 = vmatprep.subr.bf16.mxu0 0
      %7646 = vmatpush1.bf16.msra.mxu0 %v7532
      %7647 = vmatprep.subr.bf16.mxu0 0
      %7648 = vmatpush1.bf16.msra.mxu0 %v7533
      %7649 = vmatprep.subr.bf16.mxu0 0
      %7650 = vmatpush1.bf16.msra.mxu0 %v7534
      %7651 = vmatprep.mubr.bf16.mxu0 %v7278
      %7652 = vmatmul.mubr.bf16.gmra.mrb[0].mxu0 %v7277
      %v7653 = vpop.f32.mrb[0].mxu0
      %v7654 = vadd.f32 %v7613, %v7653
      %v7655 = vpop.f32.mrb[0].mxu0
      %v7656 = vpop.f32.mrb[0].mxu0
      %v7657 = vadd.f32 %v7616, %v7656
      %v7658 = vpop.f32.mrb[0].mxu0
      %7659 = vdwg.mxu0
      %7660 = vmatprep.subr.bf16.mxu0 0
      %7661 = vmatpush1.bf16.msra.mxu0 %v7535
      %7662 = vmatprep.subr.bf16.mxu0 0
      %7663 = vmatpush1.bf16.msra.mxu0 %v7536
      %7664 = vmatprep.subr.bf16.mxu0 0
      %7665 = vmatpush1.bf16.msra.mxu0 %v7537
      %7666 = vmatprep.subr.bf16.mxu0 0
      %7667 = vmatpush1.bf16.msra.mxu0 %v7538
      %7668 = vmatprep.subr.bf16.mxu0 0
      %7669 = vmatpush1.bf16.msra.mxu0 0
      %7670 = vmatprep.subr.bf16.mxu0 0
      %7671 = vmatpush1.bf16.msra.mxu0 0
      %7672 = vmatprep.subr.bf16.mxu0 0
      %7673 = vmatpush1.bf16.msra.mxu0 0
      %7674 = vmatprep.subr.bf16.mxu0 0
      %7675 = vmatpush1.bf16.msra.mxu0 0
      %7676 = vmatprep.subr.bf16.mxu0 0
      %7677 = vmatpush1.bf16.msra.mxu0 0
      %7678 = vmatprep.subr.bf16.mxu0 0
      %7679 = vmatpush1.bf16.msra.mxu0 0
      %7680 = vmatprep.subr.bf16.mxu0 0
      %7681 = vmatpush1.bf16.msra.mxu0 0
      %7682 = vmatprep.subr.bf16.mxu0 0
      %7683 = vmatpush1.bf16.msra.mxu0 0
      %7684 = vmatprep.subr.bf16.mxu0 0
      %7685 = vmatpush1.bf16.msra.mxu0 0
      %7686 = vmatprep.subr.bf16.mxu0 0
      %7687 = vmatpush1.bf16.msra.mxu0 0
      %7688 = vmatprep.subr.bf16.mxu0 0
      %7689 = vmatpush1.bf16.msra.mxu0 0
      %7690 = vmatprep.subr.bf16.mxu0 0
      %7691 = vmatpush1.bf16.msra.mxu0 0
      %7692 = vmatprep.mubr.bf16.mxu0 0
      %7693 = vmatmul.mubr.bf16.gmra.mrb[0].mxu0 %v7576
      %v7694 = vpop.f32.mrb[0].mxu0
      %v7695 = vadd.f32 %v7654, %v7694
      %v7696 = vpop.f32.mrb[0].mxu0
      %v7697 = vpop.f32.mrb[0].mxu0
      %v7698 = vadd.f32 %v7657, %v7697
      %v7699 = vpop.f32.mrb[0].mxu0
      %7700 = vdwg.mxu0
      %v7701 = vmax.f32 %v7695, 0.0
      %v7702 = vmax.f32 %v7698, 0.0
      %7703 = vst [vmem:[#allocation5] sm:$0xff] %v7701
      %7704 = vst [vmem:[#allocation5 + $0x8] sm:$0xff] %v7702
      %v7705 = vld [vmem:[#allocation5] ss:$2 sm:$0xff]
      %s7706 = scalar_lea.vmem [#allocation5], 1
      %v7707 = vld [vmem:[%s7706] ss:$2 sm:$0xff]
      %v7708 = vmax.f32 %v7705, %v7707
      %v7710 = vrot.slane %v7708, 2
      %v7712 = vmax.f32 %v7708, %v7710
      %v7714 = vrot.slane %v7712, 4
      %v7716 = vrot.slane %v7712, 1
      %v7718 = vrot.slane %v7714, 1
      %v7720 = vpack.c.bf16 %v7712, %v7712
      %v7721 = vpack.c.bf16 %v7716, %v7716
      %v7722 = vpack.c.bf16 %v7714, %v7714
      %v7723 = vpack.c.bf16 %v7718, %v7718
      %v7724 = vld [vmem:[%s9] sm:$0xff]
      %v7725 = vld [vmem:[%s9 + $0x8] sm:$0xff]
      %v7726 = vld [vmem:[%s9 + $0x10] sm:$0xff]
      %v7727 = vld [vmem:[%s9 + $0x18] sm:$0xff]
      %v7728 = vld [vmem:[%s9 + $0x20] sm:$0xff]
      %v7729 = vld [vmem:[%s9 + $0x28] sm:$0xff]
      %v7730 = vld [vmem:[%s9 + $0x30] sm:$0xff]
      %v7731 = vld [vmem:[%s9 + $0x38] sm:$0xff]
      %v7732 = vld [vmem:[%s9 + $0x40] sm:$0xff]
      %v7733 = vld [vmem:[%s9 + $0x48] sm:$0xff]
      %v7734 = vld [vmem:[%s9 + $0x50] sm:$0xff]
      %v7735 = vld [vmem:[%s9 + $0x58] sm:$0xff]
      %v7736 = vld [vmem:[%s9 + $0x60] sm:$0xff]
      %v7737 = vld [vmem:[%s9 + $0x68] sm:$0xff]
      %v7738 = vld [vmem:[%s9 + $0x70] sm:$0xff]
      %v7739 = vld [vmem:[%s9 + $0x78] sm:$0xff]
      %v7740 = vld [vmem:[%s9 + $0x80] sm:$0xff]
      %v7741 = vld [vmem:[%s9 + $0x88] sm:$0xff]
      %v7742 = vld [vmem:[%s9 + $0x90] sm:$0xff]
      %v7743 = vld [vmem:[%s9 + $0x98] sm:$0xff]
      %v7744 = vld [vmem:[%s9 + $0xa0] sm:$0xff]
      %v7745 = vld [vmem:[%s9 + $0xa8] sm:$0xff]
      %v7746 = vld [vmem:[%s9 + $0xb0] sm:$0xff]
      %v7747 = vld [vmem:[%s9 + $0xb8] sm:$0xff]
      %v7748 = vld [vmem:[%s9 + $0xc0] sm:$0xff]
      %v7749 = vld [vmem:[%s9 + $0xc8] sm:$0xff]
      %v7750 = vld [vmem:[%s9 + $0xd0] sm:$0xff]
      %v7751 = vld [vmem:[%s9 + $0xd8] sm:$0xff]
      %v7752 = vld [vmem:[%s9 + $0xe0] sm:$0xff]
      %v7753 = vld [vmem:[%s9 + $0xe8] sm:$0xff]
      %v7754 = vld [vmem:[%s9 + $0xf0] sm:$0xff]
      %v7755 = vld [vmem:[%s9 + $0xf8] sm:$0xff]
      %v7756 = vld [vmem:[%s9 + $0x100] sm:$0xff]
      %v7757 = vld [vmem:[%s9 + $0x108] sm:$0xff]
      %v7758 = vld [vmem:[%s9 + $0x110] sm:$0xff]
      %v7759 = vld [vmem:[%s9 + $0x118] sm:$0xff]
      %v7760 = vld [vmem:[%s9 + $0x120] sm:$0xff]
      %v7761 = vld [vmem:[%s9 + $0x128] sm:$0xff]
      %v7762 = vld [vmem:[%s9 + $0x130] sm:$0xff]
      %v7763 = vld [vmem:[%s9 + $0x138] sm:$0xff]
      %v7764 = vld [vmem:[%s9 + $0x140] sm:$0xff]
      %v7765 = vld [vmem:[%s9 + $0x148] sm:$0xff]
      %v7766 = vld [vmem:[%s9 + $0x150] sm:$0xff]
      %v7767 = vld [vmem:[%s9 + $0x158] sm:$0xff]
      %v7768 = vld [vmem:[%s9 + $0x160] sm:$0xff]
      %v7769 = vld [vmem:[%s9 + $0x168] sm:$0xff]
      %v7770 = vld [vmem:[%s9 + $0x170] sm:$0xff]
      %v7771 = vld [vmem:[%s9 + $0x178] sm:$0xff]
      %v7772 = vld [vmem:[%s9 + $0x180] sm:$0xff]
      %v7773 = vld [vmem:[%s9 + $0x188] sm:$0xff]
      %v7774 = vld [vmem:[%s9 + $0x190] sm:$0xff]
      %v7775 = vld [vmem:[%s9 + $0x198] sm:$0xff]
      %v7776 = vld [vmem:[%s9 + $0x1a0] sm:$0xff]
      %v7777 = vld [vmem:[%s9 + $0x1a8] sm:$0xff]
      %v7778 = vld [vmem:[%s9 + $0x1b0] sm:$0xff]
      %v7779 = vld [vmem:[%s9 + $0x1b8] sm:$0xff]
      %v7780 = vld [vmem:[%s9 + $0x1c0] sm:$0xff]
      %v7781 = vld [vmem:[%s9 + $0x1c8] sm:$0xff]
      %v7782 = vld [vmem:[%s9 + $0x1d0] sm:$0xff]
      %v7783 = vld [vmem:[%s9 + $0x1d8] sm:$0xff]
      %v7784 = vld [vmem:[%s9 + $0x1e0] sm:$0xff]
      %v7785 = vld [vmem:[%s9 + $0x1e8] sm:$0xff]
      %v7786 = vld [vmem:[%s9 + $0x1f0] sm:$0xff]
      %v7787 = vld [vmem:[%s9 + $0x1f8] sm:$0xff]
      %v7788 = vld [vmem:[%s10] sm:$0x3]
      %v7853 = vunpack.c.l.b16 %v7724
      %v7854 = vunpack.c.h.b16 %v7724
      %v7855 = vunpack.c.l.b16 %v7725
      %v7856 = vunpack.c.h.b16 %v7725
      %v7857 = vunpack.c.l.b16 %v7726
      %v7858 = vunpack.c.h.b16 %v7726
      %v7859 = vunpack.c.l.b16 %v7727
      %v7860 = vunpack.c.h.b16 %v7727
      %v7861 = vunpack.c.l.b16 %v7728
      %v7862 = vunpack.c.h.b16 %v7728
      %v7863 = vunpack.c.l.b16 %v7729
      %v7864 = vunpack.c.h.b16 %v7729
      %v7865 = vunpack.c.l.b16 %v7730
      %v7866 = vunpack.c.h.b16 %v7730
      %v7867 = vunpack.c.l.b16 %v7731
      %v7868 = vunpack.c.h.b16 %v7731
      %v7869 = vunpack.c.l.b16 %v7732
      %v7870 = vunpack.c.h.b16 %v7732
      %v7871 = vunpack.c.l.b16 %v7733
      %v7872 = vunpack.c.h.b16 %v7733
      %v7873 = vunpack.c.l.b16 %v7734
      %v7874 = vunpack.c.h.b16 %v7734
      %v7875 = vunpack.c.l.b16 %v7735
      %v7876 = vunpack.c.h.b16 %v7735
      %v7877 = vunpack.c.l.b16 %v7736
      %v7878 = vunpack.c.h.b16 %v7736
      %v7879 = vunpack.c.l.b16 %v7737
      %v7880 = vunpack.c.h.b16 %v7737
      %v7881 = vunpack.c.l.b16 %v7738
      %v7882 = vunpack.c.h.b16 %v7738
      %v7883 = vunpack.c.l.b16 %v7739
      %v7884 = vunpack.c.h.b16 %v7739
      %v7885 = vunpack.c.l.b16 %v7740
      %v7886 = vunpack.c.h.b16 %v7740
      %v7887 = vunpack.c.l.b16 %v7741
      %v7888 = vunpack.c.h.b16 %v7741
      %v7889 = vunpack.c.l.b16 %v7742
      %v7890 = vunpack.c.h.b16 %v7742
      %v7891 = vunpack.c.l.b16 %v7743
      %v7892 = vunpack.c.h.b16 %v7743
      %v7893 = vunpack.c.l.b16 %v7744
      %v7894 = vunpack.c.h.b16 %v7744
      %v7895 = vunpack.c.l.b16 %v7745
      %v7896 = vunpack.c.h.b16 %v7745
      %v7897 = vunpack.c.l.b16 %v7746
      %v7898 = vunpack.c.h.b16 %v7746
      %v7899 = vunpack.c.l.b16 %v7747
      %v7900 = vunpack.c.h.b16 %v7747
      %v7901 = vunpack.c.l.b16 %v7748
      %v7902 = vunpack.c.h.b16 %v7748
      %v7903 = vunpack.c.l.b16 %v7749
      %v7904 = vunpack.c.h.b16 %v7749
      %v7905 = vunpack.c.l.b16 %v7750
      %v7906 = vunpack.c.h.b16 %v7750
      %v7907 = vunpack.c.l.b16 %v7751
      %v7908 = vunpack.c.h.b16 %v7751
      %v7909 = vunpack.c.l.b16 %v7752
      %v7910 = vunpack.c.h.b16 %v7752
      %v7911 = vunpack.c.l.b16 %v7753
      %v7912 = vunpack.c.h.b16 %v7753
      %v7913 = vunpack.c.l.b16 %v7754
      %v7914 = vunpack.c.h.b16 %v7754
      %v7915 = vunpack.c.l.b16 %v7755
      %v7916 = vunpack.c.h.b16 %v7755
      %v7917 = vunpack.c.l.b16 %v7756
      %v7918 = vunpack.c.h.b16 %v7756
      %v7919 = vunpack.c.l.b16 %v7757
      %v7920 = vunpack.c.h.b16 %v7757
      %v7921 = vunpack.c.l.b16 %v7758
      %v7922 = vunpack.c.h.b16 %v7758
      %v7923 = vunpack.c.l.b16 %v7759
      %v7924 = vunpack.c.h.b16 %v7759
      %v7925 = vunpack.c.l.b16 %v7760
      %v7926 = vunpack.c.h.b16 %v7760
      %v7927 = vunpack.c.l.b16 %v7761
      %v7928 = vunpack.c.h.b16 %v7761
      %v7929 = vunpack.c.l.b16 %v7762
      %v7930 = vunpack.c.h.b16 %v7762
      %v7931 = vunpack.c.l.b16 %v7763
      %v7932 = vunpack.c.h.b16 %v7763
      %v7933 = vunpack.c.l.b16 %v7764
      %v7934 = vunpack.c.h.b16 %v7764
      %v7935 = vunpack.c.l.b16 %v7765
      %v7936 = vunpack.c.h.b16 %v7765
      %v7937 = vunpack.c.l.b16 %v7766
      %v7938 = vunpack.c.h.b16 %v7766
      %v7939 = vunpack.c.l.b16 %v7767
      %v7940 = vunpack.c.h.b16 %v7767
      %v7941 = vunpack.c.l.b16 %v7768
      %v7942 = vunpack.c.h.b16 %v7768
      %v7943 = vunpack.c.l.b16 %v7769
      %v7944 = vunpack.c.h.b16 %v7769
      %v7945 = vunpack.c.l.b16 %v7770
      %v7946 = vunpack.c.h.b16 %v7770
      %v7947 = vunpack.c.l.b16 %v7771
      %v7948 = vunpack.c.h.b16 %v7771
      %v7949 = vunpack.c.l.b16 %v7772
      %v7950 = vunpack.c.h.b16 %v7772
      %v7951 = vunpack.c.l.b16 %v7773
      %v7952 = vunpack.c.h.b16 %v7773
      %v7953 = vunpack.c.l.b16 %v7774
      %v7954 = vunpack.c.h.b16 %v7774
      %v7955 = vunpack.c.l.b16 %v7775
      %v7956 = vunpack.c.h.b16 %v7775
      %v7957 = vunpack.c.l.b16 %v7776
      %v7958 = vunpack.c.h.b16 %v7776
      %v7959 = vunpack.c.l.b16 %v7777
      %v7960 = vunpack.c.h.b16 %v7777
      %v7961 = vunpack.c.l.b16 %v7778
      %v7962 = vunpack.c.h.b16 %v7778
      %v7963 = vunpack.c.l.b16 %v7779
      %v7964 = vunpack.c.h.b16 %v7779
      %v7965 = vunpack.c.l.b16 %v7780
      %v7966 = vunpack.c.h.b16 %v7780
      %v7967 = vunpack.c.l.b16 %v7781
      %v7968 = vunpack.c.h.b16 %v7781
      %v7969 = vunpack.c.l.b16 %v7782
      %v7970 = vunpack.c.h.b16 %v7782
      %v7971 = vunpack.c.l.b16 %v7783
      %v7972 = vunpack.c.h.b16 %v7783
      %v7973 = vunpack.c.l.b16 %v7784
      %v7974 = vunpack.c.h.b16 %v7784
      %v7975 = vunpack.c.l.b16 %v7785
      %v7976 = vunpack.c.h.b16 %v7785
      %v7977 = vunpack.c.l.b16 %v7786
      %v7978 = vunpack.c.h.b16 %v7786
      %v7979 = vunpack.c.l.b16 %v7787
      %v7980 = vunpack.c.h.b16 %v7787
      %v7981 = vpack.c.b16 %v7855, %v7853
      %v7982 = vpack.c.b16 %v7856, %v7854
      %v7983 = vpack.c.b16 %v7859, %v7857
      %v7984 = vpack.c.b16 %v7860, %v7858
      %v7985 = vpack.c.b16 %v7863, %v7861
      %v7986 = vpack.c.b16 %v7864, %v7862
      %v7987 = vpack.c.b16 %v7867, %v7865
      %v7988 = vpack.c.b16 %v7868, %v7866
      %v7989 = vpack.c.b16 %v7871, %v7869
      %v7990 = vpack.c.b16 %v7872, %v7870
      %v7991 = vpack.c.b16 %v7875, %v7873
      %v7992 = vpack.c.b16 %v7876, %v7874
      %v7993 = vpack.c.b16 %v7879, %v7877
      %v7994 = vpack.c.b16 %v7880, %v7878
      %v7995 = vpack.c.b16 %v7883, %v7881
      %v7996 = vpack.c.b16 %v7884, %v7882
      %v7997 = vpack.c.b16 %v7887, %v7885
      %v7998 = vpack.c.b16 %v7888, %v7886
      %v7999 = vpack.c.b16 %v7891, %v7889
      %v8000 = vpack.c.b16 %v7892, %v7890
      %v8001 = vpack.c.b16 %v7895, %v7893
      %v8002 = vpack.c.b16 %v7896, %v7894
      %v8003 = vpack.c.b16 %v7899, %v7897
      %v8004 = vpack.c.b16 %v7900, %v7898
      %v8005 = vpack.c.b16 %v7903, %v7901
      %v8006 = vpack.c.b16 %v7904, %v7902
      %v8007 = vpack.c.b16 %v7907, %v7905
      %v8008 = vpack.c.b16 %v7908, %v7906
      %v8009 = vpack.c.b16 %v7911, %v7909
      %v8010 = vpack.c.b16 %v7912, %v7910
      %v8011 = vpack.c.b16 %v7915, %v7913
      %v8012 = vpack.c.b16 %v7916, %v7914
      %v8013 = vpack.c.b16 %v7919, %v7917
      %v8014 = vpack.c.b16 %v7920, %v7918
      %v8015 = vpack.c.b16 %v7923, %v7921
      %v8016 = vpack.c.b16 %v7924, %v7922
      %v8017 = vpack.c.b16 %v7927, %v7925
      %v8018 = vpack.c.b16 %v7928, %v7926
      %v8019 = vpack.c.b16 %v7931, %v7929
      %v8020 = vpack.c.b16 %v7932, %v7930
      %v8021 = vpack.c.b16 %v7935, %v7933
      %v8022 = vpack.c.b16 %v7936, %v7934
      %v8023 = vpack.c.b16 %v7939, %v7937
      %v8024 = vpack.c.b16 %v7940, %v7938
      %v8025 = vpack.c.b16 %v7943, %v7941
      %v8026 = vpack.c.b16 %v7944, %v7942
      %v8027 = vpack.c.b16 %v7947, %v7945
      %v8028 = vpack.c.b16 %v7948, %v7946
      %v8029 = vpack.c.b16 %v7951, %v7949
      %v8030 = vpack.c.b16 %v7952, %v7950
      %v8031 = vpack.c.b16 %v7955, %v7953
      %v8032 = vpack.c.b16 %v7956, %v7954
      %v8033 = vpack.c.b16 %v7959, %v7957
      %v8034 = vpack.c.b16 %v7960, %v7958
      %v8035 = vpack.c.b16 %v7963, %v7961
      %v8036 = vpack.c.b16 %v7964, %v7962
      %v8037 = vpack.c.b16 %v7967, %v7965
      %v8038 = vpack.c.b16 %v7968, %v7966
      %v8039 = vpack.c.b16 %v7971, %v7969
      %v8040 = vpack.c.b16 %v7972, %v7970
      %v8041 = vpack.c.b16 %v7975, %v7973
      %v8042 = vpack.c.b16 %v7976, %v7974
      %v8043 = vpack.c.b16 %v7979, %v7977
      %v8044 = vpack.c.b16 %v7980, %v7978
      %v8110 = vlaneseq
      %v8111 = vshrl.u32 %v8110, 7
      %v8112 = vsub.s32 0, %v8111
      %v8113 = vrot.slane %v7788, %v8112
      %v8114 = vlaneseq
      %v8115 = vshrl.u32 %v8114, 7
      %v8116 = vsub.s32 1, %v8115
      %v8117 = vrot.slane %v7788, %v8116
      %8120 = vmatprep.subr.bf16.mxu0 %v7982
      %8121 = vmatpush1.bf16.msra.mxu0 %v7981
      %8122 = vmatprep.subr.bf16.mxu0 %v7984
      %8123 = vmatpush1.bf16.msra.mxu0 %v7983
      %8124 = vmatprep.subr.bf16.mxu0 %v7986
      %8125 = vmatpush1.bf16.msra.mxu0 %v7985
      %8126 = vmatprep.subr.bf16.mxu0 %v7988
      %8127 = vmatpush1.bf16.msra.mxu0 %v7987
      %8128 = vmatprep.subr.bf16.mxu0 %v7990
      %8129 = vmatpush1.bf16.msra.mxu0 %v7989
      %8130 = vmatprep.subr.bf16.mxu0 %v7992
      %8131 = vmatpush1.bf16.msra.mxu0 %v7991
      %8132 = vmatprep.subr.bf16.mxu0 %v7994
      %8133 = vmatpush1.bf16.msra.mxu0 %v7993
      %8134 = vmatprep.subr.bf16.mxu0 %v7996
      %8135 = vmatpush1.bf16.msra.mxu0 %v7995
      %8136 = vmatprep.subr.bf16.mxu0 %v7998
      %8137 = vmatpush1.bf16.msra.mxu0 %v7997
      %8138 = vmatprep.subr.bf16.mxu0 %v8000
      %8139 = vmatpush1.bf16.msra.mxu0 %v7999
      %8140 = vmatprep.subr.bf16.mxu0 %v8002
      %8141 = vmatpush1.bf16.msra.mxu0 %v8001
      %8142 = vmatprep.subr.bf16.mxu0 %v8004
      %8143 = vmatpush1.bf16.msra.mxu0 %v8003
      %8144 = vmatprep.subr.bf16.mxu0 %v8006
      %8145 = vmatpush1.bf16.msra.mxu0 %v8005
      %8146 = vmatprep.subr.bf16.mxu0 %v8008
      %8147 = vmatpush1.bf16.msra.mxu0 %v8007
      %8148 = vmatprep.subr.bf16.mxu0 %v8010
      %8149 = vmatpush1.bf16.msra.mxu0 %v8009
      %8150 = vmatprep.subr.bf16.mxu0 %v8012
      %8151 = vmatpush1.bf16.msra.mxu0 %v8011
      %8152 = vmatprep.mubr.bf16.mxu0 %v7721
      %8153 = vmatmul.mubr.bf16.gmra.mrb[0].mxu0 %v7720
      %v8154 = vpop.f32.mrb[0].mxu0
      %v8155 = vadd.f32 %v8113, %v8154
      %v8156 = vpop.f32.mrb[0].mxu0
      %v8157 = vadd.f32 %v8117, %v8156
      %v8158 = vpop.f32.mrb[0].mxu0
      %v8159 = vpop.f32.mrb[0].mxu0
      %8160 = vdwg.mxu0
      %8161 = vmatprep.subr.bf16.mxu0 %v8014
      %8162 = vmatpush1.bf16.msra.mxu0 %v8013
      %8163 = vmatprep.subr.bf16.mxu0 %v8016
      %8164 = vmatpush1.bf16.msra.mxu0 %v8015
      %8165 = vmatprep.subr.bf16.mxu0 %v8018
      %8166 = vmatpush1.bf16.msra.mxu0 %v8017
      %8167 = vmatprep.subr.bf16.mxu0 %v8020
      %8168 = vmatpush1.bf16.msra.mxu0 %v8019
      %8169 = vmatprep.subr.bf16.mxu0 %v8022
      %8170 = vmatpush1.bf16.msra.mxu0 %v8021
      %8171 = vmatprep.subr.bf16.mxu0 %v8024
      %8172 = vmatpush1.bf16.msra.mxu0 %v8023
      %8173 = vmatprep.subr.bf16.mxu0 %v8026
      %8174 = vmatpush1.bf16.msra.mxu0 %v8025
      %8175 = vmatprep.subr.bf16.mxu0 %v8028
      %8176 = vmatpush1.bf16.msra.mxu0 %v8027
      %8177 = vmatprep.subr.bf16.mxu0 %v8030
      %8178 = vmatpush1.bf16.msra.mxu0 %v8029
      %8179 = vmatprep.subr.bf16.mxu0 %v8032
      %8180 = vmatpush1.bf16.msra.mxu0 %v8031
      %8181 = vmatprep.subr.bf16.mxu0 %v8034
      %8182 = vmatpush1.bf16.msra.mxu0 %v8033
      %8183 = vmatprep.subr.bf16.mxu0 %v8036
      %8184 = vmatpush1.bf16.msra.mxu0 %v8035
      %8185 = vmatprep.subr.bf16.mxu0 %v8038
      %8186 = vmatpush1.bf16.msra.mxu0 %v8037
      %8187 = vmatprep.subr.bf16.mxu0 %v8040
      %8188 = vmatpush1.bf16.msra.mxu0 %v8039
      %8189 = vmatprep.subr.bf16.mxu0 %v8042
      %8190 = vmatpush1.bf16.msra.mxu0 %v8041
      %8191 = vmatprep.subr.bf16.mxu0 %v8044
      %8192 = vmatpush1.bf16.msra.mxu0 %v8043
      %8193 = vmatprep.mubr.bf16.mxu0 %v7723
      %8194 = vmatmul.mubr.bf16.gmra.mrb[0].mxu0 %v7722
      %v8195 = vpop.f32.mrb[0].mxu0
      %v8196 = vadd.f32 %v8155, %v8195
      %v8197 = vpop.f32.mrb[0].mxu0
      %v8198 = vadd.f32 %v8157, %v8197
      %v8199 = vpop.f32.mrb[0].mxu0
      %v8200 = vpop.f32.mrb[0].mxu0
      %8201 = vdwg.mxu0
      %v8202 = vmax.f32 %v8196, 0.0
      %v8203 = vmax.f32 %v8198, 0.0
      %v8204 = vpack.c.bf16 %v8202, %v8202
      %v8205 = vpack.c.bf16 %v8203, %v8203
      %v8206 = vld [vmem:[%s11] sm:$0xf]
      %v8207 = vld [vmem:[%s11 + $0x4] sm:$0xf]
      %v8208 = vld [vmem:[%s11 + $0x8] sm:$0xf]
      %v8209 = vld [vmem:[%s11 + $0xc] sm:$0xf]
      %v8210 = vld [vmem:[%s11 + $0x10] sm:$0xf]
      %v8211 = vld [vmem:[%s11 + $0x14] sm:$0xf]
      %v8212 = vld [vmem:[%s11 + $0x18] sm:$0xf]
      %v8213 = vld [vmem:[%s11 + $0x1c] sm:$0xf]
      %v8214 = vld [vmem:[%s11 + $0x20] sm:$0xf]
      %v8215 = vld [vmem:[%s11 + $0x24] sm:$0xf]
      %v8216 = vld [vmem:[%s11 + $0x28] sm:$0xf]
      %v8217 = vld [vmem:[%s11 + $0x2c] sm:$0xf]
      %v8218 = vld [vmem:[%s11 + $0x30] sm:$0xf]
      %v8219 = vld [vmem:[%s11 + $0x34] sm:$0xf]
      %v8220 = vld [vmem:[%s11 + $0x38] sm:$0xf]
      %v8221 = vld [vmem:[%s11 + $0x3c] sm:$0xf]
      %v8222 = vld [vmem:[%s11 + $0x40] sm:$0xf]
      %v8223 = vld [vmem:[%s11 + $0x44] sm:$0xf]
      %v8224 = vld [vmem:[%s11 + $0x48] sm:$0xf]
      %v8225 = vld [vmem:[%s11 + $0x4c] sm:$0xf]
      %v8226 = vld [vmem:[%s11 + $0x50] sm:$0xf]
      %v8227 = vld [vmem:[%s11 + $0x54] sm:$0xf]
      %v8228 = vld [vmem:[%s11 + $0x58] sm:$0xf]
      %v8229 = vld [vmem:[%s11 + $0x5c] sm:$0xf]
      %v8230 = vld [vmem:[%s11 + $0x60] sm:$0xf]
      %v8231 = vld [vmem:[%s11 + $0x64] sm:$0xf]
      %v8232 = vld [vmem:[%s11 + $0x68] sm:$0xf]
      %v8233 = vld [vmem:[%s11 + $0x6c] sm:$0xf]
      %v8234 = vld [vmem:[%s11 + $0x70] sm:$0xf]
      %v8235 = vld [vmem:[%s11 + $0x74] sm:$0xf]
      %v8236 = vld [vmem:[%s11 + $0x78] sm:$0xf]
      %v8237 = vld [vmem:[%s11 + $0x7c] sm:$0xf]
      %v8238 = vld [vmem:[%s12] sm:$0x1]
      %v8271 = vunpack.c.l.b16 %v8206
      %v8272 = vunpack.c.l.b16 %v8207
      %v8273 = vunpack.c.l.b16 %v8208
      %v8274 = vunpack.c.l.b16 %v8209
      %v8275 = vunpack.c.l.b16 %v8210
      %v8276 = vunpack.c.l.b16 %v8211
      %v8277 = vunpack.c.l.b16 %v8212
      %v8278 = vunpack.c.l.b16 %v8213
      %v8279 = vunpack.c.l.b16 %v8214
      %v8280 = vunpack.c.l.b16 %v8215
      %v8281 = vunpack.c.l.b16 %v8216
      %v8282 = vunpack.c.l.b16 %v8217
      %v8283 = vunpack.c.l.b16 %v8218
      %v8284 = vunpack.c.l.b16 %v8219
      %v8285 = vunpack.c.l.b16 %v8220
      %v8286 = vunpack.c.l.b16 %v8221
      %v8287 = vunpack.c.l.b16 %v8222
      %v8288 = vunpack.c.l.b16 %v8223
      %v8289 = vunpack.c.l.b16 %v8224
      %v8290 = vunpack.c.l.b16 %v8225
      %v8291 = vunpack.c.l.b16 %v8226
      %v8292 = vunpack.c.l.b16 %v8227
      %v8293 = vunpack.c.l.b16 %v8228
      %v8294 = vunpack.c.l.b16 %v8229
      %v8295 = vunpack.c.l.b16 %v8230
      %v8296 = vunpack.c.l.b16 %v8231
      %v8297 = vunpack.c.l.b16 %v8232
      %v8298 = vunpack.c.l.b16 %v8233
      %v8299 = vunpack.c.l.b16 %v8234
      %v8300 = vunpack.c.l.b16 %v8235
      %v8301 = vunpack.c.l.b16 %v8236
      %v8302 = vunpack.c.l.b16 %v8237
      %v8303 = vpack.c.b16 %v8272, %v8271
      %v8304 = vpack.c.b16 %v8274, %v8273
      %v8305 = vpack.c.b16 %v8276, %v8275
      %v8306 = vpack.c.b16 %v8278, %v8277
      %v8307 = vpack.c.b16 %v8280, %v8279
      %v8308 = vpack.c.b16 %v8282, %v8281
      %v8309 = vpack.c.b16 %v8284, %v8283
      %v8310 = vpack.c.b16 %v8286, %v8285
      %v8311 = vpack.c.b16 %v8288, %v8287
      %v8312 = vpack.c.b16 %v8290, %v8289
      %v8313 = vpack.c.b16 %v8292, %v8291
      %v8314 = vpack.c.b16 %v8294, %v8293
      %v8315 = vpack.c.b16 %v8296, %v8295
      %v8316 = vpack.c.b16 %v8298, %v8297
      %v8317 = vpack.c.b16 %v8300, %v8299
      %v8318 = vpack.c.b16 %v8302, %v8301
      %8335 = vmatprep.subr.bf16.mxu0 0
      %8336 = vmatpush1.bf16.msra.mxu0 %v8303
      %8337 = vmatprep.subr.bf16.mxu0 0
      %8338 = vmatpush1.bf16.msra.mxu0 %v8304
      %8339 = vmatprep.subr.bf16.mxu0 0
      %8340 = vmatpush1.bf16.msra.mxu0 %v8305
      %8341 = vmatprep.subr.bf16.mxu0 0
      %8342 = vmatpush1.bf16.msra.mxu0 %v8306
      %8343 = vmatprep.subr.bf16.mxu0 0
      %8344 = vmatpush1.bf16.msra.mxu0 %v8307
      %8345 = vmatprep.subr.bf16.mxu0 0
      %8346 = vmatpush1.bf16.msra.mxu0 %v8308
      %8347 = vmatprep.subr.bf16.mxu0 0
      %8348 = vmatpush1.bf16.msra.mxu0 %v8309
      %8349 = vmatprep.subr.bf16.mxu0 0
      %8350 = vmatpush1.bf16.msra.mxu0 %v8310
      %8351 = vmatprep.subr.bf16.mxu0 0
      %8352 = vmatpush1.bf16.msra.mxu0 %v8311
      %8353 = vmatprep.subr.bf16.mxu0 0
      %8354 = vmatpush1.bf16.msra.mxu0 %v8312
      %8355 = vmatprep.subr.bf16.mxu0 0
      %8356 = vmatpush1.bf16.msra.mxu0 %v8313
      %8357 = vmatprep.subr.bf16.mxu0 0
      %8358 = vmatpush1.bf16.msra.mxu0 %v8314
      %8359 = vmatprep.subr.bf16.mxu0 0
      %8360 = vmatpush1.bf16.msra.mxu0 %v8315
      %8361 = vmatprep.subr.bf16.mxu0 0
      %8362 = vmatpush1.bf16.msra.mxu0 %v8316
      %8363 = vmatprep.subr.bf16.mxu0 0
      %8364 = vmatpush1.bf16.msra.mxu0 %v8317
      %8365 = vmatprep.subr.bf16.mxu0 0
      %8366 = vmatpush1.bf16.msra.mxu0 %v8318
      %8367 = vmatprep.mubr.bf16.mxu0 %v8205
      %8368 = vmatmul.mubr.bf16.gmra.mrb[0].mxu0 %v8204
      %v8369 = vpop.f32.mrb[0].mxu0
      %v8370 = vadd.f32 %v8238, %v8369
      %v8371 = vpop.f32.mrb[0].mxu0
      %v8372 = vpop.f32.mrb[0].mxu0
      %v8373 = vpop.f32.mrb[0].mxu0
      %8374 = vdwg.mxu0
      %v8375 = vmax.f32 %v8370, 0.0
      %v8376 = vld [vmem:[%s13] sm:$0x1]
      %v8377 = vmul.f32 %v8375, %v8376
      %vm8378 = vcmask 516096
      %v8379 = vsel %vm8378, %v8377, 0.0
      %8380 = vadd.xlane.f32.xlu0 %v8379
      %v8381 = vpop.xlane.xlu0 %8380
      %v8382 = vld [vmem:[#allocation6] sm:$0x1]
      %v8383 = vadd.f32 %v8381, %v8382
      %vm8384 = vcmask 0
      %8385 = vst.msk [vmem:[%s492] sm:$0x1] %vm8384, %v8383
      %p8386 = scmp.lt.s32.totalorder %s28, 1
      %s8387 = scalar_select %p8386, %s28, 1
      %s8388 = scalar_lea.vmem %s15, %s8387
      // Predicated region
      $region81: #{_lambda_.1} parent=79 // pred_check
        %p8389 = pneg %p366
      $region82: #{_lambda_.1} parent=79 // pred_check_branch
        %8391 = sbr.rel (%p8389) target = $region84
      $region83: #{_lambda_.1} parent=79 // pred_region
        _
      $region84: #{_lambda_.1} parent=79 // pred_fallthru
        _
    $region80: #{_lambda_.1} parent=5 // pred_fallthru
      _
    %p8392 = scmp.le.s32.totalorder 2, %s23
    // Predicated region
    $region85: #{_lambda_.1} parent=5 // pred_check
      %p8393 = pneg %p8392
    $region86: #{_lambda_.1} parent=5 // pred_check_branch
      %8395 = sbr.rel (%p8393) target = $region88
    $region87: #{_lambda_.1} parent=5 // pred_region
      %s8396 = ssub.s32 %s23, 2
      // Predicated region
      $region89: #{_lambda_.1} parent=87 // pred_check
        %p8397 = pneg %p372
      $region90: #{_lambda_.1} parent=87 // pred_check_branch
        %8399 = sbr.rel (%p8397) target = $region92
      $region91: #{_lambda_.1} parent=87 // pred_region
        %p8400 = scmp.lt.s32.totalorder %s29, 1
        %s8401 = scalar_select %p8400, %s29, 1
        %s8402 = scalar_lea.vmem %s15, %s8401
      $region92: #{_lambda_.1} parent=87 // pred_fallthru
        _
    $region88: #{_lambda_.1} parent=5 // pred_fallthru
      _
  $region6: #{_lambda_.1} parent=0 // loop_footer
    %s27 = sadd.s32 1, %s23
  $region7: #{_lambda_.1} parent=0 // loop_footer_branch
    %22 = sbr.rel target = $region3
  $region8: #{_lambda_.1} parent=0 // loop_exit
    _

</llo_original>
